<compile_context>
chip_gen: v7x
topology: tpu7x:2x2x1
jax: 0.10.0
libtpu: 0.0.40
codegen_flags: <defaults>
</compile_context>

<pallas_src>
import functools
import math

import jax
import jax.numpy as jnp
from jax.experimental import pallas as pl
from jax.experimental.pallas import tpu as pltpu

NEG_INF = -1e9  # instead of -inf: fully-masked rows give uniform attn, not NaN

# Positional order of per-layer parameters inside the fused decoder kernel.
_LAYER_PARAM_NAMES = (
    "self_w_qkv", "self_b_qkv", "self_w_o", "self_b_o", "norm1_w", "norm1_b",
    "cross_w_q", "cross_b_q", "cross_w_kv", "cross_b_kv", "cross_w_o",
    "cross_b_o", "norm2_w", "norm2_b",
    "lin1_w", "lin1_b", "lin2_w", "lin2_b", "norm3_w", "norm3_b",
)

_BF16_WEIGHTS = ("self_w_qkv", "self_w_o", "cross_w_q", "cross_w_kv",
                 "cross_w_o", "lin1_w", "lin2_w")


# ----------------------------------------------------------------------------
# Pallas kernels
# ----------------------------------------------------------------------------

def _mlp_encoder_kernel(x_ref, w1_ref, b1_ref, w2_ref, b2_ref, o_ref):
    h = jnp.dot(x_ref[...], w1_ref[...], preferred_element_type=jnp.float32) + b1_ref[...]
    h = jnp.maximum(h, 0.0)
    y = jnp.dot(h, w2_ref[...], preferred_element_type=jnp.float32) + b2_ref[...]
    o_ref[...] = y.astype(o_ref.dtype)


def _generator_kernel(x_ref, w_ref, b_ref, o_ref):
    y = jnp.dot(x_ref[...].astype(w_ref.dtype), w_ref[...],
                preferred_element_type=jnp.float32) + b_ref[...]
    o_ref[...] = y.astype(o_ref.dtype)


def _layer_norm(y, g, b, eps=1e-5):
    mu = jnp.mean(y, axis=-1, keepdims=True)
    var = jnp.mean(jnp.square(y - mu), axis=-1, keepdims=True)
    return (y - mu) * jax.lax.rsqrt(var + eps) * g + b


def _decoder_stack_kernel(
    x0_ref, mem_ref, cmask_ref, pad_ref,
    wqkv_ref, bqkv_ref, wos_ref, bos_ref, n1w_ref, n1b_ref,
    wqc_ref, bqc_ref, wkvc_ref, bkvc_ref, woc_ref, boc_ref, n2w_ref, n2b_ref,
    w1_ref, b1_ref, w2_ref, b2_ref, n3w_ref, n3b_ref,
    o_ref,
    *, nhead, B, L, P,
):
    D = o_ref.shape[1]
    H = nhead
    dh = D // H

    # Grid step 0: seed the resident output accumulator with the embedded input.
    @pl.when(pl.program_id(0) == 0)
    def _():
        o_ref[...] = x0_ref[...]

    x = o_ref[...]                                      # (B*L, D) f32

    def split_heads(y2d, rows):
        # (B*rows, H*dh) f32 -> (B*H, rows, dh) f32
        return y2d.reshape(B, rows, H, dh).transpose(0, 2, 1, 3).reshape(B * H, rows, dh)

    def merge_heads(y, rows):
        # (B*H, rows, dh) f32 -> (B*rows, D) f32 (lane-dense concat over heads)
        return y.reshape(B, H, rows, dh).transpose(0, 2, 1, 3).reshape(B * rows, D)

    def attention(q2d, k2d, v2d, Lq, Lk, mask):
        """All heads in one batched einsum pair; 1/sqrt(dh) pre-folded into Q."""
        q = split_heads(q2d, Lq).astype(jnp.bfloat16)
        k = split_heads(k2d, Lk).astype(jnp.bfloat16)
        v = split_heads(v2d, Lk).astype(jnp.bfloat16)
        s = jnp.einsum("zqd,zkd->zqk", q, k, preferred_element_type=jnp.float32)
        if mask is not None:
            s = s + mask
        s = s - jnp.max(s, axis=-1, keepdims=True)
        p = jnp.exp(s)
        ctx = jnp.einsum("zqk,zkd->zqd", p.astype(jnp.bfloat16), v,
                         preferred_element_type=jnp.float32)
        # normalize after the PV matmul: small reciprocal on the EUP slot
        ctx = ctx * pl.reciprocal(jnp.sum(p, axis=-1, keepdims=True), approx=True)
        return merge_heads(ctx, Lq)                     # (B*Lq, D) f32

    # Additive mask = causal (L, L) + key padding (B, L); built in-kernel from
    # O(L^2) + O(L) inputs instead of DMA-ing an O(B*L^2) tensor per layer.
    mask = cmask_ref[...][None, :, :] + pad_ref[...][:, None, :]       # (B, L, L)
    mask = jnp.broadcast_to(mask[:, None], (B, H, L, L)).reshape(B * H, L, L)

    # ----- self-attention (fused QKV matmul) + residual + norm1 -----
    xb = x.astype(jnp.bfloat16)
    qkv = jnp.dot(xb, wqkv_ref[...], preferred_element_type=jnp.float32) + bqkv_ref[...]
    sa = attention(qkv[:, :D], qkv[:, D:2 * D], qkv[:, 2 * D:], L, L, mask)
    sa = jnp.dot(sa.astype(jnp.bfloat16), wos_ref[...],
                 preferred_element_type=jnp.float32) + bos_ref[...]
    x = _layer_norm(x + sa, n1w_ref[...], n1b_ref[...])

    # ----- cross-attention (fused KV matmul on memory, no mask) + norm2 -----
    xb = x.astype(jnp.bfloat16)
    q = jnp.dot(xb, wqc_ref[...], preferred_element_type=jnp.float32) + bqc_ref[...]
    kv = jnp.dot(mem_ref[...], wkvc_ref[...],
                 preferred_element_type=jnp.float32) + bkvc_ref[...]
    ca = attention(q, kv[:, :D], kv[:, D:], L, P, None)
    ca = jnp.dot(ca.astype(jnp.bfloat16), woc_ref[...],
                 preferred_element_type=jnp.float32) + boc_ref[...]
    x = _layer_norm(x + ca, n2w_ref[...], n2b_ref[...])

    # ----- feed-forward (ReLU) + residual + norm3 -----
    h = jnp.maximum(jnp.dot(x.astype(jnp.bfloat16), w1_ref[...],
                            preferred_element_type=jnp.float32) + b1_ref[...], 0.0)
    ff = jnp.dot(h.astype(jnp.bfloat16), w2_ref[...],
                 preferred_element_type=jnp.float32) + b2_ref[...]
    o_ref[...] = _layer_norm(x + ff, n3w_ref[...], n3b_ref[...]).astype(o_ref.dtype)


# ----------------------------------------------------------------------------
# pallas_call wrappers
# ----------------------------------------------------------------------------

def mlp_encoder(src2d, params):
    M = src2d.shape[0]
    D = params["enc_w2"].shape[1]
    return pl.pallas_call(
        _mlp_encoder_kernel,
        out_shape=jax.ShapeDtypeStruct((M, D), jnp.float32),
    )(src2d, params["enc_w1"], params["enc_b1"], params["enc_w2"], params["enc_b2"])


def generator(x2d, params):
    M = x2d.shape[0]
    V = params["gen_w"].shape[1]
    return pl.pallas_call(
        _generator_kernel,
        out_shape=jax.ShapeDtypeStruct((M, V), jnp.float32),
    )(x2d, params["gen_w"], params["gen_b"])


def decoder_stack(x0, memory, tgt_mask, pad_add, dec, *, nhead, B, L, P):
    """All decoder layers in ONE pallas_call, grid=(nlayers,)."""
    D = x0.shape[1]
    nlayers = dec["norm1_w"].shape[0]

    def full_spec(arr):
        zeros = (0,) * arr.ndim
        return pl.BlockSpec(arr.shape, lambda l, z=zeros: z)

    def layer_spec(arr):
        zeros = (0,) * (arr.ndim - 1)
        return pl.BlockSpec((None,) + arr.shape[1:], lambda l, z=zeros: (l,) + z)

    in_specs = [full_spec(x0), full_spec(memory), full_spec(tgt_mask), full_spec(pad_add)]
    args = [x0, memory, tgt_mask, pad_add]
    for name in _LAYER_PARAM_NAMES:
        arr = dec[name]
        in_specs.append(layer_spec(arr))
        args.append(arr)

    kernel = functools.partial(_decoder_stack_kernel, nhead=nhead, B=B, L=L, P=P)
    return pl.pallas_call(
        kernel,
        out_shape=jax.ShapeDtypeStruct((B * L, D), jnp.float32),
        grid_spec=pltpu.PrefetchScalarGridSpec(
            num_scalar_prefetch=0,
            grid=(nlayers,),
            in_specs=in_specs,
            # constant block index across layers => x stays resident in VMEM,
            # written back to HBM only once at the end.
            out_specs=pl.BlockSpec((B * L, D), lambda l: (0, 0)),
        ),
        compiler_params=pltpu.CompilerParams(dimension_semantics=("arbitrary",)),
    )(*args)


# ----------------------------------------------------------------------------
# Model forward (plain-JAX glue: embedding gather, layout, mask prep)
# ----------------------------------------------------------------------------

def symbolic_regression_transformer(params, src, tgt, tgt_mask, tgt_padding_mask, *, nhead):
    B, P, pd = src.shape
    L = tgt.shape[0]
    D = params["emb"].shape[1]

    # ----- encode: point-wise MLP; memory kept batch-first flat (B*P, D) -----
    memory = mlp_encoder(src.reshape(B * P, pd), params).astype(jnp.bfloat16)

    # ----- target token embedding + positional encoding (dropout = identity) -----
    # TODO(synk): embedding gather stays in plain JAX (dynamic gather in-kernel
    # would need scalar-prefetch / pl.Element machinery not worth it here).
    x = jnp.take(params["emb"], tgt, axis=0) * math.sqrt(D)      # (L, B, D)
    x = x + params["pos_enc"][:L]                                # (L, B, D)
    x = x.transpose(1, 0, 2).reshape(B * L, D)                   # one transpose total

    # ----- compact mask pieces (full (B,L,L) mask is built in-kernel) -----
    pad_add = jnp.where(tgt_padding_mask, NEG_INF, 0.0).astype(jnp.float32)  # (B, L)

    # ----- fused decoder stack: single pallas_call, grid over layers -----
    x = decoder_stack(x, memory, tgt_mask.astype(jnp.float32), pad_add,
                      params["dec"], nhead=nhead, B=B, L=L, P=P)

    # ----- generator, back to PyTorch's seq-first (L, B, vocab) -----
    logits = generator(x, params)                                # (B*L, V)
    return logits.reshape(B, L, -1).transpose(1, 0, 2)


# ----------------------------------------------------------------------------
# Deterministic parameter construction + kernel-ready packing
# ----------------------------------------------------------------------------

def sinusoidal_pos_encoding(max_len, d_model):
    pos = jnp.arange(max_len, dtype=jnp.float32)[:, None]
    den = jnp.exp(-jnp.arange(0, d_model, 2, dtype=jnp.float32)
                  * (math.log(10000.0) / d_model))
    pe = jnp.zeros((max_len, d_model), jnp.float32)
    pe = pe.at[:, 0::2].set(jnp.sin(pos * den))
    pe = pe.at[:, 1::2].set(jnp.cos(pos * den))
    return pe[:, None, :]    # (max_len, 1, d_model)


def init_params(key, *, point_dim, enc_hidden, d_model, nhead, dff, vocab,
                nlayers, max_len):
    def w(k, shape, scale=0.02):
        return scale * jax.random.normal(k, shape, jnp.float32)

    def zeros(*shape):
        return jnp.zeros(shape, jnp.float32)

    def ones(*shape):
        return jnp.ones(shape, jnp.float32)

    keys = iter(jax.random.split(key, 4 + 7 * nlayers))

    layers = []
    for _ in range(nlayers):
        layers.append(dict(
            self_w_qkv=w(next(keys), (d_model, 3 * d_model)),
            self_b_qkv=zeros(1, 3 * d_model),
            self_w_o=w(next(keys), (d_model, d_model)), self_b_o=zeros(1, d_model),
            norm1_w=ones(1, d_model), norm1_b=zeros(1, d_model),
            cross_w_q=w(next(keys), (d_model, d_model)), cross_b_q=zeros(1, d_model),
            cross_w_kv=w(next(keys), (d_model, 2 * d_model)),
            cross_b_kv=zeros(1, 2 * d_model),
            cross_w_o=w(next(keys), (d_model, d_model)), cross_b_o=zeros(1, d_model),
            norm2_w=ones(1, d_model), norm2_b=zeros(1, d_model),
            lin1_w=w(next(keys), (d_model, dff)), lin1_b=zeros(1, dff),
            lin2_w=w(next(keys), (dff, d_model)), lin2_b=zeros(1, d_model),
            norm3_w=ones(1, d_model), norm3_b=zeros(1, d_model),
        ))

    return dict(
        enc_w1=w(next(keys), (point_dim, enc_hidden)), enc_b1=zeros(1, enc_hidden),
        enc_w2=w(next(keys), (enc_hidden, d_model)),   enc_b2=zeros(1, d_model),
        emb=w(next(keys), (vocab, d_model), scale=1.0),
        pos_enc=sinusoidal_pos_encoding(max_len, d_model),
        layers=layers,
        gen_w=w(next(keys), (d_model, vocab)), gen_b=zeros(1, vocab),
    )


def prepare_params(raw, nhead):
    """Pack params for the fused kernels: stack decoder layers along a leading
    layer axis, fold 1/sqrt(dh) into the Q projections (constant fold), and
    cast MXU weight operands to bf16 (biases / norms / elementwise stay f32)."""
    D = raw["emb"].shape[1]
    scale = 1.0 / math.sqrt(D // nhead)
    layers = raw["layers"]

    dec = {name: jnp.stack([lp[name] for lp in layers], axis=0)
           for name in _LAYER_PARAM_NAMES}

    # fold attention score scale into Q weights/biases
    dec["self_w_qkv"] = dec["self_w_qkv"].at[:, :, :D].multiply(scale)
    dec["self_b_qkv"] = dec["self_b_qkv"].at[:, :, :D].multiply(scale)
    dec["cross_w_q"] = dec["cross_w_q"] * scale
    dec["cross_b_q"] = dec["cross_b_q"] * scale

    for name in _BF16_WEIGHTS:
        dec[name] = dec[name].astype(jnp.bfloat16)

    out = {k: v for k, v in raw.items() if k != "layers"}
    out["dec"] = dec
    out["gen_w"] = raw["gen_w"].astype(jnp.bfloat16)
    return out


# ----------------------------------------------------------------------------
# Main
# ----------------------------------------------------------------------------

if __name__ == "__main__":
    B, P, point_dim = 2, 8, 2            # batch, num data points, point dim
    D, nhead, dff = 128, 4, 256          # d_model, heads, feed-forward (lane-dense)
    vocab, L, nlayers = 128, 8, 2        # vocab size, target seq len, layers
    enc_hidden = 128

    root = jax.random.PRNGKey(0)
    k_params, k_src, k_tgt = jax.random.split(root, 3)

    raw = init_params(k_params, point_dim=point_dim, enc_hidden=enc_hidden,
                      d_model=D, nhead=nhead, dff=dff, vocab=vocab,
                      nlayers=nlayers, max_len=64)
    params = prepare_params(raw, nhead)

    src = jax.random.normal(k_src, (B, P, point_dim), jnp.float32)
    tgt = jax.random.randint(k_tgt, (L, B), 0, vocab, dtype=jnp.int32)  # seq-first

    # causal additive mask (generate_square_subsequent_mask semantics)
    idx = jnp.arange(L)
    tgt_mask = jnp.where(idx[None, :] > idx[:, None], NEG_INF, 0.0).astype(jnp.float32)
    # key-padding mask: True = padded; pad last 2 positions of batch element 1
    tgt_padding_mask = jnp.zeros((B, L), dtype=bool).at[1, 6:].set(True)

    fwd = jax.jit(functools.partial(symbolic_regression_transformer, nhead=nhead))
    logits = fwd(params, src, tgt, tgt_mask, tgt_padding_mask)
    jax.block_until_ready(logits)

    assert logits.shape == (L, B, vocab), logits.shape
    assert bool(jnp.all(jnp.isfinite(logits)))
    print("KERNEL_OK")
</pallas_src>

<mosaic_0001>
module attributes {stable_mosaic.version = 11 : i64} {
  func.func @_mlp_encoder_kernel(%arg0: memref<16x2xf32, #tpu.memory_space<vmem>>, %arg1: memref<2x128xf32, #tpu.memory_space<vmem>>, %arg2: memref<1x128xf32, #tpu.memory_space<vmem>>, %arg3: memref<128x128xf32, #tpu.memory_space<vmem>>, %arg4: memref<1x128xf32, #tpu.memory_space<vmem>>, %arg5: memref<16x128xf32, #tpu.memory_space<vmem>>) attributes {dimension_semantics = [], scalar_prefetch = 0 : i64, scratch_operands = 0 : i64, tpu.core_type = #tpu.core_type<tc>} {
    %c0 = arith.constant 0 : index
    %c0_0 = arith.constant 0 : index
    %0 = vector.load %arg0[%c0, %c0_0] : memref<16x2xf32, #tpu.memory_space<vmem>>, vector<16x2xf32>
    %c0_1 = arith.constant 0 : index
    %c0_2 = arith.constant 0 : index
    %1 = vector.load %arg1[%c0_1, %c0_2] : memref<2x128xf32, #tpu.memory_space<vmem>>, vector<2x128xf32>
    %cst = arith.constant dense<0.000000e+00> : vector<16x128xf32>
    %2 = tpu.matmul %0, %1, %cst {dimension_numbers = #tpu.dot_dimension_numbers<[1], [0], [0], [1], [0, 0, 1, 1], [], []>} : vector<16x2xf32>, vector<2x128xf32>, vector<16x128xf32> -> vector<16x128xf32>
    %c0_3 = arith.constant 0 : index
    %c0_4 = arith.constant 0 : index
    %3 = vector.load %arg2[%c0_3, %c0_4] : memref<1x128xf32, #tpu.memory_space<vmem>>, vector<1x128xf32>
    %4 = vector.broadcast %3 : vector<1x128xf32> to vector<16x128xf32>
    %5 = arith.addf %2, %4 : vector<16x128xf32>
    %cst_5 = arith.constant 0.000000e+00 : f32
    %6 = vector.broadcast %cst_5 : f32 to vector<16x128xf32>
    %7 = arith.maximumf %5, %6 : vector<16x128xf32>
    %c0_6 = arith.constant 0 : index
    %c0_7 = arith.constant 0 : index
    %8 = vector.load %arg3[%c0_6, %c0_7] : memref<128x128xf32, #tpu.memory_space<vmem>>, vector<128x128xf32>
    %cst_8 = arith.constant dense<0.000000e+00> : vector<16x128xf32>
    %9 = tpu.matmul %7, %8, %cst_8 {dimension_numbers = #tpu.dot_dimension_numbers<[1], [0], [0], [1], [0, 0, 1, 1], [], []>} : vector<16x128xf32>, vector<128x128xf32>, vector<16x128xf32> -> vector<16x128xf32>
    %c0_9 = arith.constant 0 : index
    %c0_10 = arith.constant 0 : index
    %10 = vector.load %arg4[%c0_9, %c0_10] : memref<1x128xf32, #tpu.memory_space<vmem>>, vector<1x128xf32>
    %11 = vector.broadcast %10 : vector<1x128xf32> to vector<16x128xf32>
    %12 = arith.addf %9, %11 : vector<16x128xf32>
    %c0_11 = arith.constant 0 : index
    %c0_12 = arith.constant 0 : index
    %13 = vector.load %arg5[%c0_11, %c0_12] : memref<16x128xf32, #tpu.memory_space<vmem>>, vector<16x128xf32>
    tpu.vector_store %arg5[%c0_11, %c0_12], %12 {strides = array<i32>} : memref<16x128xf32, #tpu.memory_space<vmem>>, vector<16x128xf32>,
    return
  }
}

module attributes {stable_mosaic.version = 11 : i64} {
  func.func @_generator_kernel(%arg0: memref<16x128xf32, #tpu.memory_space<vmem>>, %arg1: memref<128x128xbf16, #tpu.memory_space<vmem>>, %arg2: memref<1x128xf32, #tpu.memory_space<vmem>>, %arg3: memref<16x128xf32, #tpu.memory_space<vmem>>) attributes {dimension_semantics = [], scalar_prefetch = 0 : i64, scratch_operands = 0 : i64, tpu.core_type = #tpu.core_type<tc>} {
    %c0 = arith.constant 0 : index
    %c0_0 = arith.constant 0 : index
    %0 = vector.load %arg0[%c0, %c0_0] : memref<16x128xf32, #tpu.memory_space<vmem>>, vector<16x128xf32>
    %1 = arith.truncf %0 : vector<16x128xf32> to vector<16x128xbf16>
    %c0_1 = arith.constant 0 : index
    %c0_2 = arith.constant 0 : index
    %2 = vector.load %arg1[%c0_1, %c0_2] : memref<128x128xbf16, #tpu.memory_space<vmem>>, vector<128x128xbf16>
    %cst = arith.constant dense<0.000000e+00> : vector<16x128xf32>
    %3 = tpu.matmul %1, %2, %cst {dimension_numbers = #tpu.dot_dimension_numbers<[1], [0], [0], [1], [0, 0, 1, 1], [], []>} : vector<16x128xbf16>, vector<128x128xbf16>, vector<16x128xf32> -> vector<16x128xf32>
    %c0_3 = arith.constant 0 : index
    %c0_4 = arith.constant 0 : index
    %4 = vector.load %arg2[%c0_3, %c0_4] : memref<1x128xf32, #tpu.memory_space<vmem>>, vector<1x128xf32>
    %5 = vector.broadcast %4 : vector<1x128xf32> to vector<16x128xf32>
    %6 = arith.addf %3, %5 : vector<16x128xf32>
    %c0_5 = arith.constant 0 : index
    %c0_6 = arith.constant 0 : index
    %7 = vector.load %arg3[%c0_5, %c0_6] : memref<16x128xf32, #tpu.memory_space<vmem>>, vector<16x128xf32>
    tpu.vector_store %arg3[%c0_5, %c0_6], %6 {strides = array<i32>} : memref<16x128xf32, #tpu.memory_space<vmem>>, vector<16x128xf32>,
    return
  }
}

module attributes {stable_mosaic.version = 11 : i64} {
  func.func @_decoder_stack_kernel(%arg0: i32, %arg1: memref<16x128xf32, #tpu.memory_space<vmem>>, %arg2: memref<16x128xbf16, #tpu.memory_space<vmem>>, %arg3: memref<8x8xf32, #tpu.memory_space<vmem>>, %arg4: memref<2x8xf32, #tpu.memory_space<vmem>>, %arg5: memref<1x128x384xbf16, #tpu.memory_space<vmem>>, %arg6: memref<1x1x384xf32, #tpu.memory_space<vmem>>, %arg7: memref<1x128x128xbf16, #tpu.memory_space<vmem>>, %arg8: memref<1x1x128xf32, #tpu.memory_space<vmem>>, %arg9: memref<1x1x128xf32, #tpu.memory_space<vmem>>, %arg10: memref<1x1x128xf32, #tpu.memory_space<vmem>>, %arg11: memref<1x128x128xbf16, #tpu.memory_space<vmem>>, %arg12: memref<1x1x128xf32, #tpu.memory_space<vmem>>, %arg13: memref<1x128x256xbf16, #tpu.memory_space<vmem>>, %arg14: memref<1x1x256xf32, #tpu.memory_space<vmem>>, %arg15: memref<1x128x128xbf16, #tpu.memory_space<vmem>>, %arg16: memref<1x1x128xf32, #tpu.memory_space<vmem>>, %arg17: memref<1x1x128xf32, #tpu.memory_space<vmem>>, %arg18: memref<1x1x128xf32, #tpu.memory_space<vmem>>, %arg19: memref<1x128x256xbf16, #tpu.memory_space<vmem>>, %arg20: memref<1x1x256xf32, #tpu.memory_space<vmem>>, %arg21: memref<1x256x128xbf16, #tpu.memory_space<vmem>>, %arg22: memref<1x1x128xf32, #tpu.memory_space<vmem>>, %arg23: memref<1x1x128xf32, #tpu.memory_space<vmem>>, %arg24: memref<1x1x128xf32, #tpu.memory_space<vmem>>, %arg25: memref<16x128xf32, #tpu.memory_space<vmem>>) attributes {dimension_semantics = [#tpu.dimension_semantics<arbitrary>], iteration_bounds = array<i64: 2>, scalar_prefetch = 0 : i64, scratch_operands = 0 : i64, tpu.core_type = #tpu.core_type<tc>, window_params = [{pipeline_mode = #tpu.pipeline_mode<synchronous>, transform_indices = @transform_0, window_bounds = array<i64: 16, 128>}, {pipeline_mode = #tpu.pipeline_mode<synchronous>, transform_indices = @transform_1, window_bounds = array<i64: 16, 128>}, {pipeline_mode = #tpu.pipeline_mode<synchronous>, transform_indices = @transform_2, window_bounds = array<i64: 8, 8>}, {pipeline_mode = #tpu.pipeline_mode<synchronous>, transform_indices = @transform_3, window_bounds = array<i64: 2, 8>}, {transform_indices = @transform_4, window_bounds = array<i64: 1, 128, 384>}, {transform_indices = @transform_5, window_bounds = array<i64: 1, 1, 384>}, {transform_indices = @transform_6, window_bounds = array<i64: 1, 128, 128>}, {transform_indices = @transform_7, window_bounds = array<i64: 1, 1, 128>}, {transform_indices = @transform_8, window_bounds = array<i64: 1, 1, 128>}, {transform_indices = @transform_9, window_bounds = array<i64: 1, 1, 128>}, {transform_indices = @transform_10, window_bounds = array<i64: 1, 128, 128>}, {transform_indices = @transform_11, window_bounds = array<i64: 1, 1, 128>}, {transform_indices = @transform_12, window_bounds = array<i64: 1, 128, 256>}, {transform_indices = @transform_13, window_bounds = array<i64: 1, 1, 256>}, {transform_indices = @transform_14, window_bounds = array<i64: 1, 128, 128>}, {transform_indices = @transform_15, window_bounds = array<i64: 1, 1, 128>}, {transform_indices = @transform_16, window_bounds = array<i64: 1, 1, 128>}, {transform_indices = @transform_17, window_bounds = array<i64: 1, 1, 128>}, {transform_indices = @transform_18, window_bounds = array<i64: 1, 128, 256>}, {transform_indices = @transform_19, window_bounds = array<i64: 1, 1, 256>}, {transform_indices = @transform_20, window_bounds = array<i64: 1, 256, 128>}, {transform_indices = @transform_21, window_bounds = array<i64: 1, 1, 128>}, {transform_indices = @transform_22, window_bounds = array<i64: 1, 1, 128>}, {transform_indices = @transform_23, window_bounds = array<i64: 1, 1, 128>}, {pipeline_mode = #tpu.pipeline_mode<synchronous>, transform_indices = @transform_24, window_bounds = array<i64: 16, 128>}]} {
    %c0_i32 = arith.constant 0 : i32
    %0 = arith.cmpi eq, %arg0, %c0_i32 : i32
    %1 = arith.extui %0 : i1 to i32
    %c0_i32_0 = arith.constant 0 : i32
    %2 = arith.cmpi ne, %1, %c0_i32_0 : i32
    scf.if %2 {
      %c0_100 = arith.constant 0 : index
      %c0_101 = arith.constant 0 : index
      %217 = vector.load %arg1[%c0_100, %c0_101] : memref<16x128xf32, #tpu.memory_space<vmem>>, vector<16x128xf32>
      %c0_102 = arith.constant 0 : index
      %c0_103 = arith.constant 0 : index
      %218 = vector.load %arg25[%c0_102, %c0_103] : memref<16x128xf32, #tpu.memory_space<vmem>>, vector<16x128xf32>
      tpu.vector_store %arg25[%c0_102, %c0_103], %217 {strides = array<i32>} : memref<16x128xf32, #tpu.memory_space<vmem>>, vector<16x128xf32>,
    } else {
    }
    %c0 = arith.constant 0 : index
    %c0_1 = arith.constant 0 : index
    %3 = vector.load %arg25[%c0, %c0_1] : memref<16x128xf32, #tpu.memory_space<vmem>>, vector<16x128xf32>
    %c0_2 = arith.constant 0 : index
    %c0_3 = arith.constant 0 : index
    %4 = vector.load %arg3[%c0_2, %c0_3] : memref<8x8xf32, #tpu.memory_space<vmem>>, vector<8x8xf32>
    %5 = vector.shape_cast %4 : vector<8x8xf32> to vector<1x8x8xf32>
    %c0_4 = arith.constant 0 : index
    %c0_5 = arith.constant 0 : index
    %6 = vector.load %arg4[%c0_4, %c0_5] : memref<2x8xf32, #tpu.memory_space<vmem>>, vector<2x8xf32>
    %7 = vector.shape_cast %6 : vector<2x8xf32> to vector<2x1x8xf32>
    %8 = vector.broadcast %5 : vector<1x8x8xf32> to vector<2x8x8xf32>
    %9 = vector.broadcast %7 : vector<2x1x8xf32> to vector<2x8x8xf32>
    %10 = arith.addf %8, %9 : vector<2x8x8xf32>
    %11 = vector.shape_cast %10 : vector<2x8x8xf32> to vector<2x1x8x8xf32>
    %12 = vector.shape_cast %11 : vector<2x1x8x8xf32> to vector<2x1x8x8xf32>
    %13 = vector.broadcast %12 : vector<2x1x8x8xf32> to vector<2x4x8x8xf32>
    %14 = vector.shape_cast %13 : vector<2x4x8x8xf32> to vector<8x8x8xf32>
    %15 = arith.truncf %3 : vector<16x128xf32> to vector<16x128xbf16>
    %c0_6 = arith.constant 0 : index
    %c0_7 = arith.constant 0 : index
    %c0_8 = arith.constant 0 : index
    %16 = vector.load %arg5[%c0_6, %c0_7, %c0_8] : memref<1x128x384xbf16, #tpu.memory_space<vmem>>, vector<1x128x384xbf16>
    %17 = vector.shape_cast %16 : vector<1x128x384xbf16> to vector<128x384xbf16>
    %cst = arith.constant dense<0.000000e+00> : vector<16x384xf32>
    %18 = tpu.matmul %15, %17, %cst {dimension_numbers = #tpu.dot_dimension_numbers<[1], [0], [0], [1], [0, 0, 1, 1], [], []>} : vector<16x128xbf16>, vector<128x384xbf16>, vector<16x384xf32> -> vector<16x384xf32>
    %c0_9 = arith.constant 0 : index
    %c0_10 = arith.constant 0 : index
    %c0_11 = arith.constant 0 : index
    %19 = vector.load %arg6[%c0_9, %c0_10, %c0_11] : memref<1x1x384xf32, #tpu.memory_space<vmem>>, vector<1x1x384xf32>
    %20 = vector.shape_cast %19 : vector<1x1x384xf32> to vector<1x384xf32>
    %21 = vector.broadcast %20 : vector<1x384xf32> to vector<16x384xf32>
    %22 = arith.addf %18, %21 : vector<16x384xf32>
    %23 = vector.extract_strided_slice %22 {offsets = [0, 0], sizes = [16, 128], strides = [1, 1]} : vector<16x384xf32> to vector<16x128xf32>
    %24 = vector.extract_strided_slice %22 {offsets = [0, 128], sizes = [16, 128], strides = [1, 1]} : vector<16x384xf32> to vector<16x128xf32>
    %25 = vector.extract_strided_slice %22 {offsets = [0, 256], sizes = [16, 128], strides = [1, 1]} : vector<16x384xf32> to vector<16x128xf32>
    %26 = vector.shape_cast %23 : vector<16x128xf32> to vector<2x8x4x32xf32>
    %27 = tpu.transpose %26, [0, 2, 1, 3] : vector<2x8x4x32xf32> -> vector<2x4x8x32xf32>
    %28 = vector.shape_cast %27 : vector<2x4x8x32xf32> to vector<8x8x32xf32>
    %29 = arith.truncf %28 : vector<8x8x32xf32> to vector<8x8x32xbf16>
    %30 = vector.shape_cast %24 : vector<16x128xf32> to vector<2x8x4x32xf32>
    %31 = tpu.transpose %30, [0, 2, 1, 3] : vector<2x8x4x32xf32> -> vector<2x4x8x32xf32>
    %32 = vector.shape_cast %31 : vector<2x4x8x32xf32> to vector<8x8x32xf32>
    %33 = arith.truncf %32 : vector<8x8x32xf32> to vector<8x8x32xbf16>
    %34 = vector.shape_cast %25 : vector<16x128xf32> to vector<2x8x4x32xf32>
    %35 = tpu.transpose %34, [0, 2, 1, 3] : vector<2x8x4x32xf32> -> vector<2x4x8x32xf32>
    %36 = vector.shape_cast %35 : vector<2x4x8x32xf32> to vector<8x8x32xf32>
    %37 = arith.truncf %36 : vector<8x8x32xf32> to vector<8x8x32xbf16>
    "tpu.trace_start"() <{level = 10 : i32, message = "zqd,zkd->zqk"}> : () -> ()
    %cst_12 = arith.constant dense<0.000000e+00> : vector<8x8x8xf32>
    %38 = tpu.matmul %29, %33, %cst_12 {dimension_numbers = #tpu.dot_dimension_numbers<[2], [2], [1], [1], [0, 0, 0, 1, 1, 1], [0], [0]>} : vector<8x8x32xbf16>, vector<8x8x32xbf16>, vector<8x8x8xf32> -> vector<8x8x8xf32>
    "tpu.trace_stop"() : () -> ()
    %39 = arith.addf %38, %14 : vector<8x8x8xf32>
    %cst_13 = arith.constant dense<0xFF800000> : vector<8x8xf32>
    %40 = vector.multi_reduction <maximumf>, %39, %cst_13 [2] : vector<8x8x8xf32> to vector<8x8xf32>
    %41 = vector.shape_cast %40 : vector<8x8xf32> to vector<8x8x1xf32>
    %42 = vector.broadcast %41 : vector<8x8x1xf32> to vector<8x8x8xf32>
    %43 = arith.subf %39, %42 : vector<8x8x8xf32>
    %44 = math.exp %43 : vector<8x8x8xf32>
    %45 = arith.truncf %44 : vector<8x8x8xf32> to vector<8x8x8xbf16>
    "tpu.trace_start"() <{level = 10 : i32, message = "zqk,zkd->zqd"}> : () -> ()
    %cst_14 = arith.constant dense<0.000000e+00> : vector<8x8x32xf32>
    %46 = tpu.matmul %45, %37, %cst_14 {dimension_numbers = #tpu.dot_dimension_numbers<[2], [1], [1], [2], [0, 0, 0, 1, 1, 2], [0], [0]>} : vector<8x8x8xbf16>, vector<8x8x32xbf16>, vector<8x8x32xf32> -> vector<8x8x32xf32>
    "tpu.trace_stop"() : () -> ()
    %cst_15 = arith.constant dense<0.000000e+00> : vector<8x8xf32>
    %47 = vector.multi_reduction <add>, %44, %cst_15 [2] : vector<8x8x8xf32> to vector<8x8xf32>
    %48 = vector.shape_cast %47 : vector<8x8xf32> to vector<8x8x1xf32>
    %49 = tpu.reciprocal %48 {approx = true} : vector<8x8x1xf32> -> vector<8x8x1xf32>
    %50 = vector.broadcast %49 : vector<8x8x1xf32> to vector<8x8x32xf32>
    %51 = arith.mulf %46, %50 : vector<8x8x32xf32>
    %52 = vector.shape_cast %51 : vector<8x8x32xf32> to vector<2x4x8x32xf32>
    %53 = tpu.transpose %52, [0, 2, 1, 3] : vector<2x4x8x32xf32> -> vector<2x8x4x32xf32>
    %54 = vector.shape_cast %53 : vector<2x8x4x32xf32> to vector<16x128xf32>
    %55 = arith.truncf %54 : vector<16x128xf32> to vector<16x128xbf16>
    %c0_16 = arith.constant 0 : index
    %c0_17 = arith.constant 0 : index
    %c0_18 = arith.constant 0 : index
    %56 = vector.load %arg7[%c0_16, %c0_17, %c0_18] : memref<1x128x128xbf16, #tpu.memory_space<vmem>>, vector<1x128x128xbf16>
    %57 = vector.shape_cast %56 : vector<1x128x128xbf16> to vector<128x128xbf16>
    %cst_19 = arith.constant dense<0.000000e+00> : vector<16x128xf32>
    %58 = tpu.matmul %55, %57, %cst_19 {dimension_numbers = #tpu.dot_dimension_numbers<[1], [0], [0], [1], [0, 0, 1, 1], [], []>} : vector<16x128xbf16>, vector<128x128xbf16>, vector<16x128xf32> -> vector<16x128xf32>
    %c0_20 = arith.constant 0 : index
    %c0_21 = arith.constant 0 : index
    %c0_22 = arith.constant 0 : index
    %59 = vector.load %arg8[%c0_20, %c0_21, %c0_22] : memref<1x1x128xf32, #tpu.memory_space<vmem>>, vector<1x1x128xf32>
    %60 = vector.shape_cast %59 : vector<1x1x128xf32> to vector<1x128xf32>
    %61 = vector.broadcast %60 : vector<1x128xf32> to vector<16x128xf32>
    %62 = arith.addf %58, %61 : vector<16x128xf32>
    %63 = arith.addf %3, %62 : vector<16x128xf32>
    %c0_23 = arith.constant 0 : index
    %c0_24 = arith.constant 0 : index
    %c0_25 = arith.constant 0 : index
    %64 = vector.load %arg9[%c0_23, %c0_24, %c0_25] : memref<1x1x128xf32, #tpu.memory_space<vmem>>, vector<1x1x128xf32>
    %65 = vector.shape_cast %64 : vector<1x1x128xf32> to vector<1x128xf32>
    %c0_26 = arith.constant 0 : index
    %c0_27 = arith.constant 0 : index
    %c0_28 = arith.constant 0 : index
    %66 = vector.load %arg10[%c0_26, %c0_27, %c0_28] : memref<1x1x128xf32, #tpu.memory_space<vmem>>, vector<1x1x128xf32>
    %67 = vector.shape_cast %66 : vector<1x1x128xf32> to vector<1x128xf32>
    %cst_29 = arith.constant dense<0.000000e+00> : vector<16xf32>
    %68 = vector.multi_reduction <add>, %63, %cst_29 [1] : vector<16x128xf32> to vector<16xf32>
    %69 = vector.shape_cast %68 : vector<16xf32> to vector<16x1xf32>
    %cst_30 = arith.constant 1.280000e+02 : f32
    %70 = vector.broadcast %cst_30 : f32 to vector<16x1xf32>
    %71 = arith.divf %69, %70 : vector<16x1xf32>
    %72 = vector.broadcast %71 : vector<16x1xf32> to vector<16x128xf32>
    %73 = arith.subf %63, %72 : vector<16x128xf32>
    %74 = arith.mulf %73, %73 : vector<16x128xf32>
    %cst_31 = arith.constant dense<0.000000e+00> : vector<16xf32>
    %75 = vector.multi_reduction <add>, %74, %cst_31 [1] : vector<16x128xf32> to vector<16xf32>
    %76 = vector.shape_cast %75 : vector<16xf32> to vector<16x1xf32>
    %cst_32 = arith.constant 1.280000e+02 : f32
    %77 = vector.broadcast %cst_32 : f32 to vector<16x1xf32>
    %78 = arith.divf %76, %77 : vector<16x1xf32>
    %79 = vector.broadcast %71 : vector<16x1xf32> to vector<16x128xf32>
    %80 = arith.subf %63, %79 : vector<16x128xf32>
    %cst_33 = arith.constant 9.99999974E-6 : f32
    %81 = vector.broadcast %cst_33 : f32 to vector<16x1xf32>
    %82 = arith.addf %78, %81 : vector<16x1xf32>
    %83 = math.rsqrt %82 : vector<16x1xf32>
    %84 = vector.broadcast %83 : vector<16x1xf32> to vector<16x128xf32>
    %85 = arith.mulf %80, %84 : vector<16x128xf32>
    %86 = vector.broadcast %65 : vector<1x128xf32> to vector<16x128xf32>
    %87 = arith.mulf %85, %86 : vector<16x128xf32>
    %88 = vector.broadcast %67 : vector<1x128xf32> to vector<16x128xf32>
    %89 = arith.addf %87, %88 : vector<16x128xf32>
    %90 = arith.truncf %89 : vector<16x128xf32> to vector<16x128xbf16>
    %c0_34 = arith.constant 0 : index
    %c0_35 = arith.constant 0 : index
    %c0_36 = arith.constant 0 : index
    %91 = vector.load %arg11[%c0_34, %c0_35, %c0_36] : memref<1x128x128xbf16, #tpu.memory_space<vmem>>, vector<1x128x128xbf16>
    %92 = vector.shape_cast %91 : vector<1x128x128xbf16> to vector<128x128xbf16>
    %cst_37 = arith.constant dense<0.000000e+00> : vector<16x128xf32>
    %93 = tpu.matmul %90, %92, %cst_37 {dimension_numbers = #tpu.dot_dimension_numbers<[1], [0], [0], [1], [0, 0, 1, 1], [], []>} : vector<16x128xbf16>, vector<128x128xbf16>, vector<16x128xf32> -> vector<16x128xf32>
    %c0_38 = arith.constant 0 : index
    %c0_39 = arith.constant 0 : index
    %c0_40 = arith.constant 0 : index
    %94 = vector.load %arg12[%c0_38, %c0_39, %c0_40] : memref<1x1x128xf32, #tpu.memory_space<vmem>>, vector<1x1x128xf32>
    %95 = vector.shape_cast %94 : vector<1x1x128xf32> to vector<1x128xf32>
    %96 = vector.broadcast %95 : vector<1x128xf32> to vector<16x128xf32>
    %97 = arith.addf %93, %96 : vector<16x128xf32>
    %c0_41 = arith.constant 0 : index
    %c0_42 = arith.constant 0 : index
    %98 = vector.load %arg2[%c0_41, %c0_42] : memref<16x128xbf16, #tpu.memory_space<vmem>>, vector<16x128xbf16>
    %c0_43 = arith.constant 0 : index
    %c0_44 = arith.constant 0 : index
    %c0_45 = arith.constant 0 : index
    %99 = vector.load %arg13[%c0_43, %c0_44, %c0_45] : memref<1x128x256xbf16, #tpu.memory_space<vmem>>, vector<1x128x256xbf16>
    %100 = vector.shape_cast %99 : vector<1x128x256xbf16> to vector<128x256xbf16>
    %cst_46 = arith.constant dense<0.000000e+00> : vector<16x256xf32>
    %101 = tpu.matmul %98, %100, %cst_46 {dimension_numbers = #tpu.dot_dimension_numbers<[1], [0], [0], [1], [0, 0, 1, 1], [], []>} : vector<16x128xbf16>, vector<128x256xbf16>, vector<16x256xf32> -> vector<16x256xf32>
    %c0_47 = arith.constant 0 : index
    %c0_48 = arith.constant 0 : index
    %c0_49 = arith.constant 0 : index
    %102 = vector.load %arg14[%c0_47, %c0_48, %c0_49] : memref<1x1x256xf32, #tpu.memory_space<vmem>>, vector<1x1x256xf32>
    %103 = vector.shape_cast %102 : vector<1x1x256xf32> to vector<1x256xf32>
    %104 = vector.broadcast %103 : vector<1x256xf32> to vector<16x256xf32>
    %105 = arith.addf %101, %104 : vector<16x256xf32>
    %106 = vector.extract_strided_slice %105 {offsets = [0, 0], sizes = [16, 128], strides = [1, 1]} : vector<16x256xf32> to vector<16x128xf32>
    %107 = vector.extract_strided_slice %105 {offsets = [0, 128], sizes = [16, 128], strides = [1, 1]} : vector<16x256xf32> to vector<16x128xf32>
    %108 = vector.shape_cast %97 : vector<16x128xf32> to vector<2x8x4x32xf32>
    %109 = tpu.transpose %108, [0, 2, 1, 3] : vector<2x8x4x32xf32> -> vector<2x4x8x32xf32>
    %110 = vector.shape_cast %109 : vector<2x4x8x32xf32> to vector<8x8x32xf32>
    %111 = arith.truncf %110 : vector<8x8x32xf32> to vector<8x8x32xbf16>
    %112 = vector.shape_cast %106 : vector<16x128xf32> to vector<2x8x4x32xf32>
    %113 = tpu.transpose %112, [0, 2, 1, 3] : vector<2x8x4x32xf32> -> vector<2x4x8x32xf32>
    %114 = vector.shape_cast %113 : vector<2x4x8x32xf32> to vector<8x8x32xf32>
    %115 = arith.truncf %114 : vector<8x8x32xf32> to vector<8x8x32xbf16>
    %116 = vector.shape_cast %107 : vector<16x128xf32> to vector<2x8x4x32xf32>
    %117 = tpu.transpose %116, [0, 2, 1, 3] : vector<2x8x4x32xf32> -> vector<2x4x8x32xf32>
    %118 = vector.shape_cast %117 : vector<2x4x8x32xf32> to vector<8x8x32xf32>
    %119 = arith.truncf %118 : vector<8x8x32xf32> to vector<8x8x32xbf16>
    "tpu.trace_start"() <{level = 10 : i32, message = "zqd,zkd->zqk"}> : () -> ()
    %cst_50 = arith.constant dense<0.000000e+00> : vector<8x8x8xf32>
    %120 = tpu.matmul %111, %115, %cst_50 {dimension_numbers = #tpu.dot_dimension_numbers<[2], [2], [1], [1], [0, 0, 0, 1, 1, 1], [0], [0]>} : vector<8x8x32xbf16>, vector<8x8x32xbf16>, vector<8x8x8xf32> -> vector<8x8x8xf32>
    "tpu.trace_stop"() : () -> ()
    %cst_51 = arith.constant dense<0xFF800000> : vector<8x8xf32>
    %121 = vector.multi_reduction <maximumf>, %120, %cst_51 [2] : vector<8x8x8xf32> to vector<8x8xf32>
    %122 = vector.shape_cast %121 : vector<8x8xf32> to vector<8x8x1xf32>
    %123 = vector.broadcast %122 : vector<8x8x1xf32> to vector<8x8x8xf32>
    %124 = arith.subf %120, %123 : vector<8x8x8xf32>
    %125 = math.exp %124 : vector<8x8x8xf32>
    %126 = arith.truncf %125 : vector<8x8x8xf32> to vector<8x8x8xbf16>
    "tpu.trace_start"() <{level = 10 : i32, message = "zqk,zkd->zqd"}> : () -> ()
    %cst_52 = arith.constant dense<0.000000e+00> : vector<8x8x32xf32>
    %127 = tpu.matmul %126, %119, %cst_52 {dimension_numbers = #tpu.dot_dimension_numbers<[2], [1], [1], [2], [0, 0, 0, 1, 1, 2], [0], [0]>} : vector<8x8x8xbf16>, vector<8x8x32xbf16>, vector<8x8x32xf32> -> vector<8x8x32xf32>
    "tpu.trace_stop"() : () -> ()
    %cst_53 = arith.constant dense<0.000000e+00> : vector<8x8xf32>
    %128 = vector.multi_reduction <add>, %125, %cst_53 [2] : vector<8x8x8xf32> to vector<8x8xf32>
    %129 = vector.shape_cast %128 : vector<8x8xf32> to vector<8x8x1xf32>
    %130 = tpu.reciprocal %129 {approx = true} : vector<8x8x1xf32> -> vector<8x8x1xf32>
    %131 = vector.broadcast %130 : vector<8x8x1xf32> to vector<8x8x32xf32>
    %132 = arith.mulf %127, %131 : vector<8x8x32xf32>
    %133 = vector.shape_cast %132 : vector<8x8x32xf32> to vector<2x4x8x32xf32>
    %134 = tpu.transpose %133, [0, 2, 1, 3] : vector<2x4x8x32xf32> -> vector<2x8x4x32xf32>
    %135 = vector.shape_cast %134 : vector<2x8x4x32xf32> to vector<16x128xf32>
    %136 = arith.truncf %135 : vector<16x128xf32> to vector<16x128xbf16>
    %c0_54 = arith.constant 0 : index
    %c0_55 = arith.constant 0 : index
    %c0_56 = arith.constant 0 : index
    %137 = vector.load %arg15[%c0_54, %c0_55, %c0_56] : memref<1x128x128xbf16, #tpu.memory_space<vmem>>, vector<1x128x128xbf16>
    %138 = vector.shape_cast %137 : vector<1x128x128xbf16> to vector<128x128xbf16>
    %cst_57 = arith.constant dense<0.000000e+00> : vector<16x128xf32>
    %139 = tpu.matmul %136, %138, %cst_57 {dimension_numbers = #tpu.dot_dimension_numbers<[1], [0], [0], [1], [0, 0, 1, 1], [], []>} : vector<16x128xbf16>, vector<128x128xbf16>, vector<16x128xf32> -> vector<16x128xf32>
    %c0_58 = arith.constant 0 : index
    %c0_59 = arith.constant 0 : index
    %c0_60 = arith.constant 0 : index
    %140 = vector.load %arg16[%c0_58, %c0_59, %c0_60] : memref<1x1x128xf32, #tpu.memory_space<vmem>>, vector<1x1x128xf32>
    %141 = vector.shape_cast %140 : vector<1x1x128xf32> to vector<1x128xf32>
    %142 = vector.broadcast %141 : vector<1x128xf32> to vector<16x128xf32>
    %143 = arith.addf %139, %142 : vector<16x128xf32>
    %144 = arith.addf %89, %143 : vector<16x128xf32>
    %c0_61 = arith.constant 0 : index
    %c0_62 = arith.constant 0 : index
    %c0_63 = arith.constant 0 : index
    %145 = vector.load %arg17[%c0_61, %c0_62, %c0_63] : memref<1x1x128xf32, #tpu.memory_space<vmem>>, vector<1x1x128xf32>
    %146 = vector.shape_cast %145 : vector<1x1x128xf32> to vector<1x128xf32>
    %c0_64 = arith.constant 0 : index
    %c0_65 = arith.constant 0 : index
    %c0_66 = arith.constant 0 : index
    %147 = vector.load %arg18[%c0_64, %c0_65, %c0_66] : memref<1x1x128xf32, #tpu.memory_space<vmem>>, vector<1x1x128xf32>
    %148 = vector.shape_cast %147 : vector<1x1x128xf32> to vector<1x128xf32>
    %cst_67 = arith.constant dense<0.000000e+00> : vector<16xf32>
    %149 = vector.multi_reduction <add>, %144, %cst_67 [1] : vector<16x128xf32> to vector<16xf32>
    %150 = vector.shape_cast %149 : vector<16xf32> to vector<16x1xf32>
    %cst_68 = arith.constant 1.280000e+02 : f32
    %151 = vector.broadcast %cst_68 : f32 to vector<16x1xf32>
    %152 = arith.divf %150, %151 : vector<16x1xf32>
    %153 = vector.broadcast %152 : vector<16x1xf32> to vector<16x128xf32>
    %154 = arith.subf %144, %153 : vector<16x128xf32>
    %155 = arith.mulf %154, %154 : vector<16x128xf32>
    %cst_69 = arith.constant dense<0.000000e+00> : vector<16xf32>
    %156 = vector.multi_reduction <add>, %155, %cst_69 [1] : vector<16x128xf32> to vector<16xf32>
    %157 = vector.shape_cast %156 : vector<16xf32> to vector<16x1xf32>
    %cst_70 = arith.constant 1.280000e+02 : f32
    %158 = vector.broadcast %cst_70 : f32 to vector<16x1xf32>
    %159 = arith.divf %157, %158 : vector<16x1xf32>
    %160 = vector.broadcast %152 : vector<16x1xf32> to vector<16x128xf32>
    %161 = arith.subf %144, %160 : vector<16x128xf32>
    %cst_71 = arith.constant 9.99999974E-6 : f32
    %162 = vector.broadcast %cst_71 : f32 to vector<16x1xf32>
    %163 = arith.addf %159, %162 : vector<16x1xf32>
    %164 = math.rsqrt %163 : vector<16x1xf32>
    %165 = vector.broadcast %164 : vector<16x1xf32> to vector<16x128xf32>
    %166 = arith.mulf %161, %165 : vector<16x128xf32>
    %167 = vector.broadcast %146 : vector<1x128xf32> to vector<16x128xf32>
    %168 = arith.mulf %166, %167 : vector<16x128xf32>
    %169 = vector.broadcast %148 : vector<1x128xf32> to vector<16x128xf32>
    %170 = arith.addf %168, %169 : vector<16x128xf32>
    %171 = arith.truncf %170 : vector<16x128xf32> to vector<16x128xbf16>
    %c0_72 = arith.constant 0 : index
    %c0_73 = arith.constant 0 : index
    %c0_74 = arith.constant 0 : index
    %172 = vector.load %arg19[%c0_72, %c0_73, %c0_74] : memref<1x128x256xbf16, #tpu.memory_space<vmem>>, vector<1x128x256xbf16>
    %173 = vector.shape_cast %172 : vector<1x128x256xbf16> to vector<128x256xbf16>
    %cst_75 = arith.constant dense<0.000000e+00> : vector<16x256xf32>
    %174 = tpu.matmul %171, %173, %cst_75 {dimension_numbers = #tpu.dot_dimension_numbers<[1], [0], [0], [1], [0, 0, 1, 1], [], []>} : vector<16x128xbf16>, vector<128x256xbf16>, vector<16x256xf32> -> vector<16x256xf32>
    %c0_76 = arith.constant 0 : index
    %c0_77 = arith.constant 0 : index
    %c0_78 = arith.constant 0 : index
    %175 = vector.load %arg20[%c0_76, %c0_77, %c0_78] : memref<1x1x256xf32, #tpu.memory_space<vmem>>, vector<1x1x256xf32>
    %176 = vector.shape_cast %175 : vector<1x1x256xf32> to vector<1x256xf32>
    %177 = vector.broadcast %176 : vector<1x256xf32> to vector<16x256xf32>
    %178 = arith.addf %174, %177 : vector<16x256xf32>
    %cst_79 = arith.constant 0.000000e+00 : f32
    %179 = vector.broadcast %cst_79 : f32 to vector<16x256xf32>
    %180 = arith.maximumf %178, %179 : vector<16x256xf32>
    %181 = arith.truncf %180 : vector<16x256xf32> to vector<16x256xbf16>
    %c0_80 = arith.constant 0 : index
    %c0_81 = arith.constant 0 : index
    %c0_82 = arith.constant 0 : index
    %182 = vector.load %arg21[%c0_80, %c0_81, %c0_82] : memref<1x256x128xbf16, #tpu.memory_space<vmem>>, vector<1x256x128xbf16>
    %183 = vector.shape_cast %182 : vector<1x256x128xbf16> to vector<256x128xbf16>
    %cst_83 = arith.constant dense<0.000000e+00> : vector<16x128xf32>
    %184 = tpu.matmul %181, %183, %cst_83 {dimension_numbers = #tpu.dot_dimension_numbers<[1], [0], [0], [1], [0, 0, 1, 1], [], []>} : vector<16x256xbf16>, vector<256x128xbf16>, vector<16x128xf32> -> vector<16x128xf32>
    %c0_84 = arith.constant 0 : index
    %c0_85 = arith.constant 0 : index
    %c0_86 = arith.constant 0 : index
    %185 = vector.load %arg22[%c0_84, %c0_85, %c0_86] : memref<1x1x128xf32, #tpu.memory_space<vmem>>, vector<1x1x128xf32>
    %186 = vector.shape_cast %185 : vector<1x1x128xf32> to vector<1x128xf32>
    %187 = vector.broadcast %186 : vector<1x128xf32> to vector<16x128xf32>
    %188 = arith.addf %184, %187 : vector<16x128xf32>
    %189 = arith.addf %170, %188 : vector<16x128xf32>
    %c0_87 = arith.constant 0 : index
    %c0_88 = arith.constant 0 : index
    %c0_89 = arith.constant 0 : index
    %190 = vector.load %arg23[%c0_87, %c0_88, %c0_89] : memref<1x1x128xf32, #tpu.memory_space<vmem>>, vector<1x1x128xf32>
    %191 = vector.shape_cast %190 : vector<1x1x128xf32> to vector<1x128xf32>
    %c0_90 = arith.constant 0 : index
    %c0_91 = arith.constant 0 : index
    %c0_92 = arith.constant 0 : index
    %192 = vector.load %arg24[%c0_90, %c0_91, %c0_92] : memref<1x1x128xf32, #tpu.memory_space<vmem>>, vector<1x1x128xf32>
    %193 = vector.shape_cast %192 : vector<1x1x128xf32> to vector<1x128xf32>
    %cst_93 = arith.constant dense<0.000000e+00> : vector<16xf32>
    %194 = vector.multi_reduction <add>, %189, %cst_93 [1] : vector<16x128xf32> to vector<16xf32>
    %195 = vector.shape_cast %194 : vector<16xf32> to vector<16x1xf32>
    %cst_94 = arith.constant 1.280000e+02 : f32
    %196 = vector.broadcast %cst_94 : f32 to vector<16x1xf32>
    %197 = arith.divf %195, %196 : vector<16x1xf32>
    %198 = vector.broadcast %197 : vector<16x1xf32> to vector<16x128xf32>
    %199 = arith.subf %189, %198 : vector<16x128xf32>
    %200 = arith.mulf %199, %199 : vector<16x128xf32>
    %cst_95 = arith.constant dense<0.000000e+00> : vector<16xf32>
    %201 = vector.multi_reduction <add>, %200, %cst_95 [1] : vector<16x128xf32> to vector<16xf32>
    %202 = vector.shape_cast %201 : vector<16xf32> to vector<16x1xf32>
    %cst_96 = arith.constant 1.280000e+02 : f32
    %203 = vector.broadcast %cst_96 : f32 to vector<16x1xf32>
    %204 = arith.divf %202, %203 : vector<16x1xf32>
    %205 = vector.broadcast %197 : vector<16x1xf32> to vector<16x128xf32>
    %206 = arith.subf %189, %205 : vector<16x128xf32>
    %cst_97 = arith.constant 9.99999974E-6 : f32
    %207 = vector.broadcast %cst_97 : f32 to vector<16x1xf32>
    %208 = arith.addf %204, %207 : vector<16x1xf32>
    %209 = math.rsqrt %208 : vector<16x1xf32>
    %210 = vector.broadcast %209 : vector<16x1xf32> to vector<16x128xf32>
    %211 = arith.mulf %206, %210 : vector<16x128xf32>
    %212 = vector.broadcast %191 : vector<1x128xf32> to vector<16x128xf32>
    %213 = arith.mulf %211, %212 : vector<16x128xf32>
    %214 = vector.broadcast %193 : vector<1x128xf32> to vector<16x128xf32>
    %215 = arith.addf %213, %214 : vector<16x128xf32>
    %c0_98 = arith.constant 0 : index
    %c0_99 = arith.constant 0 : index
    %216 = vector.load %arg25[%c0_98, %c0_99] : memref<16x128xf32, #tpu.memory_space<vmem>>, vector<16x128xf32>
    tpu.vector_store %arg25[%c0_98, %c0_99], %215 {strides = array<i32>} : memref<16x128xf32, #tpu.memory_space<vmem>>, vector<16x128xf32>,
    return
  }
  func.func @transform_0(%arg0: i32) -> (i32, i32) {
    %c0_i32 = arith.constant 0 : i32
    %c0_i32_0 = arith.constant 0 : i32
    %c0_i32_1 = arith.constant 0 : i32
    return %c0_i32, %c0_i32_0 : i32, i32
  }
  func.func @transform_1(%arg0: i32) -> (i32, i32) {
    %c0_i32 = arith.constant 0 : i32
    %c0_i32_0 = arith.constant 0 : i32
    %c0_i32_1 = arith.constant 0 : i32
    return %c0_i32, %c0_i32_0 : i32, i32
  }
  func.func @transform_2(%arg0: i32) -> (i32, i32) {
    %c0_i32 = arith.constant 0 : i32
    %c0_i32_0 = arith.constant 0 : i32
    %c0_i32_1 = arith.constant 0 : i32
    return %c0_i32, %c0_i32_0 : i32, i32
  }
  func.func @transform_3(%arg0: i32) -> (i32, i32) {
    %c0_i32 = arith.constant 0 : i32
    %c0_i32_0 = arith.constant 0 : i32
    %c0_i32_1 = arith.constant 0 : i32
    return %c0_i32, %c0_i32_0 : i32, i32
  }
  func.func @transform_4(%arg0: i32) -> (i32, i32, i32) {
    %c0_i32 = arith.constant 0 : i32
    %c0_i32_0 = arith.constant 0 : i32
    %c0_i32_1 = arith.constant 0 : i32
    return %arg0, %c0_i32, %c0_i32_0 : i32, i32, i32
  }
  func.func @transform_5(%arg0: i32) -> (i32, i32, i32) {
    %c0_i32 = arith.constant 0 : i32
    %c0_i32_0 = arith.constant 0 : i32
    %c0_i32_1 = arith.constant 0 : i32
    return %arg0, %c0_i32, %c0_i32_0 : i32, i32, i32
  }
  func.func @transform_6(%arg0: i32) -> (i32, i32, i32) {
    %c0_i32 = arith.constant 0 : i32
    %c0_i32_0 = arith.constant 0 : i32
    %c0_i32_1 = arith.constant 0 : i32
    return %arg0, %c0_i32, %c0_i32_0 : i32, i32, i32
  }
  func.func @transform_7(%arg0: i32) -> (i32, i32, i32) {
    %c0_i32 = arith.constant 0 : i32
    %c0_i32_0 = arith.constant 0 : i32
    %c0_i32_1 = arith.constant 0 : i32
    return %arg0, %c0_i32, %c0_i32_0 : i32, i32, i32
  }
  func.func @transform_8(%arg0: i32) -> (i32, i32, i32) {
    %c0_i32 = arith.constant 0 : i32
    %c0_i32_0 = arith.constant 0 : i32
    %c0_i32_1 = arith.constant 0 : i32
    return %arg0, %c0_i32, %c0_i32_0 : i32, i32, i32
  }
  func.func @transform_9(%arg0: i32) -> (i32, i32, i32) {
    %c0_i32 = arith.constant 0 : i32
    %c0_i32_0 = arith.constant 0 : i32
    %c0_i32_1 = arith.constant 0 : i32
    return %arg0, %c0_i32, %c0_i32_0 : i32, i32, i32
  }
  func.func @transform_10(%arg0: i32) -> (i32, i32, i32) {
    %c0_i32 = arith.constant 0 : i32
    %c0_i32_0 = arith.constant 0 : i32
    %c0_i32_1 = arith.constant 0 : i32
    return %arg0, %c0_i32, %c0_i32_0 : i32, i32, i32
  }
  func.func @transform_11(%arg0: i32) -> (i32, i32, i32) {
    %c0_i32 = arith.constant 0 : i32
    %c0_i32_0 = arith.constant 0 : i32
    %c0_i32_1 = arith.constant 0 : i32
    return %arg0, %c0_i32, %c0_i32_0 : i32, i32, i32
  }
  func.func @transform_12(%arg0: i32) -> (i32, i32, i32) {
    %c0_i32 = arith.constant 0 : i32
    %c0_i32_0 = arith.constant 0 : i32
    %c0_i32_1 = arith.constant 0 : i32
    return %arg0, %c0_i32, %c0_i32_0 : i32, i32, i32
  }
  func.func @transform_13(%arg0: i32) -> (i32, i32, i32) {
    %c0_i32 = arith.constant 0 : i32
    %c0_i32_0 = arith.constant 0 : i32
    %c0_i32_1 = arith.constant 0 : i32
    return %arg0, %c0_i32, %c0_i32_0 : i32, i32, i32
  }
  func.func @transform_14(%arg0: i32) -> (i32, i32, i32) {
    %c0_i32 = arith.constant 0 : i32
    %c0_i32_0 = arith.constant 0 : i32
    %c0_i32_1 = arith.constant 0 : i32
    return %arg0, %c0_i32, %c0_i32_0 : i32, i32, i32
  }
  func.func @transform_15(%arg0: i32) -> (i32, i32, i32) {
    %c0_i32 = arith.constant 0 : i32
    %c0_i32_0 = arith.constant 0 : i32
    %c0_i32_1 = arith.constant 0 : i32
    return %arg0, %c0_i32, %c0_i32_0 : i32, i32, i32
  }
  func.func @transform_16(%arg0: i32) -> (i32, i32, i32) {
    %c0_i32 = arith.constant 0 : i32
    %c0_i32_0 = arith.constant 0 : i32
    %c0_i32_1 = arith.constant 0 : i32
    return %arg0, %c0_i32, %c0_i32_0 : i32, i32, i32
  }
  func.func @transform_17(%arg0: i32) -> (i32, i32, i32) {
    %c0_i32 = arith.constant 0 : i32
    %c0_i32_0 = arith.constant 0 : i32
    %c0_i32_1 = arith.constant 0 : i32
    return %arg0, %c0_i32, %c0_i32_0 : i32, i32, i32
  }
  func.func @transform_18(%arg0: i32) -> (i32, i32, i32) {
    %c0_i32 = arith.constant 0 : i32
    %c0_i32_0 = arith.constant 0 : i32
    %c0_i32_1 = arith.constant 0 : i32
    return %arg0, %c0_i32, %c0_i32_0 : i32, i32, i32
  }
  func.func @transform_19(%arg0: i32) -> (i32, i32, i32) {
    %c0_i32 = arith.constant 0 : i32
    %c0_i32_0 = arith.constant 0 : i32
    %c0_i32_1 = arith.constant 0 : i32
    return %arg0, %c0_i32, %c0_i32_0 : i32, i32, i32
  }
  func.func @transform_20(%arg0: i32) -> (i32, i32, i32) {
    %c0_i32 = arith.constant 0 : i32
    %c0_i32_0 = arith.constant 0 : i32
    %c0_i32_1 = arith.constant 0 : i32
    return %arg0, %c0_i32, %c0_i32_0 : i32, i32, i32
  }
  func.func @transform_21(%arg0: i32) -> (i32, i32, i32) {
    %c0_i32 = arith.constant 0 : i32
    %c0_i32_0 = arith.constant 0 : i32
    %c0_i32_1 = arith.constant 0 : i32
    return %arg0, %c0_i32, %c0_i32_0 : i32, i32, i32
  }
  func.func @transform_22(%arg0: i32) -> (i32, i32, i32) {
    %c0_i32 = arith.constant 0 : i32
    %c0_i32_0 = arith.constant 0 : i32
    %c0_i32_1 = arith.constant 0 : i32
    return %arg0, %c0_i32, %c0_i32_0 : i32, i32, i32
  }
  func.func @transform_23(%arg0: i32) -> (i32, i32, i32) {
    %c0_i32 = arith.constant 0 : i32
    %c0_i32_0 = arith.constant 0 : i32
    %c0_i32_1 = arith.constant 0 : i32
    return %arg0, %c0_i32, %c0_i32_0 : i32, i32, i32
  }
  func.func @transform_24(%arg0: i32) -> (i32, i32) {
    %c0_i32 = arith.constant 0 : i32
    %c0_i32_0 = arith.constant 0 : i32
    %c0_i32_1 = arith.constant 0 : i32
    return %c0_i32, %c0_i32_0 : i32, i32
  }
}

</mosaic_0001>

<llo_original>
// kernel: symbolic_regression_transformer.5
$region0: #{symbolic_regression_transformer.5}
  #allocation0 [shape = 'u32[]', space=smem, size = 0x4, offset = 0x4, fixed_abs, tag = 'smem constant byte address 0x4 - core index']
  #allocation1 [shape = 'u32[144,128]{1,0:T(1,128)}', space=vmem, size = 0x12000, scoped, tag = 'internal scratch']
  %s0 = inlined_call_operand.vmem [shape: f32[16,128], index: 0, kind: input, shape index: {}]
  %s1 = inlined_call_operand.vmem [shape: bf16[128,128], index: 1, kind: input, shape index: {}]
  %s2 = inlined_call_operand.vmem [shape: f32[1,128], index: 2, kind: input, shape index: {}]
  %s3 = inlined_call_operand.vmem [shape: f32[16,128], index: 3, kind: output, shape index: {}]
  %s4 = sld [smem:[#allocation0]]
  $region22: #{symbolic_regression_transformer.5} parent=0
    _
  %s6 = ssub.s32 1, %s4
  %s7 = scalar_select 0, %s6, %s4
  // Predicated region
  $region2: #{symbolic_regression_transformer.5} parent=0 // pred_check
    _
  $region3: #{symbolic_regression_transformer.5} parent=0 // pred_check_branch
    %9 = sbr.rel (0) target = $region5
  $region4: #{symbolic_regression_transformer.5} parent=0 // pred_region
    _
  $region5: #{symbolic_regression_transformer.5} parent=0 // pred_fallthru
    _
  // Predicated region
  $region6: #{symbolic_regression_transformer.5} parent=0 // pred_check
    _
  $region7: #{symbolic_regression_transformer.5} parent=0 // pred_check_branch
    %11 = sbr.rel (0) target = $region9
  $region8: #{symbolic_regression_transformer.5} parent=0 // pred_region
    _
  $region9: #{symbolic_regression_transformer.5} parent=0 // pred_fallthru
    _
  // Predicated region
  $region10: #{symbolic_regression_transformer.5} parent=0 // pred_check
    _
  $region11: #{symbolic_regression_transformer.5} parent=0 // pred_check_branch
    %13 = sbr.rel (0) target = $region13
  $region12: #{symbolic_regression_transformer.5} parent=0 // pred_region
    _
  $region13: #{symbolic_regression_transformer.5} parent=0 // pred_fallthru
    _
  %v15 = vld [vmem:[%s0] sm:$0xff]
  %v16 = vld [vmem:[%s0 + $0x8] sm:$0xff]
  %v17 = vpack.c.bf16 %v16, %v15
  %v18 = vld [vmem:[%s1] sm:$0xf]
  %v19 = vld [vmem:[%s1 + $0x4] sm:$0xf]
  %v20 = vld [vmem:[%s1 + $0x8] sm:$0xf]
  %v21 = vld [vmem:[%s1 + $0xc] sm:$0xf]
  %v22 = vld [vmem:[%s1 + $0x10] sm:$0xf]
  %v23 = vld [vmem:[%s1 + $0x14] sm:$0xf]
  %v24 = vld [vmem:[%s1 + $0x18] sm:$0xf]
  %v25 = vld [vmem:[%s1 + $0x1c] sm:$0xf]
  %v26 = vld [vmem:[%s1 + $0x20] sm:$0xf]
  %v27 = vld [vmem:[%s1 + $0x24] sm:$0xf]
  %v28 = vld [vmem:[%s1 + $0x28] sm:$0xf]
  %v29 = vld [vmem:[%s1 + $0x2c] sm:$0xf]
  %v30 = vld [vmem:[%s1 + $0x30] sm:$0xf]
  %v31 = vld [vmem:[%s1 + $0x34] sm:$0xf]
  %v32 = vld [vmem:[%s1 + $0x38] sm:$0xf]
  %v33 = vld [vmem:[%s1 + $0x3c] sm:$0xf]
  %v34 = vld [vmem:[%s2] sm:$0x1]
  %v36 = vlaneseq
  %v37 = vshrl.u32 %v36, 7
  %v38 = vsub.s32 0, %v37
  %v39 = vrot.slane %v34, %v38
  %v57 = vunpack.c.l.b16 %v18
  %v58 = vunpack.c.l.b16 %v19
  %v59 = vunpack.c.l.b16 %v20
  %v60 = vunpack.c.l.b16 %v21
  %v61 = vunpack.c.l.b16 %v22
  %v62 = vunpack.c.l.b16 %v23
  %v63 = vunpack.c.l.b16 %v24
  %v64 = vunpack.c.l.b16 %v25
  %v65 = vunpack.c.l.b16 %v26
  %v66 = vunpack.c.l.b16 %v27
  %v67 = vunpack.c.l.b16 %v28
  %v68 = vunpack.c.l.b16 %v29
  %v69 = vunpack.c.l.b16 %v30
  %v70 = vunpack.c.l.b16 %v31
  %v71 = vunpack.c.l.b16 %v32
  %v72 = vunpack.c.l.b16 %v33
  %v73 = vpack.c.b16 %v58, %v57
  %v74 = vpack.c.b16 %v60, %v59
  %v75 = vpack.c.b16 %v62, %v61
  %v76 = vpack.c.b16 %v64, %v63
  %v77 = vpack.c.b16 %v66, %v65
  %v78 = vpack.c.b16 %v68, %v67
  %v79 = vpack.c.b16 %v70, %v69
  %v80 = vpack.c.b16 %v72, %v71
  %89 = vmatprep.subr.bf16.mxu0 0
  %90 = vmatpush1.bf16.msra.mxu0 %v73
  %91 = vmatprep.subr.bf16.mxu0 0
  %92 = vmatpush1.bf16.msra.mxu0 %v74
  %93 = vmatprep.subr.bf16.mxu0 0
  %94 = vmatpush1.bf16.msra.mxu0 %v75
  %95 = vmatprep.subr.bf16.mxu0 0
  %96 = vmatpush1.bf16.msra.mxu0 %v76
  %97 = vmatprep.subr.bf16.mxu0 0
  %98 = vmatpush1.bf16.msra.mxu0 %v77
  %99 = vmatprep.subr.bf16.mxu0 0
  %100 = vmatpush1.bf16.msra.mxu0 %v78
  %101 = vmatprep.subr.bf16.mxu0 0
  %102 = vmatpush1.bf16.msra.mxu0 %v79
  %103 = vmatprep.subr.bf16.mxu0 0
  %104 = vmatpush1.bf16.msra.mxu0 %v80
  %105 = vmatprep.subr.bf16.mxu0 0
  %106 = vmatpush1.bf16.msra.mxu0 0
  %107 = vmatprep.subr.bf16.mxu0 0
  %108 = vmatpush1.bf16.msra.mxu0 0
  %109 = vmatprep.subr.bf16.mxu0 0
  %110 = vmatpush1.bf16.msra.mxu0 0
  %111 = vmatprep.subr.bf16.mxu0 0
  %112 = vmatpush1.bf16.msra.mxu0 0
  %113 = vmatprep.subr.bf16.mxu0 0
  %114 = vmatpush1.bf16.msra.mxu0 0
  %115 = vmatprep.subr.bf16.mxu0 0
  %116 = vmatpush1.bf16.msra.mxu0 0
  %117 = vmatprep.subr.bf16.mxu0 0
  %118 = vmatpush1.bf16.msra.mxu0 0
  %119 = vmatprep.subr.bf16.mxu0 0
  %120 = vmatpush1.bf16.msra.mxu0 0
  %121 = vmatprep.mubr.bf16.mxu0 0
  %122 = vmatmul.mubr.bf16.gmra.mrb[0].mxu0 %v17
  %v123 = vpop.f32.mrb[0].mxu0
  %v124 = vadd.f32 %v39, %v123
  %v125 = vpop.f32.mrb[0].mxu0
  %v126 = vpop.f32.mrb[0].mxu0
  %v127 = vadd.f32 %v39, %v126
  %v128 = vpop.f32.mrb[0].mxu0
  %129 = vdwg.mxu0
  %130 = vst [vmem:[%s3] sm:$0xff] %v124
  %131 = vst [vmem:[%s3 + $0x8] sm:$0xff] %v127
  // Predicated region
  $region14: #{symbolic_regression_transformer.5} parent=0 // pred_check
    _
  $region15: #{symbolic_regression_transformer.5} parent=0 // pred_check_branch
    %133 = sbr.rel (0) target = $region17
  $region16: #{symbolic_regression_transformer.5} parent=0 // pred_region
    _
  $region17: #{symbolic_regression_transformer.5} parent=0 // pred_fallthru
    _
  // Predicated region
  $region18: #{symbolic_regression_transformer.5} parent=0 // pred_check
    _
  $region19: #{symbolic_regression_transformer.5} parent=0 // pred_check_branch
    %135 = sbr.rel (0) target = $region21
  $region20: #{symbolic_regression_transformer.5} parent=0 // pred_region
    _
  $region21: #{symbolic_regression_transformer.5} parent=0 // pred_fallthru
    _

// kernel: symbolic_regression_transformer.3
$region0: #{symbolic_regression_transformer.3}
  #allocation0 [shape = 'u32[]', space=smem, size = 0x4, offset = 0x4, fixed_abs, tag = 'smem constant byte address 0x4 - core index']
  #allocation1 [shape = 'u32[144,128]{1,0:T(1,128)}', space=vmem, size = 0x12000, scoped, tag = 'internal scratch']
  %s0 = inlined_call_operand.vmem [shape: f32[16,2], index: 0, kind: input, shape index: {}]
  %s1 = inlined_call_operand.vmem [shape: f32[2,128], index: 1, kind: input, shape index: {}]
  %s2 = inlined_call_operand.vmem [shape: f32[1,128], index: 2, kind: input, shape index: {}]
  %s3 = inlined_call_operand.hbm [shape: f32[128,128], index: 3, kind: input, shape index: {}]
  %s4 = inlined_call_operand.vmem [shape: f32[1,128], index: 4, kind: input, shape index: {}]
  %s5 = inlined_call_operand.vmem [shape: f32[16,128], index: 5, kind: output, shape index: {}]
  %s6 = sld [smem:[#allocation0]]
  $region34: #{symbolic_regression_transformer.3} parent=0
    _
  %s8 = ssub.s32 1, %s6
  %s9 = scalar_select 0, %s8, %s6
  $region1: #{symbolic_regression_transformer.3} parent=0
    #allocation2 [shape = 'u8[65536]{0}', space=vmem, size = 0x10000, scoped, tag = 'input window, operand 3, single buffered']
    #allocation3 [shape = 's32[1]{0}', space=sflag, size = 0x4, scoped, tag = 'scoped memory for symbolic_regression_transformer.3']
    %10 = vsyncpa [#allocation3], 0
    // Predicated region
    $region2: #{symbolic_regression_transformer.3} parent=1 // pred_check
      _
    $region3: #{symbolic_regression_transformer.3} parent=1 // pred_check_branch
      %12 = sbr.rel (0) target = $region5
    $region4: #{symbolic_regression_transformer.3} parent=1 // pred_region
      _
    $region5: #{symbolic_regression_transformer.3} parent=1 // pred_fallthru
      _
    // Predicated region
    $region6: #{symbolic_regression_transformer.3} parent=1 // pred_check
      _
    $region7: #{symbolic_regression_transformer.3} parent=1 // pred_check_branch
      %14 = sbr.rel (0) target = $region9
    $region8: #{symbolic_regression_transformer.3} parent=1 // pred_region
      _
    $region9: #{symbolic_regression_transformer.3} parent=1 // pred_fallthru
      _
    // Predicated region
    $region10: #{symbolic_regression_transformer.3} parent=1 // pred_check
      _
    $region11: #{symbolic_regression_transformer.3} parent=1 // pred_check_branch
      %16 = sbr.rel (0) target = $region13
    $region12: #{symbolic_regression_transformer.3} parent=1 // pred_region
      _
    $region13: #{symbolic_regression_transformer.3} parent=1 // pred_fallthru
      _
    // Predicated region
    $region14: #{symbolic_regression_transformer.3} parent=1 // pred_check
      _
    $region15: #{symbolic_regression_transformer.3} parent=1 // pred_check_branch
      %18 = sbr.rel (0) target = $region17
    $region16: #{symbolic_regression_transformer.3} parent=1 // pred_region
      %s20 = ssub.s32 2048, 2048
      %21 = vsyncadd [#allocation3], %s20
      %s22 = sshll.u32 [#allocation2], 4
      %s23 = int_to_ptr.vmem [resolvable:$true] %s22
      %28 = dma.hbm_to_vmem [thread:$0]  %s3, 2048, %s23, [#allocation3], 128, 128, 8
    $region17: #{symbolic_regression_transformer.3} parent=1 // pred_fallthru
      _
    // Predicated region
    $region18: #{symbolic_regression_transformer.3} parent=1 // pred_check
      _
    $region19: #{symbolic_regression_transformer.3} parent=1 // pred_check_branch
      %30 = sbr.rel (0) target = $region21
    $region20: #{symbolic_regression_transformer.3} parent=1 // pred_region
      _
    $region21: #{symbolic_regression_transformer.3} parent=1 // pred_fallthru
      _
    // Predicated region
    $region22: #{symbolic_regression_transformer.3} parent=1 // pred_check
      _
    $region23: #{symbolic_regression_transformer.3} parent=1 // pred_check_branch
      %32 = sbr.rel (0) target = $region25
    $region24: #{symbolic_regression_transformer.3} parent=1 // pred_region
      %33 = dma.done [#allocation3], 2048
    $region25: #{symbolic_regression_transformer.3} parent=1 // pred_fallthru
      _
    %v34 = vld [vmem:[%s0] sm:$0xff]
    %v35 = vld [vmem:[%s0 + $0x8] sm:$0xff]
    %v36 = vld [vmem:[%s1] sm:$0x3]
    %v37 = vld [vmem:[%s2] sm:$0x1]
    %v39 = vlaneseq
    %v40 = vshrl.u32 %v39, 7
    %v41 = vsub.s32 0, %v40
    %v42 = vrot.slane %v37, %v41
    %vm44 = vcmask 15360
    %v46 = vsel %vm44, %v34, 0
    %v49 = vsel %vm44, %v35, 0
    %vm51 = vcmask 1041408
    %v53 = vsel %vm51, %v36, 0
    %55 = vmatprep.subr.mxu0 0.0
    %56 = vmatpush1.msra.mxu0 %v53
    %57 = vmatprep.subr.mxu0 0.0
    %58 = vmatpush1.msra.mxu0 0.0
    %59 = vmatprep.subr.mxu0 0.0
    %60 = vmatpush1.msra.mxu0 0.0
    %61 = vmatprep.subr.mxu0 0.0
    %62 = vmatpush1.msra.mxu0 0.0
    %63 = vmatprep.subr.mxu0 0.0
    %64 = vmatpush1.msra.mxu0 0.0
    %65 = vmatprep.subr.mxu0 0.0
    %66 = vmatpush1.msra.mxu0 0.0
    %67 = vmatprep.subr.mxu0 0.0
    %68 = vmatpush1.msra.mxu0 0.0
    %69 = vmatprep.subr.mxu0 0.0
    %70 = vmatpush1.msra.mxu0 0.0
    %71 = vmatprep.subr.mxu0 0.0
    %72 = vmatpush1.msra.mxu0 0.0
    %73 = vmatprep.subr.mxu0 0.0
    %74 = vmatpush1.msra.mxu0 0.0
    %75 = vmatprep.subr.mxu0 0.0
    %76 = vmatpush1.msra.mxu0 0.0
    %77 = vmatprep.subr.mxu0 0.0
    %78 = vmatpush1.msra.mxu0 0.0
    %79 = vmatprep.subr.mxu0 0.0
    %80 = vmatpush1.msra.mxu0 0.0
    %81 = vmatprep.subr.mxu0 0.0
    %82 = vmatpush1.msra.mxu0 0.0
    %83 = vmatprep.subr.mxu0 0.0
    %84 = vmatpush1.msra.mxu0 0.0
    %85 = vmatprep.subr.mxu0 0.0
    %86 = vmatpush1.msra.mxu0 0.0
    %87 = vmatprep.subr.mxu0 0.0
    %88 = vmatpush1.msra.mxu0 0.0
    %89 = vmatprep.subr.mxu0 0.0
    %90 = vmatpush1.msra.mxu0 0.0
    %91 = vmatprep.subr.mxu0 0.0
    %92 = vmatpush1.msra.mxu0 0.0
    %93 = vmatprep.subr.mxu0 0.0
    %94 = vmatpush1.msra.mxu0 0.0
    %95 = vmatprep.subr.mxu0 0.0
    %96 = vmatpush1.msra.mxu0 0.0
    %97 = vmatprep.subr.mxu0 0.0
    %98 = vmatpush1.msra.mxu0 0.0
    %99 = vmatprep.subr.mxu0 0.0
    %100 = vmatpush1.msra.mxu0 0.0
    %101 = vmatprep.subr.mxu0 0.0
    %102 = vmatpush1.msra.mxu0 0.0
    %103 = vmatprep.subr.mxu0 0.0
    %104 = vmatpush1.msra.mxu0 0.0
    %105 = vmatprep.subr.mxu0 0.0
    %106 = vmatpush1.msra.mxu0 0.0
    %107 = vmatprep.subr.mxu0 0.0
    %108 = vmatpush1.msra.mxu0 0.0
    %109 = vmatprep.subr.mxu0 0.0
    %110 = vmatpush1.msra.mxu0 0.0
    %111 = vmatprep.subr.mxu0 0.0
    %112 = vmatpush1.msra.mxu0 0.0
    %113 = vmatprep.subr.mxu0 0.0
    %114 = vmatpush1.msra.mxu0 0.0
    %115 = vmatprep.subr.mxu0 0.0
    %116 = vmatpush1.msra.mxu0 0.0
    %117 = vmatprep.subr.mxu0 0.0
    %118 = vmatpush1.msra.mxu0 0.0
    %119 = vmatprep.mubr.f32.mxu0 0.0
    %120 = vmatmul.mubr.f32.gmra.mrb[0].mxu0 %v46
    %v121 = vpop.f32.mrb[0].mxu0
    %v122 = vadd.f32 %v42, %v121
    %v123 = vpop.f32.mrb[0].mxu0
    %124 = vmatprep.mubr.f32.mxu0 0.0
    %125 = vmatmul.mubr.f32.gmra.mrb[0].mxu0 %v49
    %v126 = vpop.f32.mrb[0].mxu0
    %v127 = vadd.f32 %v42, %v126
    %v128 = vpop.f32.mrb[0].mxu0
    %129 = vdwg.mxu0
    %v130 = vmax.f32 %v122, 0.0
    %v131 = vmax.f32 %v127, 0.0
    %v132 = vld [vmem:[#allocation2] sm:$0xff]
    %v133 = vld [vmem:[#allocation2 + $0x8] sm:$0xff]
    %v134 = vld [vmem:[#allocation2 + $0x10] sm:$0xff]
    %v135 = vld [vmem:[#allocation2 + $0x18] sm:$0xff]
    %v136 = vld [vmem:[#allocation2 + $0x20] sm:$0xff]
    %v137 = vld [vmem:[#allocation2 + $0x28] sm:$0xff]
    %v138 = vld [vmem:[#allocation2 + $0x30] sm:$0xff]
    %v139 = vld [vmem:[#allocation2 + $0x38] sm:$0xff]
    %v140 = vld [vmem:[#allocation2 + $0x40] sm:$0xff]
    %v141 = vld [vmem:[#allocation2 + $0x48] sm:$0xff]
    %v142 = vld [vmem:[#allocation2 + $0x50] sm:$0xff]
    %v143 = vld [vmem:[#allocation2 + $0x58] sm:$0xff]
    %v144 = vld [vmem:[#allocation2 + $0x60] sm:$0xff]
    %v145 = vld [vmem:[#allocation2 + $0x68] sm:$0xff]
    %v146 = vld [vmem:[#allocation2 + $0x70] sm:$0xff]
    %v147 = vld [vmem:[#allocation2 + $0x78] sm:$0xff]
    %v148 = vld [vmem:[%s4] sm:$0x1]
    %v150 = vlaneseq
    %v151 = vshrl.u32 %v150, 7
    %v152 = vsub.s32 0, %v151
    %v153 = vrot.slane %v148, %v152
    %155 = vmatprep.subr.mxu0 0.0
    %156 = vmatpush1.msra.mxu0 %v132
    %157 = vmatprep.subr.mxu0 0.0
    %158 = vmatpush1.msra.mxu0 %v133
    %159 = vmatprep.subr.mxu0 0.0
    %160 = vmatpush1.msra.mxu0 %v134
    %161 = vmatprep.subr.mxu0 0.0
    %162 = vmatpush1.msra.mxu0 %v135
    %163 = vmatprep.subr.mxu0 0.0
    %164 = vmatpush1.msra.mxu0 %v136
    %165 = vmatprep.subr.mxu0 0.0
    %166 = vmatpush1.msra.mxu0 %v137
    %167 = vmatprep.subr.mxu0 0.0
    %168 = vmatpush1.msra.mxu0 %v138
    %169 = vmatprep.subr.mxu0 0.0
    %170 = vmatpush1.msra.mxu0 %v139
    %171 = vmatprep.subr.mxu0 0.0
    %172 = vmatpush1.msra.mxu0 %v140
    %173 = vmatprep.subr.mxu0 0.0
    %174 = vmatpush1.msra.mxu0 %v141
    %175 = vmatprep.subr.mxu0 0.0
    %176 = vmatpush1.msra.mxu0 %v142
    %177 = vmatprep.subr.mxu0 0.0
    %178 = vmatpush1.msra.mxu0 %v143
    %179 = vmatprep.subr.mxu0 0.0
    %180 = vmatpush1.msra.mxu0 %v144
    %181 = vmatprep.subr.mxu0 0.0
    %182 = vmatpush1.msra.mxu0 %v145
    %183 = vmatprep.subr.mxu0 0.0
    %184 = vmatpush1.msra.mxu0 %v146
    %185 = vmatprep.subr.mxu0 0.0
    %186 = vmatpush1.msra.mxu0 %v147
    %187 = vmatprep.subr.mxu0 0.0
    %188 = vmatpush1.msra.mxu0 0.0
    %189 = vmatprep.subr.mxu0 0.0
    %190 = vmatpush1.msra.mxu0 0.0
    %191 = vmatprep.subr.mxu0 0.0
    %192 = vmatpush1.msra.mxu0 0.0
    %193 = vmatprep.subr.mxu0 0.0
    %194 = vmatpush1.msra.mxu0 0.0
    %195 = vmatprep.subr.mxu0 0.0
    %196 = vmatpush1.msra.mxu0 0.0
    %197 = vmatprep.subr.mxu0 0.0
    %198 = vmatpush1.msra.mxu0 0.0
    %199 = vmatprep.subr.mxu0 0.0
    %200 = vmatpush1.msra.mxu0 0.0
    %201 = vmatprep.subr.mxu0 0.0
    %202 = vmatpush1.msra.mxu0 0.0
    %203 = vmatprep.subr.mxu0 0.0
    %204 = vmatpush1.msra.mxu0 0.0
    %205 = vmatprep.subr.mxu0 0.0
    %206 = vmatpush1.msra.mxu0 0.0
    %207 = vmatprep.subr.mxu0 0.0
    %208 = vmatpush1.msra.mxu0 0.0
    %209 = vmatprep.subr.mxu0 0.0
    %210 = vmatpush1.msra.mxu0 0.0
    %211 = vmatprep.subr.mxu0 0.0
    %212 = vmatpush1.msra.mxu0 0.0
    %213 = vmatprep.subr.mxu0 0.0
    %214 = vmatpush1.msra.mxu0 0.0
    %215 = vmatprep.subr.mxu0 0.0
    %216 = vmatpush1.msra.mxu0 0.0
    %217 = vmatprep.subr.mxu0 0.0
    %218 = vmatpush1.msra.mxu0 0.0
    %219 = vmatprep.mubr.f32.mxu0 0.0
    %220 = vmatmul.mubr.f32.gmra.mrb[0].mxu0 %v130
    %v221 = vpop.f32.mrb[0].mxu0
    %v222 = vadd.f32 %v153, %v221
    %v223 = vpop.f32.mrb[0].mxu0
    %224 = vmatprep.mubr.f32.mxu0 0.0
    %225 = vmatmul.mubr.f32.gmra.mrb[0].mxu0 %v131
    %v226 = vpop.f32.mrb[0].mxu0
    %v227 = vadd.f32 %v153, %v226
    %v228 = vpop.f32.mrb[0].mxu0
    %229 = vdwg.mxu0
    %230 = vst [vmem:[%s5] sm:$0xff] %v222
    %231 = vst [vmem:[%s5 + $0x8] sm:$0xff] %v227
    // Predicated region
    $region26: #{symbolic_regression_transformer.3} parent=1 // pred_check
      _
    $region27: #{symbolic_regression_transformer.3} parent=1 // pred_check_branch
      %233 = sbr.rel (0) target = $region29
    $region28: #{symbolic_regression_transformer.3} parent=1 // pred_region
      _
    $region29: #{symbolic_regression_transformer.3} parent=1 // pred_fallthru
      _
    // Predicated region
    $region30: #{symbolic_regression_transformer.3} parent=1 // pred_check
      _
    $region31: #{symbolic_regression_transformer.3} parent=1 // pred_check_branch
      %235 = sbr.rel (0) target = $region33
    $region32: #{symbolic_regression_transformer.3} parent=1 // pred_region
      _
    $region33: #{symbolic_regression_transformer.3} parent=1 // pred_fallthru
      _
    %236 = vsyncpa [#allocation3], 1

// kernel: symbolic_regression_transformer.4
$region0: #{symbolic_regression_transformer.4}
  #allocation0 [shape = 'u32[]', space=smem, size = 0x4, offset = 0x4, fixed_abs, tag = 'smem constant byte address 0x4 - core index']
  #allocation1 [shape = 'u32[144,128]{1,0:T(1,128)}', space=vmem, size = 0x12000, scoped, tag = 'internal scratch']
  %s0 = inlined_call_operand.vmem [shape: f32[16,128], index: 0, kind: input, shape index: {}]
  %s1 = inlined_call_operand.vmem [shape: bf16[16,128], index: 1, kind: input, shape index: {}]
  %s2 = inlined_call_operand.hbm [shape: f32[8,8], index: 2, kind: input, shape index: {}]
  %s3 = inlined_call_operand.vmem [shape: f32[2,8], index: 3, kind: input, shape index: {}]
  %s4 = inlined_call_operand.vmem [shape: bf16[2,128,384], index: 4, kind: input, shape index: {}]
  %s5 = inlined_call_operand.hbm [shape: f32[2,1,384], index: 5, kind: input, shape index: {}]
  %s6 = inlined_call_operand.hbm [shape: bf16[2,128,128], index: 6, kind: input, shape index: {}]
  %s7 = inlined_call_operand.hbm [shape: f32[2,1,128], index: 7, kind: input, shape index: {}]
  %s8 = inlined_call_operand.hbm [shape: f32[2,1,128], index: 8, kind: input, shape index: {}]
  %s9 = inlined_call_operand.hbm [shape: f32[2,1,128], index: 9, kind: input, shape index: {}]
  %s10 = inlined_call_operand.vmem [shape: bf16[2,128,128], index: 10, kind: input, shape index: {}]
  %s11 = inlined_call_operand.vmem [shape: f32[2,1,128], index: 11, kind: input, shape index: {}]
  %s12 = inlined_call_operand.hbm [shape: bf16[2,128,256], index: 12, kind: input, shape index: {}]
  %s13 = inlined_call_operand.vmem [shape: f32[2,1,256], index: 13, kind: input, shape index: {}]
  %s14 = inlined_call_operand.hbm [shape: bf16[2,128,128], index: 14, kind: input, shape index: {}]
  %s15 = inlined_call_operand.vmem [shape: f32[2,1,128], index: 15, kind: input, shape index: {}]
  %s16 = inlined_call_operand.hbm [shape: f32[2,1,128], index: 16, kind: input, shape index: {}]
  %s17 = inlined_call_operand.hbm [shape: f32[2,1,128], index: 17, kind: input, shape index: {}]
  %s18 = inlined_call_operand.hbm [shape: bf16[2,128,256], index: 18, kind: input, shape index: {}]
  %s19 = inlined_call_operand.hbm [shape: f32[2,1,256], index: 19, kind: input, shape index: {}]
  %s20 = inlined_call_operand.hbm [shape: bf16[2,256,128], index: 20, kind: input, shape index: {}]
  %s21 = inlined_call_operand.hbm [shape: f32[2,1,128], index: 21, kind: input, shape index: {}]
  %s22 = inlined_call_operand.hbm [shape: f32[2,1,128], index: 22, kind: input, shape index: {}]
  %s23 = inlined_call_operand.hbm [shape: f32[2,1,128], index: 23, kind: input, shape index: {}]
  %s24 = inlined_call_operand.vmem [shape: f32[16,128], index: 24, kind: output, shape index: {}]
  %s25 = sld [smem:[#allocation0]]
  $region197: #{symbolic_regression_transformer.4} parent=0
    _
  %s27 = ssub.s32 1, %s25
  %s28 = scalar_select 0, %s27, %s25
  $region1: #{symbolic_regression_transformer.4} parent=0
    #allocation2 [shape = 'u8[4096]{0}', space=vmem, size = 0x1000, scoped, tag = 'input window, operand 2, single buffered']
    #allocation3 [shape = 's32[2]{0}', space=sflag, size = 0x8, scoped, tag = 'scoped memory for symbolic_regression_transformer.4']
    #allocation4 [shape = 'u8[3072]{0}', space=vmem, size = 0xc00, scoped, tag = 'input window, operand 5']
    #allocation5 [shape = 's32[2]{0}', space=sflag, size = 0x8, scoped, tag = 'scoped memory for symbolic_regression_transformer.4']
    #allocation6 [shape = 'u8[65536]{0}', space=vmem, size = 0x10000, scoped, tag = 'input window, operand 6']
    #allocation7 [shape = 'u8[1024]{0}', space=vmem, size = 0x400, scoped, tag = 'input window, operand 7']
    #allocation8 [shape = 's32[2]{0}', space=sflag, size = 0x8, scoped, tag = 'scoped memory for symbolic_regression_transformer.4']
    #allocation9 [shape = 'u8[1024]{0}', space=vmem, size = 0x400, scoped, tag = 'input window, operand 8']
    #allocation10 [shape = 'u8[1024]{0}', space=vmem, size = 0x400, scoped, tag = 'input window, operand 9']
    #allocation11 [shape = 's32[2]{0}', space=sflag, size = 0x8, scoped, tag = 'scoped memory for symbolic_regression_transformer.4']
    #allocation12 [shape = 'u8[131072]{0}', space=vmem, size = 0x20000, scoped, tag = 'input window, operand 12']
    #allocation13 [shape = 'u8[65536]{0}', space=vmem, size = 0x10000, scoped, tag = 'input window, operand 14']
    #allocation14 [shape = 's32[2]{0}', space=sflag, size = 0x8, scoped, tag = 'scoped memory for symbolic_regression_transformer.4']
    #allocation15 [shape = 'u8[1024]{0}', space=vmem, size = 0x400, scoped, tag = 'input window, operand 16']
    #allocation16 [shape = 'u8[1024]{0}', space=vmem, size = 0x400, scoped, tag = 'input window, operand 17']
    #allocation17 [shape = 's32[2]{0}', space=sflag, size = 0x8, scoped, tag = 'scoped memory for symbolic_regression_transformer.4']
    #allocation18 [shape = 'u8[131072]{0}', space=vmem, size = 0x20000, scoped, tag = 'input window, operand 18']
    #allocation19 [shape = 'u8[2048]{0}', space=vmem, size = 0x800, scoped, tag = 'input window, operand 19']
    #allocation20 [shape = 's32[2]{0}', space=sflag, size = 0x8, scoped, tag = 'scoped memory for symbolic_regression_transformer.4']
    #allocation21 [shape = 'u8[131072]{0}', space=vmem, size = 0x20000, scoped, tag = 'input window, operand 20']
    #allocation22 [shape = 'u8[1024]{0}', space=vmem, size = 0x400, scoped, tag = 'input window, operand 21']
    #allocation23 [shape = 's32[2]{0}', space=sflag, size = 0x8, scoped, tag = 'scoped memory for symbolic_regression_transformer.4']
    #allocation24 [shape = 'u8[1024]{0}', space=vmem, size = 0x400, scoped, tag = 'input window, operand 22']
    #allocation25 [shape = 'u8[1024]{0}', space=vmem, size = 0x400, scoped, tag = 'input window, operand 23']
    #allocation26 [shape = 's32[2]{0}', space=sflag, size = 0x8, scoped, tag = 'scoped memory for symbolic_regression_transformer.4']
    %29 = vsyncpa [#allocation3], 0
    %30 = vsyncpa [#allocation5], 0
    %s31 = scalar_lea.sflag [#allocation5], 1
    %32 = vsyncpa %s31, 0
    %33 = vsyncpa [#allocation8], 0
    %s34 = scalar_lea.sflag [#allocation8], 1
    %35 = vsyncpa %s34, 0
    %36 = vsyncpa [#allocation11], 0
    %s37 = scalar_lea.sflag [#allocation11], 1
    %38 = vsyncpa %s37, 0
    %39 = vsyncpa [#allocation14], 0
    %s40 = scalar_lea.sflag [#allocation14], 1
    %41 = vsyncpa %s40, 0
    %42 = vsyncpa [#allocation17], 0
    %s43 = scalar_lea.sflag [#allocation17], 1
    %44 = vsyncpa %s43, 0
    %45 = vsyncpa [#allocation20], 0
    %s46 = scalar_lea.sflag [#allocation20], 1
    %47 = vsyncpa %s46, 0
    %48 = vsyncpa [#allocation23], 0
    %s49 = scalar_lea.sflag [#allocation23], 1
    %50 = vsyncpa %s49, 0
    %51 = vsyncpa [#allocation26], 0
    %s52 = scalar_lea.sflag [#allocation26], 1
    %53 = vsyncpa %s52, 0
    loop: start=0, step=1, limit=4
    $region2: #{symbolic_regression_transformer.4} parent=1 // loop_pre_header
      _
    $region3: #{symbolic_regression_transformer.4} parent=1 // loop_header
      %s55 = sphi 0, %s59
      %p56 = scmp.ge.s32.totalorder %s55, 4
      %s63 = sphi 0, %s63
      %s65 = sphi 0, %s63
      %s66 = sphi 0, %s65
      %s80 = sphi 0, %s66
      %s84 = sphi 0, %s84
      %s86 = sphi 0, %s84
      %s87 = sphi 0, %s86
      %s101 = sphi 0, %s87
      %s105 = sphi 0, %s105
      %s107 = sphi 0, %s105
      %s108 = sphi 0, %s107
      %s122 = sphi 0, %s108
      %s126 = sphi 0, %s126
      %s128 = sphi 0, %s126
      %s129 = sphi 0, %s128
      %s143 = sphi 0, %s129
      %s149 = sphi 0, %s151
      %s152 = sphi 0, %s149
      %s153 = sphi 0, %s152
      %s169 = sphi 0, %s153
      %s175 = sphi 0, %s177
      %s178 = sphi 0, %s175
      %s179 = sphi 0, %s178
      %s195 = sphi 0, %s179
      %s201 = sphi 0, %s203
      %s204 = sphi 0, %s201
      %s205 = sphi 0, %s204
      %s221 = sphi 0, %s205
      %s227 = sphi 0, %s229
      %s230 = sphi 0, %s227
      %s231 = sphi 0, %s230
      %s247 = sphi 0, %s231
      %s253 = sphi 0, %s255
      %s256 = sphi 0, %s253
      %s257 = sphi 0, %s256
      %s273 = sphi 0, %s257
      %s279 = sphi 0, %s281
      %s282 = sphi 0, %s279
      %s283 = sphi 0, %s282
      %s299 = sphi 0, %s283
      %s305 = sphi 0, %s307
      %s308 = sphi 0, %s305
      %s309 = sphi 0, %s308
      %s325 = sphi 0, %s309
      %s331 = sphi 0, %s333
      %s334 = sphi 0, %s331
      %s335 = sphi 0, %s334
      %s351 = sphi 0, %s335
      %s357 = sphi 0, %s359
      %s360 = sphi 0, %s357
      %s361 = sphi 0, %s360
      %s377 = sphi 0, %s361
      %s383 = sphi 0, %s385
      %s386 = sphi 0, %s383
      %s387 = sphi 0, %s386
      %s403 = sphi 0, %s387
      %s409 = sphi 0, %s411
      %s412 = sphi 0, %s409
      %s413 = sphi 0, %s412
      %s429 = sphi 0, %s413
      %s435 = sphi 0, %s437
      %s438 = sphi 0, %s435
      %s439 = sphi 0, %s438
      %s455 = sphi 0, %s439
      %s461 = sphi 0, %s463
      %s464 = sphi 0, %s461
      %s465 = sphi 0, %s464
      %s481 = sphi 0, %s465
      %s487 = sphi 0, %s489
      %s490 = sphi 0, %s487
      %s491 = sphi 0, %s490
      %s507 = sphi 0, %s491
      %s513 = sphi 0, %s515
      %s516 = sphi 0, %s513
      %s517 = sphi 0, %s516
      %s533 = sphi 0, %s517
      %s539 = sphi 0, %s541
      %s542 = sphi 0, %s539
      %s543 = sphi 0, %s542
      %s559 = sphi 0, %s543
      %s565 = sphi 0, %s567
      %s568 = sphi 0, %s565
      %s569 = sphi 0, %s568
      %s585 = sphi 0, %s569
      %s591 = sphi 0, %s593
      %s594 = sphi 0, %s591
      %s595 = sphi 0, %s594
      %s611 = sphi 0, %s595
      %s617 = sphi 0, %s619
      %s620 = sphi 0, %s617
      %s621 = sphi 0, %s620
      %s637 = sphi 0, %s621
      %s643 = sphi 0, %s645
      %s646 = sphi 0, %s643
      %s647 = sphi 0, %s646
      %s663 = sphi 0, %s647
      %s667 = sphi 0, %s667
      %s669 = sphi 0, %s667
      %s670 = sphi 0, %s669
      %s684 = sphi 0, %s670
    $region4: #{symbolic_regression_transformer.4} parent=1 // loop_header_branch
      %58 = sbr.rel (%p56) target = $region8
    $region5: #{symbolic_regression_transformer.4} parent=1 // loop_body
      %s60 = ssub.s32 %s55, 1
      %s61 = ssub.s32 %s55, 2
      %s62 = sadd.s32 %s55, 1
      %s64 = sadd.s32 %s63, 1
      %p67 = scmp.eq.s32.totalorder %s55, 1
      %p68 = scmp.ne.s32.totalorder %s63, %s65
      %p69 = scmp.eq.s32.totalorder %s55, 0
      %p70 = por %p68, %p69
      %p71 = scmp.ne.s32.totalorder %s63, %s65
      %p72 = scmp.eq.s32.totalorder %s60, 1
      %p73 = por %p71, %p72
      %p74 = scmp.ne.s32.totalorder %s65, %s66
      %p75 = scmp.eq.s32.totalorder %s60, 0
      %p76 = por %p74, %p75
      %p77 = scmp.ne.s32.totalorder %s65, %s66
      %p78 = scmp.eq.s32.totalorder %s61, 1
      %p79 = por %p77, %p78
      %p81 = scmp.ne.s32.totalorder %s66, %s80
      %p82 = scmp.eq.s32.totalorder %s61, 0
      %p83 = por %p81, %p82
      %s85 = sadd.s32 %s84, 1
      %p88 = scmp.eq.s32.totalorder %s55, 1
      %p89 = scmp.ne.s32.totalorder %s84, %s86
      %p90 = scmp.eq.s32.totalorder %s55, 0
      %p91 = por %p89, %p90
      %p92 = scmp.ne.s32.totalorder %s84, %s86
      %p93 = scmp.eq.s32.totalorder %s60, 1
      %p94 = por %p92, %p93
      %p95 = scmp.ne.s32.totalorder %s86, %s87
      %p96 = scmp.eq.s32.totalorder %s60, 0
      %p97 = por %p95, %p96
      %p98 = scmp.ne.s32.totalorder %s86, %s87
      %p99 = scmp.eq.s32.totalorder %s61, 1
      %p100 = por %p98, %p99
      %p102 = scmp.ne.s32.totalorder %s87, %s101
      %p103 = scmp.eq.s32.totalorder %s61, 0
      %p104 = por %p102, %p103
      %s106 = sadd.s32 %s105, 1
      %p109 = scmp.eq.s32.totalorder %s55, 1
      %p110 = scmp.ne.s32.totalorder %s105, %s107
      %p111 = scmp.eq.s32.totalorder %s55, 0
      %p112 = por %p110, %p111
      %p113 = scmp.ne.s32.totalorder %s105, %s107
      %p114 = scmp.eq.s32.totalorder %s60, 1
      %p115 = por %p113, %p114
      %p116 = scmp.ne.s32.totalorder %s107, %s108
      %p117 = scmp.eq.s32.totalorder %s60, 0
      %p118 = por %p116, %p117
      %p119 = scmp.ne.s32.totalorder %s107, %s108
      %p120 = scmp.eq.s32.totalorder %s61, 1
      %p121 = por %p119, %p120
      %p123 = scmp.ne.s32.totalorder %s108, %s122
      %p124 = scmp.eq.s32.totalorder %s61, 0
      %p125 = por %p123, %p124
      %s127 = sadd.s32 %s126, 1
      %p130 = scmp.eq.s32.totalorder %s55, 1
      %p131 = scmp.ne.s32.totalorder %s126, %s128
      %p132 = scmp.eq.s32.totalorder %s55, 0
      %p133 = por %p131, %p132
      %p134 = scmp.ne.s32.totalorder %s126, %s128
      %p135 = scmp.eq.s32.totalorder %s60, 1
      %p136 = por %p134, %p135
      %p137 = scmp.ne.s32.totalorder %s128, %s129
      %p138 = scmp.eq.s32.totalorder %s60, 0
      %p139 = por %p137, %p138
      %p140 = scmp.ne.s32.totalorder %s128, %s129
      %p141 = scmp.eq.s32.totalorder %s61, 1
      %p142 = por %p140, %p141
      %p144 = scmp.ne.s32.totalorder %s129, %s143
      %p145 = scmp.eq.s32.totalorder %s61, 0
      %p146 = por %p144, %p145
      %s147 = ssub.s32 %s55, %s62
      %p148 = scmp.eq.s32.totalorder %s147, 0
      %s150 = sadd.s32 %s149, 1
      %s151 = scalar_select %p148, %s149, %s150
      %p154 = pneg %p148
      %p155 = scmp.eq.s32.totalorder %s55, 1
      %p156 = por %p154, %p155
      %p157 = scmp.ne.s32.totalorder %s149, %s152
      %p158 = scmp.eq.s32.totalorder %s55, 0
      %p159 = por %p157, %p158
      %p160 = scmp.ne.s32.totalorder %s149, %s152
      %p161 = scmp.eq.s32.totalorder %s60, 1
      %p162 = por %p160, %p161
      %p163 = scmp.ne.s32.totalorder %s152, %s153
      %p164 = scmp.eq.s32.totalorder %s60, 0
      %p165 = por %p163, %p164
      %p166 = scmp.ne.s32.totalorder %s152, %s153
      %p167 = scmp.eq.s32.totalorder %s61, 1
      %p168 = por %p166, %p167
      %p170 = scmp.ne.s32.totalorder %s153, %s169
      %p171 = scmp.eq.s32.totalorder %s61, 0
      %p172 = por %p170, %p171
      %s173 = ssub.s32 %s55, %s62
      %p174 = scmp.eq.s32.totalorder %s173, 0
      %s176 = sadd.s32 %s175, 1
      %s177 = scalar_select %p174, %s175, %s176
      %p180 = pneg %p174
      %p181 = scmp.eq.s32.totalorder %s55, 1
      %p182 = por %p180, %p181
      %p183 = scmp.ne.s32.totalorder %s175, %s178
      %p184 = scmp.eq.s32.totalorder %s55, 0
      %p185 = por %p183, %p184
      %p186 = scmp.ne.s32.totalorder %s175, %s178
      %p187 = scmp.eq.s32.totalorder %s60, 1
      %p188 = por %p186, %p187
      %p189 = scmp.ne.s32.totalorder %s178, %s179
      %p190 = scmp.eq.s32.totalorder %s60, 0
      %p191 = por %p189, %p190
      %p192 = scmp.ne.s32.totalorder %s178, %s179
      %p193 = scmp.eq.s32.totalorder %s61, 1
      %p194 = por %p192, %p193
      %p196 = scmp.ne.s32.totalorder %s179, %s195
      %p197 = scmp.eq.s32.totalorder %s61, 0
      %p198 = por %p196, %p197
      %s199 = ssub.s32 %s55, %s62
      %p200 = scmp.eq.s32.totalorder %s199, 0
      %s202 = sadd.s32 %s201, 1
      %s203 = scalar_select %p200, %s201, %s202
      %p206 = pneg %p200
      %p207 = scmp.eq.s32.totalorder %s55, 1
      %p208 = por %p206, %p207
      %p209 = scmp.ne.s32.totalorder %s201, %s204
      %p210 = scmp.eq.s32.totalorder %s55, 0
      %p211 = por %p209, %p210
      %p212 = scmp.ne.s32.totalorder %s201, %s204
      %p213 = scmp.eq.s32.totalorder %s60, 1
      %p214 = por %p212, %p213
      %p215 = scmp.ne.s32.totalorder %s204, %s205
      %p216 = scmp.eq.s32.totalorder %s60, 0
      %p217 = por %p215, %p216
      %p218 = scmp.ne.s32.totalorder %s204, %s205
      %p219 = scmp.eq.s32.totalorder %s61, 1
      %p220 = por %p218, %p219
      %p222 = scmp.ne.s32.totalorder %s205, %s221
      %p223 = scmp.eq.s32.totalorder %s61, 0
      %p224 = por %p222, %p223
      %s225 = ssub.s32 %s55, %s62
      %p226 = scmp.eq.s32.totalorder %s225, 0
      %s228 = sadd.s32 %s227, 1
      %s229 = scalar_select %p226, %s227, %s228
      %p232 = pneg %p226
      %p233 = scmp.eq.s32.totalorder %s55, 1
      %p234 = por %p232, %p233
      %p235 = scmp.ne.s32.totalorder %s227, %s230
      %p236 = scmp.eq.s32.totalorder %s55, 0
      %p237 = por %p235, %p236
      %p238 = scmp.ne.s32.totalorder %s227, %s230
      %p239 = scmp.eq.s32.totalorder %s60, 1
      %p240 = por %p238, %p239
      %p241 = scmp.ne.s32.totalorder %s230, %s231
      %p242 = scmp.eq.s32.totalorder %s60, 0
      %p243 = por %p241, %p242
      %p244 = scmp.ne.s32.totalorder %s230, %s231
      %p245 = scmp.eq.s32.totalorder %s61, 1
      %p246 = por %p244, %p245
      %p248 = scmp.ne.s32.totalorder %s231, %s247
      %p249 = scmp.eq.s32.totalorder %s61, 0
      %p250 = por %p248, %p249
      %s251 = ssub.s32 %s55, %s62
      %p252 = scmp.eq.s32.totalorder %s251, 0
      %s254 = sadd.s32 %s253, 1
      %s255 = scalar_select %p252, %s253, %s254
      %p258 = pneg %p252
      %p259 = scmp.eq.s32.totalorder %s55, 1
      %p260 = por %p258, %p259
      %p261 = scmp.ne.s32.totalorder %s253, %s256
      %p262 = scmp.eq.s32.totalorder %s55, 0
      %p263 = por %p261, %p262
      %p264 = scmp.ne.s32.totalorder %s253, %s256
      %p265 = scmp.eq.s32.totalorder %s60, 1
      %p266 = por %p264, %p265
      %p267 = scmp.ne.s32.totalorder %s256, %s257
      %p268 = scmp.eq.s32.totalorder %s60, 0
      %p269 = por %p267, %p268
      %p270 = scmp.ne.s32.totalorder %s256, %s257
      %p271 = scmp.eq.s32.totalorder %s61, 1
      %p272 = por %p270, %p271
      %p274 = scmp.ne.s32.totalorder %s257, %s273
      %p275 = scmp.eq.s32.totalorder %s61, 0
      %p276 = por %p274, %p275
      %s277 = ssub.s32 %s55, %s62
      %p278 = scmp.eq.s32.totalorder %s277, 0
      %s280 = sadd.s32 %s279, 1
      %s281 = scalar_select %p278, %s279, %s280
      %p284 = pneg %p278
      %p285 = scmp.eq.s32.totalorder %s55, 1
      %p286 = por %p284, %p285
      %p287 = scmp.ne.s32.totalorder %s279, %s282
      %p288 = scmp.eq.s32.totalorder %s55, 0
      %p289 = por %p287, %p288
      %p290 = scmp.ne.s32.totalorder %s279, %s282
      %p291 = scmp.eq.s32.totalorder %s60, 1
      %p292 = por %p290, %p291
      %p293 = scmp.ne.s32.totalorder %s282, %s283
      %p294 = scmp.eq.s32.totalorder %s60, 0
      %p295 = por %p293, %p294
      %p296 = scmp.ne.s32.totalorder %s282, %s283
      %p297 = scmp.eq.s32.totalorder %s61, 1
      %p298 = por %p296, %p297
      %p300 = scmp.ne.s32.totalorder %s283, %s299
      %p301 = scmp.eq.s32.totalorder %s61, 0
      %p302 = por %p300, %p301
      %s303 = ssub.s32 %s55, %s62
      %p304 = scmp.eq.s32.totalorder %s303, 0
      %s306 = sadd.s32 %s305, 1
      %s307 = scalar_select %p304, %s305, %s306
      %p310 = pneg %p304
      %p311 = scmp.eq.s32.totalorder %s55, 1
      %p312 = por %p310, %p311
      %p313 = scmp.ne.s32.totalorder %s305, %s308
      %p314 = scmp.eq.s32.totalorder %s55, 0
      %p315 = por %p313, %p314
      %p316 = scmp.ne.s32.totalorder %s305, %s308
      %p317 = scmp.eq.s32.totalorder %s60, 1
      %p318 = por %p316, %p317
      %p319 = scmp.ne.s32.totalorder %s308, %s309
      %p320 = scmp.eq.s32.totalorder %s60, 0
      %p321 = por %p319, %p320
      %p322 = scmp.ne.s32.totalorder %s308, %s309
      %p323 = scmp.eq.s32.totalorder %s61, 1
      %p324 = por %p322, %p323
      %p326 = scmp.ne.s32.totalorder %s309, %s325
      %p327 = scmp.eq.s32.totalorder %s61, 0
      %p328 = por %p326, %p327
      %s329 = ssub.s32 %s55, %s62
      %p330 = scmp.eq.s32.totalorder %s329, 0
      %s332 = sadd.s32 %s331, 1
      %s333 = scalar_select %p330, %s331, %s332
      %p336 = pneg %p330
      %p337 = scmp.eq.s32.totalorder %s55, 1
      %p338 = por %p336, %p337
      %p339 = scmp.ne.s32.totalorder %s331, %s334
      %p340 = scmp.eq.s32.totalorder %s55, 0
      %p341 = por %p339, %p340
      %p342 = scmp.ne.s32.totalorder %s331, %s334
      %p343 = scmp.eq.s32.totalorder %s60, 1
      %p344 = por %p342, %p343
      %p345 = scmp.ne.s32.totalorder %s334, %s335
      %p346 = scmp.eq.s32.totalorder %s60, 0
      %p347 = por %p345, %p346
      %p348 = scmp.ne.s32.totalorder %s334, %s335
      %p349 = scmp.eq.s32.totalorder %s61, 1
      %p350 = por %p348, %p349
      %p352 = scmp.ne.s32.totalorder %s335, %s351
      %p353 = scmp.eq.s32.totalorder %s61, 0
      %p354 = por %p352, %p353
      %s355 = ssub.s32 %s55, %s62
      %p356 = scmp.eq.s32.totalorder %s355, 0
      %s358 = sadd.s32 %s357, 1
      %s359 = scalar_select %p356, %s357, %s358
      %p362 = pneg %p356
      %p363 = scmp.eq.s32.totalorder %s55, 1
      %p364 = por %p362, %p363
      %p365 = scmp.ne.s32.totalorder %s357, %s360
      %p366 = scmp.eq.s32.totalorder %s55, 0
      %p367 = por %p365, %p366
      %p368 = scmp.ne.s32.totalorder %s357, %s360
      %p369 = scmp.eq.s32.totalorder %s60, 1
      %p370 = por %p368, %p369
      %p371 = scmp.ne.s32.totalorder %s360, %s361
      %p372 = scmp.eq.s32.totalorder %s60, 0
      %p373 = por %p371, %p372
      %p374 = scmp.ne.s32.totalorder %s360, %s361
      %p375 = scmp.eq.s32.totalorder %s61, 1
      %p376 = por %p374, %p375
      %p378 = scmp.ne.s32.totalorder %s361, %s377
      %p379 = scmp.eq.s32.totalorder %s61, 0
      %p380 = por %p378, %p379
      %s381 = ssub.s32 %s55, %s62
      %p382 = scmp.eq.s32.totalorder %s381, 0
      %s384 = sadd.s32 %s383, 1
      %s385 = scalar_select %p382, %s383, %s384
      %p388 = pneg %p382
      %p389 = scmp.eq.s32.totalorder %s55, 1
      %p390 = por %p388, %p389
      %p391 = scmp.ne.s32.totalorder %s383, %s386
      %p392 = scmp.eq.s32.totalorder %s55, 0
      %p393 = por %p391, %p392
      %p394 = scmp.ne.s32.totalorder %s383, %s386
      %p395 = scmp.eq.s32.totalorder %s60, 1
      %p396 = por %p394, %p395
      %p397 = scmp.ne.s32.totalorder %s386, %s387
      %p398 = scmp.eq.s32.totalorder %s60, 0
      %p399 = por %p397, %p398
      %p400 = scmp.ne.s32.totalorder %s386, %s387
      %p401 = scmp.eq.s32.totalorder %s61, 1
      %p402 = por %p400, %p401
      %p404 = scmp.ne.s32.totalorder %s387, %s403
      %p405 = scmp.eq.s32.totalorder %s61, 0
      %p406 = por %p404, %p405
      %s407 = ssub.s32 %s55, %s62
      %p408 = scmp.eq.s32.totalorder %s407, 0
      %s410 = sadd.s32 %s409, 1
      %s411 = scalar_select %p408, %s409, %s410
      %p414 = pneg %p408
      %p415 = scmp.eq.s32.totalorder %s55, 1
      %p416 = por %p414, %p415
      %p417 = scmp.ne.s32.totalorder %s409, %s412
      %p418 = scmp.eq.s32.totalorder %s55, 0
      %p419 = por %p417, %p418
      %p420 = scmp.ne.s32.totalorder %s409, %s412
      %p421 = scmp.eq.s32.totalorder %s60, 1
      %p422 = por %p420, %p421
      %p423 = scmp.ne.s32.totalorder %s412, %s413
      %p424 = scmp.eq.s32.totalorder %s60, 0
      %p425 = por %p423, %p424
      %p426 = scmp.ne.s32.totalorder %s412, %s413
      %p427 = scmp.eq.s32.totalorder %s61, 1
      %p428 = por %p426, %p427
      %p430 = scmp.ne.s32.totalorder %s413, %s429
      %p431 = scmp.eq.s32.totalorder %s61, 0
      %p432 = por %p430, %p431
      %s433 = ssub.s32 %s55, %s62
      %p434 = scmp.eq.s32.totalorder %s433, 0
      %s436 = sadd.s32 %s435, 1
      %s437 = scalar_select %p434, %s435, %s436
      %p440 = pneg %p434
      %p441 = scmp.eq.s32.totalorder %s55, 1
      %p442 = por %p440, %p441
      %p443 = scmp.ne.s32.totalorder %s435, %s438
      %p444 = scmp.eq.s32.totalorder %s55, 0
      %p445 = por %p443, %p444
      %p446 = scmp.ne.s32.totalorder %s435, %s438
      %p447 = scmp.eq.s32.totalorder %s60, 1
      %p448 = por %p446, %p447
      %p449 = scmp.ne.s32.totalorder %s438, %s439
      %p450 = scmp.eq.s32.totalorder %s60, 0
      %p451 = por %p449, %p450
      %p452 = scmp.ne.s32.totalorder %s438, %s439
      %p453 = scmp.eq.s32.totalorder %s61, 1
      %p454 = por %p452, %p453
      %p456 = scmp.ne.s32.totalorder %s439, %s455
      %p457 = scmp.eq.s32.totalorder %s61, 0
      %p458 = por %p456, %p457
      %s459 = ssub.s32 %s55, %s62
      %p460 = scmp.eq.s32.totalorder %s459, 0
      %s462 = sadd.s32 %s461, 1
      %s463 = scalar_select %p460, %s461, %s462
      %p466 = pneg %p460
      %p467 = scmp.eq.s32.totalorder %s55, 1
      %p468 = por %p466, %p467
      %p469 = scmp.ne.s32.totalorder %s461, %s464
      %p470 = scmp.eq.s32.totalorder %s55, 0
      %p471 = por %p469, %p470
      %p472 = scmp.ne.s32.totalorder %s461, %s464
      %p473 = scmp.eq.s32.totalorder %s60, 1
      %p474 = por %p472, %p473
      %p475 = scmp.ne.s32.totalorder %s464, %s465
      %p476 = scmp.eq.s32.totalorder %s60, 0
      %p477 = por %p475, %p476
      %p478 = scmp.ne.s32.totalorder %s464, %s465
      %p479 = scmp.eq.s32.totalorder %s61, 1
      %p480 = por %p478, %p479
      %p482 = scmp.ne.s32.totalorder %s465, %s481
      %p483 = scmp.eq.s32.totalorder %s61, 0
      %p484 = por %p482, %p483
      %s485 = ssub.s32 %s55, %s62
      %p486 = scmp.eq.s32.totalorder %s485, 0
      %s488 = sadd.s32 %s487, 1
      %s489 = scalar_select %p486, %s487, %s488
      %p492 = pneg %p486
      %p493 = scmp.eq.s32.totalorder %s55, 1
      %p494 = por %p492, %p493
      %p495 = scmp.ne.s32.totalorder %s487, %s490
      %p496 = scmp.eq.s32.totalorder %s55, 0
      %p497 = por %p495, %p496
      %p498 = scmp.ne.s32.totalorder %s487, %s490
      %p499 = scmp.eq.s32.totalorder %s60, 1
      %p500 = por %p498, %p499
      %p501 = scmp.ne.s32.totalorder %s490, %s491
      %p502 = scmp.eq.s32.totalorder %s60, 0
      %p503 = por %p501, %p502
      %p504 = scmp.ne.s32.totalorder %s490, %s491
      %p505 = scmp.eq.s32.totalorder %s61, 1
      %p506 = por %p504, %p505
      %p508 = scmp.ne.s32.totalorder %s491, %s507
      %p509 = scmp.eq.s32.totalorder %s61, 0
      %p510 = por %p508, %p509
      %s511 = ssub.s32 %s55, %s62
      %p512 = scmp.eq.s32.totalorder %s511, 0
      %s514 = sadd.s32 %s513, 1
      %s515 = scalar_select %p512, %s513, %s514
      %p518 = pneg %p512
      %p519 = scmp.eq.s32.totalorder %s55, 1
      %p520 = por %p518, %p519
      %p521 = scmp.ne.s32.totalorder %s513, %s516
      %p522 = scmp.eq.s32.totalorder %s55, 0
      %p523 = por %p521, %p522
      %p524 = scmp.ne.s32.totalorder %s513, %s516
      %p525 = scmp.eq.s32.totalorder %s60, 1
      %p526 = por %p524, %p525
      %p527 = scmp.ne.s32.totalorder %s516, %s517
      %p528 = scmp.eq.s32.totalorder %s60, 0
      %p529 = por %p527, %p528
      %p530 = scmp.ne.s32.totalorder %s516, %s517
      %p531 = scmp.eq.s32.totalorder %s61, 1
      %p532 = por %p530, %p531
      %p534 = scmp.ne.s32.totalorder %s517, %s533
      %p535 = scmp.eq.s32.totalorder %s61, 0
      %p536 = por %p534, %p535
      %s537 = ssub.s32 %s55, %s62
      %p538 = scmp.eq.s32.totalorder %s537, 0
      %s540 = sadd.s32 %s539, 1
      %s541 = scalar_select %p538, %s539, %s540
      %p544 = pneg %p538
      %p545 = scmp.eq.s32.totalorder %s55, 1
      %p546 = por %p544, %p545
      %p547 = scmp.ne.s32.totalorder %s539, %s542
      %p548 = scmp.eq.s32.totalorder %s55, 0
      %p549 = por %p547, %p548
      %p550 = scmp.ne.s32.totalorder %s539, %s542
      %p551 = scmp.eq.s32.totalorder %s60, 1
      %p552 = por %p550, %p551
      %p553 = scmp.ne.s32.totalorder %s542, %s543
      %p554 = scmp.eq.s32.totalorder %s60, 0
      %p555 = por %p553, %p554
      %p556 = scmp.ne.s32.totalorder %s542, %s543
      %p557 = scmp.eq.s32.totalorder %s61, 1
      %p558 = por %p556, %p557
      %p560 = scmp.ne.s32.totalorder %s543, %s559
      %p561 = scmp.eq.s32.totalorder %s61, 0
      %p562 = por %p560, %p561
      %s563 = ssub.s32 %s55, %s62
      %p564 = scmp.eq.s32.totalorder %s563, 0
      %s566 = sadd.s32 %s565, 1
      %s567 = scalar_select %p564, %s565, %s566
      %p570 = pneg %p564
      %p571 = scmp.eq.s32.totalorder %s55, 1
      %p572 = por %p570, %p571
      %p573 = scmp.ne.s32.totalorder %s565, %s568
      %p574 = scmp.eq.s32.totalorder %s55, 0
      %p575 = por %p573, %p574
      %p576 = scmp.ne.s32.totalorder %s565, %s568
      %p577 = scmp.eq.s32.totalorder %s60, 1
      %p578 = por %p576, %p577
      %p579 = scmp.ne.s32.totalorder %s568, %s569
      %p580 = scmp.eq.s32.totalorder %s60, 0
      %p581 = por %p579, %p580
      %p582 = scmp.ne.s32.totalorder %s568, %s569
      %p583 = scmp.eq.s32.totalorder %s61, 1
      %p584 = por %p582, %p583
      %p586 = scmp.ne.s32.totalorder %s569, %s585
      %p587 = scmp.eq.s32.totalorder %s61, 0
      %p588 = por %p586, %p587
      %s589 = ssub.s32 %s55, %s62
      %p590 = scmp.eq.s32.totalorder %s589, 0
      %s592 = sadd.s32 %s591, 1
      %s593 = scalar_select %p590, %s591, %s592
      %p596 = pneg %p590
      %p597 = scmp.eq.s32.totalorder %s55, 1
      %p598 = por %p596, %p597
      %p599 = scmp.ne.s32.totalorder %s591, %s594
      %p600 = scmp.eq.s32.totalorder %s55, 0
      %p601 = por %p599, %p600
      %p602 = scmp.ne.s32.totalorder %s591, %s594
      %p603 = scmp.eq.s32.totalorder %s60, 1
      %p604 = por %p602, %p603
      %p605 = scmp.ne.s32.totalorder %s594, %s595
      %p606 = scmp.eq.s32.totalorder %s60, 0
      %p607 = por %p605, %p606
      %p608 = scmp.ne.s32.totalorder %s594, %s595
      %p609 = scmp.eq.s32.totalorder %s61, 1
      %p610 = por %p608, %p609
      %p612 = scmp.ne.s32.totalorder %s595, %s611
      %p613 = scmp.eq.s32.totalorder %s61, 0
      %p614 = por %p612, %p613
      %s615 = ssub.s32 %s55, %s62
      %p616 = scmp.eq.s32.totalorder %s615, 0
      %s618 = sadd.s32 %s617, 1
      %s619 = scalar_select %p616, %s617, %s618
      %p622 = pneg %p616
      %p623 = scmp.eq.s32.totalorder %s55, 1
      %p624 = por %p622, %p623
      %p625 = scmp.ne.s32.totalorder %s617, %s620
      %p626 = scmp.eq.s32.totalorder %s55, 0
      %p627 = por %p625, %p626
      %p628 = scmp.ne.s32.totalorder %s617, %s620
      %p629 = scmp.eq.s32.totalorder %s60, 1
      %p630 = por %p628, %p629
      %p631 = scmp.ne.s32.totalorder %s620, %s621
      %p632 = scmp.eq.s32.totalorder %s60, 0
      %p633 = por %p631, %p632
      %p634 = scmp.ne.s32.totalorder %s620, %s621
      %p635 = scmp.eq.s32.totalorder %s61, 1
      %p636 = por %p634, %p635
      %p638 = scmp.ne.s32.totalorder %s621, %s637
      %p639 = scmp.eq.s32.totalorder %s61, 0
      %p640 = por %p638, %p639
      %s641 = ssub.s32 %s55, %s62
      %p642 = scmp.eq.s32.totalorder %s641, 0
      %s644 = sadd.s32 %s643, 1
      %s645 = scalar_select %p642, %s643, %s644
      %p648 = pneg %p642
      %p649 = scmp.eq.s32.totalorder %s55, 1
      %p650 = por %p648, %p649
      %p651 = scmp.ne.s32.totalorder %s643, %s646
      %p652 = scmp.eq.s32.totalorder %s55, 0
      %p653 = por %p651, %p652
      %p654 = scmp.ne.s32.totalorder %s643, %s646
      %p655 = scmp.eq.s32.totalorder %s60, 1
      %p656 = por %p654, %p655
      %p657 = scmp.ne.s32.totalorder %s646, %s647
      %p658 = scmp.eq.s32.totalorder %s60, 0
      %p659 = por %p657, %p658
      %p660 = scmp.ne.s32.totalorder %s646, %s647
      %p661 = scmp.eq.s32.totalorder %s61, 1
      %p662 = por %p660, %p661
      %p664 = scmp.ne.s32.totalorder %s647, %s663
      %p665 = scmp.eq.s32.totalorder %s61, 0
      %p666 = por %p664, %p665
      %s668 = sadd.s32 %s667, 1
      %p671 = scmp.eq.s32.totalorder %s55, 1
      %p672 = scmp.ne.s32.totalorder %s667, %s669
      %p673 = scmp.eq.s32.totalorder %s55, 0
      %p674 = por %p672, %p673
      %p675 = scmp.ne.s32.totalorder %s667, %s669
      %p676 = scmp.eq.s32.totalorder %s60, 1
      %p677 = por %p675, %p676
      %p678 = scmp.ne.s32.totalorder %s669, %s670
      %p679 = scmp.eq.s32.totalorder %s60, 0
      %p680 = por %p678, %p679
      %p681 = scmp.ne.s32.totalorder %s669, %s670
      %p682 = scmp.eq.s32.totalorder %s61, 1
      %p683 = por %p681, %p682
      %p685 = scmp.ne.s32.totalorder %s670, %s684
      %p686 = scmp.eq.s32.totalorder %s61, 0
      %p687 = por %p685, %p686
      %p688 = scmp.le.s32.totalorder 1, %s55
      %p689 = scmp.lt.s32.totalorder %s55, 3
      %p690 = pnand %p688, %p689
      %p691 = pneg %p690
      // Predicated region
      $region9: #{symbolic_regression_transformer.4} parent=5 // pred_check
        _
      $region10: #{symbolic_regression_transformer.4} parent=5 // pred_check_branch
        %693 = sbr.rel (%p690) target = $region12
      $region11: #{symbolic_regression_transformer.4} parent=5 // pred_region
        %s694 = ssub.s32 %s55, 1
        // Predicated region
        $region13: #{symbolic_regression_transformer.4} parent=11 // pred_check
          %p695 = pneg %p76
        $region14: #{symbolic_regression_transformer.4} parent=11 // pred_check_branch
          %697 = sbr.rel (%p695) target = $region16
        $region15: #{symbolic_regression_transformer.4} parent=11 // pred_region
          _
        $region16: #{symbolic_regression_transformer.4} parent=11 // pred_fallthru
          _
        // Predicated region
        $region17: #{symbolic_regression_transformer.4} parent=11 // pred_check
          %p698 = pneg %p97
        $region18: #{symbolic_regression_transformer.4} parent=11 // pred_check_branch
          %700 = sbr.rel (%p698) target = $region20
        $region19: #{symbolic_regression_transformer.4} parent=11 // pred_region
          _
        $region20: #{symbolic_regression_transformer.4} parent=11 // pred_fallthru
          _
        // Predicated region
        $region21: #{symbolic_regression_transformer.4} parent=11 // pred_check
          %p701 = pneg %p118
        $region22: #{symbolic_regression_transformer.4} parent=11 // pred_check_branch
          %703 = sbr.rel (%p701) target = $region24
        $region23: #{symbolic_regression_transformer.4} parent=11 // pred_region
          %s705 = ssub.s32 128, 128
          %706 = vsyncadd [#allocation3], %s705
          %s708 = sshll.u32 [#allocation2], 4
          %s709 = int_to_ptr.vmem [resolvable:$true] %s708
          %711 = dma.hbm_to_vmem [thread:$0]  %s2, 128, %s709, [#allocation3]
        $region24: #{symbolic_regression_transformer.4} parent=11 // pred_fallthru
          _
        // Predicated region
        $region25: #{symbolic_regression_transformer.4} parent=11 // pred_check
          %p712 = pneg %p139
        $region26: #{symbolic_regression_transformer.4} parent=11 // pred_check_branch
          %714 = sbr.rel (%p712) target = $region28
        $region27: #{symbolic_regression_transformer.4} parent=11 // pred_region
          _
        $region28: #{symbolic_regression_transformer.4} parent=11 // pred_fallthru
          _
      $region12: #{symbolic_regression_transformer.4} parent=5 // pred_fallthru
        _
      %p715 = scmp.lt.s32.totalorder %s55, 2
      // Predicated region
      $region29: #{symbolic_regression_transformer.4} parent=5 // pred_check
        %p716 = pneg %p715
      $region30: #{symbolic_regression_transformer.4} parent=5 // pred_check_branch
        %718 = sbr.rel (%p716) target = $region32
      $region31: #{symbolic_regression_transformer.4} parent=5 // pred_region
        // Predicated region
        $region33: #{symbolic_regression_transformer.4} parent=31 // pred_check
          %p719 = pneg %p159
        $region34: #{symbolic_regression_transformer.4} parent=31 // pred_check_branch
          %721 = sbr.rel (%p719) target = $region36
        $region35: #{symbolic_regression_transformer.4} parent=31 // pred_region
          %p722 = scmp.lt.s32.totalorder %s55, 1
          %s723 = scalar_select %p722, %s55, 1
          %s724 = smul.addr %s723, 48
          %s725 = smul.addr %s724, 4
          %s726 = scalar_lea.vmem %s4, %s725
        $region36: #{symbolic_regression_transformer.4} parent=31 // pred_fallthru
          _
        // Predicated region
        $region37: #{symbolic_regression_transformer.4} parent=31 // pred_check
          %p727 = pneg %p185
        $region38: #{symbolic_regression_transformer.4} parent=31 // pred_check_branch
          %729 = sbr.rel (%p727) target = $region40
        $region39: #{symbolic_regression_transformer.4} parent=31 // pred_region
          %s730 = sand.u32 %s55, 1
          %s731 = scalar_lea.sflag [#allocation5], %s730
          %s732 = sand.u32 %s175, 1
          %s733 = smul.addr %s732, 3
          %s734 = scalar_lea.vmem [#allocation4], %s733
          %s736 = ssub.s32 48, 48
          %737 = vsyncadd %s731, %s736
          %s738 = smul.addr %s55, 3
          %s739 = smul.addr %s738, 16
          %s740 = scalar_lea.hbm %s5, %s739
          %s742 = sshll.u32 %s734, 4
          %s743 = int_to_ptr.vmem [resolvable:$true] %s742
          %745 = dma.hbm_to_vmem [thread:$0]  %s740, 48, %s743, %s731
        $region40: #{symbolic_regression_transformer.4} parent=31 // pred_fallthru
          _
        // Predicated region
        $region41: #{symbolic_regression_transformer.4} parent=31 // pred_check
          %p746 = pneg %p211
        $region42: #{symbolic_regression_transformer.4} parent=31 // pred_check_branch
          %748 = sbr.rel (%p746) target = $region44
        $region43: #{symbolic_regression_transformer.4} parent=31 // pred_region
          %s749 = sand.u32 %s55, 1
          %s750 = scalar_lea.sflag [#allocation5], %s749
          %s751 = sand.u32 %s201, 1
          %s752 = smul.addr %s751, 64
          %s753 = scalar_lea.vmem [#allocation6], %s752
          %s755 = ssub.s32 1024, 1024
          %756 = vsyncadd %s750, %s755
          %s757 = smul.addr %s55, 16
          %s758 = smul.addr %s757, 64
          %s759 = scalar_lea.hbm %s6, %s758
          %s760 = sshll.u32 %s753, 4
          %s761 = int_to_ptr.vmem [resolvable:$true] %s760
          %766 = dma.hbm_to_vmem [thread:$0]  %s759, 1024, %s761, %s750, 64, 64, 4
        $region44: #{symbolic_regression_transformer.4} parent=31 // pred_fallthru
          _
        // Predicated region
        $region45: #{symbolic_regression_transformer.4} parent=31 // pred_check
          %p767 = pneg %p237
        $region46: #{symbolic_regression_transformer.4} parent=31 // pred_check_branch
          %769 = sbr.rel (%p767) target = $region48
        $region47: #{symbolic_regression_transformer.4} parent=31 // pred_region
          %s770 = sand.u32 %s55, 1
          %s771 = scalar_lea.sflag [#allocation8], %s770
          %s772 = sand.u32 %s227, 1
          %s773 = scalar_lea.vmem [#allocation7], %s772
          %s775 = ssub.s32 16, 16
          %776 = vsyncadd %s771, %s775
          %s777 = smul.addr %s55, 16
          %s778 = scalar_lea.hbm %s7, %s777
          %s780 = sshll.u32 %s773, 4
          %s781 = int_to_ptr.vmem [resolvable:$true] %s780
          %783 = dma.hbm_to_vmem [thread:$0]  %s778, 16, %s781, %s771
        $region48: #{symbolic_regression_transformer.4} parent=31 // pred_fallthru
          _
        // Predicated region
        $region49: #{symbolic_regression_transformer.4} parent=31 // pred_check
          %p784 = pneg %p263
        $region50: #{symbolic_regression_transformer.4} parent=31 // pred_check_branch
          %786 = sbr.rel (%p784) target = $region52
        $region51: #{symbolic_regression_transformer.4} parent=31 // pred_region
          %s787 = sand.u32 %s55, 1
          %s788 = scalar_lea.sflag [#allocation8], %s787
          %s789 = sand.u32 %s253, 1
          %s790 = scalar_lea.vmem [#allocation9], %s789
          %s792 = ssub.s32 16, 16
          %793 = vsyncadd %s788, %s792
          %s794 = smul.addr %s55, 16
          %s795 = scalar_lea.hbm %s8, %s794
          %s797 = sshll.u32 %s790, 4
          %s798 = int_to_ptr.vmem [resolvable:$true] %s797
          %800 = dma.hbm_to_vmem [thread:$0]  %s795, 16, %s798, %s788
        $region52: #{symbolic_regression_transformer.4} parent=31 // pred_fallthru
          _
        // Predicated region
        $region53: #{symbolic_regression_transformer.4} parent=31 // pred_check
          %p801 = pneg %p289
        $region54: #{symbolic_regression_transformer.4} parent=31 // pred_check_branch
          %803 = sbr.rel (%p801) target = $region56
        $region55: #{symbolic_regression_transformer.4} parent=31 // pred_region
          %s804 = sand.u32 %s55, 1
          %s805 = scalar_lea.sflag [#allocation11], %s804
          %s806 = sand.u32 %s279, 1
          %s807 = scalar_lea.vmem [#allocation10], %s806
          %s809 = ssub.s32 16, 16
          %810 = vsyncadd %s805, %s809
          %s811 = smul.addr %s55, 16
          %s812 = scalar_lea.hbm %s9, %s811
          %s814 = sshll.u32 %s807, 4
          %s815 = int_to_ptr.vmem [resolvable:$true] %s814
          %817 = dma.hbm_to_vmem [thread:$0]  %s812, 16, %s815, %s805
        $region56: #{symbolic_regression_transformer.4} parent=31 // pred_fallthru
          _
        // Predicated region
        $region57: #{symbolic_regression_transformer.4} parent=31 // pred_check
          %p818 = pneg %p315
        $region58: #{symbolic_regression_transformer.4} parent=31 // pred_check_branch
          %820 = sbr.rel (%p818) target = $region60
        $region59: #{symbolic_regression_transformer.4} parent=31 // pred_region
          %p821 = scmp.lt.s32.totalorder %s55, 1
          %s822 = scalar_select %p821, %s55, 1
          %s823 = smul.addr %s822, 16
          %s824 = smul.addr %s823, 4
          %s825 = scalar_lea.vmem %s10, %s824
        $region60: #{symbolic_regression_transformer.4} parent=31 // pred_fallthru
          _
        // Predicated region
        $region61: #{symbolic_regression_transformer.4} parent=31 // pred_check
          %p826 = pneg %p341
        $region62: #{symbolic_regression_transformer.4} parent=31 // pred_check_branch
          %828 = sbr.rel (%p826) target = $region64
        $region63: #{symbolic_regression_transformer.4} parent=31 // pred_region
          %p829 = scmp.lt.s32.totalorder %s55, 1
          %s830 = scalar_select %p829, %s55, 1
          %s831 = scalar_lea.vmem %s11, %s830
        $region64: #{symbolic_regression_transformer.4} parent=31 // pred_fallthru
          _
        // Predicated region
        $region65: #{symbolic_regression_transformer.4} parent=31 // pred_check
          %p832 = pneg %p367
        $region66: #{symbolic_regression_transformer.4} parent=31 // pred_check_branch
          %834 = sbr.rel (%p832) target = $region68
        $region67: #{symbolic_regression_transformer.4} parent=31 // pred_region
          %s835 = sand.u32 %s55, 1
          %s836 = scalar_lea.sflag [#allocation11], %s835
          %s837 = sand.u32 %s357, 1
          %s838 = smul.addr %s837, 128
          %s839 = scalar_lea.vmem [#allocation12], %s838
          %s841 = ssub.s32 2048, 2048
          %842 = vsyncadd %s836, %s841
          %s843 = smul.addr %s55, 32
          %s844 = smul.addr %s843, 64
          %s845 = scalar_lea.hbm %s12, %s844
          %s846 = sshll.u32 %s839, 4
          %s847 = int_to_ptr.vmem [resolvable:$true] %s846
          %852 = dma.hbm_to_vmem [thread:$0]  %s845, 2048, %s847, %s836, 128, 128, 8
        $region68: #{symbolic_regression_transformer.4} parent=31 // pred_fallthru
          _
        // Predicated region
        $region69: #{symbolic_regression_transformer.4} parent=31 // pred_check
          %p853 = pneg %p393
        $region70: #{symbolic_regression_transformer.4} parent=31 // pred_check_branch
          %855 = sbr.rel (%p853) target = $region72
        $region71: #{symbolic_regression_transformer.4} parent=31 // pred_region
          %p856 = scmp.lt.s32.totalorder %s55, 1
          %s857 = scalar_select %p856, %s55, 1
          %s858 = smul.addr %s857, 2
          %s859 = scalar_lea.vmem %s13, %s858
        $region72: #{symbolic_regression_transformer.4} parent=31 // pred_fallthru
          _
        // Predicated region
        $region73: #{symbolic_regression_transformer.4} parent=31 // pred_check
          %p860 = pneg %p419
        $region74: #{symbolic_regression_transformer.4} parent=31 // pred_check_branch
          %862 = sbr.rel (%p860) target = $region76
        $region75: #{symbolic_regression_transformer.4} parent=31 // pred_region
          %s863 = sand.u32 %s55, 1
          %s864 = scalar_lea.sflag [#allocation14], %s863
          %s865 = sand.u32 %s409, 1
          %s866 = smul.addr %s865, 64
          %s867 = scalar_lea.vmem [#allocation13], %s866
          %s869 = ssub.s32 1024, 1024
          %870 = vsyncadd %s864, %s869
          %s871 = smul.addr %s55, 16
          %s872 = smul.addr %s871, 64
          %s873 = scalar_lea.hbm %s14, %s872
          %s874 = sshll.u32 %s867, 4
          %s875 = int_to_ptr.vmem [resolvable:$true] %s874
          %880 = dma.hbm_to_vmem [thread:$0]  %s873, 1024, %s875, %s864, 64, 64, 4
        $region76: #{symbolic_regression_transformer.4} parent=31 // pred_fallthru
          _
        // Predicated region
        $region77: #{symbolic_regression_transformer.4} parent=31 // pred_check
          %p881 = pneg %p445
        $region78: #{symbolic_regression_transformer.4} parent=31 // pred_check_branch
          %883 = sbr.rel (%p881) target = $region80
        $region79: #{symbolic_regression_transformer.4} parent=31 // pred_region
          %p884 = scmp.lt.s32.totalorder %s55, 1
          %s885 = scalar_select %p884, %s55, 1
          %s886 = scalar_lea.vmem %s15, %s885
        $region80: #{symbolic_regression_transformer.4} parent=31 // pred_fallthru
          _
        // Predicated region
        $region81: #{symbolic_regression_transformer.4} parent=31 // pred_check
          %p887 = pneg %p471
        $region82: #{symbolic_regression_transformer.4} parent=31 // pred_check_branch
          %889 = sbr.rel (%p887) target = $region84
        $region83: #{symbolic_regression_transformer.4} parent=31 // pred_region
          %s890 = sand.u32 %s55, 1
          %s891 = scalar_lea.sflag [#allocation14], %s890
          %s892 = sand.u32 %s461, 1
          %s893 = scalar_lea.vmem [#allocation15], %s892
          %s895 = ssub.s32 16, 16
          %896 = vsyncadd %s891, %s895
          %s897 = smul.addr %s55, 16
          %s898 = scalar_lea.hbm %s16, %s897
          %s900 = sshll.u32 %s893, 4
          %s901 = int_to_ptr.vmem [resolvable:$true] %s900
          %903 = dma.hbm_to_vmem [thread:$0]  %s898, 16, %s901, %s891
        $region84: #{symbolic_regression_transformer.4} parent=31 // pred_fallthru
          _
        // Predicated region
        $region85: #{symbolic_regression_transformer.4} parent=31 // pred_check
          %p904 = pneg %p497
        $region86: #{symbolic_regression_transformer.4} parent=31 // pred_check_branch
          %906 = sbr.rel (%p904) target = $region88
        $region87: #{symbolic_regression_transformer.4} parent=31 // pred_region
          %s907 = sand.u32 %s55, 1
          %s908 = scalar_lea.sflag [#allocation17], %s907
          %s909 = sand.u32 %s487, 1
          %s910 = scalar_lea.vmem [#allocation16], %s909
          %s912 = ssub.s32 16, 16
          %913 = vsyncadd %s908, %s912
          %s914 = smul.addr %s55, 16
          %s915 = scalar_lea.hbm %s17, %s914
          %s917 = sshll.u32 %s910, 4
          %s918 = int_to_ptr.vmem [resolvable:$true] %s917
          %920 = dma.hbm_to_vmem [thread:$0]  %s915, 16, %s918, %s908
        $region88: #{symbolic_regression_transformer.4} parent=31 // pred_fallthru
          _
        // Predicated region
        $region89: #{symbolic_regression_transformer.4} parent=31 // pred_check
          %p921 = pneg %p523
        $region90: #{symbolic_regression_transformer.4} parent=31 // pred_check_branch
          %923 = sbr.rel (%p921) target = $region92
        $region91: #{symbolic_regression_transformer.4} parent=31 // pred_region
          %s924 = sand.u32 %s55, 1
          %s925 = scalar_lea.sflag [#allocation17], %s924
          %s926 = sand.u32 %s513, 1
          %s927 = smul.addr %s926, 128
          %s928 = scalar_lea.vmem [#allocation18], %s927
          %s930 = ssub.s32 2048, 2048
          %931 = vsyncadd %s925, %s930
          %s932 = smul.addr %s55, 32
          %s933 = smul.addr %s932, 64
          %s934 = scalar_lea.hbm %s18, %s933
          %s935 = sshll.u32 %s928, 4
          %s936 = int_to_ptr.vmem [resolvable:$true] %s935
          %941 = dma.hbm_to_vmem [thread:$0]  %s934, 2048, %s936, %s925, 128, 128, 8
        $region92: #{symbolic_regression_transformer.4} parent=31 // pred_fallthru
          _
        // Predicated region
        $region93: #{symbolic_regression_transformer.4} parent=31 // pred_check
          %p942 = pneg %p549
        $region94: #{symbolic_regression_transformer.4} parent=31 // pred_check_branch
          %944 = sbr.rel (%p942) target = $region96
        $region95: #{symbolic_regression_transformer.4} parent=31 // pred_region
          %s945 = sand.u32 %s55, 1
          %s946 = scalar_lea.sflag [#allocation20], %s945
          %s947 = sand.u32 %s539, 1
          %s948 = smul.addr %s947, 2
          %s949 = scalar_lea.vmem [#allocation19], %s948
          %s951 = ssub.s32 32, 32
          %952 = vsyncadd %s946, %s951
          %s953 = smul.addr %s55, 2
          %s954 = smul.addr %s953, 16
          %s955 = scalar_lea.hbm %s19, %s954
          %s957 = sshll.u32 %s949, 4
          %s958 = int_to_ptr.vmem [resolvable:$true] %s957
          %960 = dma.hbm_to_vmem [thread:$0]  %s955, 32, %s958, %s946
        $region96: #{symbolic_regression_transformer.4} parent=31 // pred_fallthru
          _
        // Predicated region
        $region97: #{symbolic_regression_transformer.4} parent=31 // pred_check
          %p961 = pneg %p575
        $region98: #{symbolic_regression_transformer.4} parent=31 // pred_check_branch
          %963 = sbr.rel (%p961) target = $region100
        $region99: #{symbolic_regression_transformer.4} parent=31 // pred_region
          %s964 = sand.u32 %s55, 1
          %s965 = scalar_lea.sflag [#allocation20], %s964
          %s966 = sand.u32 %s565, 1
          %s967 = smul.addr %s966, 128
          %s968 = scalar_lea.vmem [#allocation21], %s967
          %s970 = ssub.s32 2048, 2048
          %971 = vsyncadd %s965, %s970
          %s972 = smul.addr %s55, 32
          %s973 = smul.addr %s972, 64
          %s974 = scalar_lea.hbm %s20, %s973
          %s975 = sshll.u32 %s968, 4
          %s976 = int_to_ptr.vmem [resolvable:$true] %s975
          %981 = dma.hbm_to_vmem [thread:$0]  %s974, 2048, %s976, %s965, 64, 64, 4
        $region100: #{symbolic_regression_transformer.4} parent=31 // pred_fallthru
          _
        // Predicated region
        $region101: #{symbolic_regression_transformer.4} parent=31 // pred_check
          %p982 = pneg %p601
        $region102: #{symbolic_regression_transformer.4} parent=31 // pred_check_branch
          %984 = sbr.rel (%p982) target = $region104
        $region103: #{symbolic_regression_transformer.4} parent=31 // pred_region
          %s985 = sand.u32 %s55, 1
          %s986 = scalar_lea.sflag [#allocation23], %s985
          %s987 = sand.u32 %s591, 1
          %s988 = scalar_lea.vmem [#allocation22], %s987
          %s990 = ssub.s32 16, 16
          %991 = vsyncadd %s986, %s990
          %s992 = smul.addr %s55, 16
          %s993 = scalar_lea.hbm %s21, %s992
          %s995 = sshll.u32 %s988, 4
          %s996 = int_to_ptr.vmem [resolvable:$true] %s995
          %998 = dma.hbm_to_vmem [thread:$0]  %s993, 16, %s996, %s986
        $region104: #{symbolic_regression_transformer.4} parent=31 // pred_fallthru
          _
        // Predicated region
        $region105: #{symbolic_regression_transformer.4} parent=31 // pred_check
          %p999 = pneg %p627
        $region106: #{symbolic_regression_transformer.4} parent=31 // pred_check_branch
          %1001 = sbr.rel (%p999) target = $region108
        $region107: #{symbolic_regression_transformer.4} parent=31 // pred_region
          %s1002 = sand.u32 %s55, 1
          %s1003 = scalar_lea.sflag [#allocation23], %s1002
          %s1004 = sand.u32 %s617, 1
          %s1005 = scalar_lea.vmem [#allocation24], %s1004
          %s1007 = ssub.s32 16, 16
          %1008 = vsyncadd %s1003, %s1007
          %s1009 = smul.addr %s55, 16
          %s1010 = scalar_lea.hbm %s22, %s1009
          %s1012 = sshll.u32 %s1005, 4
          %s1013 = int_to_ptr.vmem [resolvable:$true] %s1012
          %1015 = dma.hbm_to_vmem [thread:$0]  %s1010, 16, %s1013, %s1003
        $region108: #{symbolic_regression_transformer.4} parent=31 // pred_fallthru
          _
        // Predicated region
        $region109: #{symbolic_regression_transformer.4} parent=31 // pred_check
          %p1016 = pneg %p653
        $region110: #{symbolic_regression_transformer.4} parent=31 // pred_check_branch
          %1018 = sbr.rel (%p1016) target = $region112
        $region111: #{symbolic_regression_transformer.4} parent=31 // pred_region
          %s1019 = sand.u32 %s643, 1
          %s1020 = scalar_lea.sflag [#allocation26], %s1019
          %s1021 = sand.u32 %s643, 1
          %s1022 = scalar_lea.vmem [#allocation25], %s1021
          %s1024 = ssub.s32 16, 16
          %1025 = vsyncadd %s1020, %s1024
          %s1026 = smul.addr %s55, 16
          %s1027 = scalar_lea.hbm %s23, %s1026
          %s1029 = sshll.u32 %s1022, 4
          %s1030 = int_to_ptr.vmem [resolvable:$true] %s1029
          %1032 = dma.hbm_to_vmem [thread:$0]  %s1027, 16, %s1030, %s1020
        $region112: #{symbolic_regression_transformer.4} parent=31 // pred_fallthru
          _
      $region32: #{symbolic_regression_transformer.4} parent=5 // pred_fallthru
        _
      %p1033 = scmp.le.s32.totalorder 1, %s55
      %p1034 = scmp.lt.s32.totalorder %s55, 3
      %p1035 = pnand %p1033, %p1034
      %p1036 = pneg %p1035
      // Predicated region
      $region113: #{symbolic_regression_transformer.4} parent=5 // pred_check
        _
      $region114: #{symbolic_regression_transformer.4} parent=5 // pred_check_branch
        %1038 = sbr.rel (%p1035) target = $region116
      $region115: #{symbolic_regression_transformer.4} parent=5 // pred_region
        %s1039 = ssub.s32 %s55, 1
        // Predicated region
        $region117: #{symbolic_regression_transformer.4} parent=115 // pred_check
          %p1040 = pneg %p118
        $region118: #{symbolic_regression_transformer.4} parent=115 // pred_check_branch
          %1042 = sbr.rel (%p1040) target = $region120
        $region119: #{symbolic_regression_transformer.4} parent=115 // pred_region
          %1043 = dma.done [#allocation3], 128
        $region120: #{symbolic_regression_transformer.4} parent=115 // pred_fallthru
          _
        %s1044 = sand.u32 %s60, 1
        %s1045 = scalar_lea.sflag [#allocation5], %s1044
        %s1046 = sand.u32 %s178, 1
        %s1047 = smul.addr %s1046, 3
        %s1048 = scalar_lea.vmem [#allocation4], %s1047
        // Predicated region
        $region121: #{symbolic_regression_transformer.4} parent=115 // pred_check
          %p1049 = pneg %p191
        $region122: #{symbolic_regression_transformer.4} parent=115 // pred_check_branch
          %1051 = sbr.rel (%p1049) target = $region124
        $region123: #{symbolic_regression_transformer.4} parent=115 // pred_region
          %1052 = dma.done %s1045, 48
        $region124: #{symbolic_regression_transformer.4} parent=115 // pred_fallthru
          _
        %s1053 = sand.u32 %s60, 1
        %s1054 = scalar_lea.sflag [#allocation5], %s1053
        %s1055 = sand.u32 %s204, 1
        %s1056 = smul.addr %s1055, 64
        %s1057 = scalar_lea.vmem [#allocation6], %s1056
        // Predicated region
        $region125: #{symbolic_regression_transformer.4} parent=115 // pred_check
          %p1058 = pneg %p217
        $region126: #{symbolic_regression_transformer.4} parent=115 // pred_check_branch
          %1060 = sbr.rel (%p1058) target = $region128
        $region127: #{symbolic_regression_transformer.4} parent=115 // pred_region
          %1061 = dma.done %s1054, 1024
        $region128: #{symbolic_regression_transformer.4} parent=115 // pred_fallthru
          _
        %s1062 = sand.u32 %s60, 1
        %s1063 = scalar_lea.sflag [#allocation8], %s1062
        %s1064 = sand.u32 %s230, 1
        %s1065 = scalar_lea.vmem [#allocation7], %s1064
        // Predicated region
        $region129: #{symbolic_regression_transformer.4} parent=115 // pred_check
          %p1066 = pneg %p243
        $region130: #{symbolic_regression_transformer.4} parent=115 // pred_check_branch
          %1068 = sbr.rel (%p1066) target = $region132
        $region131: #{symbolic_regression_transformer.4} parent=115 // pred_region
          %1069 = dma.done %s1063, 16
        $region132: #{symbolic_regression_transformer.4} parent=115 // pred_fallthru
          _
        %s1070 = sand.u32 %s60, 1
        %s1071 = scalar_lea.sflag [#allocation8], %s1070
        %s1072 = sand.u32 %s256, 1
        %s1073 = scalar_lea.vmem [#allocation9], %s1072
        // Predicated region
        $region133: #{symbolic_regression_transformer.4} parent=115 // pred_check
          %p1074 = pneg %p269
        $region134: #{symbolic_regression_transformer.4} parent=115 // pred_check_branch
          %1076 = sbr.rel (%p1074) target = $region136
        $region135: #{symbolic_regression_transformer.4} parent=115 // pred_region
          %1077 = dma.done %s1071, 16
        $region136: #{symbolic_regression_transformer.4} parent=115 // pred_fallthru
          _
        %s1078 = sand.u32 %s60, 1
        %s1079 = scalar_lea.sflag [#allocation11], %s1078
        %s1080 = sand.u32 %s282, 1
        %s1081 = scalar_lea.vmem [#allocation10], %s1080
        // Predicated region
        $region137: #{symbolic_regression_transformer.4} parent=115 // pred_check
          %p1082 = pneg %p295
        $region138: #{symbolic_regression_transformer.4} parent=115 // pred_check_branch
          %1084 = sbr.rel (%p1082) target = $region140
        $region139: #{symbolic_regression_transformer.4} parent=115 // pred_region
          %1085 = dma.done %s1079, 16
        $region140: #{symbolic_regression_transformer.4} parent=115 // pred_fallthru
          _
        %s1086 = sand.u32 %s60, 1
        %s1087 = scalar_lea.sflag [#allocation11], %s1086
        %s1088 = sand.u32 %s360, 1
        %s1089 = smul.addr %s1088, 128
        %s1090 = scalar_lea.vmem [#allocation12], %s1089
        // Predicated region
        $region141: #{symbolic_regression_transformer.4} parent=115 // pred_check
          %p1091 = pneg %p373
        $region142: #{symbolic_regression_transformer.4} parent=115 // pred_check_branch
          %1093 = sbr.rel (%p1091) target = $region144
        $region143: #{symbolic_regression_transformer.4} parent=115 // pred_region
          %1094 = dma.done %s1087, 2048
        $region144: #{symbolic_regression_transformer.4} parent=115 // pred_fallthru
          _
        %s1095 = sand.u32 %s60, 1
        %s1096 = scalar_lea.sflag [#allocation14], %s1095
        %s1097 = sand.u32 %s412, 1
        %s1098 = smul.addr %s1097, 64
        %s1099 = scalar_lea.vmem [#allocation13], %s1098
        // Predicated region
        $region145: #{symbolic_regression_transformer.4} parent=115 // pred_check
          %p1100 = pneg %p425
        $region146: #{symbolic_regression_transformer.4} parent=115 // pred_check_branch
          %1102 = sbr.rel (%p1100) target = $region148
        $region147: #{symbolic_regression_transformer.4} parent=115 // pred_region
          %1103 = dma.done %s1096, 1024
        $region148: #{symbolic_regression_transformer.4} parent=115 // pred_fallthru
          _
        %s1104 = sand.u32 %s60, 1
        %s1105 = scalar_lea.sflag [#allocation14], %s1104
        %s1106 = sand.u32 %s464, 1
        %s1107 = scalar_lea.vmem [#allocation15], %s1106
        // Predicated region
        $region149: #{symbolic_regression_transformer.4} parent=115 // pred_check
          %p1108 = pneg %p477
        $region150: #{symbolic_regression_transformer.4} parent=115 // pred_check_branch
          %1110 = sbr.rel (%p1108) target = $region152
        $region151: #{symbolic_regression_transformer.4} parent=115 // pred_region
          %1111 = dma.done %s1105, 16
        $region152: #{symbolic_regression_transformer.4} parent=115 // pred_fallthru
          _
        %s1112 = sand.u32 %s60, 1
        %s1113 = scalar_lea.sflag [#allocation17], %s1112
        %s1114 = sand.u32 %s490, 1
        %s1115 = scalar_lea.vmem [#allocation16], %s1114
        // Predicated region
        $region153: #{symbolic_regression_transformer.4} parent=115 // pred_check
          %p1116 = pneg %p503
        $region154: #{symbolic_regression_transformer.4} parent=115 // pred_check_branch
          %1118 = sbr.rel (%p1116) target = $region156
        $region155: #{symbolic_regression_transformer.4} parent=115 // pred_region
          %1119 = dma.done %s1113, 16
        $region156: #{symbolic_regression_transformer.4} parent=115 // pred_fallthru
          _
        %s1120 = sand.u32 %s60, 1
        %s1121 = scalar_lea.sflag [#allocation17], %s1120
        %s1122 = sand.u32 %s516, 1
        %s1123 = smul.addr %s1122, 128
        %s1124 = scalar_lea.vmem [#allocation18], %s1123
        // Predicated region
        $region157: #{symbolic_regression_transformer.4} parent=115 // pred_check
          %p1125 = pneg %p529
        $region158: #{symbolic_regression_transformer.4} parent=115 // pred_check_branch
          %1127 = sbr.rel (%p1125) target = $region160
        $region159: #{symbolic_regression_transformer.4} parent=115 // pred_region
          %1128 = dma.done %s1121, 2048
        $region160: #{symbolic_regression_transformer.4} parent=115 // pred_fallthru
          _
        %s1129 = sand.u32 %s60, 1
        %s1130 = scalar_lea.sflag [#allocation20], %s1129
        %s1131 = sand.u32 %s542, 1
        %s1132 = smul.addr %s1131, 2
        %s1133 = scalar_lea.vmem [#allocation19], %s1132
        // Predicated region
        $region161: #{symbolic_regression_transformer.4} parent=115 // pred_check
          %p1134 = pneg %p555
        $region162: #{symbolic_regression_transformer.4} parent=115 // pred_check_branch
          %1136 = sbr.rel (%p1134) target = $region164
        $region163: #{symbolic_regression_transformer.4} parent=115 // pred_region
          %1137 = dma.done %s1130, 32
        $region164: #{symbolic_regression_transformer.4} parent=115 // pred_fallthru
          _
        %s1138 = sand.u32 %s60, 1
        %s1139 = scalar_lea.sflag [#allocation20], %s1138
        %s1140 = sand.u32 %s568, 1
        %s1141 = smul.addr %s1140, 128
        %s1142 = scalar_lea.vmem [#allocation21], %s1141
        // Predicated region
        $region165: #{symbolic_regression_transformer.4} parent=115 // pred_check
          %p1143 = pneg %p581
        $region166: #{symbolic_regression_transformer.4} parent=115 // pred_check_branch
          %1145 = sbr.rel (%p1143) target = $region168
        $region167: #{symbolic_regression_transformer.4} parent=115 // pred_region
          %1146 = dma.done %s1139, 2048
        $region168: #{symbolic_regression_transformer.4} parent=115 // pred_fallthru
          _
        %s1147 = sand.u32 %s60, 1
        %s1148 = scalar_lea.sflag [#allocation23], %s1147
        %s1149 = sand.u32 %s594, 1
        %s1150 = scalar_lea.vmem [#allocation22], %s1149
        // Predicated region
        $region169: #{symbolic_regression_transformer.4} parent=115 // pred_check
          %p1151 = pneg %p607
        $region170: #{symbolic_regression_transformer.4} parent=115 // pred_check_branch
          %1153 = sbr.rel (%p1151) target = $region172
        $region171: #{symbolic_regression_transformer.4} parent=115 // pred_region
          %1154 = dma.done %s1148, 16
        $region172: #{symbolic_regression_transformer.4} parent=115 // pred_fallthru
          _
        %s1155 = sand.u32 %s60, 1
        %s1156 = scalar_lea.sflag [#allocation23], %s1155
        %s1157 = sand.u32 %s620, 1
        %s1158 = scalar_lea.vmem [#allocation24], %s1157
        // Predicated region
        $region173: #{symbolic_regression_transformer.4} parent=115 // pred_check
          %p1159 = pneg %p633
        $region174: #{symbolic_regression_transformer.4} parent=115 // pred_check_branch
          %1161 = sbr.rel (%p1159) target = $region176
        $region175: #{symbolic_regression_transformer.4} parent=115 // pred_region
          %1162 = dma.done %s1156, 16
        $region176: #{symbolic_regression_transformer.4} parent=115 // pred_fallthru
          _
        %s1163 = sand.u32 %s646, 1
        %s1164 = scalar_lea.sflag [#allocation26], %s1163
        %s1165 = sand.u32 %s646, 1
        %s1166 = scalar_lea.vmem [#allocation25], %s1165
        // Predicated region
        $region177: #{symbolic_regression_transformer.4} parent=115 // pred_check
          %p1167 = pneg %p659
        $region178: #{symbolic_regression_transformer.4} parent=115 // pred_check_branch
          %1169 = sbr.rel (%p1167) target = $region180
        $region179: #{symbolic_regression_transformer.4} parent=115 // pred_region
          %1170 = dma.done %s1164, 16
        $region180: #{symbolic_regression_transformer.4} parent=115 // pred_fallthru
          _
        %p1171 = pneg %p76
        %p1172 = pneg %p73
        %p1173 = pneg %p97
        %p1174 = pneg %p94
        %p1175 = pneg %p118
        %p1176 = pneg %p115
        %p1177 = pneg %p139
        %p1178 = pneg %p136
        %p1179 = scmp.lt.s32.totalorder %s60, 1
        %s1180 = scalar_select %p1179, %s60, 1
        %s1181 = smul.addr %s1180, 48
        %s1182 = smul.addr %s1181, 4
        %s1183 = scalar_lea.vmem %s4, %s1182
        %p1184 = pneg %p165
        %p1185 = pneg %p162
        %s1186 = sand.u32 %s60, 1
        %s1187 = scalar_lea.sflag [#allocation5], %s1186
        %s1188 = sand.u32 %s178, 1
        %s1189 = smul.addr %s1188, 3
        %s1190 = scalar_lea.vmem [#allocation4], %s1189
        %p1191 = pneg %p191
        %p1192 = pneg %p188
        %s1193 = sand.u32 %s60, 1
        %s1194 = scalar_lea.sflag [#allocation5], %s1193
        %s1195 = sand.u32 %s204, 1
        %s1196 = smul.addr %s1195, 64
        %s1197 = scalar_lea.vmem [#allocation6], %s1196
        %p1198 = pneg %p217
        %p1199 = pneg %p214
        %s1200 = sand.u32 %s60, 1
        %s1201 = scalar_lea.sflag [#allocation8], %s1200
        %s1202 = sand.u32 %s230, 1
        %s1203 = scalar_lea.vmem [#allocation7], %s1202
        %p1204 = pneg %p243
        %p1205 = pneg %p240
        %s1206 = sand.u32 %s60, 1
        %s1207 = scalar_lea.sflag [#allocation8], %s1206
        %s1208 = sand.u32 %s256, 1
        %s1209 = scalar_lea.vmem [#allocation9], %s1208
        %p1210 = pneg %p269
        %p1211 = pneg %p266
        %s1212 = sand.u32 %s60, 1
        %s1213 = scalar_lea.sflag [#allocation11], %s1212
        %s1214 = sand.u32 %s282, 1
        %s1215 = scalar_lea.vmem [#allocation10], %s1214
        %p1216 = pneg %p295
        %p1217 = pneg %p292
        %p1218 = scmp.lt.s32.totalorder %s60, 1
        %s1219 = scalar_select %p1218, %s60, 1
        %s1220 = smul.addr %s1219, 16
        %s1221 = smul.addr %s1220, 4
        %s1222 = scalar_lea.vmem %s10, %s1221
        %p1223 = pneg %p321
        %p1224 = pneg %p318
        %p1225 = scmp.lt.s32.totalorder %s60, 1
        %s1226 = scalar_select %p1225, %s60, 1
        %s1227 = scalar_lea.vmem %s11, %s1226
        %p1228 = pneg %p347
        %p1229 = pneg %p344
        %s1230 = sand.u32 %s60, 1
        %s1231 = scalar_lea.sflag [#allocation11], %s1230
        %s1232 = sand.u32 %s360, 1
        %s1233 = smul.addr %s1232, 128
        %s1234 = scalar_lea.vmem [#allocation12], %s1233
        %p1235 = pneg %p373
        %p1236 = pneg %p370
        %p1237 = scmp.lt.s32.totalorder %s60, 1
        %s1238 = scalar_select %p1237, %s60, 1
        %s1239 = smul.addr %s1238, 2
        %s1240 = scalar_lea.vmem %s13, %s1239
        %p1241 = pneg %p399
        %p1242 = pneg %p396
        %s1243 = sand.u32 %s60, 1
        %s1244 = scalar_lea.sflag [#allocation14], %s1243
        %s1245 = sand.u32 %s412, 1
        %s1246 = smul.addr %s1245, 64
        %s1247 = scalar_lea.vmem [#allocation13], %s1246
        %p1248 = pneg %p425
        %p1249 = pneg %p422
        %p1250 = scmp.lt.s32.totalorder %s60, 1
        %s1251 = scalar_select %p1250, %s60, 1
        %s1252 = scalar_lea.vmem %s15, %s1251
        %p1253 = pneg %p451
        %p1254 = pneg %p448
        %s1255 = sand.u32 %s60, 1
        %s1256 = scalar_lea.sflag [#allocation14], %s1255
        %s1257 = sand.u32 %s464, 1
        %s1258 = scalar_lea.vmem [#allocation15], %s1257
        %p1259 = pneg %p477
        %p1260 = pneg %p474
        %s1261 = sand.u32 %s60, 1
        %s1262 = scalar_lea.sflag [#allocation17], %s1261
        %s1263 = sand.u32 %s490, 1
        %s1264 = scalar_lea.vmem [#allocation16], %s1263
        %p1265 = pneg %p503
        %p1266 = pneg %p500
        %s1267 = sand.u32 %s60, 1
        %s1268 = scalar_lea.sflag [#allocation17], %s1267
        %s1269 = sand.u32 %s516, 1
        %s1270 = smul.addr %s1269, 128
        %s1271 = scalar_lea.vmem [#allocation18], %s1270
        %p1272 = pneg %p529
        %p1273 = pneg %p526
        %s1274 = sand.u32 %s60, 1
        %s1275 = scalar_lea.sflag [#allocation20], %s1274
        %s1276 = sand.u32 %s542, 1
        %s1277 = smul.addr %s1276, 2
        %s1278 = scalar_lea.vmem [#allocation19], %s1277
        %p1279 = pneg %p555
        %p1280 = pneg %p552
        %s1281 = sand.u32 %s60, 1
        %s1282 = scalar_lea.sflag [#allocation20], %s1281
        %s1283 = sand.u32 %s568, 1
        %s1284 = smul.addr %s1283, 128
        %s1285 = scalar_lea.vmem [#allocation21], %s1284
        %p1286 = pneg %p581
        %p1287 = pneg %p578
        %s1288 = sand.u32 %s60, 1
        %s1289 = scalar_lea.sflag [#allocation23], %s1288
        %s1290 = sand.u32 %s594, 1
        %s1291 = scalar_lea.vmem [#allocation22], %s1290
        %p1292 = pneg %p607
        %p1293 = pneg %p604
        %s1294 = sand.u32 %s60, 1
        %s1295 = scalar_lea.sflag [#allocation23], %s1294
        %s1296 = sand.u32 %s620, 1
        %s1297 = scalar_lea.vmem [#allocation24], %s1296
        %p1298 = pneg %p633
        %p1299 = pneg %p630
        %s1300 = sand.u32 %s646, 1
        %s1301 = scalar_lea.sflag [#allocation26], %s1300
        %s1302 = sand.u32 %s646, 1
        %s1303 = scalar_lea.vmem [#allocation25], %s1302
        %p1304 = pneg %p659
        %p1305 = pneg %p656
        %p1306 = pneg %p680
        %p1307 = pneg %p677
        %p1308 = scmp.lt.s32.totalorder %s60, 1
        %s1309 = scalar_select %p1308, %s60, 1
        %s1310 = smul.addr %s1309, 48
        %s1311 = smul.addr %s1310, 4
        %s1312 = scalar_lea.vmem %s4, %s1311
        %p1313 = scmp.lt.s32.totalorder %s60, 1
        %s1314 = scalar_select %p1313, %s60, 1
        %s1315 = smul.addr %s1314, 16
        %s1316 = smul.addr %s1315, 4
        %s1317 = scalar_lea.vmem %s10, %s1316
        %p1318 = scmp.lt.s32.totalorder %s60, 1
        %s1319 = scalar_select %p1318, %s60, 1
        %s1320 = scalar_lea.vmem %s11, %s1319
        %p1321 = scmp.lt.s32.totalorder %s60, 1
        %s1322 = scalar_select %p1321, %s60, 1
        %s1323 = smul.addr %s1322, 2
        %s1324 = scalar_lea.vmem %s13, %s1323
        %p1325 = scmp.lt.s32.totalorder %s60, 1
        %s1326 = scalar_select %p1325, %s60, 1
        %s1327 = scalar_lea.vmem %s15, %s1326
        %p1329 = scmp.eq.s32.totalorder %s60, 0
        // Predicated region
        $region181: #{symbolic_regression_transformer.4} parent=115 // pred_check
          %p1330 = pneg %p1329
        $region182: #{symbolic_regression_transformer.4} parent=115 // pred_check_branch
          %1332 = sbr.rel (%p1330) target = $region184
        $region183: #{symbolic_regression_transformer.4} parent=115 // pred_region
          %v1333 = vld [vmem:[%s0] sm:$0xff]
          %v1334 = vld [vmem:[%s0 + $0x8] sm:$0xff]
          %1335 = vst [vmem:[%s24] sm:$0xff] %v1333
          %1336 = vst [vmem:[%s24 + $0x8] sm:$0xff] %v1334
        $region184: #{symbolic_regression_transformer.4} parent=115 // pred_fallthru
          _
        %v1337 = vld [vmem:[%s24] sm:$0xff]
        %v1338 = vld [vmem:[%s24 + $0x8] sm:$0xff]
        %v1339 = vld [vmem:[#allocation2] sm:$0xff]
        %v1340 = vld [vmem:[%s3] sm:$0x3]
        %v1343 = vunpack.c.l.s4 1966171168
        %v1344 = vunpack.c.0.s8 %v1343
        %v1345 = vlaneseq
        %v1346 = vshrl.u32 %v1345, 7
        %v1347 = vsub.s32 %v1344, %v1346
        %v1348 = vrot.slane %v1340, %v1347
        %v1349 = vcombine.high %v1348, %v1348
        %v1351 = vunpack.c.l.s4 1966171168
        %v1352 = vunpack.c.0.s8 %v1351
        %v1353 = vlaneseq
        %v1354 = vshrl.u32 %v1353, 7
        %v1355 = vsub.s32 %v1352, %v1354
        %v1356 = vrot.slane %v1348, %v1355
        %v1358 = vunpack.c.l.s4 1966171168
        %v1359 = vunpack.c.0.s8 %v1358
        %v1360 = vlaneseq
        %v1361 = vshrl.u32 %v1360, 7
        %v1362 = vsub.s32 %v1359, %v1361
        %v1363 = vrot.slane %v1349, %v1362
        %v1364 = vlaneseq
        %v1365 = vshrl.u32 %v1364, 7
        %v1366 = vsub.s32 0, %v1365
        %v1367 = vrot.slane %v1356, %v1366
        %v1368 = vlaneseq
        %v1369 = vshrl.u32 %v1368, 7
        %v1370 = vsub.s32 0, %v1369
        %v1371 = vrot.slane %v1363, %v1370
        %v1374 = vadd.f32 %v1339, %v1367
        %v1375 = vadd.f32 %v1339, %v1371
        %v1376 = vpack.c.bf16 %v1338, %v1337
        %v1377 = vld [vmem:[%s1312] sm:$0xff]
        %v1378 = vld [vmem:[%s1312 + $0x8] sm:$0xf]
        %v1379 = vld [vmem:[%s1312 + $0xc] sm:$0xff]
        %v1380 = vld [vmem:[%s1312 + $0x14] sm:$0xf]
        %v1381 = vld [vmem:[%s1312 + $0x18] sm:$0xff]
        %v1382 = vld [vmem:[%s1312 + $0x20] sm:$0xf]
        %v1383 = vld [vmem:[%s1312 + $0x24] sm:$0xff]
        %v1384 = vld [vmem:[%s1312 + $0x2c] sm:$0xf]
        %v1385 = vld [vmem:[%s1312 + $0x30] sm:$0xff]
        %v1386 = vld [vmem:[%s1312 + $0x38] sm:$0xf]
        %v1387 = vld [vmem:[%s1312 + $0x3c] sm:$0xff]
        %v1388 = vld [vmem:[%s1312 + $0x44] sm:$0xf]
        %v1389 = vld [vmem:[%s1312 + $0x48] sm:$0xff]
        %v1390 = vld [vmem:[%s1312 + $0x50] sm:$0xf]
        %v1391 = vld [vmem:[%s1312 + $0x54] sm:$0xff]
        %v1392 = vld [vmem:[%s1312 + $0x5c] sm:$0xf]
        %v1393 = vld [vmem:[%s1312 + $0x60] sm:$0xff]
        %v1394 = vld [vmem:[%s1312 + $0x68] sm:$0xf]
        %v1395 = vld [vmem:[%s1312 + $0x6c] sm:$0xff]
        %v1396 = vld [vmem:[%s1312 + $0x74] sm:$0xf]
        %v1397 = vld [vmem:[%s1312 + $0x78] sm:$0xff]
        %v1398 = vld [vmem:[%s1312 + $0x80] sm:$0xf]
        %v1399 = vld [vmem:[%s1312 + $0x84] sm:$0xff]
        %v1400 = vld [vmem:[%s1312 + $0x8c] sm:$0xf]
        %v1401 = vld [vmem:[%s1312 + $0x90] sm:$0xff]
        %v1402 = vld [vmem:[%s1312 + $0x98] sm:$0xf]
        %v1403 = vld [vmem:[%s1312 + $0x9c] sm:$0xff]
        %v1404 = vld [vmem:[%s1312 + $0xa4] sm:$0xf]
        %v1405 = vld [vmem:[%s1312 + $0xa8] sm:$0xff]
        %v1406 = vld [vmem:[%s1312 + $0xb0] sm:$0xf]
        %v1407 = vld [vmem:[%s1312 + $0xb4] sm:$0xff]
        %v1408 = vld [vmem:[%s1312 + $0xbc] sm:$0xf]
        %v1409 = vld [vmem:[%s1048] sm:$0x7]
        %v1411 = vlaneseq
        %v1412 = vshrl.u32 %v1411, 7
        %v1413 = vsub.s32 0, %v1412
        %v1414 = vrot.slane %v1409, %v1413
        %v1415 = vlaneseq
        %v1416 = vshrl.u32 %v1415, 7
        %v1417 = vsub.s32 1, %v1416
        %v1418 = vrot.slane %v1409, %v1417
        %v1419 = vlaneseq
        %v1420 = vshrl.u32 %v1419, 7
        %v1421 = vsub.s32 2, %v1420
        %v1422 = vrot.slane %v1409, %v1421
        %v1458 = vunpack.c.l.b16 %v1377
        %v1459 = vunpack.c.h.b16 %v1377
        %v1460 = vunpack.c.l.b16 %v1378
        %v1461 = vunpack.c.l.b16 %v1379
        %v1462 = vunpack.c.h.b16 %v1379
        %v1463 = vunpack.c.l.b16 %v1380
        %v1464 = vunpack.c.l.b16 %v1381
        %v1465 = vunpack.c.h.b16 %v1381
        %v1466 = vunpack.c.l.b16 %v1382
        %v1467 = vunpack.c.l.b16 %v1383
        %v1468 = vunpack.c.h.b16 %v1383
        %v1469 = vunpack.c.l.b16 %v1384
        %v1470 = vunpack.c.l.b16 %v1385
        %v1471 = vunpack.c.h.b16 %v1385
        %v1472 = vunpack.c.l.b16 %v1386
        %v1473 = vunpack.c.l.b16 %v1387
        %v1474 = vunpack.c.h.b16 %v1387
        %v1475 = vunpack.c.l.b16 %v1388
        %v1476 = vunpack.c.l.b16 %v1389
        %v1477 = vunpack.c.h.b16 %v1389
        %v1478 = vunpack.c.l.b16 %v1390
        %v1479 = vunpack.c.l.b16 %v1391
        %v1480 = vunpack.c.h.b16 %v1391
        %v1481 = vunpack.c.l.b16 %v1392
        %v1482 = vunpack.c.l.b16 %v1393
        %v1483 = vunpack.c.h.b16 %v1393
        %v1484 = vunpack.c.l.b16 %v1394
        %v1485 = vunpack.c.l.b16 %v1395
        %v1486 = vunpack.c.h.b16 %v1395
        %v1487 = vunpack.c.l.b16 %v1396
        %v1488 = vunpack.c.l.b16 %v1397
        %v1489 = vunpack.c.h.b16 %v1397
        %v1490 = vunpack.c.l.b16 %v1398
        %v1491 = vunpack.c.l.b16 %v1399
        %v1492 = vunpack.c.h.b16 %v1399
        %v1493 = vunpack.c.l.b16 %v1400
        %v1494 = vunpack.c.l.b16 %v1401
        %v1495 = vunpack.c.h.b16 %v1401
        %v1496 = vunpack.c.l.b16 %v1402
        %v1497 = vunpack.c.l.b16 %v1403
        %v1498 = vunpack.c.h.b16 %v1403
        %v1499 = vunpack.c.l.b16 %v1404
        %v1500 = vunpack.c.l.b16 %v1405
        %v1501 = vunpack.c.h.b16 %v1405
        %v1502 = vunpack.c.l.b16 %v1406
        %v1503 = vunpack.c.l.b16 %v1407
        %v1504 = vunpack.c.h.b16 %v1407
        %v1505 = vunpack.c.l.b16 %v1408
        %v1506 = vpack.c.b16 %v1461, %v1458
        %v1507 = vpack.c.b16 %v1462, %v1459
        %v1508 = vpack.c.b16 %v1463, %v1460
        %v1509 = vpack.c.b16 %v1467, %v1464
        %v1510 = vpack.c.b16 %v1468, %v1465
        %v1511 = vpack.c.b16 %v1469, %v1466
        %v1512 = vpack.c.b16 %v1473, %v1470
        %v1513 = vpack.c.b16 %v1474, %v1471
        %v1514 = vpack.c.b16 %v1475, %v1472
        %v1515 = vpack.c.b16 %v1479, %v1476
        %v1516 = vpack.c.b16 %v1480, %v1477
        %v1517 = vpack.c.b16 %v1481, %v1478
        %v1518 = vpack.c.b16 %v1485, %v1482
        %v1519 = vpack.c.b16 %v1486, %v1483
        %v1520 = vpack.c.b16 %v1487, %v1484
        %v1521 = vpack.c.b16 %v1491, %v1488
        %v1522 = vpack.c.b16 %v1492, %v1489
        %v1523 = vpack.c.b16 %v1493, %v1490
        %v1524 = vpack.c.b16 %v1497, %v1494
        %v1525 = vpack.c.b16 %v1498, %v1495
        %v1526 = vpack.c.b16 %v1499, %v1496
        %v1527 = vpack.c.b16 %v1503, %v1500
        %v1528 = vpack.c.b16 %v1504, %v1501
        %v1529 = vpack.c.b16 %v1505, %v1502
        %1554 = vmatprep.subr.bf16.mxu0 %v1507
        %1555 = vmatpush1.bf16.msra.mxu0 %v1506
        %1556 = vmatprep.subr.bf16.mxu0 %v1510
        %1557 = vmatpush1.bf16.msra.mxu0 %v1509
        %1558 = vmatprep.subr.bf16.mxu0 %v1513
        %1559 = vmatpush1.bf16.msra.mxu0 %v1512
        %1560 = vmatprep.subr.bf16.mxu0 %v1516
        %1561 = vmatpush1.bf16.msra.mxu0 %v1515
        %1562 = vmatprep.subr.bf16.mxu0 %v1519
        %1563 = vmatpush1.bf16.msra.mxu0 %v1518
        %1564 = vmatprep.subr.bf16.mxu0 %v1522
        %1565 = vmatpush1.bf16.msra.mxu0 %v1521
        %1566 = vmatprep.subr.bf16.mxu0 %v1525
        %1567 = vmatpush1.bf16.msra.mxu0 %v1524
        %1568 = vmatprep.subr.bf16.mxu0 %v1528
        %1569 = vmatpush1.bf16.msra.mxu0 %v1527
        %1570 = vmatprep.subr.bf16.mxu0 0
        %1571 = vmatpush1.bf16.msra.mxu0 0
        %1572 = vmatprep.subr.bf16.mxu0 0
        %1573 = vmatpush1.bf16.msra.mxu0 0
        %1574 = vmatprep.subr.bf16.mxu0 0
        %1575 = vmatpush1.bf16.msra.mxu0 0
        %1576 = vmatprep.subr.bf16.mxu0 0
        %1577 = vmatpush1.bf16.msra.mxu0 0
        %1578 = vmatprep.subr.bf16.mxu0 0
        %1579 = vmatpush1.bf16.msra.mxu0 0
        %1580 = vmatprep.subr.bf16.mxu0 0
        %1581 = vmatpush1.bf16.msra.mxu0 0
        %1582 = vmatprep.subr.bf16.mxu0 0
        %1583 = vmatpush1.bf16.msra.mxu0 0
        %1584 = vmatprep.subr.bf16.mxu0 0
        %1585 = vmatpush1.bf16.msra.mxu0 0
        %1586 = vmatprep.mubr.bf16.mxu0 0
        %1587 = vmatmul.mubr.bf16.gmra.mrb[0].mxu0 %v1376
        %v1588 = vpop.f32.mrb[0].mxu0
        %v1589 = vadd.f32 %v1414, %v1588
        %v1590 = vpop.f32.mrb[0].mxu0
        %v1591 = vadd.f32 %v1418, %v1590
        %v1592 = vpop.f32.mrb[0].mxu0
        %v1593 = vadd.f32 %v1414, %v1592
        %v1594 = vpop.f32.mrb[0].mxu0
        %v1595 = vadd.f32 %v1418, %v1594
        %1596 = vdwg.mxu0
        %1597 = vmatprep.subr.bf16.mxu0 0
        %1598 = vmatpush1.bf16.msra.mxu0 %v1508
        %1599 = vmatprep.subr.bf16.mxu0 0
        %1600 = vmatpush1.bf16.msra.mxu0 %v1511
        %1601 = vmatprep.subr.bf16.mxu0 0
        %1602 = vmatpush1.bf16.msra.mxu0 %v1514
        %1603 = vmatprep.subr.bf16.mxu0 0
        %1604 = vmatpush1.bf16.msra.mxu0 %v1517
        %1605 = vmatprep.subr.bf16.mxu0 0
        %1606 = vmatpush1.bf16.msra.mxu0 %v1520
        %1607 = vmatprep.subr.bf16.mxu0 0
        %1608 = vmatpush1.bf16.msra.mxu0 %v1523
        %1609 = vmatprep.subr.bf16.mxu0 0
        %1610 = vmatpush1.bf16.msra.mxu0 %v1526
        %1611 = vmatprep.subr.bf16.mxu0 0
        %1612 = vmatpush1.bf16.msra.mxu0 %v1529
        %1613 = vmatprep.subr.bf16.mxu0 0
        %1614 = vmatpush1.bf16.msra.mxu0 0
        %1615 = vmatprep.subr.bf16.mxu0 0
        %1616 = vmatpush1.bf16.msra.mxu0 0
        %1617 = vmatprep.subr.bf16.mxu0 0
        %1618 = vmatpush1.bf16.msra.mxu0 0
        %1619 = vmatprep.subr.bf16.mxu0 0
        %1620 = vmatpush1.bf16.msra.mxu0 0
        %1621 = vmatprep.subr.bf16.mxu0 0
        %1622 = vmatpush1.bf16.msra.mxu0 0
        %1623 = vmatprep.subr.bf16.mxu0 0
        %1624 = vmatpush1.bf16.msra.mxu0 0
        %1625 = vmatprep.subr.bf16.mxu0 0
        %1626 = vmatpush1.bf16.msra.mxu0 0
        %1627 = vmatprep.subr.bf16.mxu0 0
        %1628 = vmatpush1.bf16.msra.mxu0 0
        %1629 = vmatprep.mubr.bf16.mxu0 0
        %1630 = vmatmul.mubr.bf16.gmra.mrb[0].mxu0 %v1376
        %v1631 = vpop.f32.mrb[0].mxu0
        %v1632 = vadd.f32 %v1422, %v1631
        %v1633 = vpop.f32.mrb[0].mxu0
        %v1634 = vpop.f32.mrb[0].mxu0
        %v1635 = vadd.f32 %v1422, %v1634
        %v1636 = vpop.f32.mrb[0].mxu0
        %1637 = vdwg.mxu0
        %1640 = vrot.lane.b32.xlu0 %v1589, 96
        %v1641 = vpop.permute.xlu0 %1640
        %1642 = vrot.lane.b32.xlu0 %v1593, 96
        %v1643 = vpop.permute.xlu0 %1642
        %1646 = vrot.lane.b32.xlu0 %v1589, 64
        %v1647 = vpop.permute.xlu0 %1646
        %1648 = vrot.lane.b32.xlu0 %v1593, 64
        %v1649 = vpop.permute.xlu0 %1648
        %1652 = vrot.lane.b32.xlu0 %v1589, 32
        %v1653 = vpop.permute.xlu0 %1652
        %1654 = vrot.lane.b32.xlu0 %v1593, 32
        %v1655 = vpop.permute.xlu0 %1654
        %v1658 = vcombine.low %v1589, %v1647
        %v1659 = vcombine.high %v1589, %v1647
        %v1661 = vunpack.c.l.s4 1983009808
        %v1662 = vunpack.c.0.s8 %v1661
        %v1663 = vlaneseq
        %v1664 = vshrl.u32 %v1663, 7
        %v1665 = vsub.s32 %v1662, %v1664
        %v1666 = vrot.slane %v1658, %v1665
        %v1668 = vunpack.c.l.s4 1983009808
        %v1669 = vunpack.c.0.s8 %v1668
        %v1670 = vlaneseq
        %v1671 = vshrl.u32 %v1670, 7
        %v1672 = vsub.s32 %v1669, %v1671
        %v1673 = vrot.slane %v1659, %v1672
        %v1674 = vcombine.low %v1641, %v1653
        %v1675 = vcombine.high %v1641, %v1653
        %v1677 = vunpack.c.l.s4 1983009808
        %v1678 = vunpack.c.0.s8 %v1677
        %v1679 = vlaneseq
        %v1680 = vshrl.u32 %v1679, 7
        %v1681 = vsub.s32 %v1678, %v1680
        %v1682 = vrot.slane %v1674, %v1681
        %v1684 = vunpack.c.l.s4 1983009808
        %v1685 = vunpack.c.0.s8 %v1684
        %v1686 = vlaneseq
        %v1687 = vshrl.u32 %v1686, 7
        %v1688 = vsub.s32 %v1685, %v1687
        %v1689 = vrot.slane %v1675, %v1688
        %v1690 = vcombine.low %v1666, %v1682
        %v1691 = vcombine.high %v1666, %v1682
        %v1693 = vunpack.c.l.s4 1934713408
        %v1694 = vunpack.c.0.s8 %v1693
        %v1695 = vlaneseq
        %v1696 = vshrl.u32 %v1695, 7
        %v1697 = vsub.s32 %v1694, %v1696
        %v1698 = vrot.slane %v1690, %v1697
        %v1700 = vunpack.c.l.s4 1934713408
        %v1701 = vunpack.c.0.s8 %v1700
        %v1702 = vlaneseq
        %v1703 = vshrl.u32 %v1702, 7
        %v1704 = vsub.s32 %v1701, %v1703
        %v1705 = vrot.slane %v1691, %v1704
        %v1706 = vcombine.low %v1673, %v1689
        %v1707 = vcombine.high %v1673, %v1689
        %v1709 = vunpack.c.l.s4 1934713408
        %v1710 = vunpack.c.0.s8 %v1709
        %v1711 = vlaneseq
        %v1712 = vshrl.u32 %v1711, 7
        %v1713 = vsub.s32 %v1710, %v1712
        %v1714 = vrot.slane %v1706, %v1713
        %v1716 = vunpack.c.l.s4 1934713408
        %v1717 = vunpack.c.0.s8 %v1716
        %v1718 = vlaneseq
        %v1719 = vshrl.u32 %v1718, 7
        %v1720 = vsub.s32 %v1717, %v1719
        %v1721 = vrot.slane %v1707, %v1720
        %v1722 = vcombine.high %v1698, 0.0
        %v1723 = vcombine.high %v1705, 0.0
        %v1724 = vcombine.high %v1714, 0.0
        %v1725 = vcombine.high %v1721, 0.0
        %v1726 = vcombine.low %v1593, %v1649
        %v1727 = vcombine.high %v1593, %v1649
        %v1729 = vunpack.c.l.s4 1983009808
        %v1730 = vunpack.c.0.s8 %v1729
        %v1731 = vlaneseq
        %v1732 = vshrl.u32 %v1731, 7
        %v1733 = vsub.s32 %v1730, %v1732
        %v1734 = vrot.slane %v1726, %v1733
        %v1736 = vunpack.c.l.s4 1983009808
        %v1737 = vunpack.c.0.s8 %v1736
        %v1738 = vlaneseq
        %v1739 = vshrl.u32 %v1738, 7
        %v1740 = vsub.s32 %v1737, %v1739
        %v1741 = vrot.slane %v1727, %v1740
        %v1742 = vcombine.low %v1643, %v1655
        %v1743 = vcombine.high %v1643, %v1655
        %v1745 = vunpack.c.l.s4 1983009808
        %v1746 = vunpack.c.0.s8 %v1745
        %v1747 = vlaneseq
        %v1748 = vshrl.u32 %v1747, 7
        %v1749 = vsub.s32 %v1746, %v1748
        %v1750 = vrot.slane %v1742, %v1749
        %v1752 = vunpack.c.l.s4 1983009808
        %v1753 = vunpack.c.0.s8 %v1752
        %v1754 = vlaneseq
        %v1755 = vshrl.u32 %v1754, 7
        %v1756 = vsub.s32 %v1753, %v1755
        %v1757 = vrot.slane %v1743, %v1756
        %v1758 = vcombine.low %v1734, %v1750
        %v1759 = vcombine.high %v1734, %v1750
        %v1761 = vunpack.c.l.s4 1934713408
        %v1762 = vunpack.c.0.s8 %v1761
        %v1763 = vlaneseq
        %v1764 = vshrl.u32 %v1763, 7
        %v1765 = vsub.s32 %v1762, %v1764
        %v1766 = vrot.slane %v1758, %v1765
        %v1768 = vunpack.c.l.s4 1934713408
        %v1769 = vunpack.c.0.s8 %v1768
        %v1770 = vlaneseq
        %v1771 = vshrl.u32 %v1770, 7
        %v1772 = vsub.s32 %v1769, %v1771
        %v1773 = vrot.slane %v1759, %v1772
        %v1774 = vcombine.low %v1741, %v1757
        %v1775 = vcombine.high %v1741, %v1757
        %v1777 = vunpack.c.l.s4 1934713408
        %v1778 = vunpack.c.0.s8 %v1777
        %v1779 = vlaneseq
        %v1780 = vshrl.u32 %v1779, 7
        %v1781 = vsub.s32 %v1778, %v1780
        %v1782 = vrot.slane %v1774, %v1781
        %v1784 = vunpack.c.l.s4 1934713408
        %v1785 = vunpack.c.0.s8 %v1784
        %v1786 = vlaneseq
        %v1787 = vshrl.u32 %v1786, 7
        %v1788 = vsub.s32 %v1785, %v1787
        %v1789 = vrot.slane %v1775, %v1788
        %v1790 = vcombine.high %v1766, 0.0
        %v1791 = vcombine.high %v1773, 0.0
        %v1792 = vcombine.high %v1782, 0.0
        %v1793 = vcombine.high %v1789, 0.0
        %v1794 = vcombine.low %v1698, %v1705
        %v1796 = vunpack.c.l.s4 1983009808
        %v1797 = vunpack.c.0.s8 %v1796
        %v1798 = vlaneseq
        %v1799 = vshrl.u32 %v1798, 7
        %v1800 = vsub.s32 %v1797, %v1799
        %v1801 = vrot.slane %v1794, %v1800
        %v1802 = vcombine.low %v1722, %v1723
        %v1804 = vunpack.c.l.s4 1983009808
        %v1805 = vunpack.c.0.s8 %v1804
        %v1806 = vlaneseq
        %v1807 = vshrl.u32 %v1806, 7
        %v1808 = vsub.s32 %v1805, %v1807
        %v1809 = vrot.slane %v1802, %v1808
        %v1810 = vcombine.low %v1714, %v1721
        %v1812 = vunpack.c.l.s4 1983009808
        %v1813 = vunpack.c.0.s8 %v1812
        %v1814 = vlaneseq
        %v1815 = vshrl.u32 %v1814, 7
        %v1816 = vsub.s32 %v1813, %v1815
        %v1817 = vrot.slane %v1810, %v1816
        %v1818 = vcombine.low %v1724, %v1725
        %v1820 = vunpack.c.l.s4 1983009808
        %v1821 = vunpack.c.0.s8 %v1820
        %v1822 = vlaneseq
        %v1823 = vshrl.u32 %v1822, 7
        %v1824 = vsub.s32 %v1821, %v1823
        %v1825 = vrot.slane %v1818, %v1824
        %v1826 = vcombine.low %v1801, %v1809
        %v1827 = vcombine.high %v1801, %v1809
        %v1829 = vunpack.c.l.s4 1934713408
        %v1830 = vunpack.c.0.s8 %v1829
        %v1831 = vlaneseq
        %v1832 = vshrl.u32 %v1831, 7
        %v1833 = vsub.s32 %v1830, %v1832
        %v1834 = vrot.slane %v1826, %v1833
        %v1836 = vunpack.c.l.s4 1934713408
        %v1837 = vunpack.c.0.s8 %v1836
        %v1838 = vlaneseq
        %v1839 = vshrl.u32 %v1838, 7
        %v1840 = vsub.s32 %v1837, %v1839
        %v1841 = vrot.slane %v1827, %v1840
        %v1842 = vcombine.low %v1817, %v1825
        %v1843 = vcombine.high %v1817, %v1825
        %v1845 = vunpack.c.l.s4 1934713408
        %v1846 = vunpack.c.0.s8 %v1845
        %v1847 = vlaneseq
        %v1848 = vshrl.u32 %v1847, 7
        %v1849 = vsub.s32 %v1846, %v1848
        %v1850 = vrot.slane %v1842, %v1849
        %v1852 = vunpack.c.l.s4 1934713408
        %v1853 = vunpack.c.0.s8 %v1852
        %v1854 = vlaneseq
        %v1855 = vshrl.u32 %v1854, 7
        %v1856 = vsub.s32 %v1853, %v1855
        %v1857 = vrot.slane %v1843, %v1856
        %v1858 = vcombine.low %v1834, %v1850
        %v1859 = vcombine.high %v1834, %v1850
        %v1860 = vcombine.low %v1841, %v1857
        %v1861 = vcombine.high %v1841, %v1857
        %v1862 = vcombine.low %v1766, %v1773
        %v1864 = vunpack.c.l.s4 1983009808
        %v1865 = vunpack.c.0.s8 %v1864
        %v1866 = vlaneseq
        %v1867 = vshrl.u32 %v1866, 7
        %v1868 = vsub.s32 %v1865, %v1867
        %v1869 = vrot.slane %v1862, %v1868
        %v1870 = vcombine.low %v1790, %v1791
        %v1872 = vunpack.c.l.s4 1983009808
        %v1873 = vunpack.c.0.s8 %v1872
        %v1874 = vlaneseq
        %v1875 = vshrl.u32 %v1874, 7
        %v1876 = vsub.s32 %v1873, %v1875
        %v1877 = vrot.slane %v1870, %v1876
        %v1878 = vcombine.low %v1782, %v1789
        %v1880 = vunpack.c.l.s4 1983009808
        %v1881 = vunpack.c.0.s8 %v1880
        %v1882 = vlaneseq
        %v1883 = vshrl.u32 %v1882, 7
        %v1884 = vsub.s32 %v1881, %v1883
        %v1885 = vrot.slane %v1878, %v1884
        %v1886 = vcombine.low %v1792, %v1793
        %v1888 = vunpack.c.l.s4 1983009808
        %v1889 = vunpack.c.0.s8 %v1888
        %v1890 = vlaneseq
        %v1891 = vshrl.u32 %v1890, 7
        %v1892 = vsub.s32 %v1889, %v1891
        %v1893 = vrot.slane %v1886, %v1892
        %v1894 = vcombine.low %v1869, %v1877
        %v1895 = vcombine.high %v1869, %v1877
        %v1897 = vunpack.c.l.s4 1934713408
        %v1898 = vunpack.c.0.s8 %v1897
        %v1899 = vlaneseq
        %v1900 = vshrl.u32 %v1899, 7
        %v1901 = vsub.s32 %v1898, %v1900
        %v1902 = vrot.slane %v1894, %v1901
        %v1904 = vunpack.c.l.s4 1934713408
        %v1905 = vunpack.c.0.s8 %v1904
        %v1906 = vlaneseq
        %v1907 = vshrl.u32 %v1906, 7
        %v1908 = vsub.s32 %v1905, %v1907
        %v1909 = vrot.slane %v1895, %v1908
        %v1910 = vcombine.low %v1885, %v1893
        %v1911 = vcombine.high %v1885, %v1893
        %v1913 = vunpack.c.l.s4 1934713408
        %v1914 = vunpack.c.0.s8 %v1913
        %v1915 = vlaneseq
        %v1916 = vshrl.u32 %v1915, 7
        %v1917 = vsub.s32 %v1914, %v1916
        %v1918 = vrot.slane %v1910, %v1917
        %v1920 = vunpack.c.l.s4 1934713408
        %v1921 = vunpack.c.0.s8 %v1920
        %v1922 = vlaneseq
        %v1923 = vshrl.u32 %v1922, 7
        %v1924 = vsub.s32 %v1921, %v1923
        %v1925 = vrot.slane %v1911, %v1924
        %v1926 = vcombine.low %v1902, %v1918
        %v1927 = vcombine.high %v1902, %v1918
        %v1928 = vcombine.low %v1909, %v1925
        %v1929 = vcombine.high %v1909, %v1925
        %v1930 = vpack.c.bf16 %v1858, %v1858
        %v1931 = vpack.c.bf16 %v1859, %v1859
        %v1932 = vpack.c.bf16 %v1860, %v1860
        %v1933 = vpack.c.bf16 %v1861, %v1861
        %v1934 = vpack.c.bf16 %v1926, %v1926
        %v1935 = vpack.c.bf16 %v1927, %v1927
        %v1936 = vpack.c.bf16 %v1928, %v1928
        %v1937 = vpack.c.bf16 %v1929, %v1929
        %1940 = vrot.lane.b32.xlu0 %v1591, 96
        %v1941 = vpop.permute.xlu0 %1940
        %1942 = vrot.lane.b32.xlu0 %v1595, 96
        %v1943 = vpop.permute.xlu0 %1942
        %1946 = vrot.lane.b32.xlu0 %v1591, 64
        %v1947 = vpop.permute.xlu0 %1946
        %1948 = vrot.lane.b32.xlu0 %v1595, 64
        %v1949 = vpop.permute.xlu0 %1948
        %1952 = vrot.lane.b32.xlu0 %v1591, 32
        %v1953 = vpop.permute.xlu0 %1952
        %1954 = vrot.lane.b32.xlu0 %v1595, 32
        %v1955 = vpop.permute.xlu0 %1954
        %v1958 = vcombine.low %v1591, %v1947
        %v1959 = vcombine.high %v1591, %v1947
        %v1961 = vunpack.c.l.s4 1983009808
        %v1962 = vunpack.c.0.s8 %v1961
        %v1963 = vlaneseq
        %v1964 = vshrl.u32 %v1963, 7
        %v1965 = vsub.s32 %v1962, %v1964
        %v1966 = vrot.slane %v1958, %v1965
        %v1968 = vunpack.c.l.s4 1983009808
        %v1969 = vunpack.c.0.s8 %v1968
        %v1970 = vlaneseq
        %v1971 = vshrl.u32 %v1970, 7
        %v1972 = vsub.s32 %v1969, %v1971
        %v1973 = vrot.slane %v1959, %v1972
        %v1974 = vcombine.low %v1941, %v1953
        %v1975 = vcombine.high %v1941, %v1953
        %v1977 = vunpack.c.l.s4 1983009808
        %v1978 = vunpack.c.0.s8 %v1977
        %v1979 = vlaneseq
        %v1980 = vshrl.u32 %v1979, 7
        %v1981 = vsub.s32 %v1978, %v1980
        %v1982 = vrot.slane %v1974, %v1981
        %v1984 = vunpack.c.l.s4 1983009808
        %v1985 = vunpack.c.0.s8 %v1984
        %v1986 = vlaneseq
        %v1987 = vshrl.u32 %v1986, 7
        %v1988 = vsub.s32 %v1985, %v1987
        %v1989 = vrot.slane %v1975, %v1988
        %v1990 = vcombine.low %v1966, %v1982
        %v1991 = vcombine.high %v1966, %v1982
        %v1993 = vunpack.c.l.s4 1934713408
        %v1994 = vunpack.c.0.s8 %v1993
        %v1995 = vlaneseq
        %v1996 = vshrl.u32 %v1995, 7
        %v1997 = vsub.s32 %v1994, %v1996
        %v1998 = vrot.slane %v1990, %v1997
        %v2000 = vunpack.c.l.s4 1934713408
        %v2001 = vunpack.c.0.s8 %v2000
        %v2002 = vlaneseq
        %v2003 = vshrl.u32 %v2002, 7
        %v2004 = vsub.s32 %v2001, %v2003
        %v2005 = vrot.slane %v1991, %v2004
        %v2006 = vcombine.low %v1973, %v1989
        %v2007 = vcombine.high %v1973, %v1989
        %v2009 = vunpack.c.l.s4 1934713408
        %v2010 = vunpack.c.0.s8 %v2009
        %v2011 = vlaneseq
        %v2012 = vshrl.u32 %v2011, 7
        %v2013 = vsub.s32 %v2010, %v2012
        %v2014 = vrot.slane %v2006, %v2013
        %v2016 = vunpack.c.l.s4 1934713408
        %v2017 = vunpack.c.0.s8 %v2016
        %v2018 = vlaneseq
        %v2019 = vshrl.u32 %v2018, 7
        %v2020 = vsub.s32 %v2017, %v2019
        %v2021 = vrot.slane %v2007, %v2020
        %v2022 = vcombine.high %v1998, 0.0
        %v2023 = vcombine.high %v2005, 0.0
        %v2024 = vcombine.high %v2014, 0.0
        %v2025 = vcombine.high %v2021, 0.0
        %v2026 = vcombine.low %v1595, %v1949
        %v2027 = vcombine.high %v1595, %v1949
        %v2029 = vunpack.c.l.s4 1983009808
        %v2030 = vunpack.c.0.s8 %v2029
        %v2031 = vlaneseq
        %v2032 = vshrl.u32 %v2031, 7
        %v2033 = vsub.s32 %v2030, %v2032
        %v2034 = vrot.slane %v2026, %v2033
        %v2036 = vunpack.c.l.s4 1983009808
        %v2037 = vunpack.c.0.s8 %v2036
        %v2038 = vlaneseq
        %v2039 = vshrl.u32 %v2038, 7
        %v2040 = vsub.s32 %v2037, %v2039
        %v2041 = vrot.slane %v2027, %v2040
        %v2042 = vcombine.low %v1943, %v1955
        %v2043 = vcombine.high %v1943, %v1955
        %v2045 = vunpack.c.l.s4 1983009808
        %v2046 = vunpack.c.0.s8 %v2045
        %v2047 = vlaneseq
        %v2048 = vshrl.u32 %v2047, 7
        %v2049 = vsub.s32 %v2046, %v2048
        %v2050 = vrot.slane %v2042, %v2049
        %v2052 = vunpack.c.l.s4 1983009808
        %v2053 = vunpack.c.0.s8 %v2052
        %v2054 = vlaneseq
        %v2055 = vshrl.u32 %v2054, 7
        %v2056 = vsub.s32 %v2053, %v2055
        %v2057 = vrot.slane %v2043, %v2056
        %v2058 = vcombine.low %v2034, %v2050
        %v2059 = vcombine.high %v2034, %v2050
        %v2061 = vunpack.c.l.s4 1934713408
        %v2062 = vunpack.c.0.s8 %v2061
        %v2063 = vlaneseq
        %v2064 = vshrl.u32 %v2063, 7
        %v2065 = vsub.s32 %v2062, %v2064
        %v2066 = vrot.slane %v2058, %v2065
        %v2068 = vunpack.c.l.s4 1934713408
        %v2069 = vunpack.c.0.s8 %v2068
        %v2070 = vlaneseq
        %v2071 = vshrl.u32 %v2070, 7
        %v2072 = vsub.s32 %v2069, %v2071
        %v2073 = vrot.slane %v2059, %v2072
        %v2074 = vcombine.low %v2041, %v2057
        %v2075 = vcombine.high %v2041, %v2057
        %v2077 = vunpack.c.l.s4 1934713408
        %v2078 = vunpack.c.0.s8 %v2077
        %v2079 = vlaneseq
        %v2080 = vshrl.u32 %v2079, 7
        %v2081 = vsub.s32 %v2078, %v2080
        %v2082 = vrot.slane %v2074, %v2081
        %v2084 = vunpack.c.l.s4 1934713408
        %v2085 = vunpack.c.0.s8 %v2084
        %v2086 = vlaneseq
        %v2087 = vshrl.u32 %v2086, 7
        %v2088 = vsub.s32 %v2085, %v2087
        %v2089 = vrot.slane %v2075, %v2088
        %v2090 = vcombine.high %v2066, 0.0
        %v2091 = vcombine.high %v2073, 0.0
        %v2092 = vcombine.high %v2082, 0.0
        %v2093 = vcombine.high %v2089, 0.0
        %v2094 = vcombine.low %v1998, %v2005
        %v2096 = vunpack.c.l.s4 1983009808
        %v2097 = vunpack.c.0.s8 %v2096
        %v2098 = vlaneseq
        %v2099 = vshrl.u32 %v2098, 7
        %v2100 = vsub.s32 %v2097, %v2099
        %v2101 = vrot.slane %v2094, %v2100
        %v2102 = vcombine.low %v2022, %v2023
        %v2104 = vunpack.c.l.s4 1983009808
        %v2105 = vunpack.c.0.s8 %v2104
        %v2106 = vlaneseq
        %v2107 = vshrl.u32 %v2106, 7
        %v2108 = vsub.s32 %v2105, %v2107
        %v2109 = vrot.slane %v2102, %v2108
        %v2110 = vcombine.low %v2014, %v2021
        %v2112 = vunpack.c.l.s4 1983009808
        %v2113 = vunpack.c.0.s8 %v2112
        %v2114 = vlaneseq
        %v2115 = vshrl.u32 %v2114, 7
        %v2116 = vsub.s32 %v2113, %v2115
        %v2117 = vrot.slane %v2110, %v2116
        %v2118 = vcombine.low %v2024, %v2025
        %v2120 = vunpack.c.l.s4 1983009808
        %v2121 = vunpack.c.0.s8 %v2120
        %v2122 = vlaneseq
        %v2123 = vshrl.u32 %v2122, 7
        %v2124 = vsub.s32 %v2121, %v2123
        %v2125 = vrot.slane %v2118, %v2124
        %v2126 = vcombine.low %v2101, %v2109
        %v2127 = vcombine.high %v2101, %v2109
        %v2129 = vunpack.c.l.s4 1934713408
        %v2130 = vunpack.c.0.s8 %v2129
        %v2131 = vlaneseq
        %v2132 = vshrl.u32 %v2131, 7
        %v2133 = vsub.s32 %v2130, %v2132
        %v2134 = vrot.slane %v2126, %v2133
        %v2136 = vunpack.c.l.s4 1934713408
        %v2137 = vunpack.c.0.s8 %v2136
        %v2138 = vlaneseq
        %v2139 = vshrl.u32 %v2138, 7
        %v2140 = vsub.s32 %v2137, %v2139
        %v2141 = vrot.slane %v2127, %v2140
        %v2142 = vcombine.low %v2117, %v2125
        %v2143 = vcombine.high %v2117, %v2125
        %v2145 = vunpack.c.l.s4 1934713408
        %v2146 = vunpack.c.0.s8 %v2145
        %v2147 = vlaneseq
        %v2148 = vshrl.u32 %v2147, 7
        %v2149 = vsub.s32 %v2146, %v2148
        %v2150 = vrot.slane %v2142, %v2149
        %v2152 = vunpack.c.l.s4 1934713408
        %v2153 = vunpack.c.0.s8 %v2152
        %v2154 = vlaneseq
        %v2155 = vshrl.u32 %v2154, 7
        %v2156 = vsub.s32 %v2153, %v2155
        %v2157 = vrot.slane %v2143, %v2156
        %v2158 = vcombine.low %v2134, %v2150
        %v2159 = vcombine.high %v2134, %v2150
        %v2160 = vcombine.low %v2141, %v2157
        %v2161 = vcombine.high %v2141, %v2157
        %v2162 = vcombine.low %v2066, %v2073
        %v2164 = vunpack.c.l.s4 1983009808
        %v2165 = vunpack.c.0.s8 %v2164
        %v2166 = vlaneseq
        %v2167 = vshrl.u32 %v2166, 7
        %v2168 = vsub.s32 %v2165, %v2167
        %v2169 = vrot.slane %v2162, %v2168
        %v2170 = vcombine.low %v2090, %v2091
        %v2172 = vunpack.c.l.s4 1983009808
        %v2173 = vunpack.c.0.s8 %v2172
        %v2174 = vlaneseq
        %v2175 = vshrl.u32 %v2174, 7
        %v2176 = vsub.s32 %v2173, %v2175
        %v2177 = vrot.slane %v2170, %v2176
        %v2178 = vcombine.low %v2082, %v2089
        %v2180 = vunpack.c.l.s4 1983009808
        %v2181 = vunpack.c.0.s8 %v2180
        %v2182 = vlaneseq
        %v2183 = vshrl.u32 %v2182, 7
        %v2184 = vsub.s32 %v2181, %v2183
        %v2185 = vrot.slane %v2178, %v2184
        %v2186 = vcombine.low %v2092, %v2093
        %v2188 = vunpack.c.l.s4 1983009808
        %v2189 = vunpack.c.0.s8 %v2188
        %v2190 = vlaneseq
        %v2191 = vshrl.u32 %v2190, 7
        %v2192 = vsub.s32 %v2189, %v2191
        %v2193 = vrot.slane %v2186, %v2192
        %v2194 = vcombine.low %v2169, %v2177
        %v2195 = vcombine.high %v2169, %v2177
        %v2197 = vunpack.c.l.s4 1934713408
        %v2198 = vunpack.c.0.s8 %v2197
        %v2199 = vlaneseq
        %v2200 = vshrl.u32 %v2199, 7
        %v2201 = vsub.s32 %v2198, %v2200
        %v2202 = vrot.slane %v2194, %v2201
        %v2204 = vunpack.c.l.s4 1934713408
        %v2205 = vunpack.c.0.s8 %v2204
        %v2206 = vlaneseq
        %v2207 = vshrl.u32 %v2206, 7
        %v2208 = vsub.s32 %v2205, %v2207
        %v2209 = vrot.slane %v2195, %v2208
        %v2210 = vcombine.low %v2185, %v2193
        %v2211 = vcombine.high %v2185, %v2193
        %v2213 = vunpack.c.l.s4 1934713408
        %v2214 = vunpack.c.0.s8 %v2213
        %v2215 = vlaneseq
        %v2216 = vshrl.u32 %v2215, 7
        %v2217 = vsub.s32 %v2214, %v2216
        %v2218 = vrot.slane %v2210, %v2217
        %v2220 = vunpack.c.l.s4 1934713408
        %v2221 = vunpack.c.0.s8 %v2220
        %v2222 = vlaneseq
        %v2223 = vshrl.u32 %v2222, 7
        %v2224 = vsub.s32 %v2221, %v2223
        %v2225 = vrot.slane %v2211, %v2224
        %v2226 = vcombine.low %v2202, %v2218
        %v2227 = vcombine.high %v2202, %v2218
        %v2228 = vcombine.low %v2209, %v2225
        %v2229 = vcombine.high %v2209, %v2225
        %v2230 = vpack.c.bf16 %v2158, %v2158
        %v2231 = vpack.c.bf16 %v2159, %v2159
        %v2232 = vpack.c.bf16 %v2160, %v2160
        %v2233 = vpack.c.bf16 %v2161, %v2161
        %v2234 = vpack.c.bf16 %v2226, %v2226
        %v2235 = vpack.c.bf16 %v2227, %v2227
        %v2236 = vpack.c.bf16 %v2228, %v2228
        %v2237 = vpack.c.bf16 %v2229, %v2229
        %2240 = vrot.lane.b32.xlu0 %v1632, 96
        %v2241 = vpop.permute.xlu0 %2240
        %2242 = vrot.lane.b32.xlu0 %v1635, 96
        %v2243 = vpop.permute.xlu0 %2242
        %2246 = vrot.lane.b32.xlu0 %v1632, 64
        %v2247 = vpop.permute.xlu0 %2246
        %2248 = vrot.lane.b32.xlu0 %v1635, 64
        %v2249 = vpop.permute.xlu0 %2248
        %2252 = vrot.lane.b32.xlu0 %v1632, 32
        %v2253 = vpop.permute.xlu0 %2252
        %2254 = vrot.lane.b32.xlu0 %v1635, 32
        %v2255 = vpop.permute.xlu0 %2254
        %v2258 = vcombine.low %v1632, %v2247
        %v2259 = vcombine.high %v1632, %v2247
        %v2261 = vunpack.c.l.s4 1983009808
        %v2262 = vunpack.c.0.s8 %v2261
        %v2263 = vlaneseq
        %v2264 = vshrl.u32 %v2263, 7
        %v2265 = vsub.s32 %v2262, %v2264
        %v2266 = vrot.slane %v2258, %v2265
        %v2268 = vunpack.c.l.s4 1983009808
        %v2269 = vunpack.c.0.s8 %v2268
        %v2270 = vlaneseq
        %v2271 = vshrl.u32 %v2270, 7
        %v2272 = vsub.s32 %v2269, %v2271
        %v2273 = vrot.slane %v2259, %v2272
        %v2274 = vcombine.low %v2241, %v2253
        %v2275 = vcombine.high %v2241, %v2253
        %v2277 = vunpack.c.l.s4 1983009808
        %v2278 = vunpack.c.0.s8 %v2277
        %v2279 = vlaneseq
        %v2280 = vshrl.u32 %v2279, 7
        %v2281 = vsub.s32 %v2278, %v2280
        %v2282 = vrot.slane %v2274, %v2281
        %v2284 = vunpack.c.l.s4 1983009808
        %v2285 = vunpack.c.0.s8 %v2284
        %v2286 = vlaneseq
        %v2287 = vshrl.u32 %v2286, 7
        %v2288 = vsub.s32 %v2285, %v2287
        %v2289 = vrot.slane %v2275, %v2288
        %v2290 = vcombine.low %v2266, %v2282
        %v2291 = vcombine.high %v2266, %v2282
        %v2293 = vunpack.c.l.s4 1934713408
        %v2294 = vunpack.c.0.s8 %v2293
        %v2295 = vlaneseq
        %v2296 = vshrl.u32 %v2295, 7
        %v2297 = vsub.s32 %v2294, %v2296
        %v2298 = vrot.slane %v2290, %v2297
        %v2300 = vunpack.c.l.s4 1934713408
        %v2301 = vunpack.c.0.s8 %v2300
        %v2302 = vlaneseq
        %v2303 = vshrl.u32 %v2302, 7
        %v2304 = vsub.s32 %v2301, %v2303
        %v2305 = vrot.slane %v2291, %v2304
        %v2306 = vcombine.low %v2273, %v2289
        %v2307 = vcombine.high %v2273, %v2289
        %v2309 = vunpack.c.l.s4 1934713408
        %v2310 = vunpack.c.0.s8 %v2309
        %v2311 = vlaneseq
        %v2312 = vshrl.u32 %v2311, 7
        %v2313 = vsub.s32 %v2310, %v2312
        %v2314 = vrot.slane %v2306, %v2313
        %v2316 = vunpack.c.l.s4 1934713408
        %v2317 = vunpack.c.0.s8 %v2316
        %v2318 = vlaneseq
        %v2319 = vshrl.u32 %v2318, 7
        %v2320 = vsub.s32 %v2317, %v2319
        %v2321 = vrot.slane %v2307, %v2320
        %v2322 = vcombine.high %v2298, 0.0
        %v2323 = vcombine.high %v2305, 0.0
        %v2324 = vcombine.high %v2314, 0.0
        %v2325 = vcombine.high %v2321, 0.0
        %v2326 = vcombine.low %v1635, %v2249
        %v2327 = vcombine.high %v1635, %v2249
        %v2329 = vunpack.c.l.s4 1983009808
        %v2330 = vunpack.c.0.s8 %v2329
        %v2331 = vlaneseq
        %v2332 = vshrl.u32 %v2331, 7
        %v2333 = vsub.s32 %v2330, %v2332
        %v2334 = vrot.slane %v2326, %v2333
        %v2336 = vunpack.c.l.s4 1983009808
        %v2337 = vunpack.c.0.s8 %v2336
        %v2338 = vlaneseq
        %v2339 = vshrl.u32 %v2338, 7
        %v2340 = vsub.s32 %v2337, %v2339
        %v2341 = vrot.slane %v2327, %v2340
        %v2342 = vcombine.low %v2243, %v2255
        %v2343 = vcombine.high %v2243, %v2255
        %v2345 = vunpack.c.l.s4 1983009808
        %v2346 = vunpack.c.0.s8 %v2345
        %v2347 = vlaneseq
        %v2348 = vshrl.u32 %v2347, 7
        %v2349 = vsub.s32 %v2346, %v2348
        %v2350 = vrot.slane %v2342, %v2349
        %v2352 = vunpack.c.l.s4 1983009808
        %v2353 = vunpack.c.0.s8 %v2352
        %v2354 = vlaneseq
        %v2355 = vshrl.u32 %v2354, 7
        %v2356 = vsub.s32 %v2353, %v2355
        %v2357 = vrot.slane %v2343, %v2356
        %v2358 = vcombine.low %v2334, %v2350
        %v2359 = vcombine.high %v2334, %v2350
        %v2361 = vunpack.c.l.s4 1934713408
        %v2362 = vunpack.c.0.s8 %v2361
        %v2363 = vlaneseq
        %v2364 = vshrl.u32 %v2363, 7
        %v2365 = vsub.s32 %v2362, %v2364
        %v2366 = vrot.slane %v2358, %v2365
        %v2368 = vunpack.c.l.s4 1934713408
        %v2369 = vunpack.c.0.s8 %v2368
        %v2370 = vlaneseq
        %v2371 = vshrl.u32 %v2370, 7
        %v2372 = vsub.s32 %v2369, %v2371
        %v2373 = vrot.slane %v2359, %v2372
        %v2374 = vcombine.low %v2341, %v2357
        %v2375 = vcombine.high %v2341, %v2357
        %v2377 = vunpack.c.l.s4 1934713408
        %v2378 = vunpack.c.0.s8 %v2377
        %v2379 = vlaneseq
        %v2380 = vshrl.u32 %v2379, 7
        %v2381 = vsub.s32 %v2378, %v2380
        %v2382 = vrot.slane %v2374, %v2381
        %v2384 = vunpack.c.l.s4 1934713408
        %v2385 = vunpack.c.0.s8 %v2384
        %v2386 = vlaneseq
        %v2387 = vshrl.u32 %v2386, 7
        %v2388 = vsub.s32 %v2385, %v2387
        %v2389 = vrot.slane %v2375, %v2388
        %v2390 = vcombine.high %v2366, 0.0
        %v2391 = vcombine.high %v2373, 0.0
        %v2392 = vcombine.high %v2382, 0.0
        %v2393 = vcombine.high %v2389, 0.0
        %v2394 = vcombine.low %v2298, %v2305
        %v2396 = vunpack.c.l.s4 1983009808
        %v2397 = vunpack.c.0.s8 %v2396
        %v2398 = vlaneseq
        %v2399 = vshrl.u32 %v2398, 7
        %v2400 = vsub.s32 %v2397, %v2399
        %v2401 = vrot.slane %v2394, %v2400
        %v2402 = vcombine.low %v2322, %v2323
        %v2404 = vunpack.c.l.s4 1983009808
        %v2405 = vunpack.c.0.s8 %v2404
        %v2406 = vlaneseq
        %v2407 = vshrl.u32 %v2406, 7
        %v2408 = vsub.s32 %v2405, %v2407
        %v2409 = vrot.slane %v2402, %v2408
        %v2410 = vcombine.low %v2314, %v2321
        %v2412 = vunpack.c.l.s4 1983009808
        %v2413 = vunpack.c.0.s8 %v2412
        %v2414 = vlaneseq
        %v2415 = vshrl.u32 %v2414, 7
        %v2416 = vsub.s32 %v2413, %v2415
        %v2417 = vrot.slane %v2410, %v2416
        %v2418 = vcombine.low %v2324, %v2325
        %v2420 = vunpack.c.l.s4 1983009808
        %v2421 = vunpack.c.0.s8 %v2420
        %v2422 = vlaneseq
        %v2423 = vshrl.u32 %v2422, 7
        %v2424 = vsub.s32 %v2421, %v2423
        %v2425 = vrot.slane %v2418, %v2424
        %v2426 = vcombine.low %v2401, %v2409
        %v2427 = vcombine.high %v2401, %v2409
        %v2429 = vunpack.c.l.s4 1934713408
        %v2430 = vunpack.c.0.s8 %v2429
        %v2431 = vlaneseq
        %v2432 = vshrl.u32 %v2431, 7
        %v2433 = vsub.s32 %v2430, %v2432
        %v2434 = vrot.slane %v2426, %v2433
        %v2436 = vunpack.c.l.s4 1934713408
        %v2437 = vunpack.c.0.s8 %v2436
        %v2438 = vlaneseq
        %v2439 = vshrl.u32 %v2438, 7
        %v2440 = vsub.s32 %v2437, %v2439
        %v2441 = vrot.slane %v2427, %v2440
        %v2442 = vcombine.low %v2417, %v2425
        %v2443 = vcombine.high %v2417, %v2425
        %v2445 = vunpack.c.l.s4 1934713408
        %v2446 = vunpack.c.0.s8 %v2445
        %v2447 = vlaneseq
        %v2448 = vshrl.u32 %v2447, 7
        %v2449 = vsub.s32 %v2446, %v2448
        %v2450 = vrot.slane %v2442, %v2449
        %v2452 = vunpack.c.l.s4 1934713408
        %v2453 = vunpack.c.0.s8 %v2452
        %v2454 = vlaneseq
        %v2455 = vshrl.u32 %v2454, 7
        %v2456 = vsub.s32 %v2453, %v2455
        %v2457 = vrot.slane %v2443, %v2456
        %v2458 = vcombine.low %v2434, %v2450
        %v2459 = vcombine.high %v2434, %v2450
        %v2460 = vcombine.low %v2441, %v2457
        %v2461 = vcombine.high %v2441, %v2457
        %v2462 = vcombine.low %v2366, %v2373
        %v2464 = vunpack.c.l.s4 1983009808
        %v2465 = vunpack.c.0.s8 %v2464
        %v2466 = vlaneseq
        %v2467 = vshrl.u32 %v2466, 7
        %v2468 = vsub.s32 %v2465, %v2467
        %v2469 = vrot.slane %v2462, %v2468
        %v2470 = vcombine.low %v2390, %v2391
        %v2472 = vunpack.c.l.s4 1983009808
        %v2473 = vunpack.c.0.s8 %v2472
        %v2474 = vlaneseq
        %v2475 = vshrl.u32 %v2474, 7
        %v2476 = vsub.s32 %v2473, %v2475
        %v2477 = vrot.slane %v2470, %v2476
        %v2478 = vcombine.low %v2382, %v2389
        %v2480 = vunpack.c.l.s4 1983009808
        %v2481 = vunpack.c.0.s8 %v2480
        %v2482 = vlaneseq
        %v2483 = vshrl.u32 %v2482, 7
        %v2484 = vsub.s32 %v2481, %v2483
        %v2485 = vrot.slane %v2478, %v2484
        %v2486 = vcombine.low %v2392, %v2393
        %v2488 = vunpack.c.l.s4 1983009808
        %v2489 = vunpack.c.0.s8 %v2488
        %v2490 = vlaneseq
        %v2491 = vshrl.u32 %v2490, 7
        %v2492 = vsub.s32 %v2489, %v2491
        %v2493 = vrot.slane %v2486, %v2492
        %v2494 = vcombine.low %v2469, %v2477
        %v2495 = vcombine.high %v2469, %v2477
        %v2497 = vunpack.c.l.s4 1934713408
        %v2498 = vunpack.c.0.s8 %v2497
        %v2499 = vlaneseq
        %v2500 = vshrl.u32 %v2499, 7
        %v2501 = vsub.s32 %v2498, %v2500
        %v2502 = vrot.slane %v2494, %v2501
        %v2504 = vunpack.c.l.s4 1934713408
        %v2505 = vunpack.c.0.s8 %v2504
        %v2506 = vlaneseq
        %v2507 = vshrl.u32 %v2506, 7
        %v2508 = vsub.s32 %v2505, %v2507
        %v2509 = vrot.slane %v2495, %v2508
        %v2510 = vcombine.low %v2485, %v2493
        %v2511 = vcombine.high %v2485, %v2493
        %v2513 = vunpack.c.l.s4 1934713408
        %v2514 = vunpack.c.0.s8 %v2513
        %v2515 = vlaneseq
        %v2516 = vshrl.u32 %v2515, 7
        %v2517 = vsub.s32 %v2514, %v2516
        %v2518 = vrot.slane %v2510, %v2517
        %v2520 = vunpack.c.l.s4 1934713408
        %v2521 = vunpack.c.0.s8 %v2520
        %v2522 = vlaneseq
        %v2523 = vshrl.u32 %v2522, 7
        %v2524 = vsub.s32 %v2521, %v2523
        %v2525 = vrot.slane %v2511, %v2524
        %v2526 = vcombine.low %v2502, %v2518
        %v2527 = vcombine.high %v2502, %v2518
        %v2528 = vcombine.low %v2509, %v2525
        %v2529 = vcombine.high %v2509, %v2525
        %v2530 = vpack.c.bf16 %v2458, %v2458
        %v2531 = vpack.c.bf16 %v2459, %v2459
        %v2532 = vpack.c.bf16 %v2460, %v2460
        %v2533 = vpack.c.bf16 %v2461, %v2461
        %v2534 = vpack.c.bf16 %v2526, %v2526
        %v2535 = vpack.c.bf16 %v2527, %v2527
        %v2536 = vpack.c.bf16 %v2528, %v2528
        %v2537 = vpack.c.bf16 %v2529, %v2529
        %vm2538 = vcmask 261120
        %v2540 = vsel %vm2538, %v1930, 0
        %v2543 = vsel %vm2538, %v2230, 0
        %2545 = vmatprep.subr.bf16.mxu0 0
        %2546 = vmatpush1.bf16.xpose.msra.mxu0 %v2543
        %2547 = vmatprep.subr.bf16.mxu0 0
        %2548 = vmatpush1.bf16.xpose.msra.mxu0 0
        %2549 = vmatprep.subr.bf16.mxu0 0
        %2550 = vmatpush1.bf16.xpose.msra.mxu0 0
        %2551 = vmatprep.subr.bf16.mxu0 0
        %2552 = vmatpush1.bf16.xpose.msra.mxu0 0
        %2553 = vmatprep.subr.bf16.mxu0 0
        %2554 = vmatpush1.bf16.xpose.msra.mxu0 0
        %2555 = vmatprep.subr.bf16.mxu0 0
        %2556 = vmatpush1.bf16.xpose.msra.mxu0 0
        %2557 = vmatprep.subr.bf16.mxu0 0
        %2558 = vmatpush1.bf16.xpose.msra.mxu0 0
        %2559 = vmatprep.subr.bf16.mxu0 0
        %2560 = vmatpush1.bf16.xpose.msra.mxu0 0
        %2561 = vmatprep.subr.bf16.mxu0 0
        %2562 = vmatpush1.bf16.xpose.msra.mxu0 0
        %2563 = vmatprep.subr.bf16.mxu0 0
        %2564 = vmatpush1.bf16.xpose.msra.mxu0 0
        %2565 = vmatprep.subr.bf16.mxu0 0
        %2566 = vmatpush1.bf16.xpose.msra.mxu0 0
        %2567 = vmatprep.subr.bf16.mxu0 0
        %2568 = vmatpush1.bf16.xpose.msra.mxu0 0
        %2569 = vmatprep.subr.bf16.mxu0 0
        %2570 = vmatpush1.bf16.xpose.msra.mxu0 0
        %2571 = vmatprep.subr.bf16.mxu0 0
        %2572 = vmatpush1.bf16.xpose.msra.mxu0 0
        %2573 = vmatprep.subr.bf16.mxu0 0
        %2574 = vmatpush1.bf16.xpose.msra.mxu0 0
        %2575 = vmatprep.subr.bf16.mxu0 0
        %2576 = vmatpush1.bf16.xpose.msra.mxu0 0
        %2577 = vmatprep.mubr.bf16.mxu0 0
        %2578 = vmatmul.mubr.bf16.gmra.mrb[0].mxu0 %v2540
        %v2579 = vpop.f32.mrb[0].mxu0
        %v2580 = vadd.f32 %v1374, %v2579
        %v2581 = vpop.f32.mrb[0].mxu0
        %v2582 = vpop.f32.mrb[0].mxu0
        %v2583 = vpop.f32.mrb[0].mxu0
        %2584 = vdwg.mxu0
        %v2586 = vsel %vm2538, %v1931, 0
        %v2589 = vsel %vm2538, %v2231, 0
        %2591 = vmatprep.subr.bf16.mxu0 0
        %2592 = vmatpush1.bf16.xpose.msra.mxu0 %v2589
        %2593 = vmatprep.subr.bf16.mxu0 0
        %2594 = vmatpush1.bf16.xpose.msra.mxu0 0
        %2595 = vmatprep.subr.bf16.mxu0 0
        %2596 = vmatpush1.bf16.xpose.msra.mxu0 0
        %2597 = vmatprep.subr.bf16.mxu0 0
        %2598 = vmatpush1.bf16.xpose.msra.mxu0 0
        %2599 = vmatprep.subr.bf16.mxu0 0
        %2600 = vmatpush1.bf16.xpose.msra.mxu0 0
        %2601 = vmatprep.subr.bf16.mxu0 0
        %2602 = vmatpush1.bf16.xpose.msra.mxu0 0
        %2603 = vmatprep.subr.bf16.mxu0 0
        %2604 = vmatpush1.bf16.xpose.msra.mxu0 0
        %2605 = vmatprep.subr.bf16.mxu0 0
        %2606 = vmatpush1.bf16.xpose.msra.mxu0 0
        %2607 = vmatprep.subr.bf16.mxu0 0
        %2608 = vmatpush1.bf16.xpose.msra.mxu0 0
        %2609 = vmatprep.subr.bf16.mxu0 0
        %2610 = vmatpush1.bf16.xpose.msra.mxu0 0
        %2611 = vmatprep.subr.bf16.mxu0 0
        %2612 = vmatpush1.bf16.xpose.msra.mxu0 0
        %2613 = vmatprep.subr.bf16.mxu0 0
        %2614 = vmatpush1.bf16.xpose.msra.mxu0 0
        %2615 = vmatprep.subr.bf16.mxu0 0
        %2616 = vmatpush1.bf16.xpose.msra.mxu0 0
        %2617 = vmatprep.subr.bf16.mxu0 0
        %2618 = vmatpush1.bf16.xpose.msra.mxu0 0
        %2619 = vmatprep.subr.bf16.mxu0 0
        %2620 = vmatpush1.bf16.xpose.msra.mxu0 0
        %2621 = vmatprep.subr.bf16.mxu0 0
        %2622 = vmatpush1.bf16.xpose.msra.mxu0 0
        %2623 = vmatprep.mubr.bf16.mxu0 0
        %2624 = vmatmul.mubr.bf16.gmra.mrb[0].mxu0 %v2586
        %v2625 = vpop.f32.mrb[0].mxu0
        %v2626 = vadd.f32 %v1374, %v2625
        %v2627 = vpop.f32.mrb[0].mxu0
        %v2628 = vpop.f32.mrb[0].mxu0
        %v2629 = vpop.f32.mrb[0].mxu0
        %2630 = vdwg.mxu0
        %v2632 = vsel %vm2538, %v1932, 0
        %v2635 = vsel %vm2538, %v2232, 0
        %2637 = vmatprep.subr.bf16.mxu0 0
        %2638 = vmatpush1.bf16.xpose.msra.mxu0 %v2635
        %2639 = vmatprep.subr.bf16.mxu0 0
        %2640 = vmatpush1.bf16.xpose.msra.mxu0 0
        %2641 = vmatprep.subr.bf16.mxu0 0
        %2642 = vmatpush1.bf16.xpose.msra.mxu0 0
        %2643 = vmatprep.subr.bf16.mxu0 0
        %2644 = vmatpush1.bf16.xpose.msra.mxu0 0
        %2645 = vmatprep.subr.bf16.mxu0 0
        %2646 = vmatpush1.bf16.xpose.msra.mxu0 0
        %2647 = vmatprep.subr.bf16.mxu0 0
        %2648 = vmatpush1.bf16.xpose.msra.mxu0 0
        %2649 = vmatprep.subr.bf16.mxu0 0
        %2650 = vmatpush1.bf16.xpose.msra.mxu0 0
        %2651 = vmatprep.subr.bf16.mxu0 0
        %2652 = vmatpush1.bf16.xpose.msra.mxu0 0
        %2653 = vmatprep.subr.bf16.mxu0 0
        %2654 = vmatpush1.bf16.xpose.msra.mxu0 0
        %2655 = vmatprep.subr.bf16.mxu0 0
        %2656 = vmatpush1.bf16.xpose.msra.mxu0 0
        %2657 = vmatprep.subr.bf16.mxu0 0
        %2658 = vmatpush1.bf16.xpose.msra.mxu0 0
        %2659 = vmatprep.subr.bf16.mxu0 0
        %2660 = vmatpush1.bf16.xpose.msra.mxu0 0
        %2661 = vmatprep.subr.bf16.mxu0 0
        %2662 = vmatpush1.bf16.xpose.msra.mxu0 0
        %2663 = vmatprep.subr.bf16.mxu0 0
        %2664 = vmatpush1.bf16.xpose.msra.mxu0 0
        %2665 = vmatprep.subr.bf16.mxu0 0
        %2666 = vmatpush1.bf16.xpose.msra.mxu0 0
        %2667 = vmatprep.subr.bf16.mxu0 0
        %2668 = vmatpush1.bf16.xpose.msra.mxu0 0
        %2669 = vmatprep.mubr.bf16.mxu0 0
        %2670 = vmatmul.mubr.bf16.gmra.mrb[0].mxu0 %v2632
        %v2671 = vpop.f32.mrb[0].mxu0
        %v2672 = vadd.f32 %v1374, %v2671
        %v2673 = vpop.f32.mrb[0].mxu0
        %v2674 = vpop.f32.mrb[0].mxu0
        %v2675 = vpop.f32.mrb[0].mxu0
        %2676 = vdwg.mxu0
        %v2678 = vsel %vm2538, %v1933, 0
        %v2681 = vsel %vm2538, %v2233, 0
        %2683 = vmatprep.subr.bf16.mxu0 0
        %2684 = vmatpush1.bf16.xpose.msra.mxu0 %v2681
        %2685 = vmatprep.subr.bf16.mxu0 0
        %2686 = vmatpush1.bf16.xpose.msra.mxu0 0
        %2687 = vmatprep.subr.bf16.mxu0 0
        %2688 = vmatpush1.bf16.xpose.msra.mxu0 0
        %2689 = vmatprep.subr.bf16.mxu0 0
        %2690 = vmatpush1.bf16.xpose.msra.mxu0 0
        %2691 = vmatprep.subr.bf16.mxu0 0
        %2692 = vmatpush1.bf16.xpose.msra.mxu0 0
        %2693 = vmatprep.subr.bf16.mxu0 0
        %2694 = vmatpush1.bf16.xpose.msra.mxu0 0
        %2695 = vmatprep.subr.bf16.mxu0 0
        %2696 = vmatpush1.bf16.xpose.msra.mxu0 0
        %2697 = vmatprep.subr.bf16.mxu0 0
        %2698 = vmatpush1.bf16.xpose.msra.mxu0 0
        %2699 = vmatprep.subr.bf16.mxu0 0
        %2700 = vmatpush1.bf16.xpose.msra.mxu0 0
        %2701 = vmatprep.subr.bf16.mxu0 0
        %2702 = vmatpush1.bf16.xpose.msra.mxu0 0
        %2703 = vmatprep.subr.bf16.mxu0 0
        %2704 = vmatpush1.bf16.xpose.msra.mxu0 0
        %2705 = vmatprep.subr.bf16.mxu0 0
        %2706 = vmatpush1.bf16.xpose.msra.mxu0 0
        %2707 = vmatprep.subr.bf16.mxu0 0
        %2708 = vmatpush1.bf16.xpose.msra.mxu0 0
        %2709 = vmatprep.subr.bf16.mxu0 0
        %2710 = vmatpush1.bf16.xpose.msra.mxu0 0
        %2711 = vmatprep.subr.bf16.mxu0 0
        %2712 = vmatpush1.bf16.xpose.msra.mxu0 0
        %2713 = vmatprep.subr.bf16.mxu0 0
        %2714 = vmatpush1.bf16.xpose.msra.mxu0 0
        %2715 = vmatprep.mubr.bf16.mxu0 0
        %2716 = vmatmul.mubr.bf16.gmra.mrb[0].mxu0 %v2678
        %v2717 = vpop.f32.mrb[0].mxu0
        %v2718 = vadd.f32 %v1374, %v2717
        %v2719 = vpop.f32.mrb[0].mxu0
        %v2720 = vpop.f32.mrb[0].mxu0
        %v2721 = vpop.f32.mrb[0].mxu0
        %2722 = vdwg.mxu0
        %v2724 = vsel %vm2538, %v1934, 0
        %v2727 = vsel %vm2538, %v2234, 0
        %2729 = vmatprep.subr.bf16.mxu0 0
        %2730 = vmatpush1.bf16.xpose.msra.mxu0 %v2727
        %2731 = vmatprep.subr.bf16.mxu0 0
        %2732 = vmatpush1.bf16.xpose.msra.mxu0 0
        %2733 = vmatprep.subr.bf16.mxu0 0
        %2734 = vmatpush1.bf16.xpose.msra.mxu0 0
        %2735 = vmatprep.subr.bf16.mxu0 0
        %2736 = vmatpush1.bf16.xpose.msra.mxu0 0
        %2737 = vmatprep.subr.bf16.mxu0 0
        %2738 = vmatpush1.bf16.xpose.msra.mxu0 0
        %2739 = vmatprep.subr.bf16.mxu0 0
        %2740 = vmatpush1.bf16.xpose.msra.mxu0 0
        %2741 = vmatprep.subr.bf16.mxu0 0
        %2742 = vmatpush1.bf16.xpose.msra.mxu0 0
        %2743 = vmatprep.subr.bf16.mxu0 0
        %2744 = vmatpush1.bf16.xpose.msra.mxu0 0
        %2745 = vmatprep.subr.bf16.mxu0 0
        %2746 = vmatpush1.bf16.xpose.msra.mxu0 0
        %2747 = vmatprep.subr.bf16.mxu0 0
        %2748 = vmatpush1.bf16.xpose.msra.mxu0 0
        %2749 = vmatprep.subr.bf16.mxu0 0
        %2750 = vmatpush1.bf16.xpose.msra.mxu0 0
        %2751 = vmatprep.subr.bf16.mxu0 0
        %2752 = vmatpush1.bf16.xpose.msra.mxu0 0
        %2753 = vmatprep.subr.bf16.mxu0 0
        %2754 = vmatpush1.bf16.xpose.msra.mxu0 0
        %2755 = vmatprep.subr.bf16.mxu0 0
        %2756 = vmatpush1.bf16.xpose.msra.mxu0 0
        %2757 = vmatprep.subr.bf16.mxu0 0
        %2758 = vmatpush1.bf16.xpose.msra.mxu0 0
        %2759 = vmatprep.subr.bf16.mxu0 0
        %2760 = vmatpush1.bf16.xpose.msra.mxu0 0
        %2761 = vmatprep.mubr.bf16.mxu0 0
        %2762 = vmatmul.mubr.bf16.gmra.mrb[0].mxu0 %v2724
        %v2763 = vpop.f32.mrb[0].mxu0
        %v2764 = vadd.f32 %v1375, %v2763
        %v2765 = vpop.f32.mrb[0].mxu0
        %v2766 = vpop.f32.mrb[0].mxu0
        %v2767 = vpop.f32.mrb[0].mxu0
        %2768 = vdwg.mxu0
        %v2770 = vsel %vm2538, %v1935, 0
        %v2773 = vsel %vm2538, %v2235, 0
        %2775 = vmatprep.subr.bf16.mxu0 0
        %2776 = vmatpush1.bf16.xpose.msra.mxu0 %v2773
        %2777 = vmatprep.subr.bf16.mxu0 0
        %2778 = vmatpush1.bf16.xpose.msra.mxu0 0
        %2779 = vmatprep.subr.bf16.mxu0 0
        %2780 = vmatpush1.bf16.xpose.msra.mxu0 0
        %2781 = vmatprep.subr.bf16.mxu0 0
        %2782 = vmatpush1.bf16.xpose.msra.mxu0 0
        %2783 = vmatprep.subr.bf16.mxu0 0
        %2784 = vmatpush1.bf16.xpose.msra.mxu0 0
        %2785 = vmatprep.subr.bf16.mxu0 0
        %2786 = vmatpush1.bf16.xpose.msra.mxu0 0
        %2787 = vmatprep.subr.bf16.mxu0 0
        %2788 = vmatpush1.bf16.xpose.msra.mxu0 0
        %2789 = vmatprep.subr.bf16.mxu0 0
        %2790 = vmatpush1.bf16.xpose.msra.mxu0 0
        %2791 = vmatprep.subr.bf16.mxu0 0
        %2792 = vmatpush1.bf16.xpose.msra.mxu0 0
        %2793 = vmatprep.subr.bf16.mxu0 0
        %2794 = vmatpush1.bf16.xpose.msra.mxu0 0
        %2795 = vmatprep.subr.bf16.mxu0 0
        %2796 = vmatpush1.bf16.xpose.msra.mxu0 0
        %2797 = vmatprep.subr.bf16.mxu0 0
        %2798 = vmatpush1.bf16.xpose.msra.mxu0 0
        %2799 = vmatprep.subr.bf16.mxu0 0
        %2800 = vmatpush1.bf16.xpose.msra.mxu0 0
        %2801 = vmatprep.subr.bf16.mxu0 0
        %2802 = vmatpush1.bf16.xpose.msra.mxu0 0
        %2803 = vmatprep.subr.bf16.mxu0 0
        %2804 = vmatpush1.bf16.xpose.msra.mxu0 0
        %2805 = vmatprep.subr.bf16.mxu0 0
        %2806 = vmatpush1.bf16.xpose.msra.mxu0 0
        %2807 = vmatprep.mubr.bf16.mxu0 0
        %2808 = vmatmul.mubr.bf16.gmra.mrb[0].mxu0 %v2770
        %v2809 = vpop.f32.mrb[0].mxu0
        %v2810 = vadd.f32 %v1375, %v2809
        %v2811 = vpop.f32.mrb[0].mxu0
        %v2812 = vpop.f32.mrb[0].mxu0
        %v2813 = vpop.f32.mrb[0].mxu0
        %2814 = vdwg.mxu0
        %v2816 = vsel %vm2538, %v1936, 0
        %v2819 = vsel %vm2538, %v2236, 0
        %2821 = vmatprep.subr.bf16.mxu0 0
        %2822 = vmatpush1.bf16.xpose.msra.mxu0 %v2819
        %2823 = vmatprep.subr.bf16.mxu0 0
        %2824 = vmatpush1.bf16.xpose.msra.mxu0 0
        %2825 = vmatprep.subr.bf16.mxu0 0
        %2826 = vmatpush1.bf16.xpose.msra.mxu0 0
        %2827 = vmatprep.subr.bf16.mxu0 0
        %2828 = vmatpush1.bf16.xpose.msra.mxu0 0
        %2829 = vmatprep.subr.bf16.mxu0 0
        %2830 = vmatpush1.bf16.xpose.msra.mxu0 0
        %2831 = vmatprep.subr.bf16.mxu0 0
        %2832 = vmatpush1.bf16.xpose.msra.mxu0 0
        %2833 = vmatprep.subr.bf16.mxu0 0
        %2834 = vmatpush1.bf16.xpose.msra.mxu0 0
        %2835 = vmatprep.subr.bf16.mxu0 0
        %2836 = vmatpush1.bf16.xpose.msra.mxu0 0
        %2837 = vmatprep.subr.bf16.mxu0 0
        %2838 = vmatpush1.bf16.xpose.msra.mxu0 0
        %2839 = vmatprep.subr.bf16.mxu0 0
        %2840 = vmatpush1.bf16.xpose.msra.mxu0 0
        %2841 = vmatprep.subr.bf16.mxu0 0
        %2842 = vmatpush1.bf16.xpose.msra.mxu0 0
        %2843 = vmatprep.subr.bf16.mxu0 0
        %2844 = vmatpush1.bf16.xpose.msra.mxu0 0
        %2845 = vmatprep.subr.bf16.mxu0 0
        %2846 = vmatpush1.bf16.xpose.msra.mxu0 0
        %2847 = vmatprep.subr.bf16.mxu0 0
        %2848 = vmatpush1.bf16.xpose.msra.mxu0 0
        %2849 = vmatprep.subr.bf16.mxu0 0
        %2850 = vmatpush1.bf16.xpose.msra.mxu0 0
        %2851 = vmatprep.subr.bf16.mxu0 0
        %2852 = vmatpush1.bf16.xpose.msra.mxu0 0
        %2853 = vmatprep.mubr.bf16.mxu0 0
        %2854 = vmatmul.mubr.bf16.gmra.mrb[0].mxu0 %v2816
        %v2855 = vpop.f32.mrb[0].mxu0
        %v2856 = vadd.f32 %v1375, %v2855
        %v2857 = vpop.f32.mrb[0].mxu0
        %v2858 = vpop.f32.mrb[0].mxu0
        %v2859 = vpop.f32.mrb[0].mxu0
        %2860 = vdwg.mxu0
        %v2862 = vsel %vm2538, %v1937, 0
        %v2865 = vsel %vm2538, %v2237, 0
        %2867 = vmatprep.subr.bf16.mxu0 0
        %2868 = vmatpush1.bf16.xpose.msra.mxu0 %v2865
        %2869 = vmatprep.subr.bf16.mxu0 0
        %2870 = vmatpush1.bf16.xpose.msra.mxu0 0
        %2871 = vmatprep.subr.bf16.mxu0 0
        %2872 = vmatpush1.bf16.xpose.msra.mxu0 0
        %2873 = vmatprep.subr.bf16.mxu0 0
        %2874 = vmatpush1.bf16.xpose.msra.mxu0 0
        %2875 = vmatprep.subr.bf16.mxu0 0
        %2876 = vmatpush1.bf16.xpose.msra.mxu0 0
        %2877 = vmatprep.subr.bf16.mxu0 0
        %2878 = vmatpush1.bf16.xpose.msra.mxu0 0
        %2879 = vmatprep.subr.bf16.mxu0 0
        %2880 = vmatpush1.bf16.xpose.msra.mxu0 0
        %2881 = vmatprep.subr.bf16.mxu0 0
        %2882 = vmatpush1.bf16.xpose.msra.mxu0 0
        %2883 = vmatprep.subr.bf16.mxu0 0
        %2884 = vmatpush1.bf16.xpose.msra.mxu0 0
        %2885 = vmatprep.subr.bf16.mxu0 0
        %2886 = vmatpush1.bf16.xpose.msra.mxu0 0
        %2887 = vmatprep.subr.bf16.mxu0 0
        %2888 = vmatpush1.bf16.xpose.msra.mxu0 0
        %2889 = vmatprep.subr.bf16.mxu0 0
        %2890 = vmatpush1.bf16.xpose.msra.mxu0 0
        %2891 = vmatprep.subr.bf16.mxu0 0
        %2892 = vmatpush1.bf16.xpose.msra.mxu0 0
        %2893 = vmatprep.subr.bf16.mxu0 0
        %2894 = vmatpush1.bf16.xpose.msra.mxu0 0
        %2895 = vmatprep.subr.bf16.mxu0 0
        %2896 = vmatpush1.bf16.xpose.msra.mxu0 0
        %2897 = vmatprep.subr.bf16.mxu0 0
        %2898 = vmatpush1.bf16.xpose.msra.mxu0 0
        %2899 = vmatprep.mubr.bf16.mxu0 0
        %2900 = vmatmul.mubr.bf16.gmra.mrb[0].mxu0 %v2862
        %v2901 = vpop.f32.mrb[0].mxu0
        %v2902 = vadd.f32 %v1375, %v2901
        %v2903 = vpop.f32.mrb[0].mxu0
        %v2904 = vpop.f32.mrb[0].mxu0
        %v2905 = vpop.f32.mrb[0].mxu0
        %2906 = vdwg.mxu0
        %vm2907 = vcmask 64512
        %v2908 = vsel %vm2907, %v2580, -inf
        %2909 = vmax.xlane.f32.xlu0 %v2908
        %v2910 = vpop.xlane.xlu0 %2909
        %v2911 = vsel %vm2907, %v2626, -inf
        %2912 = vmax.xlane.f32.xlu0 %v2911
        %v2913 = vpop.xlane.xlu0 %2912
        %v2914 = vsel %vm2907, %v2672, -inf
        %2915 = vmax.xlane.f32.xlu0 %v2914
        %v2916 = vpop.xlane.xlu0 %2915
        %v2917 = vsel %vm2907, %v2718, -inf
        %2918 = vmax.xlane.f32.xlu0 %v2917
        %v2919 = vpop.xlane.xlu0 %2918
        %v2920 = vsel %vm2907, %v2764, -inf
        %2921 = vmax.xlane.f32.xlu0 %v2920
        %v2922 = vpop.xlane.xlu0 %2921
        %v2923 = vsel %vm2907, %v2810, -inf
        %2924 = vmax.xlane.f32.xlu0 %v2923
        %v2925 = vpop.xlane.xlu0 %2924
        %v2926 = vsel %vm2907, %v2856, -inf
        %2927 = vmax.xlane.f32.xlu0 %v2926
        %v2928 = vpop.xlane.xlu0 %2927
        %v2929 = vsel %vm2907, %v2902, -inf
        %2930 = vmax.xlane.f32.xlu0 %v2929
        %v2931 = vpop.xlane.xlu0 %2930
        %v2932 = vsub.f32 %v2580, %v2910
        %v2933 = vsub.f32 %v2626, %v2913
        %v2934 = vsub.f32 %v2672, %v2916
        %v2935 = vsub.f32 %v2718, %v2919
        %v2936 = vsub.f32 %v2764, %v2922
        %v2937 = vsub.f32 %v2810, %v2925
        %v2938 = vsub.f32 %v2856, %v2928
        %v2939 = vsub.f32 %v2902, %v2931
        %v2940 = vmul.f32 %v2932, 1.442695
        %v2941 = vpow.pop %v2940
        %v2942 = vmul.f32 %v2933, 1.442695
        %v2943 = vpow.pop %v2942
        %v2944 = vmul.f32 %v2934, 1.442695
        %v2945 = vpow.pop %v2944
        %v2946 = vmul.f32 %v2935, 1.442695
        %v2947 = vpow.pop %v2946
        %v2948 = vmul.f32 %v2936, 1.442695
        %v2949 = vpow.pop %v2948
        %v2950 = vmul.f32 %v2937, 1.442695
        %v2951 = vpow.pop %v2950
        %v2952 = vmul.f32 %v2938, 1.442695
        %v2953 = vpow.pop %v2952
        %v2954 = vmul.f32 %v2939, 1.442695
        %v2955 = vpow.pop %v2954
        %v2956 = vpack.c.bf16 %v2941, %v2941
        %v2957 = vpack.c.bf16 %v2943, %v2943
        %v2958 = vpack.c.bf16 %v2945, %v2945
        %v2959 = vpack.c.bf16 %v2947, %v2947
        %v2960 = vpack.c.bf16 %v2949, %v2949
        %v2961 = vpack.c.bf16 %v2951, %v2951
        %v2962 = vpack.c.bf16 %v2953, %v2953
        %v2963 = vpack.c.bf16 %v2955, %v2955
        %v2965 = vsel %vm2907, %v2956, 0
        %vm2967 = vcmask 1043456
        %v2969 = vsel %vm2967, %v2530, 0
        %2971 = vmatprep.subr.bf16.mxu0 0
        %2972 = vmatpush1.bf16.msra.mxu0 %v2969
        %2973 = vmatprep.subr.bf16.mxu0 0
        %2974 = vmatpush1.bf16.msra.mxu0 0
        %2975 = vmatprep.subr.bf16.mxu0 0
        %2976 = vmatpush1.bf16.msra.mxu0 0
        %2977 = vmatprep.subr.bf16.mxu0 0
        %2978 = vmatpush1.bf16.msra.mxu0 0
        %2979 = vmatprep.subr.bf16.mxu0 0
        %2980 = vmatpush1.bf16.msra.mxu0 0
        %2981 = vmatprep.subr.bf16.mxu0 0
        %2982 = vmatpush1.bf16.msra.mxu0 0
        %2983 = vmatprep.subr.bf16.mxu0 0
        %2984 = vmatpush1.bf16.msra.mxu0 0
        %2985 = vmatprep.subr.bf16.mxu0 0
        %2986 = vmatpush1.bf16.msra.mxu0 0
        %2987 = vmatprep.subr.bf16.mxu0 0
        %2988 = vmatpush1.bf16.msra.mxu0 0
        %2989 = vmatprep.subr.bf16.mxu0 0
        %2990 = vmatpush1.bf16.msra.mxu0 0
        %2991 = vmatprep.subr.bf16.mxu0 0
        %2992 = vmatpush1.bf16.msra.mxu0 0
        %2993 = vmatprep.subr.bf16.mxu0 0
        %2994 = vmatpush1.bf16.msra.mxu0 0
        %2995 = vmatprep.subr.bf16.mxu0 0
        %2996 = vmatpush1.bf16.msra.mxu0 0
        %2997 = vmatprep.subr.bf16.mxu0 0
        %2998 = vmatpush1.bf16.msra.mxu0 0
        %2999 = vmatprep.subr.bf16.mxu0 0
        %3000 = vmatpush1.bf16.msra.mxu0 0
        %3001 = vmatprep.subr.bf16.mxu0 0
        %3002 = vmatpush1.bf16.msra.mxu0 0
        %3003 = vmatprep.mubr.bf16.mxu0 0
        %3004 = vmatmul.mubr.bf16.gmra.mrb[0].mxu0 %v2965
        %v3005 = vpop.f32.mrb[0].mxu0
        %v3006 = vadd.f32 0.0, %v3005
        %v3007 = vpop.f32.mrb[0].mxu0
        %v3008 = vpop.f32.mrb[0].mxu0
        %v3009 = vpop.f32.mrb[0].mxu0
        %3010 = vdwg.mxu0
        %v3012 = vsel %vm2907, %v2957, 0
        %v3015 = vsel %vm2967, %v2531, 0
        %3017 = vmatprep.subr.bf16.mxu0 0
        %3018 = vmatpush1.bf16.msra.mxu0 %v3015
        %3019 = vmatprep.subr.bf16.mxu0 0
        %3020 = vmatpush1.bf16.msra.mxu0 0
        %3021 = vmatprep.subr.bf16.mxu0 0
        %3022 = vmatpush1.bf16.msra.mxu0 0
        %3023 = vmatprep.subr.bf16.mxu0 0
        %3024 = vmatpush1.bf16.msra.mxu0 0
        %3025 = vmatprep.subr.bf16.mxu0 0
        %3026 = vmatpush1.bf16.msra.mxu0 0
        %3027 = vmatprep.subr.bf16.mxu0 0
        %3028 = vmatpush1.bf16.msra.mxu0 0
        %3029 = vmatprep.subr.bf16.mxu0 0
        %3030 = vmatpush1.bf16.msra.mxu0 0
        %3031 = vmatprep.subr.bf16.mxu0 0
        %3032 = vmatpush1.bf16.msra.mxu0 0
        %3033 = vmatprep.subr.bf16.mxu0 0
        %3034 = vmatpush1.bf16.msra.mxu0 0
        %3035 = vmatprep.subr.bf16.mxu0 0
        %3036 = vmatpush1.bf16.msra.mxu0 0
        %3037 = vmatprep.subr.bf16.mxu0 0
        %3038 = vmatpush1.bf16.msra.mxu0 0
        %3039 = vmatprep.subr.bf16.mxu0 0
        %3040 = vmatpush1.bf16.msra.mxu0 0
        %3041 = vmatprep.subr.bf16.mxu0 0
        %3042 = vmatpush1.bf16.msra.mxu0 0
        %3043 = vmatprep.subr.bf16.mxu0 0
        %3044 = vmatpush1.bf16.msra.mxu0 0
        %3045 = vmatprep.subr.bf16.mxu0 0
        %3046 = vmatpush1.bf16.msra.mxu0 0
        %3047 = vmatprep.subr.bf16.mxu0 0
        %3048 = vmatpush1.bf16.msra.mxu0 0
        %3049 = vmatprep.mubr.bf16.mxu0 0
        %3050 = vmatmul.mubr.bf16.gmra.mrb[0].mxu0 %v3012
        %v3051 = vpop.f32.mrb[0].mxu0
        %v3052 = vadd.f32 0.0, %v3051
        %v3053 = vpop.f32.mrb[0].mxu0
        %v3054 = vpop.f32.mrb[0].mxu0
        %v3055 = vpop.f32.mrb[0].mxu0
        %3056 = vdwg.mxu0
        %v3058 = vsel %vm2907, %v2958, 0
        %v3061 = vsel %vm2967, %v2532, 0
        %3063 = vmatprep.subr.bf16.mxu0 0
        %3064 = vmatpush1.bf16.msra.mxu0 %v3061
        %3065 = vmatprep.subr.bf16.mxu0 0
        %3066 = vmatpush1.bf16.msra.mxu0 0
        %3067 = vmatprep.subr.bf16.mxu0 0
        %3068 = vmatpush1.bf16.msra.mxu0 0
        %3069 = vmatprep.subr.bf16.mxu0 0
        %3070 = vmatpush1.bf16.msra.mxu0 0
        %3071 = vmatprep.subr.bf16.mxu0 0
        %3072 = vmatpush1.bf16.msra.mxu0 0
        %3073 = vmatprep.subr.bf16.mxu0 0
        %3074 = vmatpush1.bf16.msra.mxu0 0
        %3075 = vmatprep.subr.bf16.mxu0 0
        %3076 = vmatpush1.bf16.msra.mxu0 0
        %3077 = vmatprep.subr.bf16.mxu0 0
        %3078 = vmatpush1.bf16.msra.mxu0 0
        %3079 = vmatprep.subr.bf16.mxu0 0
        %3080 = vmatpush1.bf16.msra.mxu0 0
        %3081 = vmatprep.subr.bf16.mxu0 0
        %3082 = vmatpush1.bf16.msra.mxu0 0
        %3083 = vmatprep.subr.bf16.mxu0 0
        %3084 = vmatpush1.bf16.msra.mxu0 0
        %3085 = vmatprep.subr.bf16.mxu0 0
        %3086 = vmatpush1.bf16.msra.mxu0 0
        %3087 = vmatprep.subr.bf16.mxu0 0
        %3088 = vmatpush1.bf16.msra.mxu0 0
        %3089 = vmatprep.subr.bf16.mxu0 0
        %3090 = vmatpush1.bf16.msra.mxu0 0
        %3091 = vmatprep.subr.bf16.mxu0 0
        %3092 = vmatpush1.bf16.msra.mxu0 0
        %3093 = vmatprep.subr.bf16.mxu0 0
        %3094 = vmatpush1.bf16.msra.mxu0 0
        %3095 = vmatprep.mubr.bf16.mxu0 0
        %3096 = vmatmul.mubr.bf16.gmra.mrb[0].mxu0 %v3058
        %v3097 = vpop.f32.mrb[0].mxu0
        %v3098 = vadd.f32 0.0, %v3097
        %v3099 = vpop.f32.mrb[0].mxu0
        %v3100 = vpop.f32.mrb[0].mxu0
        %v3101 = vpop.f32.mrb[0].mxu0
        %3102 = vdwg.mxu0
        %v3104 = vsel %vm2907, %v2959, 0
        %v3107 = vsel %vm2967, %v2533, 0
        %3109 = vmatprep.subr.bf16.mxu0 0
        %3110 = vmatpush1.bf16.msra.mxu0 %v3107
        %3111 = vmatprep.subr.bf16.mxu0 0
        %3112 = vmatpush1.bf16.msra.mxu0 0
        %3113 = vmatprep.subr.bf16.mxu0 0
        %3114 = vmatpush1.bf16.msra.mxu0 0
        %3115 = vmatprep.subr.bf16.mxu0 0
        %3116 = vmatpush1.bf16.msra.mxu0 0
        %3117 = vmatprep.subr.bf16.mxu0 0
        %3118 = vmatpush1.bf16.msra.mxu0 0
        %3119 = vmatprep.subr.bf16.mxu0 0
        %3120 = vmatpush1.bf16.msra.mxu0 0
        %3121 = vmatprep.subr.bf16.mxu0 0
        %3122 = vmatpush1.bf16.msra.mxu0 0
        %3123 = vmatprep.subr.bf16.mxu0 0
        %3124 = vmatpush1.bf16.msra.mxu0 0
        %3125 = vmatprep.subr.bf16.mxu0 0
        %3126 = vmatpush1.bf16.msra.mxu0 0
        %3127 = vmatprep.subr.bf16.mxu0 0
        %3128 = vmatpush1.bf16.msra.mxu0 0
        %3129 = vmatprep.subr.bf16.mxu0 0
        %3130 = vmatpush1.bf16.msra.mxu0 0
        %3131 = vmatprep.subr.bf16.mxu0 0
        %3132 = vmatpush1.bf16.msra.mxu0 0
        %3133 = vmatprep.subr.bf16.mxu0 0
        %3134 = vmatpush1.bf16.msra.mxu0 0
        %3135 = vmatprep.subr.bf16.mxu0 0
        %3136 = vmatpush1.bf16.msra.mxu0 0
        %3137 = vmatprep.subr.bf16.mxu0 0
        %3138 = vmatpush1.bf16.msra.mxu0 0
        %3139 = vmatprep.subr.bf16.mxu0 0
        %3140 = vmatpush1.bf16.msra.mxu0 0
        %3141 = vmatprep.mubr.bf16.mxu0 0
        %3142 = vmatmul.mubr.bf16.gmra.mrb[0].mxu0 %v3104
        %v3143 = vpop.f32.mrb[0].mxu0
        %v3144 = vadd.f32 0.0, %v3143
        %v3145 = vpop.f32.mrb[0].mxu0
        %v3146 = vpop.f32.mrb[0].mxu0
        %v3147 = vpop.f32.mrb[0].mxu0
        %3148 = vdwg.mxu0
        %v3150 = vsel %vm2907, %v2960, 0
        %v3153 = vsel %vm2967, %v2534, 0
        %3155 = vmatprep.subr.bf16.mxu0 0
        %3156 = vmatpush1.bf16.msra.mxu0 %v3153
        %3157 = vmatprep.subr.bf16.mxu0 0
        %3158 = vmatpush1.bf16.msra.mxu0 0
        %3159 = vmatprep.subr.bf16.mxu0 0
        %3160 = vmatpush1.bf16.msra.mxu0 0
        %3161 = vmatprep.subr.bf16.mxu0 0
        %3162 = vmatpush1.bf16.msra.mxu0 0
        %3163 = vmatprep.subr.bf16.mxu0 0
        %3164 = vmatpush1.bf16.msra.mxu0 0
        %3165 = vmatprep.subr.bf16.mxu0 0
        %3166 = vmatpush1.bf16.msra.mxu0 0
        %3167 = vmatprep.subr.bf16.mxu0 0
        %3168 = vmatpush1.bf16.msra.mxu0 0
        %3169 = vmatprep.subr.bf16.mxu0 0
        %3170 = vmatpush1.bf16.msra.mxu0 0
        %3171 = vmatprep.subr.bf16.mxu0 0
        %3172 = vmatpush1.bf16.msra.mxu0 0
        %3173 = vmatprep.subr.bf16.mxu0 0
        %3174 = vmatpush1.bf16.msra.mxu0 0
        %3175 = vmatprep.subr.bf16.mxu0 0
        %3176 = vmatpush1.bf16.msra.mxu0 0
        %3177 = vmatprep.subr.bf16.mxu0 0
        %3178 = vmatpush1.bf16.msra.mxu0 0
        %3179 = vmatprep.subr.bf16.mxu0 0
        %3180 = vmatpush1.bf16.msra.mxu0 0
        %3181 = vmatprep.subr.bf16.mxu0 0
        %3182 = vmatpush1.bf16.msra.mxu0 0
        %3183 = vmatprep.subr.bf16.mxu0 0
        %3184 = vmatpush1.bf16.msra.mxu0 0
        %3185 = vmatprep.subr.bf16.mxu0 0
        %3186 = vmatpush1.bf16.msra.mxu0 0
        %3187 = vmatprep.mubr.bf16.mxu0 0
        %3188 = vmatmul.mubr.bf16.gmra.mrb[0].mxu0 %v3150
        %v3189 = vpop.f32.mrb[0].mxu0
        %v3190 = vadd.f32 0.0, %v3189
        %v3191 = vpop.f32.mrb[0].mxu0
        %v3192 = vpop.f32.mrb[0].mxu0
        %v3193 = vpop.f32.mrb[0].mxu0
        %3194 = vdwg.mxu0
        %v3196 = vsel %vm2907, %v2961, 0
        %v3199 = vsel %vm2967, %v2535, 0
        %3201 = vmatprep.subr.bf16.mxu0 0
        %3202 = vmatpush1.bf16.msra.mxu0 %v3199
        %3203 = vmatprep.subr.bf16.mxu0 0
        %3204 = vmatpush1.bf16.msra.mxu0 0
        %3205 = vmatprep.subr.bf16.mxu0 0
        %3206 = vmatpush1.bf16.msra.mxu0 0
        %3207 = vmatprep.subr.bf16.mxu0 0
        %3208 = vmatpush1.bf16.msra.mxu0 0
        %3209 = vmatprep.subr.bf16.mxu0 0
        %3210 = vmatpush1.bf16.msra.mxu0 0
        %3211 = vmatprep.subr.bf16.mxu0 0
        %3212 = vmatpush1.bf16.msra.mxu0 0
        %3213 = vmatprep.subr.bf16.mxu0 0
        %3214 = vmatpush1.bf16.msra.mxu0 0
        %3215 = vmatprep.subr.bf16.mxu0 0
        %3216 = vmatpush1.bf16.msra.mxu0 0
        %3217 = vmatprep.subr.bf16.mxu0 0
        %3218 = vmatpush1.bf16.msra.mxu0 0
        %3219 = vmatprep.subr.bf16.mxu0 0
        %3220 = vmatpush1.bf16.msra.mxu0 0
        %3221 = vmatprep.subr.bf16.mxu0 0
        %3222 = vmatpush1.bf16.msra.mxu0 0
        %3223 = vmatprep.subr.bf16.mxu0 0
        %3224 = vmatpush1.bf16.msra.mxu0 0
        %3225 = vmatprep.subr.bf16.mxu0 0
        %3226 = vmatpush1.bf16.msra.mxu0 0
        %3227 = vmatprep.subr.bf16.mxu0 0
        %3228 = vmatpush1.bf16.msra.mxu0 0
        %3229 = vmatprep.subr.bf16.mxu0 0
        %3230 = vmatpush1.bf16.msra.mxu0 0
        %3231 = vmatprep.subr.bf16.mxu0 0
        %3232 = vmatpush1.bf16.msra.mxu0 0
        %3233 = vmatprep.mubr.bf16.mxu0 0
        %3234 = vmatmul.mubr.bf16.gmra.mrb[0].mxu0 %v3196
        %v3235 = vpop.f32.mrb[0].mxu0
        %v3236 = vadd.f32 0.0, %v3235
        %v3237 = vpop.f32.mrb[0].mxu0
        %v3238 = vpop.f32.mrb[0].mxu0
        %v3239 = vpop.f32.mrb[0].mxu0
        %3240 = vdwg.mxu0
        %v3242 = vsel %vm2907, %v2962, 0
        %v3245 = vsel %vm2967, %v2536, 0
        %3247 = vmatprep.subr.bf16.mxu0 0
        %3248 = vmatpush1.bf16.msra.mxu0 %v3245
        %3249 = vmatprep.subr.bf16.mxu0 0
        %3250 = vmatpush1.bf16.msra.mxu0 0
        %3251 = vmatprep.subr.bf16.mxu0 0
        %3252 = vmatpush1.bf16.msra.mxu0 0
        %3253 = vmatprep.subr.bf16.mxu0 0
        %3254 = vmatpush1.bf16.msra.mxu0 0
        %3255 = vmatprep.subr.bf16.mxu0 0
        %3256 = vmatpush1.bf16.msra.mxu0 0
        %3257 = vmatprep.subr.bf16.mxu0 0
        %3258 = vmatpush1.bf16.msra.mxu0 0
        %3259 = vmatprep.subr.bf16.mxu0 0
        %3260 = vmatpush1.bf16.msra.mxu0 0
        %3261 = vmatprep.subr.bf16.mxu0 0
        %3262 = vmatpush1.bf16.msra.mxu0 0
        %3263 = vmatprep.subr.bf16.mxu0 0
        %3264 = vmatpush1.bf16.msra.mxu0 0
        %3265 = vmatprep.subr.bf16.mxu0 0
        %3266 = vmatpush1.bf16.msra.mxu0 0
        %3267 = vmatprep.subr.bf16.mxu0 0
        %3268 = vmatpush1.bf16.msra.mxu0 0
        %3269 = vmatprep.subr.bf16.mxu0 0
        %3270 = vmatpush1.bf16.msra.mxu0 0
        %3271 = vmatprep.subr.bf16.mxu0 0
        %3272 = vmatpush1.bf16.msra.mxu0 0
        %3273 = vmatprep.subr.bf16.mxu0 0
        %3274 = vmatpush1.bf16.msra.mxu0 0
        %3275 = vmatprep.subr.bf16.mxu0 0
        %3276 = vmatpush1.bf16.msra.mxu0 0
        %3277 = vmatprep.subr.bf16.mxu0 0
        %3278 = vmatpush1.bf16.msra.mxu0 0
        %3279 = vmatprep.mubr.bf16.mxu0 0
        %3280 = vmatmul.mubr.bf16.gmra.mrb[0].mxu0 %v3242
        %v3281 = vpop.f32.mrb[0].mxu0
        %v3282 = vadd.f32 0.0, %v3281
        %v3283 = vpop.f32.mrb[0].mxu0
        %v3284 = vpop.f32.mrb[0].mxu0
        %v3285 = vpop.f32.mrb[0].mxu0
        %3286 = vdwg.mxu0
        %v3288 = vsel %vm2907, %v2963, 0
        %v3291 = vsel %vm2967, %v2537, 0
        %3293 = vmatprep.subr.bf16.mxu0 0
        %3294 = vmatpush1.bf16.msra.mxu0 %v3291
        %3295 = vmatprep.subr.bf16.mxu0 0
        %3296 = vmatpush1.bf16.msra.mxu0 0
        %3297 = vmatprep.subr.bf16.mxu0 0
        %3298 = vmatpush1.bf16.msra.mxu0 0
        %3299 = vmatprep.subr.bf16.mxu0 0
        %3300 = vmatpush1.bf16.msra.mxu0 0
        %3301 = vmatprep.subr.bf16.mxu0 0
        %3302 = vmatpush1.bf16.msra.mxu0 0
        %3303 = vmatprep.subr.bf16.mxu0 0
        %3304 = vmatpush1.bf16.msra.mxu0 0
        %3305 = vmatprep.subr.bf16.mxu0 0
        %3306 = vmatpush1.bf16.msra.mxu0 0
        %3307 = vmatprep.subr.bf16.mxu0 0
        %3308 = vmatpush1.bf16.msra.mxu0 0
        %3309 = vmatprep.subr.bf16.mxu0 0
        %3310 = vmatpush1.bf16.msra.mxu0 0
        %3311 = vmatprep.subr.bf16.mxu0 0
        %3312 = vmatpush1.bf16.msra.mxu0 0
        %3313 = vmatprep.subr.bf16.mxu0 0
        %3314 = vmatpush1.bf16.msra.mxu0 0
        %3315 = vmatprep.subr.bf16.mxu0 0
        %3316 = vmatpush1.bf16.msra.mxu0 0
        %3317 = vmatprep.subr.bf16.mxu0 0
        %3318 = vmatpush1.bf16.msra.mxu0 0
        %3319 = vmatprep.subr.bf16.mxu0 0
        %3320 = vmatpush1.bf16.msra.mxu0 0
        %3321 = vmatprep.subr.bf16.mxu0 0
        %3322 = vmatpush1.bf16.msra.mxu0 0
        %3323 = vmatprep.subr.bf16.mxu0 0
        %3324 = vmatpush1.bf16.msra.mxu0 0
        %3325 = vmatprep.mubr.bf16.mxu0 0
        %3326 = vmatmul.mubr.bf16.gmra.mrb[0].mxu0 %v3288
        %v3327 = vpop.f32.mrb[0].mxu0
        %v3328 = vadd.f32 0.0, %v3327
        %v3329 = vpop.f32.mrb[0].mxu0
        %v3330 = vpop.f32.mrb[0].mxu0
        %v3331 = vpop.f32.mrb[0].mxu0
        %3332 = vdwg.mxu0
        %v3333 = vsel %vm2907, %v2941, 0.0
        %3334 = vadd.xlane.f32.xlu0 %v3333
        %v3335 = vpop.xlane.xlu0 %3334
        %v3336 = vsel %vm2907, %v2943, 0.0
        %3337 = vadd.xlane.f32.xlu0 %v3336
        %v3338 = vpop.xlane.xlu0 %3337
        %v3339 = vsel %vm2907, %v2945, 0.0
        %3340 = vadd.xlane.f32.xlu0 %v3339
        %v3341 = vpop.xlane.xlu0 %3340
        %v3342 = vsel %vm2907, %v2947, 0.0
        %3343 = vadd.xlane.f32.xlu0 %v3342
        %v3344 = vpop.xlane.xlu0 %3343
        %v3345 = vsel %vm2907, %v2949, 0.0
        %3346 = vadd.xlane.f32.xlu0 %v3345
        %v3347 = vpop.xlane.xlu0 %3346
        %v3348 = vsel %vm2907, %v2951, 0.0
        %3349 = vadd.xlane.f32.xlu0 %v3348
        %v3350 = vpop.xlane.xlu0 %3349
        %v3351 = vsel %vm2907, %v2953, 0.0
        %3352 = vadd.xlane.f32.xlu0 %v3351
        %v3353 = vpop.xlane.xlu0 %3352
        %v3354 = vsel %vm2907, %v2955, 0.0
        %3355 = vadd.xlane.f32.xlu0 %v3354
        %v3356 = vpop.xlane.xlu0 %3355
        %v3357 = vrcp.pop %v3335
        %v3358 = vrcp.pop %v3338
        %v3359 = vrcp.pop %v3341
        %v3360 = vrcp.pop %v3344
        %v3361 = vrcp.pop %v3347
        %v3362 = vrcp.pop %v3350
        %v3363 = vrcp.pop %v3353
        %v3364 = vrcp.pop %v3356
        %v3365 = vmul.f32 %v3006, %v3357
        %v3366 = vmul.f32 %v3052, %v3358
        %v3367 = vmul.f32 %v3098, %v3359
        %v3368 = vmul.f32 %v3144, %v3360
        %v3369 = vmul.f32 %v3190, %v3361
        %v3370 = vmul.f32 %v3236, %v3362
        %v3371 = vmul.f32 %v3282, %v3363
        %v3372 = vmul.f32 %v3328, %v3364
        %v3373 = vcombine.low %v3365, %v3367
        %v3374 = vcombine.high %v3365, %v3367
        %v3376 = vunpack.c.l.s4 1983009808
        %v3377 = vunpack.c.0.s8 %v3376
        %v3378 = vlaneseq
        %v3379 = vshrl.u32 %v3378, 7
        %v3380 = vsub.s32 %v3377, %v3379
        %v3381 = vrot.slane %v3373, %v3380
        %v3383 = vunpack.c.l.s4 1983009808
        %v3384 = vunpack.c.0.s8 %v3383
        %v3385 = vlaneseq
        %v3386 = vshrl.u32 %v3385, 7
        %v3387 = vsub.s32 %v3384, %v3386
        %v3388 = vrot.slane %v3374, %v3387
        %v3389 = vcombine.low %v3366, %v3368
        %v3390 = vcombine.high %v3366, %v3368
        %v3392 = vunpack.c.l.s4 1983009808
        %v3393 = vunpack.c.0.s8 %v3392
        %v3394 = vlaneseq
        %v3395 = vshrl.u32 %v3394, 7
        %v3396 = vsub.s32 %v3393, %v3395
        %v3397 = vrot.slane %v3389, %v3396
        %v3399 = vunpack.c.l.s4 1983009808
        %v3400 = vunpack.c.0.s8 %v3399
        %v3401 = vlaneseq
        %v3402 = vshrl.u32 %v3401, 7
        %v3403 = vsub.s32 %v3400, %v3402
        %v3404 = vrot.slane %v3390, %v3403
        %v3405 = vcombine.low %v3381, %v3397
        %v3406 = vcombine.high %v3381, %v3397
        %v3408 = vunpack.c.l.s4 1934713408
        %v3409 = vunpack.c.0.s8 %v3408
        %v3410 = vlaneseq
        %v3411 = vshrl.u32 %v3410, 7
        %v3412 = vsub.s32 %v3409, %v3411
        %v3413 = vrot.slane %v3405, %v3412
        %v3415 = vunpack.c.l.s4 1934713408
        %v3416 = vunpack.c.0.s8 %v3415
        %v3417 = vlaneseq
        %v3418 = vshrl.u32 %v3417, 7
        %v3419 = vsub.s32 %v3416, %v3418
        %v3420 = vrot.slane %v3406, %v3419
        %v3421 = vcombine.low %v3388, %v3404
        %v3422 = vcombine.high %v3388, %v3404
        %v3424 = vunpack.c.l.s4 1934713408
        %v3425 = vunpack.c.0.s8 %v3424
        %v3426 = vlaneseq
        %v3427 = vshrl.u32 %v3426, 7
        %v3428 = vsub.s32 %v3425, %v3427
        %v3429 = vrot.slane %v3421, %v3428
        %v3431 = vunpack.c.l.s4 1934713408
        %v3432 = vunpack.c.0.s8 %v3431
        %v3433 = vlaneseq
        %v3434 = vshrl.u32 %v3433, 7
        %v3435 = vsub.s32 %v3432, %v3434
        %v3436 = vrot.slane %v3422, %v3435
        %v3437 = vcombine.high %v3413, 0.0
        %v3438 = vcombine.high %v3420, 0.0
        %v3439 = vcombine.high %v3429, 0.0
        %v3440 = vcombine.high %v3436, 0.0
        %v3441 = vcombine.low %v3369, %v3371
        %v3442 = vcombine.high %v3369, %v3371
        %v3444 = vunpack.c.l.s4 1983009808
        %v3445 = vunpack.c.0.s8 %v3444
        %v3446 = vlaneseq
        %v3447 = vshrl.u32 %v3446, 7
        %v3448 = vsub.s32 %v3445, %v3447
        %v3449 = vrot.slane %v3441, %v3448
        %v3451 = vunpack.c.l.s4 1983009808
        %v3452 = vunpack.c.0.s8 %v3451
        %v3453 = vlaneseq
        %v3454 = vshrl.u32 %v3453, 7
        %v3455 = vsub.s32 %v3452, %v3454
        %v3456 = vrot.slane %v3442, %v3455
        %v3457 = vcombine.low %v3370, %v3372
        %v3458 = vcombine.high %v3370, %v3372
        %v3460 = vunpack.c.l.s4 1983009808
        %v3461 = vunpack.c.0.s8 %v3460
        %v3462 = vlaneseq
        %v3463 = vshrl.u32 %v3462, 7
        %v3464 = vsub.s32 %v3461, %v3463
        %v3465 = vrot.slane %v3457, %v3464
        %v3467 = vunpack.c.l.s4 1983009808
        %v3468 = vunpack.c.0.s8 %v3467
        %v3469 = vlaneseq
        %v3470 = vshrl.u32 %v3469, 7
        %v3471 = vsub.s32 %v3468, %v3470
        %v3472 = vrot.slane %v3458, %v3471
        %v3473 = vcombine.low %v3449, %v3465
        %v3474 = vcombine.high %v3449, %v3465
        %v3476 = vunpack.c.l.s4 1934713408
        %v3477 = vunpack.c.0.s8 %v3476
        %v3478 = vlaneseq
        %v3479 = vshrl.u32 %v3478, 7
        %v3480 = vsub.s32 %v3477, %v3479
        %v3481 = vrot.slane %v3473, %v3480
        %v3483 = vunpack.c.l.s4 1934713408
        %v3484 = vunpack.c.0.s8 %v3483
        %v3485 = vlaneseq
        %v3486 = vshrl.u32 %v3485, 7
        %v3487 = vsub.s32 %v3484, %v3486
        %v3488 = vrot.slane %v3474, %v3487
        %v3489 = vcombine.low %v3456, %v3472
        %v3490 = vcombine.high %v3456, %v3472
        %v3492 = vunpack.c.l.s4 1934713408
        %v3493 = vunpack.c.0.s8 %v3492
        %v3494 = vlaneseq
        %v3495 = vshrl.u32 %v3494, 7
        %v3496 = vsub.s32 %v3493, %v3495
        %v3497 = vrot.slane %v3489, %v3496
        %v3499 = vunpack.c.l.s4 1934713408
        %v3500 = vunpack.c.0.s8 %v3499
        %v3501 = vlaneseq
        %v3502 = vshrl.u32 %v3501, 7
        %v3503 = vsub.s32 %v3500, %v3502
        %v3504 = vrot.slane %v3490, %v3503
        %v3505 = vcombine.high %v3481, 0.0
        %v3506 = vcombine.high %v3488, 0.0
        %v3507 = vcombine.high %v3497, 0.0
        %v3508 = vcombine.high %v3504, 0.0
        %v3509 = vcombine.low %v3413, %v3420
        %v3511 = vunpack.c.l.s4 1983009808
        %v3512 = vunpack.c.0.s8 %v3511
        %v3513 = vlaneseq
        %v3514 = vshrl.u32 %v3513, 7
        %v3515 = vsub.s32 %v3512, %v3514
        %v3516 = vrot.slane %v3509, %v3515
        %v3517 = vcombine.low %v3437, %v3438
        %v3519 = vunpack.c.l.s4 1983009808
        %v3520 = vunpack.c.0.s8 %v3519
        %v3521 = vlaneseq
        %v3522 = vshrl.u32 %v3521, 7
        %v3523 = vsub.s32 %v3520, %v3522
        %v3524 = vrot.slane %v3517, %v3523
        %v3525 = vcombine.low %v3429, %v3436
        %v3527 = vunpack.c.l.s4 1983009808
        %v3528 = vunpack.c.0.s8 %v3527
        %v3529 = vlaneseq
        %v3530 = vshrl.u32 %v3529, 7
        %v3531 = vsub.s32 %v3528, %v3530
        %v3532 = vrot.slane %v3525, %v3531
        %v3533 = vcombine.low %v3439, %v3440
        %v3535 = vunpack.c.l.s4 1983009808
        %v3536 = vunpack.c.0.s8 %v3535
        %v3537 = vlaneseq
        %v3538 = vshrl.u32 %v3537, 7
        %v3539 = vsub.s32 %v3536, %v3538
        %v3540 = vrot.slane %v3533, %v3539
        %v3541 = vcombine.low %v3516, %v3524
        %v3542 = vcombine.high %v3516, %v3524
        %v3544 = vunpack.c.l.s4 1934713408
        %v3545 = vunpack.c.0.s8 %v3544
        %v3546 = vlaneseq
        %v3547 = vshrl.u32 %v3546, 7
        %v3548 = vsub.s32 %v3545, %v3547
        %v3549 = vrot.slane %v3541, %v3548
        %v3551 = vunpack.c.l.s4 1934713408
        %v3552 = vunpack.c.0.s8 %v3551
        %v3553 = vlaneseq
        %v3554 = vshrl.u32 %v3553, 7
        %v3555 = vsub.s32 %v3552, %v3554
        %v3556 = vrot.slane %v3542, %v3555
        %v3557 = vcombine.low %v3532, %v3540
        %v3558 = vcombine.high %v3532, %v3540
        %v3560 = vunpack.c.l.s4 1934713408
        %v3561 = vunpack.c.0.s8 %v3560
        %v3562 = vlaneseq
        %v3563 = vshrl.u32 %v3562, 7
        %v3564 = vsub.s32 %v3561, %v3563
        %v3565 = vrot.slane %v3557, %v3564
        %v3567 = vunpack.c.l.s4 1934713408
        %v3568 = vunpack.c.0.s8 %v3567
        %v3569 = vlaneseq
        %v3570 = vshrl.u32 %v3569, 7
        %v3571 = vsub.s32 %v3568, %v3570
        %v3572 = vrot.slane %v3558, %v3571
        %v3573 = vcombine.low %v3549, %v3565
        %v3574 = vcombine.high %v3549, %v3565
        %v3575 = vcombine.low %v3556, %v3572
        %v3576 = vcombine.high %v3556, %v3572
        %v3577 = vcombine.low %v3481, %v3488
        %v3579 = vunpack.c.l.s4 1983009808
        %v3580 = vunpack.c.0.s8 %v3579
        %v3581 = vlaneseq
        %v3582 = vshrl.u32 %v3581, 7
        %v3583 = vsub.s32 %v3580, %v3582
        %v3584 = vrot.slane %v3577, %v3583
        %v3585 = vcombine.low %v3505, %v3506
        %v3587 = vunpack.c.l.s4 1983009808
        %v3588 = vunpack.c.0.s8 %v3587
        %v3589 = vlaneseq
        %v3590 = vshrl.u32 %v3589, 7
        %v3591 = vsub.s32 %v3588, %v3590
        %v3592 = vrot.slane %v3585, %v3591
        %v3593 = vcombine.low %v3497, %v3504
        %v3595 = vunpack.c.l.s4 1983009808
        %v3596 = vunpack.c.0.s8 %v3595
        %v3597 = vlaneseq
        %v3598 = vshrl.u32 %v3597, 7
        %v3599 = vsub.s32 %v3596, %v3598
        %v3600 = vrot.slane %v3593, %v3599
        %v3601 = vcombine.low %v3507, %v3508
        %v3603 = vunpack.c.l.s4 1983009808
        %v3604 = vunpack.c.0.s8 %v3603
        %v3605 = vlaneseq
        %v3606 = vshrl.u32 %v3605, 7
        %v3607 = vsub.s32 %v3604, %v3606
        %v3608 = vrot.slane %v3601, %v3607
        %v3609 = vcombine.low %v3584, %v3592
        %v3610 = vcombine.high %v3584, %v3592
        %v3612 = vunpack.c.l.s4 1934713408
        %v3613 = vunpack.c.0.s8 %v3612
        %v3614 = vlaneseq
        %v3615 = vshrl.u32 %v3614, 7
        %v3616 = vsub.s32 %v3613, %v3615
        %v3617 = vrot.slane %v3609, %v3616
        %v3619 = vunpack.c.l.s4 1934713408
        %v3620 = vunpack.c.0.s8 %v3619
        %v3621 = vlaneseq
        %v3622 = vshrl.u32 %v3621, 7
        %v3623 = vsub.s32 %v3620, %v3622
        %v3624 = vrot.slane %v3610, %v3623
        %v3625 = vcombine.low %v3600, %v3608
        %v3626 = vcombine.high %v3600, %v3608
        %v3628 = vunpack.c.l.s4 1934713408
        %v3629 = vunpack.c.0.s8 %v3628
        %v3630 = vlaneseq
        %v3631 = vshrl.u32 %v3630, 7
        %v3632 = vsub.s32 %v3629, %v3631
        %v3633 = vrot.slane %v3625, %v3632
        %v3635 = vunpack.c.l.s4 1934713408
        %v3636 = vunpack.c.0.s8 %v3635
        %v3637 = vlaneseq
        %v3638 = vshrl.u32 %v3637, 7
        %v3639 = vsub.s32 %v3636, %v3638
        %v3640 = vrot.slane %v3626, %v3639
        %v3641 = vcombine.low %v3617, %v3633
        %v3642 = vcombine.high %v3617, %v3633
        %v3643 = vcombine.low %v3624, %v3640
        %v3644 = vcombine.high %v3624, %v3640
        %3647 = vrot.lane.b32.xlu0 %v3574, 32
        %v3648 = vpop.permute.xlu0 %3647
        %3649 = vrot.lane.b32.xlu0 %v3642, 32
        %v3650 = vpop.permute.xlu0 %3649
        %3655 = vrot.lane.b32.xlu0 %v3575, 64
        %v3656 = vpop.permute.xlu0 %3655
        %3657 = vrot.lane.b32.xlu0 %v3643, 64
        %v3658 = vpop.permute.xlu0 %3657
        %3663 = vrot.lane.b32.xlu0 %v3576, 96
        %v3664 = vpop.permute.xlu0 %3663
        %3665 = vrot.lane.b32.xlu0 %v3644, 96
        %v3666 = vpop.permute.xlu0 %3665
        %v3669 = vsel %vm2538, %v3573, %v3648
        %v3670 = vsel %vm2538, %v3641, %v3650
        %vm3671 = vcmask 523264
        %v3672 = vsel %vm3671, %v3669, %v3656
        %v3673 = vsel %vm3671, %v3670, %v3658
        %vm3674 = vcmask 785408
        %v3675 = vsel %vm3674, %v3672, %v3664
        %v3676 = vsel %vm3674, %v3673, %v3666
        %v3677 = vpack.c.bf16 %v3676, %v3675
        %v3678 = vld [vmem:[%s1057] sm:$0xf]
        %v3679 = vld [vmem:[%s1057 + $0x4] sm:$0xf]
        %v3680 = vld [vmem:[%s1057 + $0x8] sm:$0xf]
        %v3681 = vld [vmem:[%s1057 + $0xc] sm:$0xf]
        %v3682 = vld [vmem:[%s1057 + $0x10] sm:$0xf]
        %v3683 = vld [vmem:[%s1057 + $0x14] sm:$0xf]
        %v3684 = vld [vmem:[%s1057 + $0x18] sm:$0xf]
        %v3685 = vld [vmem:[%s1057 + $0x1c] sm:$0xf]
        %v3686 = vld [vmem:[%s1057 + $0x20] sm:$0xf]
        %v3687 = vld [vmem:[%s1057 + $0x24] sm:$0xf]
        %v3688 = vld [vmem:[%s1057 + $0x28] sm:$0xf]
        %v3689 = vld [vmem:[%s1057 + $0x2c] sm:$0xf]
        %v3690 = vld [vmem:[%s1057 + $0x30] sm:$0xf]
        %v3691 = vld [vmem:[%s1057 + $0x34] sm:$0xf]
        %v3692 = vld [vmem:[%s1057 + $0x38] sm:$0xf]
        %v3693 = vld [vmem:[%s1057 + $0x3c] sm:$0xf]
        %v3694 = vld [vmem:[%s1065] sm:$0x1]
        %v3696 = vlaneseq
        %v3697 = vshrl.u32 %v3696, 7
        %v3698 = vsub.s32 0, %v3697
        %v3699 = vrot.slane %v3694, %v3698
        %v3717 = vunpack.c.l.b16 %v3678
        %v3718 = vunpack.c.l.b16 %v3679
        %v3719 = vunpack.c.l.b16 %v3680
        %v3720 = vunpack.c.l.b16 %v3681
        %v3721 = vunpack.c.l.b16 %v3682
        %v3722 = vunpack.c.l.b16 %v3683
        %v3723 = vunpack.c.l.b16 %v3684
        %v3724 = vunpack.c.l.b16 %v3685
        %v3725 = vunpack.c.l.b16 %v3686
        %v3726 = vunpack.c.l.b16 %v3687
        %v3727 = vunpack.c.l.b16 %v3688
        %v3728 = vunpack.c.l.b16 %v3689
        %v3729 = vunpack.c.l.b16 %v3690
        %v3730 = vunpack.c.l.b16 %v3691
        %v3731 = vunpack.c.l.b16 %v3692
        %v3732 = vunpack.c.l.b16 %v3693
        %v3733 = vpack.c.b16 %v3718, %v3717
        %v3734 = vpack.c.b16 %v3720, %v3719
        %v3735 = vpack.c.b16 %v3722, %v3721
        %v3736 = vpack.c.b16 %v3724, %v3723
        %v3737 = vpack.c.b16 %v3726, %v3725
        %v3738 = vpack.c.b16 %v3728, %v3727
        %v3739 = vpack.c.b16 %v3730, %v3729
        %v3740 = vpack.c.b16 %v3732, %v3731
        %3749 = vmatprep.subr.bf16.mxu0 0
        %3750 = vmatpush1.bf16.msra.mxu0 %v3733
        %3751 = vmatprep.subr.bf16.mxu0 0
        %3752 = vmatpush1.bf16.msra.mxu0 %v3734
        %3753 = vmatprep.subr.bf16.mxu0 0
        %3754 = vmatpush1.bf16.msra.mxu0 %v3735
        %3755 = vmatprep.subr.bf16.mxu0 0
        %3756 = vmatpush1.bf16.msra.mxu0 %v3736
        %3757 = vmatprep.subr.bf16.mxu0 0
        %3758 = vmatpush1.bf16.msra.mxu0 %v3737
        %3759 = vmatprep.subr.bf16.mxu0 0
        %3760 = vmatpush1.bf16.msra.mxu0 %v3738
        %3761 = vmatprep.subr.bf16.mxu0 0
        %3762 = vmatpush1.bf16.msra.mxu0 %v3739
        %3763 = vmatprep.subr.bf16.mxu0 0
        %3764 = vmatpush1.bf16.msra.mxu0 %v3740
        %3765 = vmatprep.subr.bf16.mxu0 0
        %3766 = vmatpush1.bf16.msra.mxu0 0
        %3767 = vmatprep.subr.bf16.mxu0 0
        %3768 = vmatpush1.bf16.msra.mxu0 0
        %3769 = vmatprep.subr.bf16.mxu0 0
        %3770 = vmatpush1.bf16.msra.mxu0 0
        %3771 = vmatprep.subr.bf16.mxu0 0
        %3772 = vmatpush1.bf16.msra.mxu0 0
        %3773 = vmatprep.subr.bf16.mxu0 0
        %3774 = vmatpush1.bf16.msra.mxu0 0
        %3775 = vmatprep.subr.bf16.mxu0 0
        %3776 = vmatpush1.bf16.msra.mxu0 0
        %3777 = vmatprep.subr.bf16.mxu0 0
        %3778 = vmatpush1.bf16.msra.mxu0 0
        %3779 = vmatprep.subr.bf16.mxu0 0
        %3780 = vmatpush1.bf16.msra.mxu0 0
        %3781 = vmatprep.mubr.bf16.mxu0 0
        %3782 = vmatmul.mubr.bf16.gmra.mrb[0].mxu0 %v3677
        %v3783 = vpop.f32.mrb[0].mxu0
        %v3784 = vadd.f32 %v3699, %v3783
        %v3785 = vpop.f32.mrb[0].mxu0
        %v3786 = vpop.f32.mrb[0].mxu0
        %v3787 = vadd.f32 %v3699, %v3786
        %v3788 = vpop.f32.mrb[0].mxu0
        %3789 = vdwg.mxu0
        %v3790 = vadd.f32 %v1337, %v3784
        %v3791 = vadd.f32 %v1338, %v3787
        %v3792 = vld [vmem:[%s1073] sm:$0x1]
        %v3793 = vld [vmem:[%s1081] sm:$0x1]
        %3794 = vadd.xlane.f32.xlu0 %v3790
        %v3795 = vpop.xlane.xlu0 %3794
        %3796 = vadd.xlane.f32.xlu0 %v3791
        %v3797 = vpop.xlane.xlu0 %3796
        %v3798 = vrcp.pop 128.0
        %v3799 = vmul.f32 %v3795, %v3798
        %v3800 = vmul.f32 %v3797, %v3798
        %v3801 = vsub.f32 %v3790, %v3799
        %v3802 = vsub.f32 %v3791, %v3800
        %v3803 = vmul.f32 %v3801, %v3801
        %v3804 = vmul.f32 %v3802, %v3802
        %3805 = vadd.xlane.f32.xlu0 %v3803
        %v3806 = vpop.xlane.xlu0 %3805
        %3807 = vadd.xlane.f32.xlu0 %v3804
        %v3808 = vpop.xlane.xlu0 %3807
        %v3809 = vmul.f32 %v3806, %v3798
        %v3810 = vmul.f32 %v3808, %v3798
        %v3811 = vadd.f32 %v3809, 1e-05
        %v3812 = vadd.f32 %v3810, 1e-05
        %v3813 = vrsqrt.pop %v3811
        %v3814 = vrsqrt.pop %v3812
        %v3815 = vmul.f32 %v3801, %v3813
        %v3816 = vmul.f32 %v3802, %v3814
        %v3818 = vlaneseq
        %v3819 = vshrl.u32 %v3818, 7
        %v3820 = vsub.s32 0, %v3819
        %v3821 = vrot.slane %v3792, %v3820
        %v3823 = vmul.f32 %v3815, %v3821
        %v3824 = vmul.f32 %v3816, %v3821
        %v3826 = vlaneseq
        %v3827 = vshrl.u32 %v3826, 7
        %v3828 = vsub.s32 0, %v3827
        %v3829 = vrot.slane %v3793, %v3828
        %v3831 = vadd.f32 %v3823, %v3829
        %v3832 = vadd.f32 %v3824, %v3829
        %v3833 = vpack.c.bf16 %v3832, %v3831
        %v3834 = vld [vmem:[%s1317] sm:$0xf]
        %v3835 = vld [vmem:[%s1317 + $0x4] sm:$0xf]
        %v3836 = vld [vmem:[%s1317 + $0x8] sm:$0xf]
        %v3837 = vld [vmem:[%s1317 + $0xc] sm:$0xf]
        %v3838 = vld [vmem:[%s1317 + $0x10] sm:$0xf]
        %v3839 = vld [vmem:[%s1317 + $0x14] sm:$0xf]
        %v3840 = vld [vmem:[%s1317 + $0x18] sm:$0xf]
        %v3841 = vld [vmem:[%s1317 + $0x1c] sm:$0xf]
        %v3842 = vld [vmem:[%s1317 + $0x20] sm:$0xf]
        %v3843 = vld [vmem:[%s1317 + $0x24] sm:$0xf]
        %v3844 = vld [vmem:[%s1317 + $0x28] sm:$0xf]
        %v3845 = vld [vmem:[%s1317 + $0x2c] sm:$0xf]
        %v3846 = vld [vmem:[%s1317 + $0x30] sm:$0xf]
        %v3847 = vld [vmem:[%s1317 + $0x34] sm:$0xf]
        %v3848 = vld [vmem:[%s1317 + $0x38] sm:$0xf]
        %v3849 = vld [vmem:[%s1317 + $0x3c] sm:$0xf]
        %v3850 = vld [vmem:[%s1320] sm:$0x1]
        %v3852 = vlaneseq
        %v3853 = vshrl.u32 %v3852, 7
        %v3854 = vsub.s32 0, %v3853
        %v3855 = vrot.slane %v3850, %v3854
        %v3873 = vunpack.c.l.b16 %v3834
        %v3874 = vunpack.c.l.b16 %v3835
        %v3875 = vunpack.c.l.b16 %v3836
        %v3876 = vunpack.c.l.b16 %v3837
        %v3877 = vunpack.c.l.b16 %v3838
        %v3878 = vunpack.c.l.b16 %v3839
        %v3879 = vunpack.c.l.b16 %v3840
        %v3880 = vunpack.c.l.b16 %v3841
        %v3881 = vunpack.c.l.b16 %v3842
        %v3882 = vunpack.c.l.b16 %v3843
        %v3883 = vunpack.c.l.b16 %v3844
        %v3884 = vunpack.c.l.b16 %v3845
        %v3885 = vunpack.c.l.b16 %v3846
        %v3886 = vunpack.c.l.b16 %v3847
        %v3887 = vunpack.c.l.b16 %v3848
        %v3888 = vunpack.c.l.b16 %v3849
        %v3889 = vpack.c.b16 %v3874, %v3873
        %v3890 = vpack.c.b16 %v3876, %v3875
        %v3891 = vpack.c.b16 %v3878, %v3877
        %v3892 = vpack.c.b16 %v3880, %v3879
        %v3893 = vpack.c.b16 %v3882, %v3881
        %v3894 = vpack.c.b16 %v3884, %v3883
        %v3895 = vpack.c.b16 %v3886, %v3885
        %v3896 = vpack.c.b16 %v3888, %v3887
        %3905 = vmatprep.subr.bf16.mxu0 0
        %3906 = vmatpush1.bf16.msra.mxu0 %v3889
        %3907 = vmatprep.subr.bf16.mxu0 0
        %3908 = vmatpush1.bf16.msra.mxu0 %v3890
        %3909 = vmatprep.subr.bf16.mxu0 0
        %3910 = vmatpush1.bf16.msra.mxu0 %v3891
        %3911 = vmatprep.subr.bf16.mxu0 0
        %3912 = vmatpush1.bf16.msra.mxu0 %v3892
        %3913 = vmatprep.subr.bf16.mxu0 0
        %3914 = vmatpush1.bf16.msra.mxu0 %v3893
        %3915 = vmatprep.subr.bf16.mxu0 0
        %3916 = vmatpush1.bf16.msra.mxu0 %v3894
        %3917 = vmatprep.subr.bf16.mxu0 0
        %3918 = vmatpush1.bf16.msra.mxu0 %v3895
        %3919 = vmatprep.subr.bf16.mxu0 0
        %3920 = vmatpush1.bf16.msra.mxu0 %v3896
        %3921 = vmatprep.subr.bf16.mxu0 0
        %3922 = vmatpush1.bf16.msra.mxu0 0
        %3923 = vmatprep.subr.bf16.mxu0 0
        %3924 = vmatpush1.bf16.msra.mxu0 0
        %3925 = vmatprep.subr.bf16.mxu0 0
        %3926 = vmatpush1.bf16.msra.mxu0 0
        %3927 = vmatprep.subr.bf16.mxu0 0
        %3928 = vmatpush1.bf16.msra.mxu0 0
        %3929 = vmatprep.subr.bf16.mxu0 0
        %3930 = vmatpush1.bf16.msra.mxu0 0
        %3931 = vmatprep.subr.bf16.mxu0 0
        %3932 = vmatpush1.bf16.msra.mxu0 0
        %3933 = vmatprep.subr.bf16.mxu0 0
        %3934 = vmatpush1.bf16.msra.mxu0 0
        %3935 = vmatprep.subr.bf16.mxu0 0
        %3936 = vmatpush1.bf16.msra.mxu0 0
        %3937 = vmatprep.mubr.bf16.mxu0 0
        %3938 = vmatmul.mubr.bf16.gmra.mrb[0].mxu0 %v3833
        %v3939 = vpop.f32.mrb[0].mxu0
        %v3940 = vadd.f32 %v3855, %v3939
        %v3941 = vpop.f32.mrb[0].mxu0
        %v3942 = vpop.f32.mrb[0].mxu0
        %v3943 = vadd.f32 %v3855, %v3942
        %v3944 = vpop.f32.mrb[0].mxu0
        %3945 = vdwg.mxu0
        %v3946 = vld [vmem:[%s1] sm:$0xf]
        %v3947 = vld [vmem:[%s1 + $0x4] sm:$0xf]
        %v3948 = vld [vmem:[%s1090] sm:$0xff]
        %v3949 = vld [vmem:[%s1090 + $0x8] sm:$0xff]
        %v3950 = vld [vmem:[%s1090 + $0x10] sm:$0xff]
        %v3951 = vld [vmem:[%s1090 + $0x18] sm:$0xff]
        %v3952 = vld [vmem:[%s1090 + $0x20] sm:$0xff]
        %v3953 = vld [vmem:[%s1090 + $0x28] sm:$0xff]
        %v3954 = vld [vmem:[%s1090 + $0x30] sm:$0xff]
        %v3955 = vld [vmem:[%s1090 + $0x38] sm:$0xff]
        %v3956 = vld [vmem:[%s1090 + $0x40] sm:$0xff]
        %v3957 = vld [vmem:[%s1090 + $0x48] sm:$0xff]
        %v3958 = vld [vmem:[%s1090 + $0x50] sm:$0xff]
        %v3959 = vld [vmem:[%s1090 + $0x58] sm:$0xff]
        %v3960 = vld [vmem:[%s1090 + $0x60] sm:$0xff]
        %v3961 = vld [vmem:[%s1090 + $0x68] sm:$0xff]
        %v3962 = vld [vmem:[%s1090 + $0x70] sm:$0xff]
        %v3963 = vld [vmem:[%s1090 + $0x78] sm:$0xff]
        %v3964 = vld [vmem:[%s1324] sm:$0x3]
        %v3966 = vlaneseq
        %v3967 = vshrl.u32 %v3966, 7
        %v3968 = vsub.s32 0, %v3967
        %v3969 = vrot.slane %v3964, %v3968
        %v3970 = vlaneseq
        %v3971 = vshrl.u32 %v3970, 7
        %v3972 = vsub.s32 1, %v3971
        %v3973 = vrot.slane %v3964, %v3972
        %v3978 = vunpack.c.l.b16 %v3946
        %v3979 = vunpack.c.l.b16 %v3947
        %v3980 = vpack.c.b16 %v3979, %v3978
        %v3998 = vunpack.c.l.b16 %v3948
        %v3999 = vunpack.c.h.b16 %v3948
        %v4000 = vunpack.c.l.b16 %v3949
        %v4001 = vunpack.c.h.b16 %v3949
        %v4002 = vunpack.c.l.b16 %v3950
        %v4003 = vunpack.c.h.b16 %v3950
        %v4004 = vunpack.c.l.b16 %v3951
        %v4005 = vunpack.c.h.b16 %v3951
        %v4006 = vunpack.c.l.b16 %v3952
        %v4007 = vunpack.c.h.b16 %v3952
        %v4008 = vunpack.c.l.b16 %v3953
        %v4009 = vunpack.c.h.b16 %v3953
        %v4010 = vunpack.c.l.b16 %v3954
        %v4011 = vunpack.c.h.b16 %v3954
        %v4012 = vunpack.c.l.b16 %v3955
        %v4013 = vunpack.c.h.b16 %v3955
        %v4014 = vunpack.c.l.b16 %v3956
        %v4015 = vunpack.c.h.b16 %v3956
        %v4016 = vunpack.c.l.b16 %v3957
        %v4017 = vunpack.c.h.b16 %v3957
        %v4018 = vunpack.c.l.b16 %v3958
        %v4019 = vunpack.c.h.b16 %v3958
        %v4020 = vunpack.c.l.b16 %v3959
        %v4021 = vunpack.c.h.b16 %v3959
        %v4022 = vunpack.c.l.b16 %v3960
        %v4023 = vunpack.c.h.b16 %v3960
        %v4024 = vunpack.c.l.b16 %v3961
        %v4025 = vunpack.c.h.b16 %v3961
        %v4026 = vunpack.c.l.b16 %v3962
        %v4027 = vunpack.c.h.b16 %v3962
        %v4028 = vunpack.c.l.b16 %v3963
        %v4029 = vunpack.c.h.b16 %v3963
        %v4030 = vpack.c.b16 %v4000, %v3998
        %v4031 = vpack.c.b16 %v4001, %v3999
        %v4032 = vpack.c.b16 %v4004, %v4002
        %v4033 = vpack.c.b16 %v4005, %v4003
        %v4034 = vpack.c.b16 %v4008, %v4006
        %v4035 = vpack.c.b16 %v4009, %v4007
        %v4036 = vpack.c.b16 %v4012, %v4010
        %v4037 = vpack.c.b16 %v4013, %v4011
        %v4038 = vpack.c.b16 %v4016, %v4014
        %v4039 = vpack.c.b16 %v4017, %v4015
        %v4040 = vpack.c.b16 %v4020, %v4018
        %v4041 = vpack.c.b16 %v4021, %v4019
        %v4042 = vpack.c.b16 %v4024, %v4022
        %v4043 = vpack.c.b16 %v4025, %v4023
        %v4044 = vpack.c.b16 %v4028, %v4026
        %v4045 = vpack.c.b16 %v4029, %v4027
        %4062 = vmatprep.subr.bf16.mxu0 %v4031
        %4063 = vmatpush1.bf16.msra.mxu0 %v4030
        %4064 = vmatprep.subr.bf16.mxu0 %v4033
        %4065 = vmatpush1.bf16.msra.mxu0 %v4032
        %4066 = vmatprep.subr.bf16.mxu0 %v4035
        %4067 = vmatpush1.bf16.msra.mxu0 %v4034
        %4068 = vmatprep.subr.bf16.mxu0 %v4037
        %4069 = vmatpush1.bf16.msra.mxu0 %v4036
        %4070 = vmatprep.subr.bf16.mxu0 %v4039
        %4071 = vmatpush1.bf16.msra.mxu0 %v4038
        %4072 = vmatprep.subr.bf16.mxu0 %v4041
        %4073 = vmatpush1.bf16.msra.mxu0 %v4040
        %4074 = vmatprep.subr.bf16.mxu0 %v4043
        %4075 = vmatpush1.bf16.msra.mxu0 %v4042
        %4076 = vmatprep.subr.bf16.mxu0 %v4045
        %4077 = vmatpush1.bf16.msra.mxu0 %v4044
        %4078 = vmatprep.subr.bf16.mxu0 0
        %4079 = vmatpush1.bf16.msra.mxu0 0
        %4080 = vmatprep.subr.bf16.mxu0 0
        %4081 = vmatpush1.bf16.msra.mxu0 0
        %4082 = vmatprep.subr.bf16.mxu0 0
        %4083 = vmatpush1.bf16.msra.mxu0 0
        %4084 = vmatprep.subr.bf16.mxu0 0
        %4085 = vmatpush1.bf16.msra.mxu0 0
        %4086 = vmatprep.subr.bf16.mxu0 0
        %4087 = vmatpush1.bf16.msra.mxu0 0
        %4088 = vmatprep.subr.bf16.mxu0 0
        %4089 = vmatpush1.bf16.msra.mxu0 0
        %4090 = vmatprep.subr.bf16.mxu0 0
        %4091 = vmatpush1.bf16.msra.mxu0 0
        %4092 = vmatprep.subr.bf16.mxu0 0
        %4093 = vmatpush1.bf16.msra.mxu0 0
        %4094 = vmatprep.mubr.bf16.mxu0 0
        %4095 = vmatmul.mubr.bf16.gmra.mrb[0].mxu0 %v3980
        %v4096 = vpop.f32.mrb[0].mxu0
        %v4097 = vadd.f32 %v3969, %v4096
        %v4098 = vpop.f32.mrb[0].mxu0
        %v4099 = vadd.f32 %v3973, %v4098
        %v4100 = vpop.f32.mrb[0].mxu0
        %v4101 = vadd.f32 %v3969, %v4100
        %v4102 = vpop.f32.mrb[0].mxu0
        %v4103 = vadd.f32 %v3973, %v4102
        %4104 = vdwg.mxu0
        %4107 = vrot.lane.b32.xlu0 %v3940, 96
        %v4108 = vpop.permute.xlu0 %4107
        %4109 = vrot.lane.b32.xlu0 %v3943, 96
        %v4110 = vpop.permute.xlu0 %4109
        %4113 = vrot.lane.b32.xlu0 %v3940, 64
        %v4114 = vpop.permute.xlu0 %4113
        %4115 = vrot.lane.b32.xlu0 %v3943, 64
        %v4116 = vpop.permute.xlu0 %4115
        %4119 = vrot.lane.b32.xlu0 %v3940, 32
        %v4120 = vpop.permute.xlu0 %4119
        %4121 = vrot.lane.b32.xlu0 %v3943, 32
        %v4122 = vpop.permute.xlu0 %4121
        %v4125 = vcombine.low %v3940, %v4114
        %v4126 = vcombine.high %v3940, %v4114
        %v4128 = vunpack.c.l.s4 1983009808
        %v4129 = vunpack.c.0.s8 %v4128
        %v4130 = vlaneseq
        %v4131 = vshrl.u32 %v4130, 7
        %v4132 = vsub.s32 %v4129, %v4131
        %v4133 = vrot.slane %v4125, %v4132
        %v4135 = vunpack.c.l.s4 1983009808
        %v4136 = vunpack.c.0.s8 %v4135
        %v4137 = vlaneseq
        %v4138 = vshrl.u32 %v4137, 7
        %v4139 = vsub.s32 %v4136, %v4138
        %v4140 = vrot.slane %v4126, %v4139
        %v4141 = vcombine.low %v4108, %v4120
        %v4142 = vcombine.high %v4108, %v4120
        %v4144 = vunpack.c.l.s4 1983009808
        %v4145 = vunpack.c.0.s8 %v4144
        %v4146 = vlaneseq
        %v4147 = vshrl.u32 %v4146, 7
        %v4148 = vsub.s32 %v4145, %v4147
        %v4149 = vrot.slane %v4141, %v4148
        %v4151 = vunpack.c.l.s4 1983009808
        %v4152 = vunpack.c.0.s8 %v4151
        %v4153 = vlaneseq
        %v4154 = vshrl.u32 %v4153, 7
        %v4155 = vsub.s32 %v4152, %v4154
        %v4156 = vrot.slane %v4142, %v4155
        %v4157 = vcombine.low %v4133, %v4149
        %v4158 = vcombine.high %v4133, %v4149
        %v4160 = vunpack.c.l.s4 1934713408
        %v4161 = vunpack.c.0.s8 %v4160
        %v4162 = vlaneseq
        %v4163 = vshrl.u32 %v4162, 7
        %v4164 = vsub.s32 %v4161, %v4163
        %v4165 = vrot.slane %v4157, %v4164
        %v4167 = vunpack.c.l.s4 1934713408
        %v4168 = vunpack.c.0.s8 %v4167
        %v4169 = vlaneseq
        %v4170 = vshrl.u32 %v4169, 7
        %v4171 = vsub.s32 %v4168, %v4170
        %v4172 = vrot.slane %v4158, %v4171
        %v4173 = vcombine.low %v4140, %v4156
        %v4174 = vcombine.high %v4140, %v4156
        %v4176 = vunpack.c.l.s4 1934713408
        %v4177 = vunpack.c.0.s8 %v4176
        %v4178 = vlaneseq
        %v4179 = vshrl.u32 %v4178, 7
        %v4180 = vsub.s32 %v4177, %v4179
        %v4181 = vrot.slane %v4173, %v4180
        %v4183 = vunpack.c.l.s4 1934713408
        %v4184 = vunpack.c.0.s8 %v4183
        %v4185 = vlaneseq
        %v4186 = vshrl.u32 %v4185, 7
        %v4187 = vsub.s32 %v4184, %v4186
        %v4188 = vrot.slane %v4174, %v4187
        %v4189 = vcombine.high %v4165, 0.0
        %v4190 = vcombine.high %v4172, 0.0
        %v4191 = vcombine.high %v4181, 0.0
        %v4192 = vcombine.high %v4188, 0.0
        %v4193 = vcombine.low %v3943, %v4116
        %v4194 = vcombine.high %v3943, %v4116
        %v4196 = vunpack.c.l.s4 1983009808
        %v4197 = vunpack.c.0.s8 %v4196
        %v4198 = vlaneseq
        %v4199 = vshrl.u32 %v4198, 7
        %v4200 = vsub.s32 %v4197, %v4199
        %v4201 = vrot.slane %v4193, %v4200
        %v4203 = vunpack.c.l.s4 1983009808
        %v4204 = vunpack.c.0.s8 %v4203
        %v4205 = vlaneseq
        %v4206 = vshrl.u32 %v4205, 7
        %v4207 = vsub.s32 %v4204, %v4206
        %v4208 = vrot.slane %v4194, %v4207
        %v4209 = vcombine.low %v4110, %v4122
        %v4210 = vcombine.high %v4110, %v4122
        %v4212 = vunpack.c.l.s4 1983009808
        %v4213 = vunpack.c.0.s8 %v4212
        %v4214 = vlaneseq
        %v4215 = vshrl.u32 %v4214, 7
        %v4216 = vsub.s32 %v4213, %v4215
        %v4217 = vrot.slane %v4209, %v4216
        %v4219 = vunpack.c.l.s4 1983009808
        %v4220 = vunpack.c.0.s8 %v4219
        %v4221 = vlaneseq
        %v4222 = vshrl.u32 %v4221, 7
        %v4223 = vsub.s32 %v4220, %v4222
        %v4224 = vrot.slane %v4210, %v4223
        %v4225 = vcombine.low %v4201, %v4217
        %v4226 = vcombine.high %v4201, %v4217
        %v4228 = vunpack.c.l.s4 1934713408
        %v4229 = vunpack.c.0.s8 %v4228
        %v4230 = vlaneseq
        %v4231 = vshrl.u32 %v4230, 7
        %v4232 = vsub.s32 %v4229, %v4231
        %v4233 = vrot.slane %v4225, %v4232
        %v4235 = vunpack.c.l.s4 1934713408
        %v4236 = vunpack.c.0.s8 %v4235
        %v4237 = vlaneseq
        %v4238 = vshrl.u32 %v4237, 7
        %v4239 = vsub.s32 %v4236, %v4238
        %v4240 = vrot.slane %v4226, %v4239
        %v4241 = vcombine.low %v4208, %v4224
        %v4242 = vcombine.high %v4208, %v4224
        %v4244 = vunpack.c.l.s4 1934713408
        %v4245 = vunpack.c.0.s8 %v4244
        %v4246 = vlaneseq
        %v4247 = vshrl.u32 %v4246, 7
        %v4248 = vsub.s32 %v4245, %v4247
        %v4249 = vrot.slane %v4241, %v4248
        %v4251 = vunpack.c.l.s4 1934713408
        %v4252 = vunpack.c.0.s8 %v4251
        %v4253 = vlaneseq
        %v4254 = vshrl.u32 %v4253, 7
        %v4255 = vsub.s32 %v4252, %v4254
        %v4256 = vrot.slane %v4242, %v4255
        %v4257 = vcombine.high %v4233, 0.0
        %v4258 = vcombine.high %v4240, 0.0
        %v4259 = vcombine.high %v4249, 0.0
        %v4260 = vcombine.high %v4256, 0.0
        %v4261 = vcombine.low %v4165, %v4172
        %v4263 = vunpack.c.l.s4 1983009808
        %v4264 = vunpack.c.0.s8 %v4263
        %v4265 = vlaneseq
        %v4266 = vshrl.u32 %v4265, 7
        %v4267 = vsub.s32 %v4264, %v4266
        %v4268 = vrot.slane %v4261, %v4267
        %v4269 = vcombine.low %v4189, %v4190
        %v4271 = vunpack.c.l.s4 1983009808
        %v4272 = vunpack.c.0.s8 %v4271
        %v4273 = vlaneseq
        %v4274 = vshrl.u32 %v4273, 7
        %v4275 = vsub.s32 %v4272, %v4274
        %v4276 = vrot.slane %v4269, %v4275
        %v4277 = vcombine.low %v4181, %v4188
        %v4279 = vunpack.c.l.s4 1983009808
        %v4280 = vunpack.c.0.s8 %v4279
        %v4281 = vlaneseq
        %v4282 = vshrl.u32 %v4281, 7
        %v4283 = vsub.s32 %v4280, %v4282
        %v4284 = vrot.slane %v4277, %v4283
        %v4285 = vcombine.low %v4191, %v4192
        %v4287 = vunpack.c.l.s4 1983009808
        %v4288 = vunpack.c.0.s8 %v4287
        %v4289 = vlaneseq
        %v4290 = vshrl.u32 %v4289, 7
        %v4291 = vsub.s32 %v4288, %v4290
        %v4292 = vrot.slane %v4285, %v4291
        %v4293 = vcombine.low %v4268, %v4276
        %v4294 = vcombine.high %v4268, %v4276
        %v4296 = vunpack.c.l.s4 1934713408
        %v4297 = vunpack.c.0.s8 %v4296
        %v4298 = vlaneseq
        %v4299 = vshrl.u32 %v4298, 7
        %v4300 = vsub.s32 %v4297, %v4299
        %v4301 = vrot.slane %v4293, %v4300
        %v4303 = vunpack.c.l.s4 1934713408
        %v4304 = vunpack.c.0.s8 %v4303
        %v4305 = vlaneseq
        %v4306 = vshrl.u32 %v4305, 7
        %v4307 = vsub.s32 %v4304, %v4306
        %v4308 = vrot.slane %v4294, %v4307
        %v4309 = vcombine.low %v4284, %v4292
        %v4310 = vcombine.high %v4284, %v4292
        %v4312 = vunpack.c.l.s4 1934713408
        %v4313 = vunpack.c.0.s8 %v4312
        %v4314 = vlaneseq
        %v4315 = vshrl.u32 %v4314, 7
        %v4316 = vsub.s32 %v4313, %v4315
        %v4317 = vrot.slane %v4309, %v4316
        %v4319 = vunpack.c.l.s4 1934713408
        %v4320 = vunpack.c.0.s8 %v4319
        %v4321 = vlaneseq
        %v4322 = vshrl.u32 %v4321, 7
        %v4323 = vsub.s32 %v4320, %v4322
        %v4324 = vrot.slane %v4310, %v4323
        %v4325 = vcombine.low %v4301, %v4317
        %v4326 = vcombine.high %v4301, %v4317
        %v4327 = vcombine.low %v4308, %v4324
        %v4328 = vcombine.high %v4308, %v4324
        %v4329 = vcombine.low %v4233, %v4240
        %v4331 = vunpack.c.l.s4 1983009808
        %v4332 = vunpack.c.0.s8 %v4331
        %v4333 = vlaneseq
        %v4334 = vshrl.u32 %v4333, 7
        %v4335 = vsub.s32 %v4332, %v4334
        %v4336 = vrot.slane %v4329, %v4335
        %v4337 = vcombine.low %v4257, %v4258
        %v4339 = vunpack.c.l.s4 1983009808
        %v4340 = vunpack.c.0.s8 %v4339
        %v4341 = vlaneseq
        %v4342 = vshrl.u32 %v4341, 7
        %v4343 = vsub.s32 %v4340, %v4342
        %v4344 = vrot.slane %v4337, %v4343
        %v4345 = vcombine.low %v4249, %v4256
        %v4347 = vunpack.c.l.s4 1983009808
        %v4348 = vunpack.c.0.s8 %v4347
        %v4349 = vlaneseq
        %v4350 = vshrl.u32 %v4349, 7
        %v4351 = vsub.s32 %v4348, %v4350
        %v4352 = vrot.slane %v4345, %v4351
        %v4353 = vcombine.low %v4259, %v4260
        %v4355 = vunpack.c.l.s4 1983009808
        %v4356 = vunpack.c.0.s8 %v4355
        %v4357 = vlaneseq
        %v4358 = vshrl.u32 %v4357, 7
        %v4359 = vsub.s32 %v4356, %v4358
        %v4360 = vrot.slane %v4353, %v4359
        %v4361 = vcombine.low %v4336, %v4344
        %v4362 = vcombine.high %v4336, %v4344
        %v4364 = vunpack.c.l.s4 1934713408
        %v4365 = vunpack.c.0.s8 %v4364
        %v4366 = vlaneseq
        %v4367 = vshrl.u32 %v4366, 7
        %v4368 = vsub.s32 %v4365, %v4367
        %v4369 = vrot.slane %v4361, %v4368
        %v4371 = vunpack.c.l.s4 1934713408
        %v4372 = vunpack.c.0.s8 %v4371
        %v4373 = vlaneseq
        %v4374 = vshrl.u32 %v4373, 7
        %v4375 = vsub.s32 %v4372, %v4374
        %v4376 = vrot.slane %v4362, %v4375
        %v4377 = vcombine.low %v4352, %v4360
        %v4378 = vcombine.high %v4352, %v4360
        %v4380 = vunpack.c.l.s4 1934713408
        %v4381 = vunpack.c.0.s8 %v4380
        %v4382 = vlaneseq
        %v4383 = vshrl.u32 %v4382, 7
        %v4384 = vsub.s32 %v4381, %v4383
        %v4385 = vrot.slane %v4377, %v4384
        %v4387 = vunpack.c.l.s4 1934713408
        %v4388 = vunpack.c.0.s8 %v4387
        %v4389 = vlaneseq
        %v4390 = vshrl.u32 %v4389, 7
        %v4391 = vsub.s32 %v4388, %v4390
        %v4392 = vrot.slane %v4378, %v4391
        %v4393 = vcombine.low %v4369, %v4385
        %v4394 = vcombine.high %v4369, %v4385
        %v4395 = vcombine.low %v4376, %v4392
        %v4396 = vcombine.high %v4376, %v4392
        %v4397 = vpack.c.bf16 %v4325, %v4325
        %v4398 = vpack.c.bf16 %v4326, %v4326
        %v4399 = vpack.c.bf16 %v4327, %v4327
        %v4400 = vpack.c.bf16 %v4328, %v4328
        %v4401 = vpack.c.bf16 %v4393, %v4393
        %v4402 = vpack.c.bf16 %v4394, %v4394
        %v4403 = vpack.c.bf16 %v4395, %v4395
        %v4404 = vpack.c.bf16 %v4396, %v4396
        %4407 = vrot.lane.b32.xlu0 %v4097, 96
        %v4408 = vpop.permute.xlu0 %4407
        %4409 = vrot.lane.b32.xlu0 %v4101, 96
        %v4410 = vpop.permute.xlu0 %4409
        %4413 = vrot.lane.b32.xlu0 %v4097, 64
        %v4414 = vpop.permute.xlu0 %4413
        %4415 = vrot.lane.b32.xlu0 %v4101, 64
        %v4416 = vpop.permute.xlu0 %4415
        %4419 = vrot.lane.b32.xlu0 %v4097, 32
        %v4420 = vpop.permute.xlu0 %4419
        %4421 = vrot.lane.b32.xlu0 %v4101, 32
        %v4422 = vpop.permute.xlu0 %4421
        %v4425 = vcombine.low %v4097, %v4414
        %v4426 = vcombine.high %v4097, %v4414
        %v4428 = vunpack.c.l.s4 1983009808
        %v4429 = vunpack.c.0.s8 %v4428
        %v4430 = vlaneseq
        %v4431 = vshrl.u32 %v4430, 7
        %v4432 = vsub.s32 %v4429, %v4431
        %v4433 = vrot.slane %v4425, %v4432
        %v4435 = vunpack.c.l.s4 1983009808
        %v4436 = vunpack.c.0.s8 %v4435
        %v4437 = vlaneseq
        %v4438 = vshrl.u32 %v4437, 7
        %v4439 = vsub.s32 %v4436, %v4438
        %v4440 = vrot.slane %v4426, %v4439
        %v4441 = vcombine.low %v4408, %v4420
        %v4442 = vcombine.high %v4408, %v4420
        %v4444 = vunpack.c.l.s4 1983009808
        %v4445 = vunpack.c.0.s8 %v4444
        %v4446 = vlaneseq
        %v4447 = vshrl.u32 %v4446, 7
        %v4448 = vsub.s32 %v4445, %v4447
        %v4449 = vrot.slane %v4441, %v4448
        %v4451 = vunpack.c.l.s4 1983009808
        %v4452 = vunpack.c.0.s8 %v4451
        %v4453 = vlaneseq
        %v4454 = vshrl.u32 %v4453, 7
        %v4455 = vsub.s32 %v4452, %v4454
        %v4456 = vrot.slane %v4442, %v4455
        %v4457 = vcombine.low %v4433, %v4449
        %v4458 = vcombine.high %v4433, %v4449
        %v4460 = vunpack.c.l.s4 1934713408
        %v4461 = vunpack.c.0.s8 %v4460
        %v4462 = vlaneseq
        %v4463 = vshrl.u32 %v4462, 7
        %v4464 = vsub.s32 %v4461, %v4463
        %v4465 = vrot.slane %v4457, %v4464
        %v4467 = vunpack.c.l.s4 1934713408
        %v4468 = vunpack.c.0.s8 %v4467
        %v4469 = vlaneseq
        %v4470 = vshrl.u32 %v4469, 7
        %v4471 = vsub.s32 %v4468, %v4470
        %v4472 = vrot.slane %v4458, %v4471
        %v4473 = vcombine.low %v4440, %v4456
        %v4474 = vcombine.high %v4440, %v4456
        %v4476 = vunpack.c.l.s4 1934713408
        %v4477 = vunpack.c.0.s8 %v4476
        %v4478 = vlaneseq
        %v4479 = vshrl.u32 %v4478, 7
        %v4480 = vsub.s32 %v4477, %v4479
        %v4481 = vrot.slane %v4473, %v4480
        %v4483 = vunpack.c.l.s4 1934713408
        %v4484 = vunpack.c.0.s8 %v4483
        %v4485 = vlaneseq
        %v4486 = vshrl.u32 %v4485, 7
        %v4487 = vsub.s32 %v4484, %v4486
        %v4488 = vrot.slane %v4474, %v4487
        %v4489 = vcombine.high %v4465, 0.0
        %v4490 = vcombine.high %v4472, 0.0
        %v4491 = vcombine.high %v4481, 0.0
        %v4492 = vcombine.high %v4488, 0.0
        %v4493 = vcombine.low %v4101, %v4416
        %v4494 = vcombine.high %v4101, %v4416
        %v4496 = vunpack.c.l.s4 1983009808
        %v4497 = vunpack.c.0.s8 %v4496
        %v4498 = vlaneseq
        %v4499 = vshrl.u32 %v4498, 7
        %v4500 = vsub.s32 %v4497, %v4499
        %v4501 = vrot.slane %v4493, %v4500
        %v4503 = vunpack.c.l.s4 1983009808
        %v4504 = vunpack.c.0.s8 %v4503
        %v4505 = vlaneseq
        %v4506 = vshrl.u32 %v4505, 7
        %v4507 = vsub.s32 %v4504, %v4506
        %v4508 = vrot.slane %v4494, %v4507
        %v4509 = vcombine.low %v4410, %v4422
        %v4510 = vcombine.high %v4410, %v4422
        %v4512 = vunpack.c.l.s4 1983009808
        %v4513 = vunpack.c.0.s8 %v4512
        %v4514 = vlaneseq
        %v4515 = vshrl.u32 %v4514, 7
        %v4516 = vsub.s32 %v4513, %v4515
        %v4517 = vrot.slane %v4509, %v4516
        %v4519 = vunpack.c.l.s4 1983009808
        %v4520 = vunpack.c.0.s8 %v4519
        %v4521 = vlaneseq
        %v4522 = vshrl.u32 %v4521, 7
        %v4523 = vsub.s32 %v4520, %v4522
        %v4524 = vrot.slane %v4510, %v4523
        %v4525 = vcombine.low %v4501, %v4517
        %v4526 = vcombine.high %v4501, %v4517
        %v4528 = vunpack.c.l.s4 1934713408
        %v4529 = vunpack.c.0.s8 %v4528
        %v4530 = vlaneseq
        %v4531 = vshrl.u32 %v4530, 7
        %v4532 = vsub.s32 %v4529, %v4531
        %v4533 = vrot.slane %v4525, %v4532
        %v4535 = vunpack.c.l.s4 1934713408
        %v4536 = vunpack.c.0.s8 %v4535
        %v4537 = vlaneseq
        %v4538 = vshrl.u32 %v4537, 7
        %v4539 = vsub.s32 %v4536, %v4538
        %v4540 = vrot.slane %v4526, %v4539
        %v4541 = vcombine.low %v4508, %v4524
        %v4542 = vcombine.high %v4508, %v4524
        %v4544 = vunpack.c.l.s4 1934713408
        %v4545 = vunpack.c.0.s8 %v4544
        %v4546 = vlaneseq
        %v4547 = vshrl.u32 %v4546, 7
        %v4548 = vsub.s32 %v4545, %v4547
        %v4549 = vrot.slane %v4541, %v4548
        %v4551 = vunpack.c.l.s4 1934713408
        %v4552 = vunpack.c.0.s8 %v4551
        %v4553 = vlaneseq
        %v4554 = vshrl.u32 %v4553, 7
        %v4555 = vsub.s32 %v4552, %v4554
        %v4556 = vrot.slane %v4542, %v4555
        %v4557 = vcombine.high %v4533, 0.0
        %v4558 = vcombine.high %v4540, 0.0
        %v4559 = vcombine.high %v4549, 0.0
        %v4560 = vcombine.high %v4556, 0.0
        %v4561 = vcombine.low %v4465, %v4472
        %v4563 = vunpack.c.l.s4 1983009808
        %v4564 = vunpack.c.0.s8 %v4563
        %v4565 = vlaneseq
        %v4566 = vshrl.u32 %v4565, 7
        %v4567 = vsub.s32 %v4564, %v4566
        %v4568 = vrot.slane %v4561, %v4567
        %v4569 = vcombine.low %v4489, %v4490
        %v4571 = vunpack.c.l.s4 1983009808
        %v4572 = vunpack.c.0.s8 %v4571
        %v4573 = vlaneseq
        %v4574 = vshrl.u32 %v4573, 7
        %v4575 = vsub.s32 %v4572, %v4574
        %v4576 = vrot.slane %v4569, %v4575
        %v4577 = vcombine.low %v4481, %v4488
        %v4579 = vunpack.c.l.s4 1983009808
        %v4580 = vunpack.c.0.s8 %v4579
        %v4581 = vlaneseq
        %v4582 = vshrl.u32 %v4581, 7
        %v4583 = vsub.s32 %v4580, %v4582
        %v4584 = vrot.slane %v4577, %v4583
        %v4585 = vcombine.low %v4491, %v4492
        %v4587 = vunpack.c.l.s4 1983009808
        %v4588 = vunpack.c.0.s8 %v4587
        %v4589 = vlaneseq
        %v4590 = vshrl.u32 %v4589, 7
        %v4591 = vsub.s32 %v4588, %v4590
        %v4592 = vrot.slane %v4585, %v4591
        %v4593 = vcombine.low %v4568, %v4576
        %v4594 = vcombine.high %v4568, %v4576
        %v4596 = vunpack.c.l.s4 1934713408
        %v4597 = vunpack.c.0.s8 %v4596
        %v4598 = vlaneseq
        %v4599 = vshrl.u32 %v4598, 7
        %v4600 = vsub.s32 %v4597, %v4599
        %v4601 = vrot.slane %v4593, %v4600
        %v4603 = vunpack.c.l.s4 1934713408
        %v4604 = vunpack.c.0.s8 %v4603
        %v4605 = vlaneseq
        %v4606 = vshrl.u32 %v4605, 7
        %v4607 = vsub.s32 %v4604, %v4606
        %v4608 = vrot.slane %v4594, %v4607
        %v4609 = vcombine.low %v4584, %v4592
        %v4610 = vcombine.high %v4584, %v4592
        %v4612 = vunpack.c.l.s4 1934713408
        %v4613 = vunpack.c.0.s8 %v4612
        %v4614 = vlaneseq
        %v4615 = vshrl.u32 %v4614, 7
        %v4616 = vsub.s32 %v4613, %v4615
        %v4617 = vrot.slane %v4609, %v4616
        %v4619 = vunpack.c.l.s4 1934713408
        %v4620 = vunpack.c.0.s8 %v4619
        %v4621 = vlaneseq
        %v4622 = vshrl.u32 %v4621, 7
        %v4623 = vsub.s32 %v4620, %v4622
        %v4624 = vrot.slane %v4610, %v4623
        %v4625 = vcombine.low %v4601, %v4617
        %v4626 = vcombine.high %v4601, %v4617
        %v4627 = vcombine.low %v4608, %v4624
        %v4628 = vcombine.high %v4608, %v4624
        %v4629 = vcombine.low %v4533, %v4540
        %v4631 = vunpack.c.l.s4 1983009808
        %v4632 = vunpack.c.0.s8 %v4631
        %v4633 = vlaneseq
        %v4634 = vshrl.u32 %v4633, 7
        %v4635 = vsub.s32 %v4632, %v4634
        %v4636 = vrot.slane %v4629, %v4635
        %v4637 = vcombine.low %v4557, %v4558
        %v4639 = vunpack.c.l.s4 1983009808
        %v4640 = vunpack.c.0.s8 %v4639
        %v4641 = vlaneseq
        %v4642 = vshrl.u32 %v4641, 7
        %v4643 = vsub.s32 %v4640, %v4642
        %v4644 = vrot.slane %v4637, %v4643
        %v4645 = vcombine.low %v4549, %v4556
        %v4647 = vunpack.c.l.s4 1983009808
        %v4648 = vunpack.c.0.s8 %v4647
        %v4649 = vlaneseq
        %v4650 = vshrl.u32 %v4649, 7
        %v4651 = vsub.s32 %v4648, %v4650
        %v4652 = vrot.slane %v4645, %v4651
        %v4653 = vcombine.low %v4559, %v4560
        %v4655 = vunpack.c.l.s4 1983009808
        %v4656 = vunpack.c.0.s8 %v4655
        %v4657 = vlaneseq
        %v4658 = vshrl.u32 %v4657, 7
        %v4659 = vsub.s32 %v4656, %v4658
        %v4660 = vrot.slane %v4653, %v4659
        %v4661 = vcombine.low %v4636, %v4644
        %v4662 = vcombine.high %v4636, %v4644
        %v4664 = vunpack.c.l.s4 1934713408
        %v4665 = vunpack.c.0.s8 %v4664
        %v4666 = vlaneseq
        %v4667 = vshrl.u32 %v4666, 7
        %v4668 = vsub.s32 %v4665, %v4667
        %v4669 = vrot.slane %v4661, %v4668
        %v4671 = vunpack.c.l.s4 1934713408
        %v4672 = vunpack.c.0.s8 %v4671
        %v4673 = vlaneseq
        %v4674 = vshrl.u32 %v4673, 7
        %v4675 = vsub.s32 %v4672, %v4674
        %v4676 = vrot.slane %v4662, %v4675
        %v4677 = vcombine.low %v4652, %v4660
        %v4678 = vcombine.high %v4652, %v4660
        %v4680 = vunpack.c.l.s4 1934713408
        %v4681 = vunpack.c.0.s8 %v4680
        %v4682 = vlaneseq
        %v4683 = vshrl.u32 %v4682, 7
        %v4684 = vsub.s32 %v4681, %v4683
        %v4685 = vrot.slane %v4677, %v4684
        %v4687 = vunpack.c.l.s4 1934713408
        %v4688 = vunpack.c.0.s8 %v4687
        %v4689 = vlaneseq
        %v4690 = vshrl.u32 %v4689, 7
        %v4691 = vsub.s32 %v4688, %v4690
        %v4692 = vrot.slane %v4678, %v4691
        %v4693 = vcombine.low %v4669, %v4685
        %v4694 = vcombine.high %v4669, %v4685
        %v4695 = vcombine.low %v4676, %v4692
        %v4696 = vcombine.high %v4676, %v4692
        %v4697 = vpack.c.bf16 %v4625, %v4625
        %v4698 = vpack.c.bf16 %v4626, %v4626
        %v4699 = vpack.c.bf16 %v4627, %v4627
        %v4700 = vpack.c.bf16 %v4628, %v4628
        %v4701 = vpack.c.bf16 %v4693, %v4693
        %v4702 = vpack.c.bf16 %v4694, %v4694
        %v4703 = vpack.c.bf16 %v4695, %v4695
        %v4704 = vpack.c.bf16 %v4696, %v4696
        %4707 = vrot.lane.b32.xlu0 %v4099, 96
        %v4708 = vpop.permute.xlu0 %4707
        %4709 = vrot.lane.b32.xlu0 %v4103, 96
        %v4710 = vpop.permute.xlu0 %4709
        %4713 = vrot.lane.b32.xlu0 %v4099, 64
        %v4714 = vpop.permute.xlu0 %4713
        %4715 = vrot.lane.b32.xlu0 %v4103, 64
        %v4716 = vpop.permute.xlu0 %4715
        %4719 = vrot.lane.b32.xlu0 %v4099, 32
        %v4720 = vpop.permute.xlu0 %4719
        %4721 = vrot.lane.b32.xlu0 %v4103, 32
        %v4722 = vpop.permute.xlu0 %4721
        %v4725 = vcombine.low %v4099, %v4714
        %v4726 = vcombine.high %v4099, %v4714
        %v4728 = vunpack.c.l.s4 1983009808
        %v4729 = vunpack.c.0.s8 %v4728
        %v4730 = vlaneseq
        %v4731 = vshrl.u32 %v4730, 7
        %v4732 = vsub.s32 %v4729, %v4731
        %v4733 = vrot.slane %v4725, %v4732
        %v4735 = vunpack.c.l.s4 1983009808
        %v4736 = vunpack.c.0.s8 %v4735
        %v4737 = vlaneseq
        %v4738 = vshrl.u32 %v4737, 7
        %v4739 = vsub.s32 %v4736, %v4738
        %v4740 = vrot.slane %v4726, %v4739
        %v4741 = vcombine.low %v4708, %v4720
        %v4742 = vcombine.high %v4708, %v4720
        %v4744 = vunpack.c.l.s4 1983009808
        %v4745 = vunpack.c.0.s8 %v4744
        %v4746 = vlaneseq
        %v4747 = vshrl.u32 %v4746, 7
        %v4748 = vsub.s32 %v4745, %v4747
        %v4749 = vrot.slane %v4741, %v4748
        %v4751 = vunpack.c.l.s4 1983009808
        %v4752 = vunpack.c.0.s8 %v4751
        %v4753 = vlaneseq
        %v4754 = vshrl.u32 %v4753, 7
        %v4755 = vsub.s32 %v4752, %v4754
        %v4756 = vrot.slane %v4742, %v4755
        %v4757 = vcombine.low %v4733, %v4749
        %v4758 = vcombine.high %v4733, %v4749
        %v4760 = vunpack.c.l.s4 1934713408
        %v4761 = vunpack.c.0.s8 %v4760
        %v4762 = vlaneseq
        %v4763 = vshrl.u32 %v4762, 7
        %v4764 = vsub.s32 %v4761, %v4763
        %v4765 = vrot.slane %v4757, %v4764
        %v4767 = vunpack.c.l.s4 1934713408
        %v4768 = vunpack.c.0.s8 %v4767
        %v4769 = vlaneseq
        %v4770 = vshrl.u32 %v4769, 7
        %v4771 = vsub.s32 %v4768, %v4770
        %v4772 = vrot.slane %v4758, %v4771
        %v4773 = vcombine.low %v4740, %v4756
        %v4774 = vcombine.high %v4740, %v4756
        %v4776 = vunpack.c.l.s4 1934713408
        %v4777 = vunpack.c.0.s8 %v4776
        %v4778 = vlaneseq
        %v4779 = vshrl.u32 %v4778, 7
        %v4780 = vsub.s32 %v4777, %v4779
        %v4781 = vrot.slane %v4773, %v4780
        %v4783 = vunpack.c.l.s4 1934713408
        %v4784 = vunpack.c.0.s8 %v4783
        %v4785 = vlaneseq
        %v4786 = vshrl.u32 %v4785, 7
        %v4787 = vsub.s32 %v4784, %v4786
        %v4788 = vrot.slane %v4774, %v4787
        %v4789 = vcombine.high %v4765, 0.0
        %v4790 = vcombine.high %v4772, 0.0
        %v4791 = vcombine.high %v4781, 0.0
        %v4792 = vcombine.high %v4788, 0.0
        %v4793 = vcombine.low %v4103, %v4716
        %v4794 = vcombine.high %v4103, %v4716
        %v4796 = vunpack.c.l.s4 1983009808
        %v4797 = vunpack.c.0.s8 %v4796
        %v4798 = vlaneseq
        %v4799 = vshrl.u32 %v4798, 7
        %v4800 = vsub.s32 %v4797, %v4799
        %v4801 = vrot.slane %v4793, %v4800
        %v4803 = vunpack.c.l.s4 1983009808
        %v4804 = vunpack.c.0.s8 %v4803
        %v4805 = vlaneseq
        %v4806 = vshrl.u32 %v4805, 7
        %v4807 = vsub.s32 %v4804, %v4806
        %v4808 = vrot.slane %v4794, %v4807
        %v4809 = vcombine.low %v4710, %v4722
        %v4810 = vcombine.high %v4710, %v4722
        %v4812 = vunpack.c.l.s4 1983009808
        %v4813 = vunpack.c.0.s8 %v4812
        %v4814 = vlaneseq
        %v4815 = vshrl.u32 %v4814, 7
        %v4816 = vsub.s32 %v4813, %v4815
        %v4817 = vrot.slane %v4809, %v4816
        %v4819 = vunpack.c.l.s4 1983009808
        %v4820 = vunpack.c.0.s8 %v4819
        %v4821 = vlaneseq
        %v4822 = vshrl.u32 %v4821, 7
        %v4823 = vsub.s32 %v4820, %v4822
        %v4824 = vrot.slane %v4810, %v4823
        %v4825 = vcombine.low %v4801, %v4817
        %v4826 = vcombine.high %v4801, %v4817
        %v4828 = vunpack.c.l.s4 1934713408
        %v4829 = vunpack.c.0.s8 %v4828
        %v4830 = vlaneseq
        %v4831 = vshrl.u32 %v4830, 7
        %v4832 = vsub.s32 %v4829, %v4831
        %v4833 = vrot.slane %v4825, %v4832
        %v4835 = vunpack.c.l.s4 1934713408
        %v4836 = vunpack.c.0.s8 %v4835
        %v4837 = vlaneseq
        %v4838 = vshrl.u32 %v4837, 7
        %v4839 = vsub.s32 %v4836, %v4838
        %v4840 = vrot.slane %v4826, %v4839
        %v4841 = vcombine.low %v4808, %v4824
        %v4842 = vcombine.high %v4808, %v4824
        %v4844 = vunpack.c.l.s4 1934713408
        %v4845 = vunpack.c.0.s8 %v4844
        %v4846 = vlaneseq
        %v4847 = vshrl.u32 %v4846, 7
        %v4848 = vsub.s32 %v4845, %v4847
        %v4849 = vrot.slane %v4841, %v4848
        %v4851 = vunpack.c.l.s4 1934713408
        %v4852 = vunpack.c.0.s8 %v4851
        %v4853 = vlaneseq
        %v4854 = vshrl.u32 %v4853, 7
        %v4855 = vsub.s32 %v4852, %v4854
        %v4856 = vrot.slane %v4842, %v4855
        %v4857 = vcombine.high %v4833, 0.0
        %v4858 = vcombine.high %v4840, 0.0
        %v4859 = vcombine.high %v4849, 0.0
        %v4860 = vcombine.high %v4856, 0.0
        %v4861 = vcombine.low %v4765, %v4772
        %v4863 = vunpack.c.l.s4 1983009808
        %v4864 = vunpack.c.0.s8 %v4863
        %v4865 = vlaneseq
        %v4866 = vshrl.u32 %v4865, 7
        %v4867 = vsub.s32 %v4864, %v4866
        %v4868 = vrot.slane %v4861, %v4867
        %v4869 = vcombine.low %v4789, %v4790
        %v4871 = vunpack.c.l.s4 1983009808
        %v4872 = vunpack.c.0.s8 %v4871
        %v4873 = vlaneseq
        %v4874 = vshrl.u32 %v4873, 7
        %v4875 = vsub.s32 %v4872, %v4874
        %v4876 = vrot.slane %v4869, %v4875
        %v4877 = vcombine.low %v4781, %v4788
        %v4879 = vunpack.c.l.s4 1983009808
        %v4880 = vunpack.c.0.s8 %v4879
        %v4881 = vlaneseq
        %v4882 = vshrl.u32 %v4881, 7
        %v4883 = vsub.s32 %v4880, %v4882
        %v4884 = vrot.slane %v4877, %v4883
        %v4885 = vcombine.low %v4791, %v4792
        %v4887 = vunpack.c.l.s4 1983009808
        %v4888 = vunpack.c.0.s8 %v4887
        %v4889 = vlaneseq
        %v4890 = vshrl.u32 %v4889, 7
        %v4891 = vsub.s32 %v4888, %v4890
        %v4892 = vrot.slane %v4885, %v4891
        %v4893 = vcombine.low %v4868, %v4876
        %v4894 = vcombine.high %v4868, %v4876
        %v4896 = vunpack.c.l.s4 1934713408
        %v4897 = vunpack.c.0.s8 %v4896
        %v4898 = vlaneseq
        %v4899 = vshrl.u32 %v4898, 7
        %v4900 = vsub.s32 %v4897, %v4899
        %v4901 = vrot.slane %v4893, %v4900
        %v4903 = vunpack.c.l.s4 1934713408
        %v4904 = vunpack.c.0.s8 %v4903
        %v4905 = vlaneseq
        %v4906 = vshrl.u32 %v4905, 7
        %v4907 = vsub.s32 %v4904, %v4906
        %v4908 = vrot.slane %v4894, %v4907
        %v4909 = vcombine.low %v4884, %v4892
        %v4910 = vcombine.high %v4884, %v4892
        %v4912 = vunpack.c.l.s4 1934713408
        %v4913 = vunpack.c.0.s8 %v4912
        %v4914 = vlaneseq
        %v4915 = vshrl.u32 %v4914, 7
        %v4916 = vsub.s32 %v4913, %v4915
        %v4917 = vrot.slane %v4909, %v4916
        %v4919 = vunpack.c.l.s4 1934713408
        %v4920 = vunpack.c.0.s8 %v4919
        %v4921 = vlaneseq
        %v4922 = vshrl.u32 %v4921, 7
        %v4923 = vsub.s32 %v4920, %v4922
        %v4924 = vrot.slane %v4910, %v4923
        %v4925 = vcombine.low %v4901, %v4917
        %v4926 = vcombine.high %v4901, %v4917
        %v4927 = vcombine.low %v4908, %v4924
        %v4928 = vcombine.high %v4908, %v4924
        %v4929 = vcombine.low %v4833, %v4840
        %v4931 = vunpack.c.l.s4 1983009808
        %v4932 = vunpack.c.0.s8 %v4931
        %v4933 = vlaneseq
        %v4934 = vshrl.u32 %v4933, 7
        %v4935 = vsub.s32 %v4932, %v4934
        %v4936 = vrot.slane %v4929, %v4935
        %v4937 = vcombine.low %v4857, %v4858
        %v4939 = vunpack.c.l.s4 1983009808
        %v4940 = vunpack.c.0.s8 %v4939
        %v4941 = vlaneseq
        %v4942 = vshrl.u32 %v4941, 7
        %v4943 = vsub.s32 %v4940, %v4942
        %v4944 = vrot.slane %v4937, %v4943
        %v4945 = vcombine.low %v4849, %v4856
        %v4947 = vunpack.c.l.s4 1983009808
        %v4948 = vunpack.c.0.s8 %v4947
        %v4949 = vlaneseq
        %v4950 = vshrl.u32 %v4949, 7
        %v4951 = vsub.s32 %v4948, %v4950
        %v4952 = vrot.slane %v4945, %v4951
        %v4953 = vcombine.low %v4859, %v4860
        %v4955 = vunpack.c.l.s4 1983009808
        %v4956 = vunpack.c.0.s8 %v4955
        %v4957 = vlaneseq
        %v4958 = vshrl.u32 %v4957, 7
        %v4959 = vsub.s32 %v4956, %v4958
        %v4960 = vrot.slane %v4953, %v4959
        %v4961 = vcombine.low %v4936, %v4944
        %v4962 = vcombine.high %v4936, %v4944
        %v4964 = vunpack.c.l.s4 1934713408
        %v4965 = vunpack.c.0.s8 %v4964
        %v4966 = vlaneseq
        %v4967 = vshrl.u32 %v4966, 7
        %v4968 = vsub.s32 %v4965, %v4967
        %v4969 = vrot.slane %v4961, %v4968
        %v4971 = vunpack.c.l.s4 1934713408
        %v4972 = vunpack.c.0.s8 %v4971
        %v4973 = vlaneseq
        %v4974 = vshrl.u32 %v4973, 7
        %v4975 = vsub.s32 %v4972, %v4974
        %v4976 = vrot.slane %v4962, %v4975
        %v4977 = vcombine.low %v4952, %v4960
        %v4978 = vcombine.high %v4952, %v4960
        %v4980 = vunpack.c.l.s4 1934713408
        %v4981 = vunpack.c.0.s8 %v4980
        %v4982 = vlaneseq
        %v4983 = vshrl.u32 %v4982, 7
        %v4984 = vsub.s32 %v4981, %v4983
        %v4985 = vrot.slane %v4977, %v4984
        %v4987 = vunpack.c.l.s4 1934713408
        %v4988 = vunpack.c.0.s8 %v4987
        %v4989 = vlaneseq
        %v4990 = vshrl.u32 %v4989, 7
        %v4991 = vsub.s32 %v4988, %v4990
        %v4992 = vrot.slane %v4978, %v4991
        %v4993 = vcombine.low %v4969, %v4985
        %v4994 = vcombine.high %v4969, %v4985
        %v4995 = vcombine.low %v4976, %v4992
        %v4996 = vcombine.high %v4976, %v4992
        %v4997 = vpack.c.bf16 %v4925, %v4925
        %v4998 = vpack.c.bf16 %v4926, %v4926
        %v4999 = vpack.c.bf16 %v4927, %v4927
        %v5000 = vpack.c.bf16 %v4928, %v4928
        %v5001 = vpack.c.bf16 %v4993, %v4993
        %v5002 = vpack.c.bf16 %v4994, %v4994
        %v5003 = vpack.c.bf16 %v4995, %v4995
        %v5004 = vpack.c.bf16 %v4996, %v4996
        %v5006 = vsel %vm2538, %v4397, 0
        %v5009 = vsel %vm2538, %v4697, 0
        %5011 = vmatprep.subr.bf16.mxu0 0
        %5012 = vmatpush1.bf16.xpose.msra.mxu0 %v5009
        %5013 = vmatprep.subr.bf16.mxu0 0
        %5014 = vmatpush1.bf16.xpose.msra.mxu0 0
        %5015 = vmatprep.subr.bf16.mxu0 0
        %5016 = vmatpush1.bf16.xpose.msra.mxu0 0
        %5017 = vmatprep.subr.bf16.mxu0 0
        %5018 = vmatpush1.bf16.xpose.msra.mxu0 0
        %5019 = vmatprep.subr.bf16.mxu0 0
        %5020 = vmatpush1.bf16.xpose.msra.mxu0 0
        %5021 = vmatprep.subr.bf16.mxu0 0
        %5022 = vmatpush1.bf16.xpose.msra.mxu0 0
        %5023 = vmatprep.subr.bf16.mxu0 0
        %5024 = vmatpush1.bf16.xpose.msra.mxu0 0
        %5025 = vmatprep.subr.bf16.mxu0 0
        %5026 = vmatpush1.bf16.xpose.msra.mxu0 0
        %5027 = vmatprep.subr.bf16.mxu0 0
        %5028 = vmatpush1.bf16.xpose.msra.mxu0 0
        %5029 = vmatprep.subr.bf16.mxu0 0
        %5030 = vmatpush1.bf16.xpose.msra.mxu0 0
        %5031 = vmatprep.subr.bf16.mxu0 0
        %5032 = vmatpush1.bf16.xpose.msra.mxu0 0
        %5033 = vmatprep.subr.bf16.mxu0 0
        %5034 = vmatpush1.bf16.xpose.msra.mxu0 0
        %5035 = vmatprep.subr.bf16.mxu0 0
        %5036 = vmatpush1.bf16.xpose.msra.mxu0 0
        %5037 = vmatprep.subr.bf16.mxu0 0
        %5038 = vmatpush1.bf16.xpose.msra.mxu0 0
        %5039 = vmatprep.subr.bf16.mxu0 0
        %5040 = vmatpush1.bf16.xpose.msra.mxu0 0
        %5041 = vmatprep.subr.bf16.mxu0 0
        %5042 = vmatpush1.bf16.xpose.msra.mxu0 0
        %5043 = vmatprep.mubr.bf16.mxu0 0
        %5044 = vmatmul.mubr.bf16.gmra.mrb[0].mxu0 %v5006
        %v5045 = vpop.f32.mrb[0].mxu0
        %v5046 = vadd.f32 0.0, %v5045
        %v5047 = vpop.f32.mrb[0].mxu0
        %v5048 = vpop.f32.mrb[0].mxu0
        %v5049 = vpop.f32.mrb[0].mxu0
        %5050 = vdwg.mxu0
        %v5052 = vsel %vm2538, %v4398, 0
        %v5055 = vsel %vm2538, %v4698, 0
        %5057 = vmatprep.subr.bf16.mxu0 0
        %5058 = vmatpush1.bf16.xpose.msra.mxu0 %v5055
        %5059 = vmatprep.subr.bf16.mxu0 0
        %5060 = vmatpush1.bf16.xpose.msra.mxu0 0
        %5061 = vmatprep.subr.bf16.mxu0 0
        %5062 = vmatpush1.bf16.xpose.msra.mxu0 0
        %5063 = vmatprep.subr.bf16.mxu0 0
        %5064 = vmatpush1.bf16.xpose.msra.mxu0 0
        %5065 = vmatprep.subr.bf16.mxu0 0
        %5066 = vmatpush1.bf16.xpose.msra.mxu0 0
        %5067 = vmatprep.subr.bf16.mxu0 0
        %5068 = vmatpush1.bf16.xpose.msra.mxu0 0
        %5069 = vmatprep.subr.bf16.mxu0 0
        %5070 = vmatpush1.bf16.xpose.msra.mxu0 0
        %5071 = vmatprep.subr.bf16.mxu0 0
        %5072 = vmatpush1.bf16.xpose.msra.mxu0 0
        %5073 = vmatprep.subr.bf16.mxu0 0
        %5074 = vmatpush1.bf16.xpose.msra.mxu0 0
        %5075 = vmatprep.subr.bf16.mxu0 0
        %5076 = vmatpush1.bf16.xpose.msra.mxu0 0
        %5077 = vmatprep.subr.bf16.mxu0 0
        %5078 = vmatpush1.bf16.xpose.msra.mxu0 0
        %5079 = vmatprep.subr.bf16.mxu0 0
        %5080 = vmatpush1.bf16.xpose.msra.mxu0 0
        %5081 = vmatprep.subr.bf16.mxu0 0
        %5082 = vmatpush1.bf16.xpose.msra.mxu0 0
        %5083 = vmatprep.subr.bf16.mxu0 0
        %5084 = vmatpush1.bf16.xpose.msra.mxu0 0
        %5085 = vmatprep.subr.bf16.mxu0 0
        %5086 = vmatpush1.bf16.xpose.msra.mxu0 0
        %5087 = vmatprep.subr.bf16.mxu0 0
        %5088 = vmatpush1.bf16.xpose.msra.mxu0 0
        %5089 = vmatprep.mubr.bf16.mxu0 0
        %5090 = vmatmul.mubr.bf16.gmra.mrb[0].mxu0 %v5052
        %v5091 = vpop.f32.mrb[0].mxu0
        %v5092 = vadd.f32 0.0, %v5091
        %v5093 = vpop.f32.mrb[0].mxu0
        %v5094 = vpop.f32.mrb[0].mxu0
        %v5095 = vpop.f32.mrb[0].mxu0
        %5096 = vdwg.mxu0
        %v5098 = vsel %vm2538, %v4399, 0
        %v5101 = vsel %vm2538, %v4699, 0
        %5103 = vmatprep.subr.bf16.mxu0 0
        %5104 = vmatpush1.bf16.xpose.msra.mxu0 %v5101
        %5105 = vmatprep.subr.bf16.mxu0 0
        %5106 = vmatpush1.bf16.xpose.msra.mxu0 0
        %5107 = vmatprep.subr.bf16.mxu0 0
        %5108 = vmatpush1.bf16.xpose.msra.mxu0 0
        %5109 = vmatprep.subr.bf16.mxu0 0
        %5110 = vmatpush1.bf16.xpose.msra.mxu0 0
        %5111 = vmatprep.subr.bf16.mxu0 0
        %5112 = vmatpush1.bf16.xpose.msra.mxu0 0
        %5113 = vmatprep.subr.bf16.mxu0 0
        %5114 = vmatpush1.bf16.xpose.msra.mxu0 0
        %5115 = vmatprep.subr.bf16.mxu0 0
        %5116 = vmatpush1.bf16.xpose.msra.mxu0 0
        %5117 = vmatprep.subr.bf16.mxu0 0
        %5118 = vmatpush1.bf16.xpose.msra.mxu0 0
        %5119 = vmatprep.subr.bf16.mxu0 0
        %5120 = vmatpush1.bf16.xpose.msra.mxu0 0
        %5121 = vmatprep.subr.bf16.mxu0 0
        %5122 = vmatpush1.bf16.xpose.msra.mxu0 0
        %5123 = vmatprep.subr.bf16.mxu0 0
        %5124 = vmatpush1.bf16.xpose.msra.mxu0 0
        %5125 = vmatprep.subr.bf16.mxu0 0
        %5126 = vmatpush1.bf16.xpose.msra.mxu0 0
        %5127 = vmatprep.subr.bf16.mxu0 0
        %5128 = vmatpush1.bf16.xpose.msra.mxu0 0
        %5129 = vmatprep.subr.bf16.mxu0 0
        %5130 = vmatpush1.bf16.xpose.msra.mxu0 0
        %5131 = vmatprep.subr.bf16.mxu0 0
        %5132 = vmatpush1.bf16.xpose.msra.mxu0 0
        %5133 = vmatprep.subr.bf16.mxu0 0
        %5134 = vmatpush1.bf16.xpose.msra.mxu0 0
        %5135 = vmatprep.mubr.bf16.mxu0 0
        %5136 = vmatmul.mubr.bf16.gmra.mrb[0].mxu0 %v5098
        %v5137 = vpop.f32.mrb[0].mxu0
        %v5138 = vadd.f32 0.0, %v5137
        %v5139 = vpop.f32.mrb[0].mxu0
        %v5140 = vpop.f32.mrb[0].mxu0
        %v5141 = vpop.f32.mrb[0].mxu0
        %5142 = vdwg.mxu0
        %v5144 = vsel %vm2538, %v4400, 0
        %v5147 = vsel %vm2538, %v4700, 0
        %5149 = vmatprep.subr.bf16.mxu0 0
        %5150 = vmatpush1.bf16.xpose.msra.mxu0 %v5147
        %5151 = vmatprep.subr.bf16.mxu0 0
        %5152 = vmatpush1.bf16.xpose.msra.mxu0 0
        %5153 = vmatprep.subr.bf16.mxu0 0
        %5154 = vmatpush1.bf16.xpose.msra.mxu0 0
        %5155 = vmatprep.subr.bf16.mxu0 0
        %5156 = vmatpush1.bf16.xpose.msra.mxu0 0
        %5157 = vmatprep.subr.bf16.mxu0 0
        %5158 = vmatpush1.bf16.xpose.msra.mxu0 0
        %5159 = vmatprep.subr.bf16.mxu0 0
        %5160 = vmatpush1.bf16.xpose.msra.mxu0 0
        %5161 = vmatprep.subr.bf16.mxu0 0
        %5162 = vmatpush1.bf16.xpose.msra.mxu0 0
        %5163 = vmatprep.subr.bf16.mxu0 0
        %5164 = vmatpush1.bf16.xpose.msra.mxu0 0
        %5165 = vmatprep.subr.bf16.mxu0 0
        %5166 = vmatpush1.bf16.xpose.msra.mxu0 0
        %5167 = vmatprep.subr.bf16.mxu0 0
        %5168 = vmatpush1.bf16.xpose.msra.mxu0 0
        %5169 = vmatprep.subr.bf16.mxu0 0
        %5170 = vmatpush1.bf16.xpose.msra.mxu0 0
        %5171 = vmatprep.subr.bf16.mxu0 0
        %5172 = vmatpush1.bf16.xpose.msra.mxu0 0
        %5173 = vmatprep.subr.bf16.mxu0 0
        %5174 = vmatpush1.bf16.xpose.msra.mxu0 0
        %5175 = vmatprep.subr.bf16.mxu0 0
        %5176 = vmatpush1.bf16.xpose.msra.mxu0 0
        %5177 = vmatprep.subr.bf16.mxu0 0
        %5178 = vmatpush1.bf16.xpose.msra.mxu0 0
        %5179 = vmatprep.subr.bf16.mxu0 0
        %5180 = vmatpush1.bf16.xpose.msra.mxu0 0
        %5181 = vmatprep.mubr.bf16.mxu0 0
        %5182 = vmatmul.mubr.bf16.gmra.mrb[0].mxu0 %v5144
        %v5183 = vpop.f32.mrb[0].mxu0
        %v5184 = vadd.f32 0.0, %v5183
        %v5185 = vpop.f32.mrb[0].mxu0
        %v5186 = vpop.f32.mrb[0].mxu0
        %v5187 = vpop.f32.mrb[0].mxu0
        %5188 = vdwg.mxu0
        %v5190 = vsel %vm2538, %v4401, 0
        %v5193 = vsel %vm2538, %v4701, 0
        %5195 = vmatprep.subr.bf16.mxu0 0
        %5196 = vmatpush1.bf16.xpose.msra.mxu0 %v5193
        %5197 = vmatprep.subr.bf16.mxu0 0
        %5198 = vmatpush1.bf16.xpose.msra.mxu0 0
        %5199 = vmatprep.subr.bf16.mxu0 0
        %5200 = vmatpush1.bf16.xpose.msra.mxu0 0
        %5201 = vmatprep.subr.bf16.mxu0 0
        %5202 = vmatpush1.bf16.xpose.msra.mxu0 0
        %5203 = vmatprep.subr.bf16.mxu0 0
        %5204 = vmatpush1.bf16.xpose.msra.mxu0 0
        %5205 = vmatprep.subr.bf16.mxu0 0
        %5206 = vmatpush1.bf16.xpose.msra.mxu0 0
        %5207 = vmatprep.subr.bf16.mxu0 0
        %5208 = vmatpush1.bf16.xpose.msra.mxu0 0
        %5209 = vmatprep.subr.bf16.mxu0 0
        %5210 = vmatpush1.bf16.xpose.msra.mxu0 0
        %5211 = vmatprep.subr.bf16.mxu0 0
        %5212 = vmatpush1.bf16.xpose.msra.mxu0 0
        %5213 = vmatprep.subr.bf16.mxu0 0
        %5214 = vmatpush1.bf16.xpose.msra.mxu0 0
        %5215 = vmatprep.subr.bf16.mxu0 0
        %5216 = vmatpush1.bf16.xpose.msra.mxu0 0
        %5217 = vmatprep.subr.bf16.mxu0 0
        %5218 = vmatpush1.bf16.xpose.msra.mxu0 0
        %5219 = vmatprep.subr.bf16.mxu0 0
        %5220 = vmatpush1.bf16.xpose.msra.mxu0 0
        %5221 = vmatprep.subr.bf16.mxu0 0
        %5222 = vmatpush1.bf16.xpose.msra.mxu0 0
        %5223 = vmatprep.subr.bf16.mxu0 0
        %5224 = vmatpush1.bf16.xpose.msra.mxu0 0
        %5225 = vmatprep.subr.bf16.mxu0 0
        %5226 = vmatpush1.bf16.xpose.msra.mxu0 0
        %5227 = vmatprep.mubr.bf16.mxu0 0
        %5228 = vmatmul.mubr.bf16.gmra.mrb[0].mxu0 %v5190
        %v5229 = vpop.f32.mrb[0].mxu0
        %v5230 = vadd.f32 0.0, %v5229
        %v5231 = vpop.f32.mrb[0].mxu0
        %v5232 = vpop.f32.mrb[0].mxu0
        %v5233 = vpop.f32.mrb[0].mxu0
        %5234 = vdwg.mxu0
        %v5236 = vsel %vm2538, %v4402, 0
        %v5239 = vsel %vm2538, %v4702, 0
        %5241 = vmatprep.subr.bf16.mxu0 0
        %5242 = vmatpush1.bf16.xpose.msra.mxu0 %v5239
        %5243 = vmatprep.subr.bf16.mxu0 0
        %5244 = vmatpush1.bf16.xpose.msra.mxu0 0
        %5245 = vmatprep.subr.bf16.mxu0 0
        %5246 = vmatpush1.bf16.xpose.msra.mxu0 0
        %5247 = vmatprep.subr.bf16.mxu0 0
        %5248 = vmatpush1.bf16.xpose.msra.mxu0 0
        %5249 = vmatprep.subr.bf16.mxu0 0
        %5250 = vmatpush1.bf16.xpose.msra.mxu0 0
        %5251 = vmatprep.subr.bf16.mxu0 0
        %5252 = vmatpush1.bf16.xpose.msra.mxu0 0
        %5253 = vmatprep.subr.bf16.mxu0 0
        %5254 = vmatpush1.bf16.xpose.msra.mxu0 0
        %5255 = vmatprep.subr.bf16.mxu0 0
        %5256 = vmatpush1.bf16.xpose.msra.mxu0 0
        %5257 = vmatprep.subr.bf16.mxu0 0
        %5258 = vmatpush1.bf16.xpose.msra.mxu0 0
        %5259 = vmatprep.subr.bf16.mxu0 0
        %5260 = vmatpush1.bf16.xpose.msra.mxu0 0
        %5261 = vmatprep.subr.bf16.mxu0 0
        %5262 = vmatpush1.bf16.xpose.msra.mxu0 0
        %5263 = vmatprep.subr.bf16.mxu0 0
        %5264 = vmatpush1.bf16.xpose.msra.mxu0 0
        %5265 = vmatprep.subr.bf16.mxu0 0
        %5266 = vmatpush1.bf16.xpose.msra.mxu0 0
        %5267 = vmatprep.subr.bf16.mxu0 0
        %5268 = vmatpush1.bf16.xpose.msra.mxu0 0
        %5269 = vmatprep.subr.bf16.mxu0 0
        %5270 = vmatpush1.bf16.xpose.msra.mxu0 0
        %5271 = vmatprep.subr.bf16.mxu0 0
        %5272 = vmatpush1.bf16.xpose.msra.mxu0 0
        %5273 = vmatprep.mubr.bf16.mxu0 0
        %5274 = vmatmul.mubr.bf16.gmra.mrb[0].mxu0 %v5236
        %v5275 = vpop.f32.mrb[0].mxu0
        %v5276 = vadd.f32 0.0, %v5275
        %v5277 = vpop.f32.mrb[0].mxu0
        %v5278 = vpop.f32.mrb[0].mxu0
        %v5279 = vpop.f32.mrb[0].mxu0
        %5280 = vdwg.mxu0
        %v5282 = vsel %vm2538, %v4403, 0
        %v5285 = vsel %vm2538, %v4703, 0
        %5287 = vmatprep.subr.bf16.mxu0 0
        %5288 = vmatpush1.bf16.xpose.msra.mxu0 %v5285
        %5289 = vmatprep.subr.bf16.mxu0 0
        %5290 = vmatpush1.bf16.xpose.msra.mxu0 0
        %5291 = vmatprep.subr.bf16.mxu0 0
        %5292 = vmatpush1.bf16.xpose.msra.mxu0 0
        %5293 = vmatprep.subr.bf16.mxu0 0
        %5294 = vmatpush1.bf16.xpose.msra.mxu0 0
        %5295 = vmatprep.subr.bf16.mxu0 0
        %5296 = vmatpush1.bf16.xpose.msra.mxu0 0
        %5297 = vmatprep.subr.bf16.mxu0 0
        %5298 = vmatpush1.bf16.xpose.msra.mxu0 0
        %5299 = vmatprep.subr.bf16.mxu0 0
        %5300 = vmatpush1.bf16.xpose.msra.mxu0 0
        %5301 = vmatprep.subr.bf16.mxu0 0
        %5302 = vmatpush1.bf16.xpose.msra.mxu0 0
        %5303 = vmatprep.subr.bf16.mxu0 0
        %5304 = vmatpush1.bf16.xpose.msra.mxu0 0
        %5305 = vmatprep.subr.bf16.mxu0 0
        %5306 = vmatpush1.bf16.xpose.msra.mxu0 0
        %5307 = vmatprep.subr.bf16.mxu0 0
        %5308 = vmatpush1.bf16.xpose.msra.mxu0 0
        %5309 = vmatprep.subr.bf16.mxu0 0
        %5310 = vmatpush1.bf16.xpose.msra.mxu0 0
        %5311 = vmatprep.subr.bf16.mxu0 0
        %5312 = vmatpush1.bf16.xpose.msra.mxu0 0
        %5313 = vmatprep.subr.bf16.mxu0 0
        %5314 = vmatpush1.bf16.xpose.msra.mxu0 0
        %5315 = vmatprep.subr.bf16.mxu0 0
        %5316 = vmatpush1.bf16.xpose.msra.mxu0 0
        %5317 = vmatprep.subr.bf16.mxu0 0
        %5318 = vmatpush1.bf16.xpose.msra.mxu0 0
        %5319 = vmatprep.mubr.bf16.mxu0 0
        %5320 = vmatmul.mubr.bf16.gmra.mrb[0].mxu0 %v5282
        %v5321 = vpop.f32.mrb[0].mxu0
        %v5322 = vadd.f32 0.0, %v5321
        %v5323 = vpop.f32.mrb[0].mxu0
        %v5324 = vpop.f32.mrb[0].mxu0
        %v5325 = vpop.f32.mrb[0].mxu0
        %5326 = vdwg.mxu0
        %v5328 = vsel %vm2538, %v4404, 0
        %v5331 = vsel %vm2538, %v4704, 0
        %5333 = vmatprep.subr.bf16.mxu0 0
        %5334 = vmatpush1.bf16.xpose.msra.mxu0 %v5331
        %5335 = vmatprep.subr.bf16.mxu0 0
        %5336 = vmatpush1.bf16.xpose.msra.mxu0 0
        %5337 = vmatprep.subr.bf16.mxu0 0
        %5338 = vmatpush1.bf16.xpose.msra.mxu0 0
        %5339 = vmatprep.subr.bf16.mxu0 0
        %5340 = vmatpush1.bf16.xpose.msra.mxu0 0
        %5341 = vmatprep.subr.bf16.mxu0 0
        %5342 = vmatpush1.bf16.xpose.msra.mxu0 0
        %5343 = vmatprep.subr.bf16.mxu0 0
        %5344 = vmatpush1.bf16.xpose.msra.mxu0 0
        %5345 = vmatprep.subr.bf16.mxu0 0
        %5346 = vmatpush1.bf16.xpose.msra.mxu0 0
        %5347 = vmatprep.subr.bf16.mxu0 0
        %5348 = vmatpush1.bf16.xpose.msra.mxu0 0
        %5349 = vmatprep.subr.bf16.mxu0 0
        %5350 = vmatpush1.bf16.xpose.msra.mxu0 0
        %5351 = vmatprep.subr.bf16.mxu0 0
        %5352 = vmatpush1.bf16.xpose.msra.mxu0 0
        %5353 = vmatprep.subr.bf16.mxu0 0
        %5354 = vmatpush1.bf16.xpose.msra.mxu0 0
        %5355 = vmatprep.subr.bf16.mxu0 0
        %5356 = vmatpush1.bf16.xpose.msra.mxu0 0
        %5357 = vmatprep.subr.bf16.mxu0 0
        %5358 = vmatpush1.bf16.xpose.msra.mxu0 0
        %5359 = vmatprep.subr.bf16.mxu0 0
        %5360 = vmatpush1.bf16.xpose.msra.mxu0 0
        %5361 = vmatprep.subr.bf16.mxu0 0
        %5362 = vmatpush1.bf16.xpose.msra.mxu0 0
        %5363 = vmatprep.subr.bf16.mxu0 0
        %5364 = vmatpush1.bf16.xpose.msra.mxu0 0
        %5365 = vmatprep.mubr.bf16.mxu0 0
        %5366 = vmatmul.mubr.bf16.gmra.mrb[0].mxu0 %v5328
        %v5367 = vpop.f32.mrb[0].mxu0
        %v5368 = vadd.f32 0.0, %v5367
        %v5369 = vpop.f32.mrb[0].mxu0
        %v5370 = vpop.f32.mrb[0].mxu0
        %v5371 = vpop.f32.mrb[0].mxu0
        %5372 = vdwg.mxu0
        %v5373 = vsel %vm2907, %v5046, -inf
        %5374 = vmax.xlane.f32.xlu0 %v5373
        %v5375 = vpop.xlane.xlu0 %5374
        %v5376 = vsel %vm2907, %v5092, -inf
        %5377 = vmax.xlane.f32.xlu0 %v5376
        %v5378 = vpop.xlane.xlu0 %5377
        %v5379 = vsel %vm2907, %v5138, -inf
        %5380 = vmax.xlane.f32.xlu0 %v5379
        %v5381 = vpop.xlane.xlu0 %5380
        %v5382 = vsel %vm2907, %v5184, -inf
        %5383 = vmax.xlane.f32.xlu0 %v5382
        %v5384 = vpop.xlane.xlu0 %5383
        %v5385 = vsel %vm2907, %v5230, -inf
        %5386 = vmax.xlane.f32.xlu0 %v5385
        %v5387 = vpop.xlane.xlu0 %5386
        %v5388 = vsel %vm2907, %v5276, -inf
        %5389 = vmax.xlane.f32.xlu0 %v5388
        %v5390 = vpop.xlane.xlu0 %5389
        %v5391 = vsel %vm2907, %v5322, -inf
        %5392 = vmax.xlane.f32.xlu0 %v5391
        %v5393 = vpop.xlane.xlu0 %5392
        %v5394 = vsel %vm2907, %v5368, -inf
        %5395 = vmax.xlane.f32.xlu0 %v5394
        %v5396 = vpop.xlane.xlu0 %5395
        %v5397 = vsub.f32 %v5046, %v5375
        %v5398 = vsub.f32 %v5092, %v5378
        %v5399 = vsub.f32 %v5138, %v5381
        %v5400 = vsub.f32 %v5184, %v5384
        %v5401 = vsub.f32 %v5230, %v5387
        %v5402 = vsub.f32 %v5276, %v5390
        %v5403 = vsub.f32 %v5322, %v5393
        %v5404 = vsub.f32 %v5368, %v5396
        %v5405 = vmul.f32 %v5397, 1.442695
        %v5406 = vpow.pop %v5405
        %v5407 = vmul.f32 %v5398, 1.442695
        %v5408 = vpow.pop %v5407
        %v5409 = vmul.f32 %v5399, 1.442695
        %v5410 = vpow.pop %v5409
        %v5411 = vmul.f32 %v5400, 1.442695
        %v5412 = vpow.pop %v5411
        %v5413 = vmul.f32 %v5401, 1.442695
        %v5414 = vpow.pop %v5413
        %v5415 = vmul.f32 %v5402, 1.442695
        %v5416 = vpow.pop %v5415
        %v5417 = vmul.f32 %v5403, 1.442695
        %v5418 = vpow.pop %v5417
        %v5419 = vmul.f32 %v5404, 1.442695
        %v5420 = vpow.pop %v5419
        %v5421 = vpack.c.bf16 %v5406, %v5406
        %v5422 = vpack.c.bf16 %v5408, %v5408
        %v5423 = vpack.c.bf16 %v5410, %v5410
        %v5424 = vpack.c.bf16 %v5412, %v5412
        %v5425 = vpack.c.bf16 %v5414, %v5414
        %v5426 = vpack.c.bf16 %v5416, %v5416
        %v5427 = vpack.c.bf16 %v5418, %v5418
        %v5428 = vpack.c.bf16 %v5420, %v5420
        %v5430 = vsel %vm2907, %v5421, 0
        %v5433 = vsel %vm2967, %v4997, 0
        %5435 = vmatprep.subr.bf16.mxu0 0
        %5436 = vmatpush1.bf16.msra.mxu0 %v5433
        %5437 = vmatprep.subr.bf16.mxu0 0
        %5438 = vmatpush1.bf16.msra.mxu0 0
        %5439 = vmatprep.subr.bf16.mxu0 0
        %5440 = vmatpush1.bf16.msra.mxu0 0
        %5441 = vmatprep.subr.bf16.mxu0 0
        %5442 = vmatpush1.bf16.msra.mxu0 0
        %5443 = vmatprep.subr.bf16.mxu0 0
        %5444 = vmatpush1.bf16.msra.mxu0 0
        %5445 = vmatprep.subr.bf16.mxu0 0
        %5446 = vmatpush1.bf16.msra.mxu0 0
        %5447 = vmatprep.subr.bf16.mxu0 0
        %5448 = vmatpush1.bf16.msra.mxu0 0
        %5449 = vmatprep.subr.bf16.mxu0 0
        %5450 = vmatpush1.bf16.msra.mxu0 0
        %5451 = vmatprep.subr.bf16.mxu0 0
        %5452 = vmatpush1.bf16.msra.mxu0 0
        %5453 = vmatprep.subr.bf16.mxu0 0
        %5454 = vmatpush1.bf16.msra.mxu0 0
        %5455 = vmatprep.subr.bf16.mxu0 0
        %5456 = vmatpush1.bf16.msra.mxu0 0
        %5457 = vmatprep.subr.bf16.mxu0 0
        %5458 = vmatpush1.bf16.msra.mxu0 0
        %5459 = vmatprep.subr.bf16.mxu0 0
        %5460 = vmatpush1.bf16.msra.mxu0 0
        %5461 = vmatprep.subr.bf16.mxu0 0
        %5462 = vmatpush1.bf16.msra.mxu0 0
        %5463 = vmatprep.subr.bf16.mxu0 0
        %5464 = vmatpush1.bf16.msra.mxu0 0
        %5465 = vmatprep.subr.bf16.mxu0 0
        %5466 = vmatpush1.bf16.msra.mxu0 0
        %5467 = vmatprep.mubr.bf16.mxu0 0
        %5468 = vmatmul.mubr.bf16.gmra.mrb[0].mxu0 %v5430
        %v5469 = vpop.f32.mrb[0].mxu0
        %v5470 = vadd.f32 0.0, %v5469
        %v5471 = vpop.f32.mrb[0].mxu0
        %v5472 = vpop.f32.mrb[0].mxu0
        %v5473 = vpop.f32.mrb[0].mxu0
        %5474 = vdwg.mxu0
        %v5476 = vsel %vm2907, %v5422, 0
        %v5479 = vsel %vm2967, %v4998, 0
        %5481 = vmatprep.subr.bf16.mxu0 0
        %5482 = vmatpush1.bf16.msra.mxu0 %v5479
        %5483 = vmatprep.subr.bf16.mxu0 0
        %5484 = vmatpush1.bf16.msra.mxu0 0
        %5485 = vmatprep.subr.bf16.mxu0 0
        %5486 = vmatpush1.bf16.msra.mxu0 0
        %5487 = vmatprep.subr.bf16.mxu0 0
        %5488 = vmatpush1.bf16.msra.mxu0 0
        %5489 = vmatprep.subr.bf16.mxu0 0
        %5490 = vmatpush1.bf16.msra.mxu0 0
        %5491 = vmatprep.subr.bf16.mxu0 0
        %5492 = vmatpush1.bf16.msra.mxu0 0
        %5493 = vmatprep.subr.bf16.mxu0 0
        %5494 = vmatpush1.bf16.msra.mxu0 0
        %5495 = vmatprep.subr.bf16.mxu0 0
        %5496 = vmatpush1.bf16.msra.mxu0 0
        %5497 = vmatprep.subr.bf16.mxu0 0
        %5498 = vmatpush1.bf16.msra.mxu0 0
        %5499 = vmatprep.subr.bf16.mxu0 0
        %5500 = vmatpush1.bf16.msra.mxu0 0
        %5501 = vmatprep.subr.bf16.mxu0 0
        %5502 = vmatpush1.bf16.msra.mxu0 0
        %5503 = vmatprep.subr.bf16.mxu0 0
        %5504 = vmatpush1.bf16.msra.mxu0 0
        %5505 = vmatprep.subr.bf16.mxu0 0
        %5506 = vmatpush1.bf16.msra.mxu0 0
        %5507 = vmatprep.subr.bf16.mxu0 0
        %5508 = vmatpush1.bf16.msra.mxu0 0
        %5509 = vmatprep.subr.bf16.mxu0 0
        %5510 = vmatpush1.bf16.msra.mxu0 0
        %5511 = vmatprep.subr.bf16.mxu0 0
        %5512 = vmatpush1.bf16.msra.mxu0 0
        %5513 = vmatprep.mubr.bf16.mxu0 0
        %5514 = vmatmul.mubr.bf16.gmra.mrb[0].mxu0 %v5476
        %v5515 = vpop.f32.mrb[0].mxu0
        %v5516 = vadd.f32 0.0, %v5515
        %v5517 = vpop.f32.mrb[0].mxu0
        %v5518 = vpop.f32.mrb[0].mxu0
        %v5519 = vpop.f32.mrb[0].mxu0
        %5520 = vdwg.mxu0
        %v5522 = vsel %vm2907, %v5423, 0
        %v5525 = vsel %vm2967, %v4999, 0
        %5527 = vmatprep.subr.bf16.mxu0 0
        %5528 = vmatpush1.bf16.msra.mxu0 %v5525
        %5529 = vmatprep.subr.bf16.mxu0 0
        %5530 = vmatpush1.bf16.msra.mxu0 0
        %5531 = vmatprep.subr.bf16.mxu0 0
        %5532 = vmatpush1.bf16.msra.mxu0 0
        %5533 = vmatprep.subr.bf16.mxu0 0
        %5534 = vmatpush1.bf16.msra.mxu0 0
        %5535 = vmatprep.subr.bf16.mxu0 0
        %5536 = vmatpush1.bf16.msra.mxu0 0
        %5537 = vmatprep.subr.bf16.mxu0 0
        %5538 = vmatpush1.bf16.msra.mxu0 0
        %5539 = vmatprep.subr.bf16.mxu0 0
        %5540 = vmatpush1.bf16.msra.mxu0 0
        %5541 = vmatprep.subr.bf16.mxu0 0
        %5542 = vmatpush1.bf16.msra.mxu0 0
        %5543 = vmatprep.subr.bf16.mxu0 0
        %5544 = vmatpush1.bf16.msra.mxu0 0
        %5545 = vmatprep.subr.bf16.mxu0 0
        %5546 = vmatpush1.bf16.msra.mxu0 0
        %5547 = vmatprep.subr.bf16.mxu0 0
        %5548 = vmatpush1.bf16.msra.mxu0 0
        %5549 = vmatprep.subr.bf16.mxu0 0
        %5550 = vmatpush1.bf16.msra.mxu0 0
        %5551 = vmatprep.subr.bf16.mxu0 0
        %5552 = vmatpush1.bf16.msra.mxu0 0
        %5553 = vmatprep.subr.bf16.mxu0 0
        %5554 = vmatpush1.bf16.msra.mxu0 0
        %5555 = vmatprep.subr.bf16.mxu0 0
        %5556 = vmatpush1.bf16.msra.mxu0 0
        %5557 = vmatprep.subr.bf16.mxu0 0
        %5558 = vmatpush1.bf16.msra.mxu0 0
        %5559 = vmatprep.mubr.bf16.mxu0 0
        %5560 = vmatmul.mubr.bf16.gmra.mrb[0].mxu0 %v5522
        %v5561 = vpop.f32.mrb[0].mxu0
        %v5562 = vadd.f32 0.0, %v5561
        %v5563 = vpop.f32.mrb[0].mxu0
        %v5564 = vpop.f32.mrb[0].mxu0
        %v5565 = vpop.f32.mrb[0].mxu0
        %5566 = vdwg.mxu0
        %v5568 = vsel %vm2907, %v5424, 0
        %v5571 = vsel %vm2967, %v5000, 0
        %5573 = vmatprep.subr.bf16.mxu0 0
        %5574 = vmatpush1.bf16.msra.mxu0 %v5571
        %5575 = vmatprep.subr.bf16.mxu0 0
        %5576 = vmatpush1.bf16.msra.mxu0 0
        %5577 = vmatprep.subr.bf16.mxu0 0
        %5578 = vmatpush1.bf16.msra.mxu0 0
        %5579 = vmatprep.subr.bf16.mxu0 0
        %5580 = vmatpush1.bf16.msra.mxu0 0
        %5581 = vmatprep.subr.bf16.mxu0 0
        %5582 = vmatpush1.bf16.msra.mxu0 0
        %5583 = vmatprep.subr.bf16.mxu0 0
        %5584 = vmatpush1.bf16.msra.mxu0 0
        %5585 = vmatprep.subr.bf16.mxu0 0
        %5586 = vmatpush1.bf16.msra.mxu0 0
        %5587 = vmatprep.subr.bf16.mxu0 0
        %5588 = vmatpush1.bf16.msra.mxu0 0
        %5589 = vmatprep.subr.bf16.mxu0 0
        %5590 = vmatpush1.bf16.msra.mxu0 0
        %5591 = vmatprep.subr.bf16.mxu0 0
        %5592 = vmatpush1.bf16.msra.mxu0 0
        %5593 = vmatprep.subr.bf16.mxu0 0
        %5594 = vmatpush1.bf16.msra.mxu0 0
        %5595 = vmatprep.subr.bf16.mxu0 0
        %5596 = vmatpush1.bf16.msra.mxu0 0
        %5597 = vmatprep.subr.bf16.mxu0 0
        %5598 = vmatpush1.bf16.msra.mxu0 0
        %5599 = vmatprep.subr.bf16.mxu0 0
        %5600 = vmatpush1.bf16.msra.mxu0 0
        %5601 = vmatprep.subr.bf16.mxu0 0
        %5602 = vmatpush1.bf16.msra.mxu0 0
        %5603 = vmatprep.subr.bf16.mxu0 0
        %5604 = vmatpush1.bf16.msra.mxu0 0
        %5605 = vmatprep.mubr.bf16.mxu0 0
        %5606 = vmatmul.mubr.bf16.gmra.mrb[0].mxu0 %v5568
        %v5607 = vpop.f32.mrb[0].mxu0
        %v5608 = vadd.f32 0.0, %v5607
        %v5609 = vpop.f32.mrb[0].mxu0
        %v5610 = vpop.f32.mrb[0].mxu0
        %v5611 = vpop.f32.mrb[0].mxu0
        %5612 = vdwg.mxu0
        %v5614 = vsel %vm2907, %v5425, 0
        %v5617 = vsel %vm2967, %v5001, 0
        %5619 = vmatprep.subr.bf16.mxu0 0
        %5620 = vmatpush1.bf16.msra.mxu0 %v5617
        %5621 = vmatprep.subr.bf16.mxu0 0
        %5622 = vmatpush1.bf16.msra.mxu0 0
        %5623 = vmatprep.subr.bf16.mxu0 0
        %5624 = vmatpush1.bf16.msra.mxu0 0
        %5625 = vmatprep.subr.bf16.mxu0 0
        %5626 = vmatpush1.bf16.msra.mxu0 0
        %5627 = vmatprep.subr.bf16.mxu0 0
        %5628 = vmatpush1.bf16.msra.mxu0 0
        %5629 = vmatprep.subr.bf16.mxu0 0
        %5630 = vmatpush1.bf16.msra.mxu0 0
        %5631 = vmatprep.subr.bf16.mxu0 0
        %5632 = vmatpush1.bf16.msra.mxu0 0
        %5633 = vmatprep.subr.bf16.mxu0 0
        %5634 = vmatpush1.bf16.msra.mxu0 0
        %5635 = vmatprep.subr.bf16.mxu0 0
        %5636 = vmatpush1.bf16.msra.mxu0 0
        %5637 = vmatprep.subr.bf16.mxu0 0
        %5638 = vmatpush1.bf16.msra.mxu0 0
        %5639 = vmatprep.subr.bf16.mxu0 0
        %5640 = vmatpush1.bf16.msra.mxu0 0
        %5641 = vmatprep.subr.bf16.mxu0 0
        %5642 = vmatpush1.bf16.msra.mxu0 0
        %5643 = vmatprep.subr.bf16.mxu0 0
        %5644 = vmatpush1.bf16.msra.mxu0 0
        %5645 = vmatprep.subr.bf16.mxu0 0
        %5646 = vmatpush1.bf16.msra.mxu0 0
        %5647 = vmatprep.subr.bf16.mxu0 0
        %5648 = vmatpush1.bf16.msra.mxu0 0
        %5649 = vmatprep.subr.bf16.mxu0 0
        %5650 = vmatpush1.bf16.msra.mxu0 0
        %5651 = vmatprep.mubr.bf16.mxu0 0
        %5652 = vmatmul.mubr.bf16.gmra.mrb[0].mxu0 %v5614
        %v5653 = vpop.f32.mrb[0].mxu0
        %v5654 = vadd.f32 0.0, %v5653
        %v5655 = vpop.f32.mrb[0].mxu0
        %v5656 = vpop.f32.mrb[0].mxu0
        %v5657 = vpop.f32.mrb[0].mxu0
        %5658 = vdwg.mxu0
        %v5660 = vsel %vm2907, %v5426, 0
        %v5663 = vsel %vm2967, %v5002, 0
        %5665 = vmatprep.subr.bf16.mxu0 0
        %5666 = vmatpush1.bf16.msra.mxu0 %v5663
        %5667 = vmatprep.subr.bf16.mxu0 0
        %5668 = vmatpush1.bf16.msra.mxu0 0
        %5669 = vmatprep.subr.bf16.mxu0 0
        %5670 = vmatpush1.bf16.msra.mxu0 0
        %5671 = vmatprep.subr.bf16.mxu0 0
        %5672 = vmatpush1.bf16.msra.mxu0 0
        %5673 = vmatprep.subr.bf16.mxu0 0
        %5674 = vmatpush1.bf16.msra.mxu0 0
        %5675 = vmatprep.subr.bf16.mxu0 0
        %5676 = vmatpush1.bf16.msra.mxu0 0
        %5677 = vmatprep.subr.bf16.mxu0 0
        %5678 = vmatpush1.bf16.msra.mxu0 0
        %5679 = vmatprep.subr.bf16.mxu0 0
        %5680 = vmatpush1.bf16.msra.mxu0 0
        %5681 = vmatprep.subr.bf16.mxu0 0
        %5682 = vmatpush1.bf16.msra.mxu0 0
        %5683 = vmatprep.subr.bf16.mxu0 0
        %5684 = vmatpush1.bf16.msra.mxu0 0
        %5685 = vmatprep.subr.bf16.mxu0 0
        %5686 = vmatpush1.bf16.msra.mxu0 0
        %5687 = vmatprep.subr.bf16.mxu0 0
        %5688 = vmatpush1.bf16.msra.mxu0 0
        %5689 = vmatprep.subr.bf16.mxu0 0
        %5690 = vmatpush1.bf16.msra.mxu0 0
        %5691 = vmatprep.subr.bf16.mxu0 0
        %5692 = vmatpush1.bf16.msra.mxu0 0
        %5693 = vmatprep.subr.bf16.mxu0 0
        %5694 = vmatpush1.bf16.msra.mxu0 0
        %5695 = vmatprep.subr.bf16.mxu0 0
        %5696 = vmatpush1.bf16.msra.mxu0 0
        %5697 = vmatprep.mubr.bf16.mxu0 0
        %5698 = vmatmul.mubr.bf16.gmra.mrb[0].mxu0 %v5660
        %v5699 = vpop.f32.mrb[0].mxu0
        %v5700 = vadd.f32 0.0, %v5699
        %v5701 = vpop.f32.mrb[0].mxu0
        %v5702 = vpop.f32.mrb[0].mxu0
        %v5703 = vpop.f32.mrb[0].mxu0
        %5704 = vdwg.mxu0
        %v5706 = vsel %vm2907, %v5427, 0
        %v5709 = vsel %vm2967, %v5003, 0
        %5711 = vmatprep.subr.bf16.mxu0 0
        %5712 = vmatpush1.bf16.msra.mxu0 %v5709
        %5713 = vmatprep.subr.bf16.mxu0 0
        %5714 = vmatpush1.bf16.msra.mxu0 0
        %5715 = vmatprep.subr.bf16.mxu0 0
        %5716 = vmatpush1.bf16.msra.mxu0 0
        %5717 = vmatprep.subr.bf16.mxu0 0
        %5718 = vmatpush1.bf16.msra.mxu0 0
        %5719 = vmatprep.subr.bf16.mxu0 0
        %5720 = vmatpush1.bf16.msra.mxu0 0
        %5721 = vmatprep.subr.bf16.mxu0 0
        %5722 = vmatpush1.bf16.msra.mxu0 0
        %5723 = vmatprep.subr.bf16.mxu0 0
        %5724 = vmatpush1.bf16.msra.mxu0 0
        %5725 = vmatprep.subr.bf16.mxu0 0
        %5726 = vmatpush1.bf16.msra.mxu0 0
        %5727 = vmatprep.subr.bf16.mxu0 0
        %5728 = vmatpush1.bf16.msra.mxu0 0
        %5729 = vmatprep.subr.bf16.mxu0 0
        %5730 = vmatpush1.bf16.msra.mxu0 0
        %5731 = vmatprep.subr.bf16.mxu0 0
        %5732 = vmatpush1.bf16.msra.mxu0 0
        %5733 = vmatprep.subr.bf16.mxu0 0
        %5734 = vmatpush1.bf16.msra.mxu0 0
        %5735 = vmatprep.subr.bf16.mxu0 0
        %5736 = vmatpush1.bf16.msra.mxu0 0
        %5737 = vmatprep.subr.bf16.mxu0 0
        %5738 = vmatpush1.bf16.msra.mxu0 0
        %5739 = vmatprep.subr.bf16.mxu0 0
        %5740 = vmatpush1.bf16.msra.mxu0 0
        %5741 = vmatprep.subr.bf16.mxu0 0
        %5742 = vmatpush1.bf16.msra.mxu0 0
        %5743 = vmatprep.mubr.bf16.mxu0 0
        %5744 = vmatmul.mubr.bf16.gmra.mrb[0].mxu0 %v5706
        %v5745 = vpop.f32.mrb[0].mxu0
        %v5746 = vadd.f32 0.0, %v5745
        %v5747 = vpop.f32.mrb[0].mxu0
        %v5748 = vpop.f32.mrb[0].mxu0
        %v5749 = vpop.f32.mrb[0].mxu0
        %5750 = vdwg.mxu0
        %v5752 = vsel %vm2907, %v5428, 0
        %v5755 = vsel %vm2967, %v5004, 0
        %5757 = vmatprep.subr.bf16.mxu0 0
        %5758 = vmatpush1.bf16.msra.mxu0 %v5755
        %5759 = vmatprep.subr.bf16.mxu0 0
        %5760 = vmatpush1.bf16.msra.mxu0 0
        %5761 = vmatprep.subr.bf16.mxu0 0
        %5762 = vmatpush1.bf16.msra.mxu0 0
        %5763 = vmatprep.subr.bf16.mxu0 0
        %5764 = vmatpush1.bf16.msra.mxu0 0
        %5765 = vmatprep.subr.bf16.mxu0 0
        %5766 = vmatpush1.bf16.msra.mxu0 0
        %5767 = vmatprep.subr.bf16.mxu0 0
        %5768 = vmatpush1.bf16.msra.mxu0 0
        %5769 = vmatprep.subr.bf16.mxu0 0
        %5770 = vmatpush1.bf16.msra.mxu0 0
        %5771 = vmatprep.subr.bf16.mxu0 0
        %5772 = vmatpush1.bf16.msra.mxu0 0
        %5773 = vmatprep.subr.bf16.mxu0 0
        %5774 = vmatpush1.bf16.msra.mxu0 0
        %5775 = vmatprep.subr.bf16.mxu0 0
        %5776 = vmatpush1.bf16.msra.mxu0 0
        %5777 = vmatprep.subr.bf16.mxu0 0
        %5778 = vmatpush1.bf16.msra.mxu0 0
        %5779 = vmatprep.subr.bf16.mxu0 0
        %5780 = vmatpush1.bf16.msra.mxu0 0
        %5781 = vmatprep.subr.bf16.mxu0 0
        %5782 = vmatpush1.bf16.msra.mxu0 0
        %5783 = vmatprep.subr.bf16.mxu0 0
        %5784 = vmatpush1.bf16.msra.mxu0 0
        %5785 = vmatprep.subr.bf16.mxu0 0
        %5786 = vmatpush1.bf16.msra.mxu0 0
        %5787 = vmatprep.subr.bf16.mxu0 0
        %5788 = vmatpush1.bf16.msra.mxu0 0
        %5789 = vmatprep.mubr.bf16.mxu0 0
        %5790 = vmatmul.mubr.bf16.gmra.mrb[0].mxu0 %v5752
        %v5791 = vpop.f32.mrb[0].mxu0
        %v5792 = vadd.f32 0.0, %v5791
        %v5793 = vpop.f32.mrb[0].mxu0
        %v5794 = vpop.f32.mrb[0].mxu0
        %v5795 = vpop.f32.mrb[0].mxu0
        %5796 = vdwg.mxu0
        %v5797 = vsel %vm2907, %v5406, 0.0
        %5798 = vadd.xlane.f32.xlu0 %v5797
        %v5799 = vpop.xlane.xlu0 %5798
        %v5800 = vsel %vm2907, %v5408, 0.0
        %5801 = vadd.xlane.f32.xlu0 %v5800
        %v5802 = vpop.xlane.xlu0 %5801
        %v5803 = vsel %vm2907, %v5410, 0.0
        %5804 = vadd.xlane.f32.xlu0 %v5803
        %v5805 = vpop.xlane.xlu0 %5804
        %v5806 = vsel %vm2907, %v5412, 0.0
        %5807 = vadd.xlane.f32.xlu0 %v5806
        %v5808 = vpop.xlane.xlu0 %5807
        %v5809 = vsel %vm2907, %v5414, 0.0
        %5810 = vadd.xlane.f32.xlu0 %v5809
        %v5811 = vpop.xlane.xlu0 %5810
        %v5812 = vsel %vm2907, %v5416, 0.0
        %5813 = vadd.xlane.f32.xlu0 %v5812
        %v5814 = vpop.xlane.xlu0 %5813
        %v5815 = vsel %vm2907, %v5418, 0.0
        %5816 = vadd.xlane.f32.xlu0 %v5815
        %v5817 = vpop.xlane.xlu0 %5816
        %v5818 = vsel %vm2907, %v5420, 0.0
        %5819 = vadd.xlane.f32.xlu0 %v5818
        %v5820 = vpop.xlane.xlu0 %5819
        %v5821 = vrcp.pop %v5799
        %v5822 = vrcp.pop %v5802
        %v5823 = vrcp.pop %v5805
        %v5824 = vrcp.pop %v5808
        %v5825 = vrcp.pop %v5811
        %v5826 = vrcp.pop %v5814
        %v5827 = vrcp.pop %v5817
        %v5828 = vrcp.pop %v5820
        %v5829 = vmul.f32 %v5470, %v5821
        %v5830 = vmul.f32 %v5516, %v5822
        %v5831 = vmul.f32 %v5562, %v5823
        %v5832 = vmul.f32 %v5608, %v5824
        %v5833 = vmul.f32 %v5654, %v5825
        %v5834 = vmul.f32 %v5700, %v5826
        %v5835 = vmul.f32 %v5746, %v5827
        %v5836 = vmul.f32 %v5792, %v5828
        %v5837 = vcombine.low %v5829, %v5831
        %v5838 = vcombine.high %v5829, %v5831
        %v5840 = vunpack.c.l.s4 1983009808
        %v5841 = vunpack.c.0.s8 %v5840
        %v5842 = vlaneseq
        %v5843 = vshrl.u32 %v5842, 7
        %v5844 = vsub.s32 %v5841, %v5843
        %v5845 = vrot.slane %v5837, %v5844
        %v5847 = vunpack.c.l.s4 1983009808
        %v5848 = vunpack.c.0.s8 %v5847
        %v5849 = vlaneseq
        %v5850 = vshrl.u32 %v5849, 7
        %v5851 = vsub.s32 %v5848, %v5850
        %v5852 = vrot.slane %v5838, %v5851
        %v5853 = vcombine.low %v5830, %v5832
        %v5854 = vcombine.high %v5830, %v5832
        %v5856 = vunpack.c.l.s4 1983009808
        %v5857 = vunpack.c.0.s8 %v5856
        %v5858 = vlaneseq
        %v5859 = vshrl.u32 %v5858, 7
        %v5860 = vsub.s32 %v5857, %v5859
        %v5861 = vrot.slane %v5853, %v5860
        %v5863 = vunpack.c.l.s4 1983009808
        %v5864 = vunpack.c.0.s8 %v5863
        %v5865 = vlaneseq
        %v5866 = vshrl.u32 %v5865, 7
        %v5867 = vsub.s32 %v5864, %v5866
        %v5868 = vrot.slane %v5854, %v5867
        %v5869 = vcombine.low %v5845, %v5861
        %v5870 = vcombine.high %v5845, %v5861
        %v5872 = vunpack.c.l.s4 1934713408
        %v5873 = vunpack.c.0.s8 %v5872
        %v5874 = vlaneseq
        %v5875 = vshrl.u32 %v5874, 7
        %v5876 = vsub.s32 %v5873, %v5875
        %v5877 = vrot.slane %v5869, %v5876
        %v5879 = vunpack.c.l.s4 1934713408
        %v5880 = vunpack.c.0.s8 %v5879
        %v5881 = vlaneseq
        %v5882 = vshrl.u32 %v5881, 7
        %v5883 = vsub.s32 %v5880, %v5882
        %v5884 = vrot.slane %v5870, %v5883
        %v5885 = vcombine.low %v5852, %v5868
        %v5886 = vcombine.high %v5852, %v5868
        %v5888 = vunpack.c.l.s4 1934713408
        %v5889 = vunpack.c.0.s8 %v5888
        %v5890 = vlaneseq
        %v5891 = vshrl.u32 %v5890, 7
        %v5892 = vsub.s32 %v5889, %v5891
        %v5893 = vrot.slane %v5885, %v5892
        %v5895 = vunpack.c.l.s4 1934713408
        %v5896 = vunpack.c.0.s8 %v5895
        %v5897 = vlaneseq
        %v5898 = vshrl.u32 %v5897, 7
        %v5899 = vsub.s32 %v5896, %v5898
        %v5900 = vrot.slane %v5886, %v5899
        %v5901 = vcombine.high %v5877, 0.0
        %v5902 = vcombine.high %v5884, 0.0
        %v5903 = vcombine.high %v5893, 0.0
        %v5904 = vcombine.high %v5900, 0.0
        %v5905 = vcombine.low %v5833, %v5835
        %v5906 = vcombine.high %v5833, %v5835
        %v5908 = vunpack.c.l.s4 1983009808
        %v5909 = vunpack.c.0.s8 %v5908
        %v5910 = vlaneseq
        %v5911 = vshrl.u32 %v5910, 7
        %v5912 = vsub.s32 %v5909, %v5911
        %v5913 = vrot.slane %v5905, %v5912
        %v5915 = vunpack.c.l.s4 1983009808
        %v5916 = vunpack.c.0.s8 %v5915
        %v5917 = vlaneseq
        %v5918 = vshrl.u32 %v5917, 7
        %v5919 = vsub.s32 %v5916, %v5918
        %v5920 = vrot.slane %v5906, %v5919
        %v5921 = vcombine.low %v5834, %v5836
        %v5922 = vcombine.high %v5834, %v5836
        %v5924 = vunpack.c.l.s4 1983009808
        %v5925 = vunpack.c.0.s8 %v5924
        %v5926 = vlaneseq
        %v5927 = vshrl.u32 %v5926, 7
        %v5928 = vsub.s32 %v5925, %v5927
        %v5929 = vrot.slane %v5921, %v5928
        %v5931 = vunpack.c.l.s4 1983009808
        %v5932 = vunpack.c.0.s8 %v5931
        %v5933 = vlaneseq
        %v5934 = vshrl.u32 %v5933, 7
        %v5935 = vsub.s32 %v5932, %v5934
        %v5936 = vrot.slane %v5922, %v5935
        %v5937 = vcombine.low %v5913, %v5929
        %v5938 = vcombine.high %v5913, %v5929
        %v5940 = vunpack.c.l.s4 1934713408
        %v5941 = vunpack.c.0.s8 %v5940
        %v5942 = vlaneseq
        %v5943 = vshrl.u32 %v5942, 7
        %v5944 = vsub.s32 %v5941, %v5943
        %v5945 = vrot.slane %v5937, %v5944
        %v5947 = vunpack.c.l.s4 1934713408
        %v5948 = vunpack.c.0.s8 %v5947
        %v5949 = vlaneseq
        %v5950 = vshrl.u32 %v5949, 7
        %v5951 = vsub.s32 %v5948, %v5950
        %v5952 = vrot.slane %v5938, %v5951
        %v5953 = vcombine.low %v5920, %v5936
        %v5954 = vcombine.high %v5920, %v5936
        %v5956 = vunpack.c.l.s4 1934713408
        %v5957 = vunpack.c.0.s8 %v5956
        %v5958 = vlaneseq
        %v5959 = vshrl.u32 %v5958, 7
        %v5960 = vsub.s32 %v5957, %v5959
        %v5961 = vrot.slane %v5953, %v5960
        %v5963 = vunpack.c.l.s4 1934713408
        %v5964 = vunpack.c.0.s8 %v5963
        %v5965 = vlaneseq
        %v5966 = vshrl.u32 %v5965, 7
        %v5967 = vsub.s32 %v5964, %v5966
        %v5968 = vrot.slane %v5954, %v5967
        %v5969 = vcombine.high %v5945, 0.0
        %v5970 = vcombine.high %v5952, 0.0
        %v5971 = vcombine.high %v5961, 0.0
        %v5972 = vcombine.high %v5968, 0.0
        %v5973 = vcombine.low %v5877, %v5884
        %v5975 = vunpack.c.l.s4 1983009808
        %v5976 = vunpack.c.0.s8 %v5975
        %v5977 = vlaneseq
        %v5978 = vshrl.u32 %v5977, 7
        %v5979 = vsub.s32 %v5976, %v5978
        %v5980 = vrot.slane %v5973, %v5979
        %v5981 = vcombine.low %v5901, %v5902
        %v5983 = vunpack.c.l.s4 1983009808
        %v5984 = vunpack.c.0.s8 %v5983
        %v5985 = vlaneseq
        %v5986 = vshrl.u32 %v5985, 7
        %v5987 = vsub.s32 %v5984, %v5986
        %v5988 = vrot.slane %v5981, %v5987
        %v5989 = vcombine.low %v5893, %v5900
        %v5991 = vunpack.c.l.s4 1983009808
        %v5992 = vunpack.c.0.s8 %v5991
        %v5993 = vlaneseq
        %v5994 = vshrl.u32 %v5993, 7
        %v5995 = vsub.s32 %v5992, %v5994
        %v5996 = vrot.slane %v5989, %v5995
        %v5997 = vcombine.low %v5903, %v5904
        %v5999 = vunpack.c.l.s4 1983009808
        %v6000 = vunpack.c.0.s8 %v5999
        %v6001 = vlaneseq
        %v6002 = vshrl.u32 %v6001, 7
        %v6003 = vsub.s32 %v6000, %v6002
        %v6004 = vrot.slane %v5997, %v6003
        %v6005 = vcombine.low %v5980, %v5988
        %v6006 = vcombine.high %v5980, %v5988
        %v6008 = vunpack.c.l.s4 1934713408
        %v6009 = vunpack.c.0.s8 %v6008
        %v6010 = vlaneseq
        %v6011 = vshrl.u32 %v6010, 7
        %v6012 = vsub.s32 %v6009, %v6011
        %v6013 = vrot.slane %v6005, %v6012
        %v6015 = vunpack.c.l.s4 1934713408
        %v6016 = vunpack.c.0.s8 %v6015
        %v6017 = vlaneseq
        %v6018 = vshrl.u32 %v6017, 7
        %v6019 = vsub.s32 %v6016, %v6018
        %v6020 = vrot.slane %v6006, %v6019
        %v6021 = vcombine.low %v5996, %v6004
        %v6022 = vcombine.high %v5996, %v6004
        %v6024 = vunpack.c.l.s4 1934713408
        %v6025 = vunpack.c.0.s8 %v6024
        %v6026 = vlaneseq
        %v6027 = vshrl.u32 %v6026, 7
        %v6028 = vsub.s32 %v6025, %v6027
        %v6029 = vrot.slane %v6021, %v6028
        %v6031 = vunpack.c.l.s4 1934713408
        %v6032 = vunpack.c.0.s8 %v6031
        %v6033 = vlaneseq
        %v6034 = vshrl.u32 %v6033, 7
        %v6035 = vsub.s32 %v6032, %v6034
        %v6036 = vrot.slane %v6022, %v6035
        %v6037 = vcombine.low %v6013, %v6029
        %v6038 = vcombine.high %v6013, %v6029
        %v6039 = vcombine.low %v6020, %v6036
        %v6040 = vcombine.high %v6020, %v6036
        %v6041 = vcombine.low %v5945, %v5952
        %v6043 = vunpack.c.l.s4 1983009808
        %v6044 = vunpack.c.0.s8 %v6043
        %v6045 = vlaneseq
        %v6046 = vshrl.u32 %v6045, 7
        %v6047 = vsub.s32 %v6044, %v6046
        %v6048 = vrot.slane %v6041, %v6047
        %v6049 = vcombine.low %v5969, %v5970
        %v6051 = vunpack.c.l.s4 1983009808
        %v6052 = vunpack.c.0.s8 %v6051
        %v6053 = vlaneseq
        %v6054 = vshrl.u32 %v6053, 7
        %v6055 = vsub.s32 %v6052, %v6054
        %v6056 = vrot.slane %v6049, %v6055
        %v6057 = vcombine.low %v5961, %v5968
        %v6059 = vunpack.c.l.s4 1983009808
        %v6060 = vunpack.c.0.s8 %v6059
        %v6061 = vlaneseq
        %v6062 = vshrl.u32 %v6061, 7
        %v6063 = vsub.s32 %v6060, %v6062
        %v6064 = vrot.slane %v6057, %v6063
        %v6065 = vcombine.low %v5971, %v5972
        %v6067 = vunpack.c.l.s4 1983009808
        %v6068 = vunpack.c.0.s8 %v6067
        %v6069 = vlaneseq
        %v6070 = vshrl.u32 %v6069, 7
        %v6071 = vsub.s32 %v6068, %v6070
        %v6072 = vrot.slane %v6065, %v6071
        %v6073 = vcombine.low %v6048, %v6056
        %v6074 = vcombine.high %v6048, %v6056
        %v6076 = vunpack.c.l.s4 1934713408
        %v6077 = vunpack.c.0.s8 %v6076
        %v6078 = vlaneseq
        %v6079 = vshrl.u32 %v6078, 7
        %v6080 = vsub.s32 %v6077, %v6079
        %v6081 = vrot.slane %v6073, %v6080
        %v6083 = vunpack.c.l.s4 1934713408
        %v6084 = vunpack.c.0.s8 %v6083
        %v6085 = vlaneseq
        %v6086 = vshrl.u32 %v6085, 7
        %v6087 = vsub.s32 %v6084, %v6086
        %v6088 = vrot.slane %v6074, %v6087
        %v6089 = vcombine.low %v6064, %v6072
        %v6090 = vcombine.high %v6064, %v6072
        %v6092 = vunpack.c.l.s4 1934713408
        %v6093 = vunpack.c.0.s8 %v6092
        %v6094 = vlaneseq
        %v6095 = vshrl.u32 %v6094, 7
        %v6096 = vsub.s32 %v6093, %v6095
        %v6097 = vrot.slane %v6089, %v6096
        %v6099 = vunpack.c.l.s4 1934713408
        %v6100 = vunpack.c.0.s8 %v6099
        %v6101 = vlaneseq
        %v6102 = vshrl.u32 %v6101, 7
        %v6103 = vsub.s32 %v6100, %v6102
        %v6104 = vrot.slane %v6090, %v6103
        %v6105 = vcombine.low %v6081, %v6097
        %v6106 = vcombine.high %v6081, %v6097
        %v6107 = vcombine.low %v6088, %v6104
        %v6108 = vcombine.high %v6088, %v6104
        %6111 = vrot.lane.b32.xlu0 %v6038, 32
        %v6112 = vpop.permute.xlu0 %6111
        %6113 = vrot.lane.b32.xlu0 %v6106, 32
        %v6114 = vpop.permute.xlu0 %6113
        %6119 = vrot.lane.b32.xlu0 %v6039, 64
        %v6120 = vpop.permute.xlu0 %6119
        %6121 = vrot.lane.b32.xlu0 %v6107, 64
        %v6122 = vpop.permute.xlu0 %6121
        %6127 = vrot.lane.b32.xlu0 %v6040, 96
        %v6128 = vpop.permute.xlu0 %6127
        %6129 = vrot.lane.b32.xlu0 %v6108, 96
        %v6130 = vpop.permute.xlu0 %6129
        %v6133 = vsel %vm2538, %v6037, %v6112
        %v6134 = vsel %vm2538, %v6105, %v6114
        %v6135 = vsel %vm3671, %v6133, %v6120
        %v6136 = vsel %vm3671, %v6134, %v6122
        %v6137 = vsel %vm3674, %v6135, %v6128
        %v6138 = vsel %vm3674, %v6136, %v6130
        %v6139 = vpack.c.bf16 %v6138, %v6137
        %v6140 = vld [vmem:[%s1099] sm:$0xf]
        %v6141 = vld [vmem:[%s1099 + $0x4] sm:$0xf]
        %v6142 = vld [vmem:[%s1099 + $0x8] sm:$0xf]
        %v6143 = vld [vmem:[%s1099 + $0xc] sm:$0xf]
        %v6144 = vld [vmem:[%s1099 + $0x10] sm:$0xf]
        %v6145 = vld [vmem:[%s1099 + $0x14] sm:$0xf]
        %v6146 = vld [vmem:[%s1099 + $0x18] sm:$0xf]
        %v6147 = vld [vmem:[%s1099 + $0x1c] sm:$0xf]
        %v6148 = vld [vmem:[%s1099 + $0x20] sm:$0xf]
        %v6149 = vld [vmem:[%s1099 + $0x24] sm:$0xf]
        %v6150 = vld [vmem:[%s1099 + $0x28] sm:$0xf]
        %v6151 = vld [vmem:[%s1099 + $0x2c] sm:$0xf]
        %v6152 = vld [vmem:[%s1099 + $0x30] sm:$0xf]
        %v6153 = vld [vmem:[%s1099 + $0x34] sm:$0xf]
        %v6154 = vld [vmem:[%s1099 + $0x38] sm:$0xf]
        %v6155 = vld [vmem:[%s1099 + $0x3c] sm:$0xf]
        %v6156 = vld [vmem:[%s1327] sm:$0x1]
        %v6158 = vlaneseq
        %v6159 = vshrl.u32 %v6158, 7
        %v6160 = vsub.s32 0, %v6159
        %v6161 = vrot.slane %v6156, %v6160
        %v6179 = vunpack.c.l.b16 %v6140
        %v6180 = vunpack.c.l.b16 %v6141
        %v6181 = vunpack.c.l.b16 %v6142
        %v6182 = vunpack.c.l.b16 %v6143
        %v6183 = vunpack.c.l.b16 %v6144
        %v6184 = vunpack.c.l.b16 %v6145
        %v6185 = vunpack.c.l.b16 %v6146
        %v6186 = vunpack.c.l.b16 %v6147
        %v6187 = vunpack.c.l.b16 %v6148
        %v6188 = vunpack.c.l.b16 %v6149
        %v6189 = vunpack.c.l.b16 %v6150
        %v6190 = vunpack.c.l.b16 %v6151
        %v6191 = vunpack.c.l.b16 %v6152
        %v6192 = vunpack.c.l.b16 %v6153
        %v6193 = vunpack.c.l.b16 %v6154
        %v6194 = vunpack.c.l.b16 %v6155
        %v6195 = vpack.c.b16 %v6180, %v6179
        %v6196 = vpack.c.b16 %v6182, %v6181
        %v6197 = vpack.c.b16 %v6184, %v6183
        %v6198 = vpack.c.b16 %v6186, %v6185
        %v6199 = vpack.c.b16 %v6188, %v6187
        %v6200 = vpack.c.b16 %v6190, %v6189
        %v6201 = vpack.c.b16 %v6192, %v6191
        %v6202 = vpack.c.b16 %v6194, %v6193
        %6211 = vmatprep.subr.bf16.mxu0 0
        %6212 = vmatpush1.bf16.msra.mxu0 %v6195
        %6213 = vmatprep.subr.bf16.mxu0 0
        %6214 = vmatpush1.bf16.msra.mxu0 %v6196
        %6215 = vmatprep.subr.bf16.mxu0 0
        %6216 = vmatpush1.bf16.msra.mxu0 %v6197
        %6217 = vmatprep.subr.bf16.mxu0 0
        %6218 = vmatpush1.bf16.msra.mxu0 %v6198
        %6219 = vmatprep.subr.bf16.mxu0 0
        %6220 = vmatpush1.bf16.msra.mxu0 %v6199
        %6221 = vmatprep.subr.bf16.mxu0 0
        %6222 = vmatpush1.bf16.msra.mxu0 %v6200
        %6223 = vmatprep.subr.bf16.mxu0 0
        %6224 = vmatpush1.bf16.msra.mxu0 %v6201
        %6225 = vmatprep.subr.bf16.mxu0 0
        %6226 = vmatpush1.bf16.msra.mxu0 %v6202
        %6227 = vmatprep.subr.bf16.mxu0 0
        %6228 = vmatpush1.bf16.msra.mxu0 0
        %6229 = vmatprep.subr.bf16.mxu0 0
        %6230 = vmatpush1.bf16.msra.mxu0 0
        %6231 = vmatprep.subr.bf16.mxu0 0
        %6232 = vmatpush1.bf16.msra.mxu0 0
        %6233 = vmatprep.subr.bf16.mxu0 0
        %6234 = vmatpush1.bf16.msra.mxu0 0
        %6235 = vmatprep.subr.bf16.mxu0 0
        %6236 = vmatpush1.bf16.msra.mxu0 0
        %6237 = vmatprep.subr.bf16.mxu0 0
        %6238 = vmatpush1.bf16.msra.mxu0 0
        %6239 = vmatprep.subr.bf16.mxu0 0
        %6240 = vmatpush1.bf16.msra.mxu0 0
        %6241 = vmatprep.subr.bf16.mxu0 0
        %6242 = vmatpush1.bf16.msra.mxu0 0
        %6243 = vmatprep.mubr.bf16.mxu0 0
        %6244 = vmatmul.mubr.bf16.gmra.mrb[0].mxu0 %v6139
        %v6245 = vpop.f32.mrb[0].mxu0
        %v6246 = vadd.f32 %v6161, %v6245
        %v6247 = vpop.f32.mrb[0].mxu0
        %v6248 = vpop.f32.mrb[0].mxu0
        %v6249 = vadd.f32 %v6161, %v6248
        %v6250 = vpop.f32.mrb[0].mxu0
        %6251 = vdwg.mxu0
        %v6252 = vadd.f32 %v3831, %v6246
        %v6253 = vadd.f32 %v3832, %v6249
        %v6254 = vld [vmem:[%s1107] sm:$0x1]
        %v6255 = vld [vmem:[%s1115] sm:$0x1]
        %6256 = vadd.xlane.f32.xlu0 %v6252
        %v6257 = vpop.xlane.xlu0 %6256
        %6258 = vadd.xlane.f32.xlu0 %v6253
        %v6259 = vpop.xlane.xlu0 %6258
        %v6260 = vmul.f32 %v6257, %v3798
        %v6261 = vmul.f32 %v6259, %v3798
        %v6262 = vsub.f32 %v6252, %v6260
        %v6263 = vsub.f32 %v6253, %v6261
        %v6264 = vmul.f32 %v6262, %v6262
        %v6265 = vmul.f32 %v6263, %v6263
        %6266 = vadd.xlane.f32.xlu0 %v6264
        %v6267 = vpop.xlane.xlu0 %6266
        %6268 = vadd.xlane.f32.xlu0 %v6265
        %v6269 = vpop.xlane.xlu0 %6268
        %v6270 = vmul.f32 %v6267, %v3798
        %v6271 = vmul.f32 %v6269, %v3798
        %v6272 = vadd.f32 %v6270, 1e-05
        %v6273 = vadd.f32 %v6271, 1e-05
        %v6274 = vrsqrt.pop %v6272
        %v6275 = vrsqrt.pop %v6273
        %v6276 = vmul.f32 %v6262, %v6274
        %v6277 = vmul.f32 %v6263, %v6275
        %v6279 = vlaneseq
        %v6280 = vshrl.u32 %v6279, 7
        %v6281 = vsub.s32 0, %v6280
        %v6282 = vrot.slane %v6254, %v6281
        %v6284 = vmul.f32 %v6276, %v6282
        %v6285 = vmul.f32 %v6277, %v6282
        %v6287 = vlaneseq
        %v6288 = vshrl.u32 %v6287, 7
        %v6289 = vsub.s32 0, %v6288
        %v6290 = vrot.slane %v6255, %v6289
        %v6292 = vadd.f32 %v6284, %v6290
        %v6293 = vadd.f32 %v6285, %v6290
        %v6294 = vpack.c.bf16 %v6293, %v6292
        %v6295 = vld [vmem:[%s1124] sm:$0xff]
        %v6296 = vld [vmem:[%s1124 + $0x8] sm:$0xff]
        %v6297 = vld [vmem:[%s1124 + $0x10] sm:$0xff]
        %v6298 = vld [vmem:[%s1124 + $0x18] sm:$0xff]
        %v6299 = vld [vmem:[%s1124 + $0x20] sm:$0xff]
        %v6300 = vld [vmem:[%s1124 + $0x28] sm:$0xff]
        %v6301 = vld [vmem:[%s1124 + $0x30] sm:$0xff]
        %v6302 = vld [vmem:[%s1124 + $0x38] sm:$0xff]
        %v6303 = vld [vmem:[%s1124 + $0x40] sm:$0xff]
        %v6304 = vld [vmem:[%s1124 + $0x48] sm:$0xff]
        %v6305 = vld [vmem:[%s1124 + $0x50] sm:$0xff]
        %v6306 = vld [vmem:[%s1124 + $0x58] sm:$0xff]
        %v6307 = vld [vmem:[%s1124 + $0x60] sm:$0xff]
        %v6308 = vld [vmem:[%s1124 + $0x68] sm:$0xff]
        %v6309 = vld [vmem:[%s1124 + $0x70] sm:$0xff]
        %v6310 = vld [vmem:[%s1124 + $0x78] sm:$0xff]
        %v6311 = vld [vmem:[%s1133] sm:$0x3]
        %v6313 = vlaneseq
        %v6314 = vshrl.u32 %v6313, 7
        %v6315 = vsub.s32 0, %v6314
        %v6316 = vrot.slane %v6311, %v6315
        %v6317 = vlaneseq
        %v6318 = vshrl.u32 %v6317, 7
        %v6319 = vsub.s32 1, %v6318
        %v6320 = vrot.slane %v6311, %v6319
        %v6339 = vunpack.c.l.b16 %v6295
        %v6340 = vunpack.c.h.b16 %v6295
        %v6341 = vunpack.c.l.b16 %v6296
        %v6342 = vunpack.c.h.b16 %v6296
        %v6343 = vunpack.c.l.b16 %v6297
        %v6344 = vunpack.c.h.b16 %v6297
        %v6345 = vunpack.c.l.b16 %v6298
        %v6346 = vunpack.c.h.b16 %v6298
        %v6347 = vunpack.c.l.b16 %v6299
        %v6348 = vunpack.c.h.b16 %v6299
        %v6349 = vunpack.c.l.b16 %v6300
        %v6350 = vunpack.c.h.b16 %v6300
        %v6351 = vunpack.c.l.b16 %v6301
        %v6352 = vunpack.c.h.b16 %v6301
        %v6353 = vunpack.c.l.b16 %v6302
        %v6354 = vunpack.c.h.b16 %v6302
        %v6355 = vunpack.c.l.b16 %v6303
        %v6356 = vunpack.c.h.b16 %v6303
        %v6357 = vunpack.c.l.b16 %v6304
        %v6358 = vunpack.c.h.b16 %v6304
        %v6359 = vunpack.c.l.b16 %v6305
        %v6360 = vunpack.c.h.b16 %v6305
        %v6361 = vunpack.c.l.b16 %v6306
        %v6362 = vunpack.c.h.b16 %v6306
        %v6363 = vunpack.c.l.b16 %v6307
        %v6364 = vunpack.c.h.b16 %v6307
        %v6365 = vunpack.c.l.b16 %v6308
        %v6366 = vunpack.c.h.b16 %v6308
        %v6367 = vunpack.c.l.b16 %v6309
        %v6368 = vunpack.c.h.b16 %v6309
        %v6369 = vunpack.c.l.b16 %v6310
        %v6370 = vunpack.c.h.b16 %v6310
        %v6371 = vpack.c.b16 %v6341, %v6339
        %v6372 = vpack.c.b16 %v6342, %v6340
        %v6373 = vpack.c.b16 %v6345, %v6343
        %v6374 = vpack.c.b16 %v6346, %v6344
        %v6375 = vpack.c.b16 %v6349, %v6347
        %v6376 = vpack.c.b16 %v6350, %v6348
        %v6377 = vpack.c.b16 %v6353, %v6351
        %v6378 = vpack.c.b16 %v6354, %v6352
        %v6379 = vpack.c.b16 %v6357, %v6355
        %v6380 = vpack.c.b16 %v6358, %v6356
        %v6381 = vpack.c.b16 %v6361, %v6359
        %v6382 = vpack.c.b16 %v6362, %v6360
        %v6383 = vpack.c.b16 %v6365, %v6363
        %v6384 = vpack.c.b16 %v6366, %v6364
        %v6385 = vpack.c.b16 %v6369, %v6367
        %v6386 = vpack.c.b16 %v6370, %v6368
        %6403 = vmatprep.subr.bf16.mxu0 %v6372
        %6404 = vmatpush1.bf16.msra.mxu0 %v6371
        %6405 = vmatprep.subr.bf16.mxu0 %v6374
        %6406 = vmatpush1.bf16.msra.mxu0 %v6373
        %6407 = vmatprep.subr.bf16.mxu0 %v6376
        %6408 = vmatpush1.bf16.msra.mxu0 %v6375
        %6409 = vmatprep.subr.bf16.mxu0 %v6378
        %6410 = vmatpush1.bf16.msra.mxu0 %v6377
        %6411 = vmatprep.subr.bf16.mxu0 %v6380
        %6412 = vmatpush1.bf16.msra.mxu0 %v6379
        %6413 = vmatprep.subr.bf16.mxu0 %v6382
        %6414 = vmatpush1.bf16.msra.mxu0 %v6381
        %6415 = vmatprep.subr.bf16.mxu0 %v6384
        %6416 = vmatpush1.bf16.msra.mxu0 %v6383
        %6417 = vmatprep.subr.bf16.mxu0 %v6386
        %6418 = vmatpush1.bf16.msra.mxu0 %v6385
        %6419 = vmatprep.subr.bf16.mxu0 0
        %6420 = vmatpush1.bf16.msra.mxu0 0
        %6421 = vmatprep.subr.bf16.mxu0 0
        %6422 = vmatpush1.bf16.msra.mxu0 0
        %6423 = vmatprep.subr.bf16.mxu0 0
        %6424 = vmatpush1.bf16.msra.mxu0 0
        %6425 = vmatprep.subr.bf16.mxu0 0
        %6426 = vmatpush1.bf16.msra.mxu0 0
        %6427 = vmatprep.subr.bf16.mxu0 0
        %6428 = vmatpush1.bf16.msra.mxu0 0
        %6429 = vmatprep.subr.bf16.mxu0 0
        %6430 = vmatpush1.bf16.msra.mxu0 0
        %6431 = vmatprep.subr.bf16.mxu0 0
        %6432 = vmatpush1.bf16.msra.mxu0 0
        %6433 = vmatprep.subr.bf16.mxu0 0
        %6434 = vmatpush1.bf16.msra.mxu0 0
        %6435 = vmatprep.mubr.bf16.mxu0 0
        %6436 = vmatmul.mubr.bf16.gmra.mrb[0].mxu0 %v6294
        %v6437 = vpop.f32.mrb[0].mxu0
        %v6438 = vadd.f32 %v6316, %v6437
        %v6439 = vpop.f32.mrb[0].mxu0
        %v6440 = vadd.f32 %v6320, %v6439
        %v6441 = vpop.f32.mrb[0].mxu0
        %v6442 = vadd.f32 %v6316, %v6441
        %v6443 = vpop.f32.mrb[0].mxu0
        %v6444 = vadd.f32 %v6320, %v6443
        %6445 = vdwg.mxu0
        %v6446 = vmax.f32 %v6438, 0.0
        %v6447 = vmax.f32 %v6440, 0.0
        %v6448 = vmax.f32 %v6442, 0.0
        %v6449 = vmax.f32 %v6444, 0.0
        %v6450 = vpack.c.bf16 %v6448, %v6446
        %v6451 = vpack.c.bf16 %v6449, %v6447
        %v6452 = vld [vmem:[%s1142] sm:$0xf]
        %v6453 = vld [vmem:[%s1142 + $0x4] sm:$0xf]
        %v6454 = vld [vmem:[%s1142 + $0x8] sm:$0xf]
        %v6455 = vld [vmem:[%s1142 + $0xc] sm:$0xf]
        %v6456 = vld [vmem:[%s1142 + $0x10] sm:$0xf]
        %v6457 = vld [vmem:[%s1142 + $0x14] sm:$0xf]
        %v6458 = vld [vmem:[%s1142 + $0x18] sm:$0xf]
        %v6459 = vld [vmem:[%s1142 + $0x1c] sm:$0xf]
        %v6460 = vld [vmem:[%s1142 + $0x20] sm:$0xf]
        %v6461 = vld [vmem:[%s1142 + $0x24] sm:$0xf]
        %v6462 = vld [vmem:[%s1142 + $0x28] sm:$0xf]
        %v6463 = vld [vmem:[%s1142 + $0x2c] sm:$0xf]
        %v6464 = vld [vmem:[%s1142 + $0x30] sm:$0xf]
        %v6465 = vld [vmem:[%s1142 + $0x34] sm:$0xf]
        %v6466 = vld [vmem:[%s1142 + $0x38] sm:$0xf]
        %v6467 = vld [vmem:[%s1142 + $0x3c] sm:$0xf]
        %v6468 = vld [vmem:[%s1142 + $0x40] sm:$0xf]
        %v6469 = vld [vmem:[%s1142 + $0x44] sm:$0xf]
        %v6470 = vld [vmem:[%s1142 + $0x48] sm:$0xf]
        %v6471 = vld [vmem:[%s1142 + $0x4c] sm:$0xf]
        %v6472 = vld [vmem:[%s1142 + $0x50] sm:$0xf]
        %v6473 = vld [vmem:[%s1142 + $0x54] sm:$0xf]
        %v6474 = vld [vmem:[%s1142 + $0x58] sm:$0xf]
        %v6475 = vld [vmem:[%s1142 + $0x5c] sm:$0xf]
        %v6476 = vld [vmem:[%s1142 + $0x60] sm:$0xf]
        %v6477 = vld [vmem:[%s1142 + $0x64] sm:$0xf]
        %v6478 = vld [vmem:[%s1142 + $0x68] sm:$0xf]
        %v6479 = vld [vmem:[%s1142 + $0x6c] sm:$0xf]
        %v6480 = vld [vmem:[%s1142 + $0x70] sm:$0xf]
        %v6481 = vld [vmem:[%s1142 + $0x74] sm:$0xf]
        %v6482 = vld [vmem:[%s1142 + $0x78] sm:$0xf]
        %v6483 = vld [vmem:[%s1142 + $0x7c] sm:$0xf]
        %v6484 = vld [vmem:[%s1150] sm:$0x1]
        %v6486 = vlaneseq
        %v6487 = vshrl.u32 %v6486, 7
        %v6488 = vsub.s32 0, %v6487
        %v6489 = vrot.slane %v6484, %v6488
        %v6523 = vunpack.c.l.b16 %v6452
        %v6524 = vunpack.c.l.b16 %v6453
        %v6525 = vunpack.c.l.b16 %v6454
        %v6526 = vunpack.c.l.b16 %v6455
        %v6527 = vunpack.c.l.b16 %v6456
        %v6528 = vunpack.c.l.b16 %v6457
        %v6529 = vunpack.c.l.b16 %v6458
        %v6530 = vunpack.c.l.b16 %v6459
        %v6531 = vunpack.c.l.b16 %v6460
        %v6532 = vunpack.c.l.b16 %v6461
        %v6533 = vunpack.c.l.b16 %v6462
        %v6534 = vunpack.c.l.b16 %v6463
        %v6535 = vunpack.c.l.b16 %v6464
        %v6536 = vunpack.c.l.b16 %v6465
        %v6537 = vunpack.c.l.b16 %v6466
        %v6538 = vunpack.c.l.b16 %v6467
        %v6539 = vunpack.c.l.b16 %v6468
        %v6540 = vunpack.c.l.b16 %v6469
        %v6541 = vunpack.c.l.b16 %v6470
        %v6542 = vunpack.c.l.b16 %v6471
        %v6543 = vunpack.c.l.b16 %v6472
        %v6544 = vunpack.c.l.b16 %v6473
        %v6545 = vunpack.c.l.b16 %v6474
        %v6546 = vunpack.c.l.b16 %v6475
        %v6547 = vunpack.c.l.b16 %v6476
        %v6548 = vunpack.c.l.b16 %v6477
        %v6549 = vunpack.c.l.b16 %v6478
        %v6550 = vunpack.c.l.b16 %v6479
        %v6551 = vunpack.c.l.b16 %v6480
        %v6552 = vunpack.c.l.b16 %v6481
        %v6553 = vunpack.c.l.b16 %v6482
        %v6554 = vunpack.c.l.b16 %v6483
        %v6555 = vpack.c.b16 %v6524, %v6523
        %v6556 = vpack.c.b16 %v6526, %v6525
        %v6557 = vpack.c.b16 %v6528, %v6527
        %v6558 = vpack.c.b16 %v6530, %v6529
        %v6559 = vpack.c.b16 %v6532, %v6531
        %v6560 = vpack.c.b16 %v6534, %v6533
        %v6561 = vpack.c.b16 %v6536, %v6535
        %v6562 = vpack.c.b16 %v6538, %v6537
        %v6563 = vpack.c.b16 %v6540, %v6539
        %v6564 = vpack.c.b16 %v6542, %v6541
        %v6565 = vpack.c.b16 %v6544, %v6543
        %v6566 = vpack.c.b16 %v6546, %v6545
        %v6567 = vpack.c.b16 %v6548, %v6547
        %v6568 = vpack.c.b16 %v6550, %v6549
        %v6569 = vpack.c.b16 %v6552, %v6551
        %v6570 = vpack.c.b16 %v6554, %v6553
        %6587 = vmatprep.subr.bf16.mxu0 0
        %6588 = vmatpush1.bf16.msra.mxu0 %v6555
        %6589 = vmatprep.subr.bf16.mxu0 0
        %6590 = vmatpush1.bf16.msra.mxu0 %v6556
        %6591 = vmatprep.subr.bf16.mxu0 0
        %6592 = vmatpush1.bf16.msra.mxu0 %v6557
        %6593 = vmatprep.subr.bf16.mxu0 0
        %6594 = vmatpush1.bf16.msra.mxu0 %v6558
        %6595 = vmatprep.subr.bf16.mxu0 0
        %6596 = vmatpush1.bf16.msra.mxu0 %v6559
        %6597 = vmatprep.subr.bf16.mxu0 0
        %6598 = vmatpush1.bf16.msra.mxu0 %v6560
        %6599 = vmatprep.subr.bf16.mxu0 0
        %6600 = vmatpush1.bf16.msra.mxu0 %v6561
        %6601 = vmatprep.subr.bf16.mxu0 0
        %6602 = vmatpush1.bf16.msra.mxu0 %v6562
        %6603 = vmatprep.subr.bf16.mxu0 0
        %6604 = vmatpush1.bf16.msra.mxu0 %v6563
        %6605 = vmatprep.subr.bf16.mxu0 0
        %6606 = vmatpush1.bf16.msra.mxu0 %v6564
        %6607 = vmatprep.subr.bf16.mxu0 0
        %6608 = vmatpush1.bf16.msra.mxu0 %v6565
        %6609 = vmatprep.subr.bf16.mxu0 0
        %6610 = vmatpush1.bf16.msra.mxu0 %v6566
        %6611 = vmatprep.subr.bf16.mxu0 0
        %6612 = vmatpush1.bf16.msra.mxu0 %v6567
        %6613 = vmatprep.subr.bf16.mxu0 0
        %6614 = vmatpush1.bf16.msra.mxu0 %v6568
        %6615 = vmatprep.subr.bf16.mxu0 0
        %6616 = vmatpush1.bf16.msra.mxu0 %v6569
        %6617 = vmatprep.subr.bf16.mxu0 0
        %6618 = vmatpush1.bf16.msra.mxu0 %v6570
        %6619 = vmatprep.mubr.bf16.mxu0 %v6451
        %6620 = vmatmul.mubr.bf16.gmra.mrb[0].mxu0 %v6450
        %v6621 = vpop.f32.mrb[0].mxu0
        %v6622 = vadd.f32 %v6489, %v6621
        %v6623 = vpop.f32.mrb[0].mxu0
        %v6624 = vpop.f32.mrb[0].mxu0
        %v6625 = vadd.f32 %v6489, %v6624
        %v6626 = vpop.f32.mrb[0].mxu0
        %6627 = vdwg.mxu0
        %v6628 = vadd.f32 %v6292, %v6622
        %v6629 = vadd.f32 %v6293, %v6625
        %v6630 = vld [vmem:[%s1158] sm:$0x1]
        %v6631 = vld [vmem:[%s1166] sm:$0x1]
        %6632 = vadd.xlane.f32.xlu0 %v6628
        %v6633 = vpop.xlane.xlu0 %6632
        %6634 = vadd.xlane.f32.xlu0 %v6629
        %v6635 = vpop.xlane.xlu0 %6634
        %v6636 = vmul.f32 %v6633, %v3798
        %v6637 = vmul.f32 %v6635, %v3798
        %v6638 = vsub.f32 %v6628, %v6636
        %v6639 = vsub.f32 %v6629, %v6637
        %v6640 = vmul.f32 %v6638, %v6638
        %v6641 = vmul.f32 %v6639, %v6639
        %6642 = vadd.xlane.f32.xlu0 %v6640
        %v6643 = vpop.xlane.xlu0 %6642
        %6644 = vadd.xlane.f32.xlu0 %v6641
        %v6645 = vpop.xlane.xlu0 %6644
        %v6646 = vmul.f32 %v6643, %v3798
        %v6647 = vmul.f32 %v6645, %v3798
        %v6648 = vadd.f32 %v6646, 1e-05
        %v6649 = vadd.f32 %v6647, 1e-05
        %v6650 = vrsqrt.pop %v6648
        %v6651 = vrsqrt.pop %v6649
        %v6652 = vmul.f32 %v6638, %v6650
        %v6653 = vmul.f32 %v6639, %v6651
        %v6655 = vlaneseq
        %v6656 = vshrl.u32 %v6655, 7
        %v6657 = vsub.s32 0, %v6656
        %v6658 = vrot.slane %v6630, %v6657
        %v6660 = vmul.f32 %v6652, %v6658
        %v6661 = vmul.f32 %v6653, %v6658
        %v6663 = vlaneseq
        %v6664 = vshrl.u32 %v6663, 7
        %v6665 = vsub.s32 0, %v6664
        %v6666 = vrot.slane %v6631, %v6665
        %v6668 = vadd.f32 %v6660, %v6666
        %v6669 = vadd.f32 %v6661, %v6666
        %6670 = vst [vmem:[%s24] sm:$0xff] %v6668
        %6671 = vst [vmem:[%s24 + $0x8] sm:$0xff] %v6669
        // Predicated region
        $region185: #{symbolic_regression_transformer.4} parent=115 // pred_check
          %p6672 = pneg %p677
        $region186: #{symbolic_regression_transformer.4} parent=115 // pred_check_branch
          %6674 = sbr.rel (%p6672) target = $region188
        $region187: #{symbolic_regression_transformer.4} parent=115 // pred_region
          _
        $region188: #{symbolic_regression_transformer.4} parent=115 // pred_fallthru
          _
        // Predicated region
        $region189: #{symbolic_regression_transformer.4} parent=115 // pred_check
          %p6675 = pneg %p677
        $region190: #{symbolic_regression_transformer.4} parent=115 // pred_check_branch
          %6677 = sbr.rel (%p6675) target = $region192
        $region191: #{symbolic_regression_transformer.4} parent=115 // pred_region
          _
        $region192: #{symbolic_regression_transformer.4} parent=115 // pred_fallthru
          _
      $region116: #{symbolic_regression_transformer.4} parent=5 // pred_fallthru
        _
      %p6678 = scmp.le.s32.totalorder 2, %s55
      // Predicated region
      $region193: #{symbolic_regression_transformer.4} parent=5 // pred_check
        %p6679 = pneg %p6678
      $region194: #{symbolic_regression_transformer.4} parent=5 // pred_check_branch
        %6681 = sbr.rel (%p6679) target = $region196
      $region195: #{symbolic_regression_transformer.4} parent=5 // pred_region
        %s6682 = ssub.s32 %s55, 2
      $region196: #{symbolic_regression_transformer.4} parent=5 // pred_fallthru
        _
    $region6: #{symbolic_regression_transformer.4} parent=1 // loop_footer
      %s59 = sadd.s32 1, %s55
    $region7: #{symbolic_regression_transformer.4} parent=1 // loop_footer_branch
      %54 = sbr.rel target = $region3
    $region8: #{symbolic_regression_transformer.4} parent=1 // loop_exit
      _
    %6683 = vsyncpa [#allocation3], 1
    %s6684 = scalar_lea.sflag [#allocation3], 1
    %6685 = vsyncpa %s6684, 1
    %6686 = vsyncpa [#allocation5], 1
    %s6687 = scalar_lea.sflag [#allocation5], 1
    %6688 = vsyncpa %s6687, 1
    %6689 = vsyncpa [#allocation8], 1
    %s6690 = scalar_lea.sflag [#allocation8], 1
    %6691 = vsyncpa %s6690, 1
    %6692 = vsyncpa [#allocation11], 1
    %s6693 = scalar_lea.sflag [#allocation11], 1
    %6694 = vsyncpa %s6693, 1
    %6695 = vsyncpa [#allocation14], 1
    %s6696 = scalar_lea.sflag [#allocation14], 1
    %6697 = vsyncpa %s6696, 1
    %6698 = vsyncpa [#allocation17], 1
    %s6699 = scalar_lea.sflag [#allocation17], 1
    %6700 = vsyncpa %s6699, 1
    %6701 = vsyncpa [#allocation20], 1
    %s6702 = scalar_lea.sflag [#allocation20], 1
    %6703 = vsyncpa %s6702, 1
    %6704 = vsyncpa [#allocation23], 1
    %s6705 = scalar_lea.sflag [#allocation23], 1
    %6706 = vsyncpa %s6705, 1
    %6707 = vsyncpa [#allocation26], 1
    %s6708 = scalar_lea.sflag [#allocation26], 1
    %6709 = vsyncpa %s6708, 1

</llo_original>
